<compile_context>
chip_gen: v5e
topology: v5e:2x2
jax: 0.10.0
libtpu: 0.0.40
codegen_flags: <defaults>
</compile_context>

<pallas_src>
import jax
import jax.numpy as jnp
from jax.experimental import pallas as pl
from jax.experimental.pallas import tpu as pltpu


def _round_up(x, m):
    return ((x + m - 1) // m) * m


# -----------------------------------------------------------------------------
# Fused whole-network kernel (one grid step == B_blk samples)
# -----------------------------------------------------------------------------
def _make_fused_kernel(n_conv, n_fc, k, p, Wp, G, L, Sp, W_span, B, c_last):
    """Ref layout (positional):
      x_ref     (1, C0, B*L)      bf16  B samples on the lane slab (zero margins)
      mask_ref  (1, W_span)       f32   1.0 at valid H*W interior positions
      conv i:   w (c_out, k*k*c_in) bf16,  b (c_out, 1) f32
      fc 0:     w (c_last*Sp, F1)   bf16,  b (1, F1)    f32   (padded-grid layout)
      fc j>0:   w (F_in, F_out)     bf16,  b (1, F_out) f32
      o_ref     (B, action_size)  f32
      buf_ref   (c_buf, B*L)      bf16  activation slab (VMEM scratch)
      tap_ref   (k*k*c_in_max, W_span) bf16  stacked-tap contraction slab
      fc_ref    (B, c_last*Sp)    bf16  per-sample flattened features
    """
    kk = k * k

    def kernel(*args):
        x_ref, mask_ref = args[0], args[1]
        layer_refs = args[2:-4]
        o_ref = args[-4]
        buf_ref, tap_ref, fc_ref = args[-3], args[-2], args[-1]

        valid = mask_ref[...] > 0.5                       # (1, W_span) bool

        # ---- Conv2d(k,'same') + ReLU stack: one K=k*k*c_in matmul per layer.
        # out[:, j] = W_stacked @ taps[:, j] where taps stacks the k*k shifted
        # windows of the source slab (constant lane offsets).  Positions that
        # are not a valid interior position of some sample (halo ring,
        # inter-sample margins) are forced to exact 0 so the next layer's
        # implicit zero-padding stays exact and uninitialized VMEM can never
        # leak into a valid output.
        for li in range(n_conv):
            w_ref = layer_refs[2 * li]                    # (c_out, kk*c_in)
            b_ref = layer_refs[2 * li + 1]                # (c_out, 1)
            c_out = w_ref.shape[0]
            c_in = w_ref.shape[1] // kk
            for t in range(kk):
                dh, dw = t // k, t % k
                off = G + (dh - p) * Wp + (dw - p)        # static lane offset
                if li == 0:
                    src = x_ref[0, 0:c_in, off:off + W_span]
                else:
                    src = buf_ref[0:c_in, off:off + W_span]
                tap_ref[t * c_in:(t + 1) * c_in, :] = src
            acc = jnp.dot(w_ref[...], tap_ref[0:kk * c_in, :],
                          preferred_element_type=jnp.float32)   # (c_out, W_span)
            y = jnp.where(valid, jnp.maximum(acc + b_ref[...], 0.0), 0.0)
            buf_ref[0:c_out, G:G + W_span] = y.astype(buf_ref.dtype)

        # ---- conv -> FC boundary: per-sample flatten into (B, c_last*Sp).
        # Pure lane-to-lane copies (no lane<->sublane transpose): source and
        # destination offsets are both multiples of 128 and width Sp is a
        # multiple of 128.  The [S, Sp) tail reads the masked-zero margin, and
        # the matching FC1 weight rows are zero, so it contributes nothing.
        for c in range(c_last):
            for b in range(B):
                fc_ref[b:b + 1, c * Sp:(c + 1) * Sp] = \
                    buf_ref[c:c + 1, b * L + G:b * L + G + Sp]

        # ---- Flatten + Linear stack (M = B_blk everywhere) --------------------
        base = 2 * n_conv
        z = jnp.dot(fc_ref[...], layer_refs[base][...],
                    preferred_element_type=jnp.float32)
        z = z + layer_refs[base + 1][...]
        if n_fc > 1:
            z = jnp.maximum(z, 0.0)
        for j in range(1, n_fc):
            w_ref = layer_refs[base + 2 * j]              # (F_in, F_out)
            b2_ref = layer_refs[base + 2 * j + 1]         # (1, F_out)
            z = jnp.dot(z.astype(jnp.bfloat16), w_ref[...],
                        preferred_element_type=jnp.float32) + b2_ref[...]
            if j < n_fc - 1:
                z = jnp.maximum(z, 0.0)

        o_ref[...] = z.astype(o_ref.dtype)

    return kernel


# -----------------------------------------------------------------------------
# Wrapper: one-time weight re-layout + fused forward
# -----------------------------------------------------------------------------
def build_cnn_forward(obs_size, action_size, filters, flatten_dims, kernel_size,
                      block_batch=8):
    C0, H, W = obs_size
    k = kernel_size
    # p = (k-1)//2 reproduces PyTorch's padding only for odd kernel sizes.
    assert k % 2 == 1, "padding=(k-1)//2 matches 'same' only for odd kernels"
    assert len(filters) >= 1, "at least one conv layer expected"
    p = (k - 1) // 2
    Hp, Wp = H + 2 * p, W + 2 * p
    S = Hp * Wp                     # padded spatial grid, flattened
    G0 = p * Wp + p                 # max |lane shift| of any conv tap
    G = _round_up(G0, 128)          # lane-aligned halo margin
    Sp = _round_up(S, 128)          # per-channel FC segment (lane aligned)
    L = Sp + 2 * G                  # per-sample lane chunk (multiple of 128)
    B = int(block_batch)            # samples per grid step
    Wtot = B * L
    W_span = Wtot - 2 * G           # compute span (multiple of 128)

    n_conv = len(filters)
    n_fc = len(flatten_dims) + 1
    c_last = filters[-1]
    c_buf = max(filters)
    tap_rows = k * k * max([C0] + list(filters[:-1]))

    # Validity mask over the compute span: 1.0 at positions that are the
    # valid H x W interior of some sample, 0.0 on halo / margins.
    interior = jnp.pad(jnp.ones((H, W), jnp.float32), ((p, p), (p, p))).reshape(S)
    chunk = jnp.zeros((L,), jnp.float32).at[G:G + S].set(interior)
    mask = jnp.tile(chunk, B)[G:G + W_span].reshape(1, W_span)

    kern = _make_fused_kernel(n_conv, n_fc, k, p, Wp, G, L, Sp, W_span, B, c_last)

    def preprocess_params(params):
        """One-time re-layout, outside the hot path."""
        prepped = []
        cin = C0
        for (w, b) in params["convs"]:                     # w: (c_out, c_in, k, k)
            c_out = w.shape[0]
            # stacked contraction layout: column index = (dh*k+dw)*c_in + ci
            wst = jnp.transpose(w, (0, 2, 3, 1)).reshape(c_out, k * k * cin)
            prepped.append(wst.astype(jnp.bfloat16))
            prepped.append(b.reshape(c_out, 1).astype(jnp.float32))
            cin = c_out
        # First Linear: re-lay onto the padded grid + Sp segment padding so the
        # conv activation is consumed in place (halo / pad rows are zero).
        w1, b1 = params["fcs"][0]                          # w1: (f1, c_last*H*W)
        f1 = w1.shape[0]
        w1r = w1.reshape(f1, c_last, H, W)
        w1r = jnp.pad(w1r, ((0, 0), (0, 0), (p, p), (p, p))).reshape(f1, c_last, S)
        w1r = jnp.pad(w1r, ((0, 0), (0, 0), (0, Sp - S)))
        w1p = jnp.transpose(w1r, (1, 2, 0)).reshape(c_last * Sp, f1)
        prepped.append(w1p.astype(jnp.bfloat16))
        prepped.append(b1.reshape(1, f1).astype(jnp.float32))
        for (w, b) in params["fcs"][1:]:
            prepped.append(jnp.transpose(w).astype(jnp.bfloat16))   # (in, out)
            prepped.append(b.reshape(1, -1).astype(jnp.float32))
        return prepped

    # Logical MACs per sample (for the advisory CostEstimate).
    conv_macs, cin = 0, C0
    for co in filters:
        conv_macs += co * cin * k * k * H * W
        cin = co
    dims = [filters[-1] * H * W] + list(flatten_dims) + [action_size]
    fc_macs = sum(dims[i - 1] * dims[i] for i in range(1, len(dims)))
    macs_per_sample = conv_macs + fc_macs

    def forward_impl(x, prepped):
        N = x.shape[0]
        n_steps = -(-N // B)
        Np = n_steps * B

        # Input glue: cast to bf16 BEFORE padding (no padded f32 copy), then
        # lay each sample into its own L-lane chunk of the slab.
        xb = x.astype(jnp.bfloat16)
        if Np != N:
            xb = jnp.pad(xb, ((0, Np - N), (0, 0), (0, 0), (0, 0)))
        xb = jnp.pad(xb, ((0, 0), (0, 0), (p, p), (p, p))).reshape(Np, C0, S)
        xb = jnp.pad(xb, ((0, 0), (0, 0), (G, L - S - G)))
        xb = (xb.reshape(n_steps, B, C0, L)
                .transpose(0, 2, 1, 3)
                .reshape(n_steps, C0, Wtot))

        inputs = [xb, mask] + list(prepped)
        in_specs = [pl.BlockSpec((1, C0, Wtot), lambda n: (n, 0, 0)),
                    pl.BlockSpec((1, W_span), lambda n: (0, 0))]
        for arr in prepped:                                # full-block weights
            in_specs.append(pl.BlockSpec(arr.shape, lambda n: (0, 0)))

        wbytes = sum(int(a.size) * a.dtype.itemsize for a in prepped)
        cost = pl.CostEstimate(
            flops=2 * Np * macs_per_sample,
            transcendentals=0,
            bytes_accessed=int(xb.size) * 2 + Np * action_size * 4
                           + wbytes + int(mask.size) * 4)

        out = pl.pallas_call(
            kern,
            out_shape=jax.ShapeDtypeStruct((Np, action_size), jnp.float32),
            grid_spec=pltpu.PrefetchScalarGridSpec(
                num_scalar_prefetch=0,
                grid=(n_steps,),
                in_specs=in_specs,
                out_specs=pl.BlockSpec((B, action_size), lambda n: (n, 0)),
                scratch_shapes=[
                    pltpu.VMEM((c_buf, Wtot), jnp.bfloat16),      # activation slab
                    pltpu.VMEM((tap_rows, W_span), jnp.bfloat16), # stacked taps
                    pltpu.VMEM((B, c_last * Sp), jnp.bfloat16),   # flattened feats
                ],
            ),
            compiler_params=pltpu.CompilerParams(
                # Grid steps are independent -> v7x's 2 TensorCores split them
                # (keep >= 2 steps when choosing block_batch); no-op on v5e/v6e.
                dimension_semantics=("parallel",)),
            cost_estimate=cost,
        )(*inputs)
        return out[:N]

    return preprocess_params, jax.jit(forward_impl)


# -----------------------------------------------------------------------------
# Params + pure-JAX reference (numerics check)
# -----------------------------------------------------------------------------
def init_params(key, obs_size, action_size, filters, flatten_dims, kernel_size):
    C, H, W = obs_size
    filt = [C] + list(filters)
    dims = [filters[-1] * H * W] + list(flatten_dims) + [action_size]
    convs, fcs = [], []
    for i in range(1, len(filt)):
        key, k1, k2 = jax.random.split(key, 3)
        w = 0.1 * jax.random.normal(
            k1, (filt[i], filt[i - 1], kernel_size, kernel_size), jnp.float32)
        b = 0.1 * jax.random.normal(k2, (filt[i],), jnp.float32)
        convs.append((w, b))
    for i in range(1, len(dims)):
        key, k1, k2 = jax.random.split(key, 3)
        w = 0.05 * jax.random.normal(k1, (dims[i], dims[i - 1]), jnp.float32)
        b = 0.05 * jax.random.normal(k2, (dims[i],), jnp.float32)
        fcs.append((w, b))
    return {"convs": convs, "fcs": fcs}


def reference_forward(x, params, kernel_size, p):
    """Plain-XLA f32 reference matching the PyTorch module semantics."""
    h = x
    for (w, b) in params["convs"]:
        h = jax.lax.conv_general_dilated(
            h, w, window_strides=(1, 1), padding=[(p, p), (p, p)],
            dimension_numbers=("NCHW", "OIHW", "NCHW"))
        h = jax.nn.relu(h + b.reshape(1, -1, 1, 1))
    h = h.reshape(h.shape[0], -1)
    fcs = params["fcs"]
    for (w, b) in fcs[:-1]:
        h = jax.nn.relu(h @ w.T + b)
    w, b = fcs[-1]
    return h @ w.T + b


# -----------------------------------------------------------------------------
if __name__ == "__main__":
    obs_size = (4, 16, 16)
    filters = [8, 8]
    flatten = [32]
    kernel = 3                      # padding = (kernel - 1) // 2, as in the module
    action_size = 6
    batch = 16                      # 2 grid steps of 8 samples each

    key = jax.random.PRNGKey(0)
    key, kx = jax.random.split(key)
    x = jax.random.normal(kx, (batch,) + obs_size, dtype=jnp.float32)
    params = init_params(key, obs_size, action_size, filters, flatten, kernel)

    preprocess_params, forward = build_cnn_forward(
        obs_size, action_size, filters, flatten, kernel, block_batch=8)
    prepped = preprocess_params(params)

    out = jax.block_until_ready(forward(x, prepped))
    assert out.shape == (batch, action_size), out.shape

    # Numerics check vs. the f32 XLA reference (bf16 operands, f32 accumulation).
    ref = reference_forward(x, params, kernel, (kernel - 1) // 2)
    max_err = float(jnp.max(jnp.abs(out - ref)))
    assert max_err < 5e-2, f"max abs error vs reference: {max_err}"

    # TODO(synk): the training loop (Adam optimizer, BCELoss) is not part of
    # forward and is not translated.

    print("KERNEL_OK")
</pallas_src>

<mosaic_0001>
module attributes {stable_mosaic.version = 11 : i64} {
  func.func @kernel(%arg0: i32, %arg1: memref<1x4x5120xbf16, #tpu.memory_space<vmem>>, %arg2: memref<1x4864xf32, #tpu.memory_space<vmem>>, %arg3: memref<8x36xbf16, #tpu.memory_space<vmem>>, %arg4: memref<8x1xf32, #tpu.memory_space<vmem>>, %arg5: memref<8x72xbf16, #tpu.memory_space<vmem>>, %arg6: memref<8x1xf32, #tpu.memory_space<vmem>>, %arg7: memref<3072x32xbf16, #tpu.memory_space<vmem>>, %arg8: memref<1x32xf32, #tpu.memory_space<vmem>>, %arg9: memref<32x6xbf16, #tpu.memory_space<vmem>>, %arg10: memref<1x6xf32, #tpu.memory_space<vmem>>, %arg11: memref<8x6xf32, #tpu.memory_space<vmem>>, %arg12: memref<8x5120xbf16, #tpu.memory_space<vmem>>, %arg13: memref<72x4864xbf16, #tpu.memory_space<vmem>>, %arg14: memref<8x3072xbf16, #tpu.memory_space<vmem>>) attributes {dimension_semantics = [#tpu.dimension_semantics<parallel>], iteration_bounds = array<i64: 2>, scalar_prefetch = 0 : i64, scratch_operands = 3 : i64, tpu.core_type = #tpu.core_type<tc>, window_params = [{transform_indices = @transform_0, window_bounds = array<i64: 1, 4, 5120>}, {pipeline_mode = #tpu.pipeline_mode<synchronous>, transform_indices = @transform_1, window_bounds = array<i64: 1, 4864>}, {pipeline_mode = #tpu.pipeline_mode<synchronous>, transform_indices = @transform_2, window_bounds = array<i64: 8, 36>}, {pipeline_mode = #tpu.pipeline_mode<synchronous>, transform_indices = @transform_3, window_bounds = array<i64: 8, 1>}, {pipeline_mode = #tpu.pipeline_mode<synchronous>, transform_indices = @transform_4, window_bounds = array<i64: 8, 72>}, {pipeline_mode = #tpu.pipeline_mode<synchronous>, transform_indices = @transform_5, window_bounds = array<i64: 8, 1>}, {pipeline_mode = #tpu.pipeline_mode<synchronous>, transform_indices = @transform_6, window_bounds = array<i64: 3072, 32>}, {pipeline_mode = #tpu.pipeline_mode<synchronous>, transform_indices = @transform_7, window_bounds = array<i64: 1, 32>}, {pipeline_mode = #tpu.pipeline_mode<synchronous>, transform_indices = @transform_8, window_bounds = array<i64: 32, 6>}, {pipeline_mode = #tpu.pipeline_mode<synchronous>, transform_indices = @transform_9, window_bounds = array<i64: 1, 6>}, {transform_indices = @transform_10, window_bounds = array<i64: 8, 6>}]} {
    %c0 = arith.constant 0 : index
    %c0_0 = arith.constant 0 : index
    %0 = vector.load %arg2[%c0, %c0_0] : memref<1x4864xf32, #tpu.memory_space<vmem>>, vector<1x4864xf32>
    %cst = arith.constant 5.000000e-01 : f32
    %1 = vector.broadcast %cst : f32 to vector<1x4864xf32>
    %2 = arith.cmpf ogt, %0, %1 : vector<1x4864xf32>
    %c0_1 = arith.constant 0 : index
    %c0_2 = arith.constant 0 : index
    %c109 = arith.constant 109 : index
    %3 = vector.load %arg1[%c0_1, %c0_2, %c109] : memref<1x4x5120xbf16, #tpu.memory_space<vmem>>, vector<1x4x4864xbf16>
    %4 = vector.shape_cast %3 : vector<1x4x4864xbf16> to vector<4x4864xbf16>
    %c0_3 = arith.constant 0 : index
    %c0_4 = arith.constant 0 : index
    %5 = vector.load %arg13[%c0_3, %c0_4] : memref<72x4864xbf16, #tpu.memory_space<vmem>>, vector<4x4864xbf16>
    tpu.vector_store %arg13[%c0_3, %c0_4], %4 {strides = array<i32>} : memref<72x4864xbf16, #tpu.memory_space<vmem>>, vector<4x4864xbf16>,
    %c0_5 = arith.constant 0 : index
    %c0_6 = arith.constant 0 : index
    %c110 = arith.constant 110 : index
    %6 = vector.load %arg1[%c0_5, %c0_6, %c110] : memref<1x4x5120xbf16, #tpu.memory_space<vmem>>, vector<1x4x4864xbf16>
    %7 = vector.shape_cast %6 : vector<1x4x4864xbf16> to vector<4x4864xbf16>
    %c4 = arith.constant 4 : index
    %c0_7 = arith.constant 0 : index
    %8 = vector.load %arg13[%c4, %c0_7] : memref<72x4864xbf16, #tpu.memory_space<vmem>>, vector<4x4864xbf16>
    tpu.vector_store %arg13[%c4, %c0_7], %7 {strides = array<i32>} : memref<72x4864xbf16, #tpu.memory_space<vmem>>, vector<4x4864xbf16>,
    %c0_8 = arith.constant 0 : index
    %c0_9 = arith.constant 0 : index
    %c111 = arith.constant 111 : index
    %9 = vector.load %arg1[%c0_8, %c0_9, %c111] : memref<1x4x5120xbf16, #tpu.memory_space<vmem>>, vector<1x4x4864xbf16>
    %10 = vector.shape_cast %9 : vector<1x4x4864xbf16> to vector<4x4864xbf16>
    %c8 = arith.constant 8 : index
    %c0_10 = arith.constant 0 : index
    %11 = vector.load %arg13[%c8, %c0_10] : memref<72x4864xbf16, #tpu.memory_space<vmem>>, vector<4x4864xbf16>
    tpu.vector_store %arg13[%c8, %c0_10], %10 {strides = array<i32>} : memref<72x4864xbf16, #tpu.memory_space<vmem>>, vector<4x4864xbf16>,
    %c0_11 = arith.constant 0 : index
    %c0_12 = arith.constant 0 : index
    %c127 = arith.constant 127 : index
    %12 = vector.load %arg1[%c0_11, %c0_12, %c127] : memref<1x4x5120xbf16, #tpu.memory_space<vmem>>, vector<1x4x4864xbf16>
    %13 = vector.shape_cast %12 : vector<1x4x4864xbf16> to vector<4x4864xbf16>
    %c12 = arith.constant 12 : index
    %c0_13 = arith.constant 0 : index
    %14 = vector.load %arg13[%c12, %c0_13] : memref<72x4864xbf16, #tpu.memory_space<vmem>>, vector<4x4864xbf16>
    tpu.vector_store %arg13[%c12, %c0_13], %13 {strides = array<i32>} : memref<72x4864xbf16, #tpu.memory_space<vmem>>, vector<4x4864xbf16>,
    %c0_14 = arith.constant 0 : index
    %c0_15 = arith.constant 0 : index
    %c128 = arith.constant 128 : index
    %15 = vector.load %arg1[%c0_14, %c0_15, %c128] : memref<1x4x5120xbf16, #tpu.memory_space<vmem>>, vector<1x4x4864xbf16>
    %16 = vector.shape_cast %15 : vector<1x4x4864xbf16> to vector<4x4864xbf16>
    %c16 = arith.constant 16 : index
    %c0_16 = arith.constant 0 : index
    %17 = vector.load %arg13[%c16, %c0_16] : memref<72x4864xbf16, #tpu.memory_space<vmem>>, vector<4x4864xbf16>
    tpu.vector_store %arg13[%c16, %c0_16], %16 {strides = array<i32>} : memref<72x4864xbf16, #tpu.memory_space<vmem>>, vector<4x4864xbf16>,
    %c0_17 = arith.constant 0 : index
    %c0_18 = arith.constant 0 : index
    %c129 = arith.constant 129 : index
    %18 = vector.load %arg1[%c0_17, %c0_18, %c129] : memref<1x4x5120xbf16, #tpu.memory_space<vmem>>, vector<1x4x4864xbf16>
    %19 = vector.shape_cast %18 : vector<1x4x4864xbf16> to vector<4x4864xbf16>
    %c20 = arith.constant 20 : index
    %c0_19 = arith.constant 0 : index
    %20 = vector.load %arg13[%c20, %c0_19] : memref<72x4864xbf16, #tpu.memory_space<vmem>>, vector<4x4864xbf16>
    tpu.vector_store %arg13[%c20, %c0_19], %19 {strides = array<i32>} : memref<72x4864xbf16, #tpu.memory_space<vmem>>, vector<4x4864xbf16>,
    %c0_20 = arith.constant 0 : index
    %c0_21 = arith.constant 0 : index
    %c145 = arith.constant 145 : index
    %21 = vector.load %arg1[%c0_20, %c0_21, %c145] : memref<1x4x5120xbf16, #tpu.memory_space<vmem>>, vector<1x4x4864xbf16>
    %22 = vector.shape_cast %21 : vector<1x4x4864xbf16> to vector<4x4864xbf16>
    %c24 = arith.constant 24 : index
    %c0_22 = arith.constant 0 : index
    %23 = vector.load %arg13[%c24, %c0_22] : memref<72x4864xbf16, #tpu.memory_space<vmem>>, vector<4x4864xbf16>
    tpu.vector_store %arg13[%c24, %c0_22], %22 {strides = array<i32>} : memref<72x4864xbf16, #tpu.memory_space<vmem>>, vector<4x4864xbf16>,
    %c0_23 = arith.constant 0 : index
    %c0_24 = arith.constant 0 : index
    %c146 = arith.constant 146 : index
    %24 = vector.load %arg1[%c0_23, %c0_24, %c146] : memref<1x4x5120xbf16, #tpu.memory_space<vmem>>, vector<1x4x4864xbf16>
    %25 = vector.shape_cast %24 : vector<1x4x4864xbf16> to vector<4x4864xbf16>
    %c28 = arith.constant 28 : index
    %c0_25 = arith.constant 0 : index
    %26 = vector.load %arg13[%c28, %c0_25] : memref<72x4864xbf16, #tpu.memory_space<vmem>>, vector<4x4864xbf16>
    tpu.vector_store %arg13[%c28, %c0_25], %25 {strides = array<i32>} : memref<72x4864xbf16, #tpu.memory_space<vmem>>, vector<4x4864xbf16>,
    %c0_26 = arith.constant 0 : index
    %c0_27 = arith.constant 0 : index
    %c147 = arith.constant 147 : index
    %27 = vector.load %arg1[%c0_26, %c0_27, %c147] : memref<1x4x5120xbf16, #tpu.memory_space<vmem>>, vector<1x4x4864xbf16>
    %28 = vector.shape_cast %27 : vector<1x4x4864xbf16> to vector<4x4864xbf16>
    %c32 = arith.constant 32 : index
    %c0_28 = arith.constant 0 : index
    %29 = vector.load %arg13[%c32, %c0_28] : memref<72x4864xbf16, #tpu.memory_space<vmem>>, vector<4x4864xbf16>
    tpu.vector_store %arg13[%c32, %c0_28], %28 {strides = array<i32>} : memref<72x4864xbf16, #tpu.memory_space<vmem>>, vector<4x4864xbf16>,
    %c0_29 = arith.constant 0 : index
    %c0_30 = arith.constant 0 : index
    %30 = vector.load %arg3[%c0_29, %c0_30] : memref<8x36xbf16, #tpu.memory_space<vmem>>, vector<8x36xbf16>
    %c0_31 = arith.constant 0 : index
    %c0_32 = arith.constant 0 : index
    %31 = vector.load %arg13[%c0_31, %c0_32] : memref<72x4864xbf16, #tpu.memory_space<vmem>>, vector<36x4864xbf16>
    %cst_33 = arith.constant dense<0.000000e+00> : vector<8x4864xf32>
    %32 = tpu.matmul %30, %31, %cst_33 {dimension_numbers = #tpu.dot_dimension_numbers<[1], [0], [0], [1], [0, 0, 1, 1], [], []>} : vector<8x36xbf16>, vector<36x4864xbf16>, vector<8x4864xf32> -> vector<8x4864xf32>
    %c0_34 = arith.constant 0 : index
    %c0_35 = arith.constant 0 : index
    %33 = vector.load %arg4[%c0_34, %c0_35] : memref<8x1xf32, #tpu.memory_space<vmem>>, vector<8x1xf32>
    %34 = vector.broadcast %33 : vector<8x1xf32> to vector<8x4864xf32>
    %35 = arith.addf %32, %34 : vector<8x4864xf32>
    %cst_36 = arith.constant 0.000000e+00 : f32
    %36 = vector.broadcast %cst_36 : f32 to vector<8x4864xf32>
    %37 = arith.maximumf %35, %36 : vector<8x4864xf32>
    %cst_37 = arith.constant 0.000000e+00 : f32
    %38 = vector.shape_cast %2 : vector<1x4864xi1> to vector<1x4864xi1>
    %39 = vector.broadcast %38 : vector<1x4864xi1> to vector<8x4864xi1>
    %40 = vector.broadcast %cst_37 : f32 to vector<8x4864xf32>
    %41 = arith.select %39, %37, %40 : vector<8x4864xi1>, vector<8x4864xf32>
    %42 = arith.truncf %41 : vector<8x4864xf32> to vector<8x4864xbf16>
    %c0_38 = arith.constant 0 : index
    %c128_39 = arith.constant 128 : index
    %43 = vector.load %arg12[%c0_38, %c128_39] : memref<8x5120xbf16, #tpu.memory_space<vmem>>, vector<8x4864xbf16>
    tpu.vector_store %arg12[%c0_38, %c128_39], %42 {strides = array<i32>} : memref<8x5120xbf16, #tpu.memory_space<vmem>>, vector<8x4864xbf16>,
    %c0_40 = arith.constant 0 : index
    %c109_41 = arith.constant 109 : index
    %44 = vector.load %arg12[%c0_40, %c109_41] : memref<8x5120xbf16, #tpu.memory_space<vmem>>, vector<8x4864xbf16>
    %c0_42 = arith.constant 0 : index
    %c0_43 = arith.constant 0 : index
    %45 = vector.load %arg13[%c0_42, %c0_43] : memref<72x4864xbf16, #tpu.memory_space<vmem>>, vector<8x4864xbf16>
    tpu.vector_store %arg13[%c0_42, %c0_43], %44 {strides = array<i32>} : memref<72x4864xbf16, #tpu.memory_space<vmem>>, vector<8x4864xbf16>,
    %c0_44 = arith.constant 0 : index
    %c110_45 = arith.constant 110 : index
    %46 = vector.load %arg12[%c0_44, %c110_45] : memref<8x5120xbf16, #tpu.memory_space<vmem>>, vector<8x4864xbf16>
    %c8_46 = arith.constant 8 : index
    %c0_47 = arith.constant 0 : index
    %47 = vector.load %arg13[%c8_46, %c0_47] : memref<72x4864xbf16, #tpu.memory_space<vmem>>, vector<8x4864xbf16>
    tpu.vector_store %arg13[%c8_46, %c0_47], %46 {strides = array<i32>} : memref<72x4864xbf16, #tpu.memory_space<vmem>>, vector<8x4864xbf16>,
    %c0_48 = arith.constant 0 : index
    %c111_49 = arith.constant 111 : index
    %48 = vector.load %arg12[%c0_48, %c111_49] : memref<8x5120xbf16, #tpu.memory_space<vmem>>, vector<8x4864xbf16>
    %c16_50 = arith.constant 16 : index
    %c0_51 = arith.constant 0 : index
    %49 = vector.load %arg13[%c16_50, %c0_51] : memref<72x4864xbf16, #tpu.memory_space<vmem>>, vector<8x4864xbf16>
    tpu.vector_store %arg13[%c16_50, %c0_51], %48 {strides = array<i32>} : memref<72x4864xbf16, #tpu.memory_space<vmem>>, vector<8x4864xbf16>,
    %c0_52 = arith.constant 0 : index
    %c127_53 = arith.constant 127 : index
    %50 = vector.load %arg12[%c0_52, %c127_53] : memref<8x5120xbf16, #tpu.memory_space<vmem>>, vector<8x4864xbf16>
    %c24_54 = arith.constant 24 : index
    %c0_55 = arith.constant 0 : index
    %51 = vector.load %arg13[%c24_54, %c0_55] : memref<72x4864xbf16, #tpu.memory_space<vmem>>, vector<8x4864xbf16>
    tpu.vector_store %arg13[%c24_54, %c0_55], %50 {strides = array<i32>} : memref<72x4864xbf16, #tpu.memory_space<vmem>>, vector<8x4864xbf16>,
    %c0_56 = arith.constant 0 : index
    %c128_57 = arith.constant 128 : index
    %52 = vector.load %arg12[%c0_56, %c128_57] : memref<8x5120xbf16, #tpu.memory_space<vmem>>, vector<8x4864xbf16>
    %c32_58 = arith.constant 32 : index
    %c0_59 = arith.constant 0 : index
    %53 = vector.load %arg13[%c32_58, %c0_59] : memref<72x4864xbf16, #tpu.memory_space<vmem>>, vector<8x4864xbf16>
    tpu.vector_store %arg13[%c32_58, %c0_59], %52 {strides = array<i32>} : memref<72x4864xbf16, #tpu.memory_space<vmem>>, vector<8x4864xbf16>,
    %c0_60 = arith.constant 0 : index
    %c129_61 = arith.constant 129 : index
    %54 = vector.load %arg12[%c0_60, %c129_61] : memref<8x5120xbf16, #tpu.memory_space<vmem>>, vector<8x4864xbf16>
    %c40 = arith.constant 40 : index
    %c0_62 = arith.constant 0 : index
    %55 = vector.load %arg13[%c40, %c0_62] : memref<72x4864xbf16, #tpu.memory_space<vmem>>, vector<8x4864xbf16>
    tpu.vector_store %arg13[%c40, %c0_62], %54 {strides = array<i32>} : memref<72x4864xbf16, #tpu.memory_space<vmem>>, vector<8x4864xbf16>,
    %c0_63 = arith.constant 0 : index
    %c145_64 = arith.constant 145 : index
    %56 = vector.load %arg12[%c0_63, %c145_64] : memref<8x5120xbf16, #tpu.memory_space<vmem>>, vector<8x4864xbf16>
    %c48 = arith.constant 48 : index
    %c0_65 = arith.constant 0 : index
    %57 = vector.load %arg13[%c48, %c0_65] : memref<72x4864xbf16, #tpu.memory_space<vmem>>, vector<8x4864xbf16>
    tpu.vector_store %arg13[%c48, %c0_65], %56 {strides = array<i32>} : memref<72x4864xbf16, #tpu.memory_space<vmem>>, vector<8x4864xbf16>,
    %c0_66 = arith.constant 0 : index
    %c146_67 = arith.constant 146 : index
    %58 = vector.load %arg12[%c0_66, %c146_67] : memref<8x5120xbf16, #tpu.memory_space<vmem>>, vector<8x4864xbf16>
    %c56 = arith.constant 56 : index
    %c0_68 = arith.constant 0 : index
    %59 = vector.load %arg13[%c56, %c0_68] : memref<72x4864xbf16, #tpu.memory_space<vmem>>, vector<8x4864xbf16>
    tpu.vector_store %arg13[%c56, %c0_68], %58 {strides = array<i32>} : memref<72x4864xbf16, #tpu.memory_space<vmem>>, vector<8x4864xbf16>,
    %c0_69 = arith.constant 0 : index
    %c147_70 = arith.constant 147 : index
    %60 = vector.load %arg12[%c0_69, %c147_70] : memref<8x5120xbf16, #tpu.memory_space<vmem>>, vector<8x4864xbf16>
    %c64 = arith.constant 64 : index
    %c0_71 = arith.constant 0 : index
    %61 = vector.load %arg13[%c64, %c0_71] : memref<72x4864xbf16, #tpu.memory_space<vmem>>, vector<8x4864xbf16>
    tpu.vector_store %arg13[%c64, %c0_71], %60 {strides = array<i32>} : memref<72x4864xbf16, #tpu.memory_space<vmem>>, vector<8x4864xbf16>,
    %c0_72 = arith.constant 0 : index
    %c0_73 = arith.constant 0 : index
    %62 = vector.load %arg5[%c0_72, %c0_73] : memref<8x72xbf16, #tpu.memory_space<vmem>>, vector<8x72xbf16>
    %c0_74 = arith.constant 0 : index
    %c0_75 = arith.constant 0 : index
    %63 = vector.load %arg13[%c0_74, %c0_75] : memref<72x4864xbf16, #tpu.memory_space<vmem>>, vector<72x4864xbf16>
    %cst_76 = arith.constant dense<0.000000e+00> : vector<8x4864xf32>
    %64 = tpu.matmul %62, %63, %cst_76 {dimension_numbers = #tpu.dot_dimension_numbers<[1], [0], [0], [1], [0, 0, 1, 1], [], []>} : vector<8x72xbf16>, vector<72x4864xbf16>, vector<8x4864xf32> -> vector<8x4864xf32>
    %c0_77 = arith.constant 0 : index
    %c0_78 = arith.constant 0 : index
    %65 = vector.load %arg6[%c0_77, %c0_78] : memref<8x1xf32, #tpu.memory_space<vmem>>, vector<8x1xf32>
    %66 = vector.broadcast %65 : vector<8x1xf32> to vector<8x4864xf32>
    %67 = arith.addf %64, %66 : vector<8x4864xf32>
    %cst_79 = arith.constant 0.000000e+00 : f32
    %68 = vector.broadcast %cst_79 : f32 to vector<8x4864xf32>
    %69 = arith.maximumf %67, %68 : vector<8x4864xf32>
    %cst_80 = arith.constant 0.000000e+00 : f32
    %70 = vector.shape_cast %2 : vector<1x4864xi1> to vector<1x4864xi1>
    %71 = vector.broadcast %70 : vector<1x4864xi1> to vector<8x4864xi1>
    %72 = vector.broadcast %cst_80 : f32 to vector<8x4864xf32>
    %73 = arith.select %71, %69, %72 : vector<8x4864xi1>, vector<8x4864xf32>
    %74 = arith.truncf %73 : vector<8x4864xf32> to vector<8x4864xbf16>
    %c0_81 = arith.constant 0 : index
    %c128_82 = arith.constant 128 : index
    %75 = vector.load %arg12[%c0_81, %c128_82] : memref<8x5120xbf16, #tpu.memory_space<vmem>>, vector<8x4864xbf16>
    tpu.vector_store %arg12[%c0_81, %c128_82], %74 {strides = array<i32>} : memref<8x5120xbf16, #tpu.memory_space<vmem>>, vector<8x4864xbf16>,
    %c0_83 = arith.constant 0 : index
    %c128_84 = arith.constant 128 : index
    %76 = vector.load %arg12[%c0_83, %c128_84] : memref<8x5120xbf16, #tpu.memory_space<vmem>>, vector<1x384xbf16>
    %c0_85 = arith.constant 0 : index
    %c0_86 = arith.constant 0 : index
    %77 = vector.load %arg14[%c0_85, %c0_86] : memref<8x3072xbf16, #tpu.memory_space<vmem>>, vector<1x384xbf16>
    tpu.vector_store %arg14[%c0_85, %c0_86], %76 {strides = array<i32>} : memref<8x3072xbf16, #tpu.memory_space<vmem>>, vector<1x384xbf16>,
    %c0_87 = arith.constant 0 : index
    %c768 = arith.constant 768 : index
    %78 = vector.load %arg12[%c0_87, %c768] : memref<8x5120xbf16, #tpu.memory_space<vmem>>, vector<1x384xbf16>
    %c1 = arith.constant 1 : index
    %c0_88 = arith.constant 0 : index
    %79 = vector.load %arg14[%c1, %c0_88] : memref<8x3072xbf16, #tpu.memory_space<vmem>>, vector<1x384xbf16>
    tpu.vector_store %arg14[%c1, %c0_88], %78 {strides = array<i32>} : memref<8x3072xbf16, #tpu.memory_space<vmem>>, vector<1x384xbf16>,
    %c0_89 = arith.constant 0 : index
    %c1408 = arith.constant 1408 : index
    %80 = vector.load %arg12[%c0_89, %c1408] : memref<8x5120xbf16, #tpu.memory_space<vmem>>, vector<1x384xbf16>
    %c2 = arith.constant 2 : index
    %c0_90 = arith.constant 0 : index
    %81 = vector.load %arg14[%c2, %c0_90] : memref<8x3072xbf16, #tpu.memory_space<vmem>>, vector<1x384xbf16>
    tpu.vector_store %arg14[%c2, %c0_90], %80 {strides = array<i32>} : memref<8x3072xbf16, #tpu.memory_space<vmem>>, vector<1x384xbf16>,
    %c0_91 = arith.constant 0 : index
    %c2048 = arith.constant 2048 : index
    %82 = vector.load %arg12[%c0_91, %c2048] : memref<8x5120xbf16, #tpu.memory_space<vmem>>, vector<1x384xbf16>
    %c3 = arith.constant 3 : index
    %c0_92 = arith.constant 0 : index
    %83 = vector.load %arg14[%c3, %c0_92] : memref<8x3072xbf16, #tpu.memory_space<vmem>>, vector<1x384xbf16>
    tpu.vector_store %arg14[%c3, %c0_92], %82 {strides = array<i32>} : memref<8x3072xbf16, #tpu.memory_space<vmem>>, vector<1x384xbf16>,
    %c0_93 = arith.constant 0 : index
    %c2688 = arith.constant 2688 : index
    %84 = vector.load %arg12[%c0_93, %c2688] : memref<8x5120xbf16, #tpu.memory_space<vmem>>, vector<1x384xbf16>
    %c4_94 = arith.constant 4 : index
    %c0_95 = arith.constant 0 : index
    %85 = vector.load %arg14[%c4_94, %c0_95] : memref<8x3072xbf16, #tpu.memory_space<vmem>>, vector<1x384xbf16>
    tpu.vector_store %arg14[%c4_94, %c0_95], %84 {strides = array<i32>} : memref<8x3072xbf16, #tpu.memory_space<vmem>>, vector<1x384xbf16>,
    %c0_96 = arith.constant 0 : index
    %c3328 = arith.constant 3328 : index
    %86 = vector.load %arg12[%c0_96, %c3328] : memref<8x5120xbf16, #tpu.memory_space<vmem>>, vector<1x384xbf16>
    %c5 = arith.constant 5 : index
    %c0_97 = arith.constant 0 : index
    %87 = vector.load %arg14[%c5, %c0_97] : memref<8x3072xbf16, #tpu.memory_space<vmem>>, vector<1x384xbf16>
    tpu.vector_store %arg14[%c5, %c0_97], %86 {strides = array<i32>} : memref<8x3072xbf16, #tpu.memory_space<vmem>>, vector<1x384xbf16>,
    %c0_98 = arith.constant 0 : index
    %c3968 = arith.constant 3968 : index
    %88 = vector.load %arg12[%c0_98, %c3968] : memref<8x5120xbf16, #tpu.memory_space<vmem>>, vector<1x384xbf16>
    %c6 = arith.constant 6 : index
    %c0_99 = arith.constant 0 : index
    %89 = vector.load %arg14[%c6, %c0_99] : memref<8x3072xbf16, #tpu.memory_space<vmem>>, vector<1x384xbf16>
    tpu.vector_store %arg14[%c6, %c0_99], %88 {strides = array<i32>} : memref<8x3072xbf16, #tpu.memory_space<vmem>>, vector<1x384xbf16>,
    %c0_100 = arith.constant 0 : index
    %c4608 = arith.constant 4608 : index
    %90 = vector.load %arg12[%c0_100, %c4608] : memref<8x5120xbf16, #tpu.memory_space<vmem>>, vector<1x384xbf16>
    %c7 = arith.constant 7 : index
    %c0_101 = arith.constant 0 : index
    %91 = vector.load %arg14[%c7, %c0_101] : memref<8x3072xbf16, #tpu.memory_space<vmem>>, vector<1x384xbf16>
    tpu.vector_store %arg14[%c7, %c0_101], %90 {strides = array<i32>} : memref<8x3072xbf16, #tpu.memory_space<vmem>>, vector<1x384xbf16>,
    %c1_102 = arith.constant 1 : index
    %c128_103 = arith.constant 128 : index
    %92 = vector.load %arg12[%c1_102, %c128_103] : memref<8x5120xbf16, #tpu.memory_space<vmem>>, vector<1x384xbf16>
    %c0_104 = arith.constant 0 : index
    %c384 = arith.constant 384 : index
    %93 = vector.load %arg14[%c0_104, %c384] : memref<8x3072xbf16, #tpu.memory_space<vmem>>, vector<1x384xbf16>
    tpu.vector_store %arg14[%c0_104, %c384], %92 {strides = array<i32>} : memref<8x3072xbf16, #tpu.memory_space<vmem>>, vector<1x384xbf16>,
    %c1_105 = arith.constant 1 : index
    %c768_106 = arith.constant 768 : index
    %94 = vector.load %arg12[%c1_105, %c768_106] : memref<8x5120xbf16, #tpu.memory_space<vmem>>, vector<1x384xbf16>
    %c1_107 = arith.constant 1 : index
    %c384_108 = arith.constant 384 : index
    %95 = vector.load %arg14[%c1_107, %c384_108] : memref<8x3072xbf16, #tpu.memory_space<vmem>>, vector<1x384xbf16>
    tpu.vector_store %arg14[%c1_107, %c384_108], %94 {strides = array<i32>} : memref<8x3072xbf16, #tpu.memory_space<vmem>>, vector<1x384xbf16>,
    %c1_109 = arith.constant 1 : index
    %c1408_110 = arith.constant 1408 : index
    %96 = vector.load %arg12[%c1_109, %c1408_110] : memref<8x5120xbf16, #tpu.memory_space<vmem>>, vector<1x384xbf16>
    %c2_111 = arith.constant 2 : index
    %c384_112 = arith.constant 384 : index
    %97 = vector.load %arg14[%c2_111, %c384_112] : memref<8x3072xbf16, #tpu.memory_space<vmem>>, vector<1x384xbf16>
    tpu.vector_store %arg14[%c2_111, %c384_112], %96 {strides = array<i32>} : memref<8x3072xbf16, #tpu.memory_space<vmem>>, vector<1x384xbf16>,
    %c1_113 = arith.constant 1 : index
    %c2048_114 = arith.constant 2048 : index
    %98 = vector.load %arg12[%c1_113, %c2048_114] : memref<8x5120xbf16, #tpu.memory_space<vmem>>, vector<1x384xbf16>
    %c3_115 = arith.constant 3 : index
    %c384_116 = arith.constant 384 : index
    %99 = vector.load %arg14[%c3_115, %c384_116] : memref<8x3072xbf16, #tpu.memory_space<vmem>>, vector<1x384xbf16>
    tpu.vector_store %arg14[%c3_115, %c384_116], %98 {strides = array<i32>} : memref<8x3072xbf16, #tpu.memory_space<vmem>>, vector<1x384xbf16>,
    %c1_117 = arith.constant 1 : index
    %c2688_118 = arith.constant 2688 : index
    %100 = vector.load %arg12[%c1_117, %c2688_118] : memref<8x5120xbf16, #tpu.memory_space<vmem>>, vector<1x384xbf16>
    %c4_119 = arith.constant 4 : index
    %c384_120 = arith.constant 384 : index
    %101 = vector.load %arg14[%c4_119, %c384_120] : memref<8x3072xbf16, #tpu.memory_space<vmem>>, vector<1x384xbf16>
    tpu.vector_store %arg14[%c4_119, %c384_120], %100 {strides = array<i32>} : memref<8x3072xbf16, #tpu.memory_space<vmem>>, vector<1x384xbf16>,
    %c1_121 = arith.constant 1 : index
    %c3328_122 = arith.constant 3328 : index
    %102 = vector.load %arg12[%c1_121, %c3328_122] : memref<8x5120xbf16, #tpu.memory_space<vmem>>, vector<1x384xbf16>
    %c5_123 = arith.constant 5 : index
    %c384_124 = arith.constant 384 : index
    %103 = vector.load %arg14[%c5_123, %c384_124] : memref<8x3072xbf16, #tpu.memory_space<vmem>>, vector<1x384xbf16>
    tpu.vector_store %arg14[%c5_123, %c384_124], %102 {strides = array<i32>} : memref<8x3072xbf16, #tpu.memory_space<vmem>>, vector<1x384xbf16>,
    %c1_125 = arith.constant 1 : index
    %c3968_126 = arith.constant 3968 : index
    %104 = vector.load %arg12[%c1_125, %c3968_126] : memref<8x5120xbf16, #tpu.memory_space<vmem>>, vector<1x384xbf16>
    %c6_127 = arith.constant 6 : index
    %c384_128 = arith.constant 384 : index
    %105 = vector.load %arg14[%c6_127, %c384_128] : memref<8x3072xbf16, #tpu.memory_space<vmem>>, vector<1x384xbf16>
    tpu.vector_store %arg14[%c6_127, %c384_128], %104 {strides = array<i32>} : memref<8x3072xbf16, #tpu.memory_space<vmem>>, vector<1x384xbf16>,
    %c1_129 = arith.constant 1 : index
    %c4608_130 = arith.constant 4608 : index
    %106 = vector.load %arg12[%c1_129, %c4608_130] : memref<8x5120xbf16, #tpu.memory_space<vmem>>, vector<1x384xbf16>
    %c7_131 = arith.constant 7 : index
    %c384_132 = arith.constant 384 : index
    %107 = vector.load %arg14[%c7_131, %c384_132] : memref<8x3072xbf16, #tpu.memory_space<vmem>>, vector<1x384xbf16>
    tpu.vector_store %arg14[%c7_131, %c384_132], %106 {strides = array<i32>} : memref<8x3072xbf16, #tpu.memory_space<vmem>>, vector<1x384xbf16>,
    %c2_133 = arith.constant 2 : index
    %c128_134 = arith.constant 128 : index
    %108 = vector.load %arg12[%c2_133, %c128_134] : memref<8x5120xbf16, #tpu.memory_space<vmem>>, vector<1x384xbf16>
    %c0_135 = arith.constant 0 : index
    %c768_136 = arith.constant 768 : index
    %109 = vector.load %arg14[%c0_135, %c768_136] : memref<8x3072xbf16, #tpu.memory_space<vmem>>, vector<1x384xbf16>
    tpu.vector_store %arg14[%c0_135, %c768_136], %108 {strides = array<i32>} : memref<8x3072xbf16, #tpu.memory_space<vmem>>, vector<1x384xbf16>,
    %c2_137 = arith.constant 2 : index
    %c768_138 = arith.constant 768 : index
    %110 = vector.load %arg12[%c2_137, %c768_138] : memref<8x5120xbf16, #tpu.memory_space<vmem>>, vector<1x384xbf16>
    %c1_139 = arith.constant 1 : index
    %c768_140 = arith.constant 768 : index
    %111 = vector.load %arg14[%c1_139, %c768_140] : memref<8x3072xbf16, #tpu.memory_space<vmem>>, vector<1x384xbf16>
    tpu.vector_store %arg14[%c1_139, %c768_140], %110 {strides = array<i32>} : memref<8x3072xbf16, #tpu.memory_space<vmem>>, vector<1x384xbf16>,
    %c2_141 = arith.constant 2 : index
    %c1408_142 = arith.constant 1408 : index
    %112 = vector.load %arg12[%c2_141, %c1408_142] : memref<8x5120xbf16, #tpu.memory_space<vmem>>, vector<1x384xbf16>
    %c2_143 = arith.constant 2 : index
    %c768_144 = arith.constant 768 : index
    %113 = vector.load %arg14[%c2_143, %c768_144] : memref<8x3072xbf16, #tpu.memory_space<vmem>>, vector<1x384xbf16>
    tpu.vector_store %arg14[%c2_143, %c768_144], %112 {strides = array<i32>} : memref<8x3072xbf16, #tpu.memory_space<vmem>>, vector<1x384xbf16>,
    %c2_145 = arith.constant 2 : index
    %c2048_146 = arith.constant 2048 : index
    %114 = vector.load %arg12[%c2_145, %c2048_146] : memref<8x5120xbf16, #tpu.memory_space<vmem>>, vector<1x384xbf16>
    %c3_147 = arith.constant 3 : index
    %c768_148 = arith.constant 768 : index
    %115 = vector.load %arg14[%c3_147, %c768_148] : memref<8x3072xbf16, #tpu.memory_space<vmem>>, vector<1x384xbf16>
    tpu.vector_store %arg14[%c3_147, %c768_148], %114 {strides = array<i32>} : memref<8x3072xbf16, #tpu.memory_space<vmem>>, vector<1x384xbf16>,
    %c2_149 = arith.constant 2 : index
    %c2688_150 = arith.constant 2688 : index
    %116 = vector.load %arg12[%c2_149, %c2688_150] : memref<8x5120xbf16, #tpu.memory_space<vmem>>, vector<1x384xbf16>
    %c4_151 = arith.constant 4 : index
    %c768_152 = arith.constant 768 : index
    %117 = vector.load %arg14[%c4_151, %c768_152] : memref<8x3072xbf16, #tpu.memory_space<vmem>>, vector<1x384xbf16>
    tpu.vector_store %arg14[%c4_151, %c768_152], %116 {strides = array<i32>} : memref<8x3072xbf16, #tpu.memory_space<vmem>>, vector<1x384xbf16>,
    %c2_153 = arith.constant 2 : index
    %c3328_154 = arith.constant 3328 : index
    %118 = vector.load %arg12[%c2_153, %c3328_154] : memref<8x5120xbf16, #tpu.memory_space<vmem>>, vector<1x384xbf16>
    %c5_155 = arith.constant 5 : index
    %c768_156 = arith.constant 768 : index
    %119 = vector.load %arg14[%c5_155, %c768_156] : memref<8x3072xbf16, #tpu.memory_space<vmem>>, vector<1x384xbf16>
    tpu.vector_store %arg14[%c5_155, %c768_156], %118 {strides = array<i32>} : memref<8x3072xbf16, #tpu.memory_space<vmem>>, vector<1x384xbf16>,
    %c2_157 = arith.constant 2 : index
    %c3968_158 = arith.constant 3968 : index
    %120 = vector.load %arg12[%c2_157, %c3968_158] : memref<8x5120xbf16, #tpu.memory_space<vmem>>, vector<1x384xbf16>
    %c6_159 = arith.constant 6 : index
    %c768_160 = arith.constant 768 : index
    %121 = vector.load %arg14[%c6_159, %c768_160] : memref<8x3072xbf16, #tpu.memory_space<vmem>>, vector<1x384xbf16>
    tpu.vector_store %arg14[%c6_159, %c768_160], %120 {strides = array<i32>} : memref<8x3072xbf16, #tpu.memory_space<vmem>>, vector<1x384xbf16>,
    %c2_161 = arith.constant 2 : index
    %c4608_162 = arith.constant 4608 : index
    %122 = vector.load %arg12[%c2_161, %c4608_162] : memref<8x5120xbf16, #tpu.memory_space<vmem>>, vector<1x384xbf16>
    %c7_163 = arith.constant 7 : index
    %c768_164 = arith.constant 768 : index
    %123 = vector.load %arg14[%c7_163, %c768_164] : memref<8x3072xbf16, #tpu.memory_space<vmem>>, vector<1x384xbf16>
    tpu.vector_store %arg14[%c7_163, %c768_164], %122 {strides = array<i32>} : memref<8x3072xbf16, #tpu.memory_space<vmem>>, vector<1x384xbf16>,
    %c3_165 = arith.constant 3 : index
    %c128_166 = arith.constant 128 : index
    %124 = vector.load %arg12[%c3_165, %c128_166] : memref<8x5120xbf16, #tpu.memory_space<vmem>>, vector<1x384xbf16>
    %c0_167 = arith.constant 0 : index
    %c1152 = arith.constant 1152 : index
    %125 = vector.load %arg14[%c0_167, %c1152] : memref<8x3072xbf16, #tpu.memory_space<vmem>>, vector<1x384xbf16>
    tpu.vector_store %arg14[%c0_167, %c1152], %124 {strides = array<i32>} : memref<8x3072xbf16, #tpu.memory_space<vmem>>, vector<1x384xbf16>,
    %c3_168 = arith.constant 3 : index
    %c768_169 = arith.constant 768 : index
    %126 = vector.load %arg12[%c3_168, %c768_169] : memref<8x5120xbf16, #tpu.memory_space<vmem>>, vector<1x384xbf16>
    %c1_170 = arith.constant 1 : index
    %c1152_171 = arith.constant 1152 : index
    %127 = vector.load %arg14[%c1_170, %c1152_171] : memref<8x3072xbf16, #tpu.memory_space<vmem>>, vector<1x384xbf16>
    tpu.vector_store %arg14[%c1_170, %c1152_171], %126 {strides = array<i32>} : memref<8x3072xbf16, #tpu.memory_space<vmem>>, vector<1x384xbf16>,
    %c3_172 = arith.constant 3 : index
    %c1408_173 = arith.constant 1408 : index
    %128 = vector.load %arg12[%c3_172, %c1408_173] : memref<8x5120xbf16, #tpu.memory_space<vmem>>, vector<1x384xbf16>
    %c2_174 = arith.constant 2 : index
    %c1152_175 = arith.constant 1152 : index
    %129 = vector.load %arg14[%c2_174, %c1152_175] : memref<8x3072xbf16, #tpu.memory_space<vmem>>, vector<1x384xbf16>
    tpu.vector_store %arg14[%c2_174, %c1152_175], %128 {strides = array<i32>} : memref<8x3072xbf16, #tpu.memory_space<vmem>>, vector<1x384xbf16>,
    %c3_176 = arith.constant 3 : index
    %c2048_177 = arith.constant 2048 : index
    %130 = vector.load %arg12[%c3_176, %c2048_177] : memref<8x5120xbf16, #tpu.memory_space<vmem>>, vector<1x384xbf16>
    %c3_178 = arith.constant 3 : index
    %c1152_179 = arith.constant 1152 : index
    %131 = vector.load %arg14[%c3_178, %c1152_179] : memref<8x3072xbf16, #tpu.memory_space<vmem>>, vector<1x384xbf16>
    tpu.vector_store %arg14[%c3_178, %c1152_179], %130 {strides = array<i32>} : memref<8x3072xbf16, #tpu.memory_space<vmem>>, vector<1x384xbf16>,
    %c3_180 = arith.constant 3 : index
    %c2688_181 = arith.constant 2688 : index
    %132 = vector.load %arg12[%c3_180, %c2688_181] : memref<8x5120xbf16, #tpu.memory_space<vmem>>, vector<1x384xbf16>
    %c4_182 = arith.constant 4 : index
    %c1152_183 = arith.constant 1152 : index
    %133 = vector.load %arg14[%c4_182, %c1152_183] : memref<8x3072xbf16, #tpu.memory_space<vmem>>, vector<1x384xbf16>
    tpu.vector_store %arg14[%c4_182, %c1152_183], %132 {strides = array<i32>} : memref<8x3072xbf16, #tpu.memory_space<vmem>>, vector<1x384xbf16>,
    %c3_184 = arith.constant 3 : index
    %c3328_185 = arith.constant 3328 : index
    %134 = vector.load %arg12[%c3_184, %c3328_185] : memref<8x5120xbf16, #tpu.memory_space<vmem>>, vector<1x384xbf16>
    %c5_186 = arith.constant 5 : index
    %c1152_187 = arith.constant 1152 : index
    %135 = vector.load %arg14[%c5_186, %c1152_187] : memref<8x3072xbf16, #tpu.memory_space<vmem>>, vector<1x384xbf16>
    tpu.vector_store %arg14[%c5_186, %c1152_187], %134 {strides = array<i32>} : memref<8x3072xbf16, #tpu.memory_space<vmem>>, vector<1x384xbf16>,
    %c3_188 = arith.constant 3 : index
    %c3968_189 = arith.constant 3968 : index
    %136 = vector.load %arg12[%c3_188, %c3968_189] : memref<8x5120xbf16, #tpu.memory_space<vmem>>, vector<1x384xbf16>
    %c6_190 = arith.constant 6 : index
    %c1152_191 = arith.constant 1152 : index
    %137 = vector.load %arg14[%c6_190, %c1152_191] : memref<8x3072xbf16, #tpu.memory_space<vmem>>, vector<1x384xbf16>
    tpu.vector_store %arg14[%c6_190, %c1152_191], %136 {strides = array<i32>} : memref<8x3072xbf16, #tpu.memory_space<vmem>>, vector<1x384xbf16>,
    %c3_192 = arith.constant 3 : index
    %c4608_193 = arith.constant 4608 : index
    %138 = vector.load %arg12[%c3_192, %c4608_193] : memref<8x5120xbf16, #tpu.memory_space<vmem>>, vector<1x384xbf16>
    %c7_194 = arith.constant 7 : index
    %c1152_195 = arith.constant 1152 : index
    %139 = vector.load %arg14[%c7_194, %c1152_195] : memref<8x3072xbf16, #tpu.memory_space<vmem>>, vector<1x384xbf16>
    tpu.vector_store %arg14[%c7_194, %c1152_195], %138 {strides = array<i32>} : memref<8x3072xbf16, #tpu.memory_space<vmem>>, vector<1x384xbf16>,
    %c4_196 = arith.constant 4 : index
    %c128_197 = arith.constant 128 : index
    %140 = vector.load %arg12[%c4_196, %c128_197] : memref<8x5120xbf16, #tpu.memory_space<vmem>>, vector<1x384xbf16>
    %c0_198 = arith.constant 0 : index
    %c1536 = arith.constant 1536 : index
    %141 = vector.load %arg14[%c0_198, %c1536] : memref<8x3072xbf16, #tpu.memory_space<vmem>>, vector<1x384xbf16>
    tpu.vector_store %arg14[%c0_198, %c1536], %140 {strides = array<i32>} : memref<8x3072xbf16, #tpu.memory_space<vmem>>, vector<1x384xbf16>,
    %c4_199 = arith.constant 4 : index
    %c768_200 = arith.constant 768 : index
    %142 = vector.load %arg12[%c4_199, %c768_200] : memref<8x5120xbf16, #tpu.memory_space<vmem>>, vector<1x384xbf16>
    %c1_201 = arith.constant 1 : index
    %c1536_202 = arith.constant 1536 : index
    %143 = vector.load %arg14[%c1_201, %c1536_202] : memref<8x3072xbf16, #tpu.memory_space<vmem>>, vector<1x384xbf16>
    tpu.vector_store %arg14[%c1_201, %c1536_202], %142 {strides = array<i32>} : memref<8x3072xbf16, #tpu.memory_space<vmem>>, vector<1x384xbf16>,
    %c4_203 = arith.constant 4 : index
    %c1408_204 = arith.constant 1408 : index
    %144 = vector.load %arg12[%c4_203, %c1408_204] : memref<8x5120xbf16, #tpu.memory_space<vmem>>, vector<1x384xbf16>
    %c2_205 = arith.constant 2 : index
    %c1536_206 = arith.constant 1536 : index
    %145 = vector.load %arg14[%c2_205, %c1536_206] : memref<8x3072xbf16, #tpu.memory_space<vmem>>, vector<1x384xbf16>
    tpu.vector_store %arg14[%c2_205, %c1536_206], %144 {strides = array<i32>} : memref<8x3072xbf16, #tpu.memory_space<vmem>>, vector<1x384xbf16>,
    %c4_207 = arith.constant 4 : index
    %c2048_208 = arith.constant 2048 : index
    %146 = vector.load %arg12[%c4_207, %c2048_208] : memref<8x5120xbf16, #tpu.memory_space<vmem>>, vector<1x384xbf16>
    %c3_209 = arith.constant 3 : index
    %c1536_210 = arith.constant 1536 : index
    %147 = vector.load %arg14[%c3_209, %c1536_210] : memref<8x3072xbf16, #tpu.memory_space<vmem>>, vector<1x384xbf16>
    tpu.vector_store %arg14[%c3_209, %c1536_210], %146 {strides = array<i32>} : memref<8x3072xbf16, #tpu.memory_space<vmem>>, vector<1x384xbf16>,
    %c4_211 = arith.constant 4 : index
    %c2688_212 = arith.constant 2688 : index
    %148 = vector.load %arg12[%c4_211, %c2688_212] : memref<8x5120xbf16, #tpu.memory_space<vmem>>, vector<1x384xbf16>
    %c4_213 = arith.constant 4 : index
    %c1536_214 = arith.constant 1536 : index
    %149 = vector.load %arg14[%c4_213, %c1536_214] : memref<8x3072xbf16, #tpu.memory_space<vmem>>, vector<1x384xbf16>
    tpu.vector_store %arg14[%c4_213, %c1536_214], %148 {strides = array<i32>} : memref<8x3072xbf16, #tpu.memory_space<vmem>>, vector<1x384xbf16>,
    %c4_215 = arith.constant 4 : index
    %c3328_216 = arith.constant 3328 : index
    %150 = vector.load %arg12[%c4_215, %c3328_216] : memref<8x5120xbf16, #tpu.memory_space<vmem>>, vector<1x384xbf16>
    %c5_217 = arith.constant 5 : index
    %c1536_218 = arith.constant 1536 : index
    %151 = vector.load %arg14[%c5_217, %c1536_218] : memref<8x3072xbf16, #tpu.memory_space<vmem>>, vector<1x384xbf16>
    tpu.vector_store %arg14[%c5_217, %c1536_218], %150 {strides = array<i32>} : memref<8x3072xbf16, #tpu.memory_space<vmem>>, vector<1x384xbf16>,
    %c4_219 = arith.constant 4 : index
    %c3968_220 = arith.constant 3968 : index
    %152 = vector.load %arg12[%c4_219, %c3968_220] : memref<8x5120xbf16, #tpu.memory_space<vmem>>, vector<1x384xbf16>
    %c6_221 = arith.constant 6 : index
    %c1536_222 = arith.constant 1536 : index
    %153 = vector.load %arg14[%c6_221, %c1536_222] : memref<8x3072xbf16, #tpu.memory_space<vmem>>, vector<1x384xbf16>
    tpu.vector_store %arg14[%c6_221, %c1536_222], %152 {strides = array<i32>} : memref<8x3072xbf16, #tpu.memory_space<vmem>>, vector<1x384xbf16>,
    %c4_223 = arith.constant 4 : index
    %c4608_224 = arith.constant 4608 : index
    %154 = vector.load %arg12[%c4_223, %c4608_224] : memref<8x5120xbf16, #tpu.memory_space<vmem>>, vector<1x384xbf16>
    %c7_225 = arith.constant 7 : index
    %c1536_226 = arith.constant 1536 : index
    %155 = vector.load %arg14[%c7_225, %c1536_226] : memref<8x3072xbf16, #tpu.memory_space<vmem>>, vector<1x384xbf16>
    tpu.vector_store %arg14[%c7_225, %c1536_226], %154 {strides = array<i32>} : memref<8x3072xbf16, #tpu.memory_space<vmem>>, vector<1x384xbf16>,
    %c5_227 = arith.constant 5 : index
    %c128_228 = arith.constant 128 : index
    %156 = vector.load %arg12[%c5_227, %c128_228] : memref<8x5120xbf16, #tpu.memory_space<vmem>>, vector<1x384xbf16>
    %c0_229 = arith.constant 0 : index
    %c1920 = arith.constant 1920 : index
    %157 = vector.load %arg14[%c0_229, %c1920] : memref<8x3072xbf16, #tpu.memory_space<vmem>>, vector<1x384xbf16>
    tpu.vector_store %arg14[%c0_229, %c1920], %156 {strides = array<i32>} : memref<8x3072xbf16, #tpu.memory_space<vmem>>, vector<1x384xbf16>,
    %c5_230 = arith.constant 5 : index
    %c768_231 = arith.constant 768 : index
    %158 = vector.load %arg12[%c5_230, %c768_231] : memref<8x5120xbf16, #tpu.memory_space<vmem>>, vector<1x384xbf16>
    %c1_232 = arith.constant 1 : index
    %c1920_233 = arith.constant 1920 : index
    %159 = vector.load %arg14[%c1_232, %c1920_233] : memref<8x3072xbf16, #tpu.memory_space<vmem>>, vector<1x384xbf16>
    tpu.vector_store %arg14[%c1_232, %c1920_233], %158 {strides = array<i32>} : memref<8x3072xbf16, #tpu.memory_space<vmem>>, vector<1x384xbf16>,
    %c5_234 = arith.constant 5 : index
    %c1408_235 = arith.constant 1408 : index
    %160 = vector.load %arg12[%c5_234, %c1408_235] : memref<8x5120xbf16, #tpu.memory_space<vmem>>, vector<1x384xbf16>
    %c2_236 = arith.constant 2 : index
    %c1920_237 = arith.constant 1920 : index
    %161 = vector.load %arg14[%c2_236, %c1920_237] : memref<8x3072xbf16, #tpu.memory_space<vmem>>, vector<1x384xbf16>
    tpu.vector_store %arg14[%c2_236, %c1920_237], %160 {strides = array<i32>} : memref<8x3072xbf16, #tpu.memory_space<vmem>>, vector<1x384xbf16>,
    %c5_238 = arith.constant 5 : index
    %c2048_239 = arith.constant 2048 : index
    %162 = vector.load %arg12[%c5_238, %c2048_239] : memref<8x5120xbf16, #tpu.memory_space<vmem>>, vector<1x384xbf16>
    %c3_240 = arith.constant 3 : index
    %c1920_241 = arith.constant 1920 : index
    %163 = vector.load %arg14[%c3_240, %c1920_241] : memref<8x3072xbf16, #tpu.memory_space<vmem>>, vector<1x384xbf16>
    tpu.vector_store %arg14[%c3_240, %c1920_241], %162 {strides = array<i32>} : memref<8x3072xbf16, #tpu.memory_space<vmem>>, vector<1x384xbf16>,
    %c5_242 = arith.constant 5 : index
    %c2688_243 = arith.constant 2688 : index
    %164 = vector.load %arg12[%c5_242, %c2688_243] : memref<8x5120xbf16, #tpu.memory_space<vmem>>, vector<1x384xbf16>
    %c4_244 = arith.constant 4 : index
    %c1920_245 = arith.constant 1920 : index
    %165 = vector.load %arg14[%c4_244, %c1920_245] : memref<8x3072xbf16, #tpu.memory_space<vmem>>, vector<1x384xbf16>
    tpu.vector_store %arg14[%c4_244, %c1920_245], %164 {strides = array<i32>} : memref<8x3072xbf16, #tpu.memory_space<vmem>>, vector<1x384xbf16>,
    %c5_246 = arith.constant 5 : index
    %c3328_247 = arith.constant 3328 : index
    %166 = vector.load %arg12[%c5_246, %c3328_247] : memref<8x5120xbf16, #tpu.memory_space<vmem>>, vector<1x384xbf16>
    %c5_248 = arith.constant 5 : index
    %c1920_249 = arith.constant 1920 : index
    %167 = vector.load %arg14[%c5_248, %c1920_249] : memref<8x3072xbf16, #tpu.memory_space<vmem>>, vector<1x384xbf16>
    tpu.vector_store %arg14[%c5_248, %c1920_249], %166 {strides = array<i32>} : memref<8x3072xbf16, #tpu.memory_space<vmem>>, vector<1x384xbf16>,
    %c5_250 = arith.constant 5 : index
    %c3968_251 = arith.constant 3968 : index
    %168 = vector.load %arg12[%c5_250, %c3968_251] : memref<8x5120xbf16, #tpu.memory_space<vmem>>, vector<1x384xbf16>
    %c6_252 = arith.constant 6 : index
    %c1920_253 = arith.constant 1920 : index
    %169 = vector.load %arg14[%c6_252, %c1920_253] : memref<8x3072xbf16, #tpu.memory_space<vmem>>, vector<1x384xbf16>
    tpu.vector_store %arg14[%c6_252, %c1920_253], %168 {strides = array<i32>} : memref<8x3072xbf16, #tpu.memory_space<vmem>>, vector<1x384xbf16>,
    %c5_254 = arith.constant 5 : index
    %c4608_255 = arith.constant 4608 : index
    %170 = vector.load %arg12[%c5_254, %c4608_255] : memref<8x5120xbf16, #tpu.memory_space<vmem>>, vector<1x384xbf16>
    %c7_256 = arith.constant 7 : index
    %c1920_257 = arith.constant 1920 : index
    %171 = vector.load %arg14[%c7_256, %c1920_257] : memref<8x3072xbf16, #tpu.memory_space<vmem>>, vector<1x384xbf16>
    tpu.vector_store %arg14[%c7_256, %c1920_257], %170 {strides = array<i32>} : memref<8x3072xbf16, #tpu.memory_space<vmem>>, vector<1x384xbf16>,
    %c6_258 = arith.constant 6 : index
    %c128_259 = arith.constant 128 : index
    %172 = vector.load %arg12[%c6_258, %c128_259] : memref<8x5120xbf16, #tpu.memory_space<vmem>>, vector<1x384xbf16>
    %c0_260 = arith.constant 0 : index
    %c2304 = arith.constant 2304 : index
    %173 = vector.load %arg14[%c0_260, %c2304] : memref<8x3072xbf16, #tpu.memory_space<vmem>>, vector<1x384xbf16>
    tpu.vector_store %arg14[%c0_260, %c2304], %172 {strides = array<i32>} : memref<8x3072xbf16, #tpu.memory_space<vmem>>, vector<1x384xbf16>,
    %c6_261 = arith.constant 6 : index
    %c768_262 = arith.constant 768 : index
    %174 = vector.load %arg12[%c6_261, %c768_262] : memref<8x5120xbf16, #tpu.memory_space<vmem>>, vector<1x384xbf16>
    %c1_263 = arith.constant 1 : index
    %c2304_264 = arith.constant 2304 : index
    %175 = vector.load %arg14[%c1_263, %c2304_264] : memref<8x3072xbf16, #tpu.memory_space<vmem>>, vector<1x384xbf16>
    tpu.vector_store %arg14[%c1_263, %c2304_264], %174 {strides = array<i32>} : memref<8x3072xbf16, #tpu.memory_space<vmem>>, vector<1x384xbf16>,
    %c6_265 = arith.constant 6 : index
    %c1408_266 = arith.constant 1408 : index
    %176 = vector.load %arg12[%c6_265, %c1408_266] : memref<8x5120xbf16, #tpu.memory_space<vmem>>, vector<1x384xbf16>
    %c2_267 = arith.constant 2 : index
    %c2304_268 = arith.constant 2304 : index
    %177 = vector.load %arg14[%c2_267, %c2304_268] : memref<8x3072xbf16, #tpu.memory_space<vmem>>, vector<1x384xbf16>
    tpu.vector_store %arg14[%c2_267, %c2304_268], %176 {strides = array<i32>} : memref<8x3072xbf16, #tpu.memory_space<vmem>>, vector<1x384xbf16>,
    %c6_269 = arith.constant 6 : index
    %c2048_270 = arith.constant 2048 : index
    %178 = vector.load %arg12[%c6_269, %c2048_270] : memref<8x5120xbf16, #tpu.memory_space<vmem>>, vector<1x384xbf16>
    %c3_271 = arith.constant 3 : index
    %c2304_272 = arith.constant 2304 : index
    %179 = vector.load %arg14[%c3_271, %c2304_272] : memref<8x3072xbf16, #tpu.memory_space<vmem>>, vector<1x384xbf16>
    tpu.vector_store %arg14[%c3_271, %c2304_272], %178 {strides = array<i32>} : memref<8x3072xbf16, #tpu.memory_space<vmem>>, vector<1x384xbf16>,
    %c6_273 = arith.constant 6 : index
    %c2688_274 = arith.constant 2688 : index
    %180 = vector.load %arg12[%c6_273, %c2688_274] : memref<8x5120xbf16, #tpu.memory_space<vmem>>, vector<1x384xbf16>
    %c4_275 = arith.constant 4 : index
    %c2304_276 = arith.constant 2304 : index
    %181 = vector.load %arg14[%c4_275, %c2304_276] : memref<8x3072xbf16, #tpu.memory_space<vmem>>, vector<1x384xbf16>
    tpu.vector_store %arg14[%c4_275, %c2304_276], %180 {strides = array<i32>} : memref<8x3072xbf16, #tpu.memory_space<vmem>>, vector<1x384xbf16>,
    %c6_277 = arith.constant 6 : index
    %c3328_278 = arith.constant 3328 : index
    %182 = vector.load %arg12[%c6_277, %c3328_278] : memref<8x5120xbf16, #tpu.memory_space<vmem>>, vector<1x384xbf16>
    %c5_279 = arith.constant 5 : index
    %c2304_280 = arith.constant 2304 : index
    %183 = vector.load %arg14[%c5_279, %c2304_280] : memref<8x3072xbf16, #tpu.memory_space<vmem>>, vector<1x384xbf16>
    tpu.vector_store %arg14[%c5_279, %c2304_280], %182 {strides = array<i32>} : memref<8x3072xbf16, #tpu.memory_space<vmem>>, vector<1x384xbf16>,
    %c6_281 = arith.constant 6 : index
    %c3968_282 = arith.constant 3968 : index
    %184 = vector.load %arg12[%c6_281, %c3968_282] : memref<8x5120xbf16, #tpu.memory_space<vmem>>, vector<1x384xbf16>
    %c6_283 = arith.constant 6 : index
    %c2304_284 = arith.constant 2304 : index
    %185 = vector.load %arg14[%c6_283, %c2304_284] : memref<8x3072xbf16, #tpu.memory_space<vmem>>, vector<1x384xbf16>
    tpu.vector_store %arg14[%c6_283, %c2304_284], %184 {strides = array<i32>} : memref<8x3072xbf16, #tpu.memory_space<vmem>>, vector<1x384xbf16>,
    %c6_285 = arith.constant 6 : index
    %c4608_286 = arith.constant 4608 : index
    %186 = vector.load %arg12[%c6_285, %c4608_286] : memref<8x5120xbf16, #tpu.memory_space<vmem>>, vector<1x384xbf16>
    %c7_287 = arith.constant 7 : index
    %c2304_288 = arith.constant 2304 : index
    %187 = vector.load %arg14[%c7_287, %c2304_288] : memref<8x3072xbf16, #tpu.memory_space<vmem>>, vector<1x384xbf16>
    tpu.vector_store %arg14[%c7_287, %c2304_288], %186 {strides = array<i32>} : memref<8x3072xbf16, #tpu.memory_space<vmem>>, vector<1x384xbf16>,
    %c7_289 = arith.constant 7 : index
    %c128_290 = arith.constant 128 : index
    %188 = vector.load %arg12[%c7_289, %c128_290] : memref<8x5120xbf16, #tpu.memory_space<vmem>>, vector<1x384xbf16>
    %c0_291 = arith.constant 0 : index
    %c2688_292 = arith.constant 2688 : index
    %189 = vector.load %arg14[%c0_291, %c2688_292] : memref<8x3072xbf16, #tpu.memory_space<vmem>>, vector<1x384xbf16>
    tpu.vector_store %arg14[%c0_291, %c2688_292], %188 {strides = array<i32>} : memref<8x3072xbf16, #tpu.memory_space<vmem>>, vector<1x384xbf16>,
    %c7_293 = arith.constant 7 : index
    %c768_294 = arith.constant 768 : index
    %190 = vector.load %arg12[%c7_293, %c768_294] : memref<8x5120xbf16, #tpu.memory_space<vmem>>, vector<1x384xbf16>
    %c1_295 = arith.constant 1 : index
    %c2688_296 = arith.constant 2688 : index
    %191 = vector.load %arg14[%c1_295, %c2688_296] : memref<8x3072xbf16, #tpu.memory_space<vmem>>, vector<1x384xbf16>
    tpu.vector_store %arg14[%c1_295, %c2688_296], %190 {strides = array<i32>} : memref<8x3072xbf16, #tpu.memory_space<vmem>>, vector<1x384xbf16>,
    %c7_297 = arith.constant 7 : index
    %c1408_298 = arith.constant 1408 : index
    %192 = vector.load %arg12[%c7_297, %c1408_298] : memref<8x5120xbf16, #tpu.memory_space<vmem>>, vector<1x384xbf16>
    %c2_299 = arith.constant 2 : index
    %c2688_300 = arith.constant 2688 : index
    %193 = vector.load %arg14[%c2_299, %c2688_300] : memref<8x3072xbf16, #tpu.memory_space<vmem>>, vector<1x384xbf16>
    tpu.vector_store %arg14[%c2_299, %c2688_300], %192 {strides = array<i32>} : memref<8x3072xbf16, #tpu.memory_space<vmem>>, vector<1x384xbf16>,
    %c7_301 = arith.constant 7 : index
    %c2048_302 = arith.constant 2048 : index
    %194 = vector.load %arg12[%c7_301, %c2048_302] : memref<8x5120xbf16, #tpu.memory_space<vmem>>, vector<1x384xbf16>
    %c3_303 = arith.constant 3 : index
    %c2688_304 = arith.constant 2688 : index
    %195 = vector.load %arg14[%c3_303, %c2688_304] : memref<8x3072xbf16, #tpu.memory_space<vmem>>, vector<1x384xbf16>
    tpu.vector_store %arg14[%c3_303, %c2688_304], %194 {strides = array<i32>} : memref<8x3072xbf16, #tpu.memory_space<vmem>>, vector<1x384xbf16>,
    %c7_305 = arith.constant 7 : index
    %c2688_306 = arith.constant 2688 : index
    %196 = vector.load %arg12[%c7_305, %c2688_306] : memref<8x5120xbf16, #tpu.memory_space<vmem>>, vector<1x384xbf16>
    %c4_307 = arith.constant 4 : index
    %c2688_308 = arith.constant 2688 : index
    %197 = vector.load %arg14[%c4_307, %c2688_308] : memref<8x3072xbf16, #tpu.memory_space<vmem>>, vector<1x384xbf16>
    tpu.vector_store %arg14[%c4_307, %c2688_308], %196 {strides = array<i32>} : memref<8x3072xbf16, #tpu.memory_space<vmem>>, vector<1x384xbf16>,
    %c7_309 = arith.constant 7 : index
    %c3328_310 = arith.constant 3328 : index
    %198 = vector.load %arg12[%c7_309, %c3328_310] : memref<8x5120xbf16, #tpu.memory_space<vmem>>, vector<1x384xbf16>
    %c5_311 = arith.constant 5 : index
    %c2688_312 = arith.constant 2688 : index
    %199 = vector.load %arg14[%c5_311, %c2688_312] : memref<8x3072xbf16, #tpu.memory_space<vmem>>, vector<1x384xbf16>
    tpu.vector_store %arg14[%c5_311, %c2688_312], %198 {strides = array<i32>} : memref<8x3072xbf16, #tpu.memory_space<vmem>>, vector<1x384xbf16>,
    %c7_313 = arith.constant 7 : index
    %c3968_314 = arith.constant 3968 : index
    %200 = vector.load %arg12[%c7_313, %c3968_314] : memref<8x5120xbf16, #tpu.memory_space<vmem>>, vector<1x384xbf16>
    %c6_315 = arith.constant 6 : index
    %c2688_316 = arith.constant 2688 : index
    %201 = vector.load %arg14[%c6_315, %c2688_316] : memref<8x3072xbf16, #tpu.memory_space<vmem>>, vector<1x384xbf16>
    tpu.vector_store %arg14[%c6_315, %c2688_316], %200 {strides = array<i32>} : memref<8x3072xbf16, #tpu.memory_space<vmem>>, vector<1x384xbf16>,
    %c7_317 = arith.constant 7 : index
    %c4608_318 = arith.constant 4608 : index
    %202 = vector.load %arg12[%c7_317, %c4608_318] : memref<8x5120xbf16, #tpu.memory_space<vmem>>, vector<1x384xbf16>
    %c7_319 = arith.constant 7 : index
    %c2688_320 = arith.constant 2688 : index
    %203 = vector.load %arg14[%c7_319, %c2688_320] : memref<8x3072xbf16, #tpu.memory_space<vmem>>, vector<1x384xbf16>
    tpu.vector_store %arg14[%c7_319, %c2688_320], %202 {strides = array<i32>} : memref<8x3072xbf16, #tpu.memory_space<vmem>>, vector<1x384xbf16>,
    %c0_321 = arith.constant 0 : index
    %c0_322 = arith.constant 0 : index
    %204 = vector.load %arg14[%c0_321, %c0_322] : memref<8x3072xbf16, #tpu.memory_space<vmem>>, vector<8x3072xbf16>
    %c0_323 = arith.constant 0 : index
    %c0_324 = arith.constant 0 : index
    %205 = vector.load %arg7[%c0_323, %c0_324] : memref<3072x32xbf16, #tpu.memory_space<vmem>>, vector<3072x32xbf16>
    %cst_325 = arith.constant dense<0.000000e+00> : vector<8x32xf32>
    %206 = tpu.matmul %204, %205, %cst_325 {dimension_numbers = #tpu.dot_dimension_numbers<[1], [0], [0], [1], [0, 0, 1, 1], [], []>} : vector<8x3072xbf16>, vector<3072x32xbf16>, vector<8x32xf32> -> vector<8x32xf32>
    %c0_326 = arith.constant 0 : index
    %c0_327 = arith.constant 0 : index
    %207 = vector.load %arg8[%c0_326, %c0_327] : memref<1x32xf32, #tpu.memory_space<vmem>>, vector<1x32xf32>
    %208 = vector.broadcast %207 : vector<1x32xf32> to vector<8x32xf32>
    %209 = arith.addf %206, %208 : vector<8x32xf32>
    %cst_328 = arith.constant 0.000000e+00 : f32
    %210 = vector.broadcast %cst_328 : f32 to vector<8x32xf32>
    %211 = arith.maximumf %209, %210 : vector<8x32xf32>
    %212 = arith.truncf %211 : vector<8x32xf32> to vector<8x32xbf16>
    %c0_329 = arith.constant 0 : index
    %c0_330 = arith.constant 0 : index
    %213 = vector.load %arg9[%c0_329, %c0_330] : memref<32x6xbf16, #tpu.memory_space<vmem>>, vector<32x6xbf16>
    %cst_331 = arith.constant dense<0.000000e+00> : vector<8x6xf32>
    %214 = tpu.matmul %212, %213, %cst_331 {dimension_numbers = #tpu.dot_dimension_numbers<[1], [0], [0], [1], [0, 0, 1, 1], [], []>} : vector<8x32xbf16>, vector<32x6xbf16>, vector<8x6xf32> -> vector<8x6xf32>
    %c0_332 = arith.constant 0 : index
    %c0_333 = arith.constant 0 : index
    %215 = vector.load %arg10[%c0_332, %c0_333] : memref<1x6xf32, #tpu.memory_space<vmem>>, vector<1x6xf32>
    %216 = vector.broadcast %215 : vector<1x6xf32> to vector<8x6xf32>
    %217 = arith.addf %214, %216 : vector<8x6xf32>
    %c0_334 = arith.constant 0 : index
    %c0_335 = arith.constant 0 : index
    %218 = vector.load %arg11[%c0_334, %c0_335] : memref<8x6xf32, #tpu.memory_space<vmem>>, vector<8x6xf32>
    tpu.vector_store %arg11[%c0_334, %c0_335], %217 {strides = array<i32>} : memref<8x6xf32, #tpu.memory_space<vmem>>, vector<8x6xf32>,
    return
  }
  func.func @transform_0(%arg0: i32) -> (i32, i32, i32) {
    %c0_i32 = arith.constant 0 : i32
    %c0_i32_0 = arith.constant 0 : i32
    %c0_i32_1 = arith.constant 0 : i32
    return %arg0, %c0_i32, %c0_i32_0 : i32, i32, i32
  }
  func.func @transform_1(%arg0: i32) -> (i32, i32) {
    %c0_i32 = arith.constant 0 : i32
    %c0_i32_0 = arith.constant 0 : i32
    %c0_i32_1 = arith.constant 0 : i32
    return %c0_i32, %c0_i32_0 : i32, i32
  }
  func.func @transform_2(%arg0: i32) -> (i32, i32) {
    %c0_i32 = arith.constant 0 : i32
    %c0_i32_0 = arith.constant 0 : i32
    %c0_i32_1 = arith.constant 0 : i32
    return %c0_i32, %c0_i32_0 : i32, i32
  }
  func.func @transform_3(%arg0: i32) -> (i32, i32) {
    %c0_i32 = arith.constant 0 : i32
    %c0_i32_0 = arith.constant 0 : i32
    %c0_i32_1 = arith.constant 0 : i32
    return %c0_i32, %c0_i32_0 : i32, i32
  }
  func.func @transform_4(%arg0: i32) -> (i32, i32) {
    %c0_i32 = arith.constant 0 : i32
    %c0_i32_0 = arith.constant 0 : i32
    %c0_i32_1 = arith.constant 0 : i32
    return %c0_i32, %c0_i32_0 : i32, i32
  }
  func.func @transform_5(%arg0: i32) -> (i32, i32) {
    %c0_i32 = arith.constant 0 : i32
    %c0_i32_0 = arith.constant 0 : i32
    %c0_i32_1 = arith.constant 0 : i32
    return %c0_i32, %c0_i32_0 : i32, i32
  }
  func.func @transform_6(%arg0: i32) -> (i32, i32) {
    %c0_i32 = arith.constant 0 : i32
    %c0_i32_0 = arith.constant 0 : i32
    %c0_i32_1 = arith.constant 0 : i32
    return %c0_i32, %c0_i32_0 : i32, i32
  }
  func.func @transform_7(%arg0: i32) -> (i32, i32) {
    %c0_i32 = arith.constant 0 : i32
    %c0_i32_0 = arith.constant 0 : i32
    %c0_i32_1 = arith.constant 0 : i32
    return %c0_i32, %c0_i32_0 : i32, i32
  }
  func.func @transform_8(%arg0: i32) -> (i32, i32) {
    %c0_i32 = arith.constant 0 : i32
    %c0_i32_0 = arith.constant 0 : i32
    %c0_i32_1 = arith.constant 0 : i32
    return %c0_i32, %c0_i32_0 : i32, i32
  }
  func.func @transform_9(%arg0: i32) -> (i32, i32) {
    %c0_i32 = arith.constant 0 : i32
    %c0_i32_0 = arith.constant 0 : i32
    %c0_i32_1 = arith.constant 0 : i32
    return %c0_i32, %c0_i32_0 : i32, i32
  }
  func.func @transform_10(%arg0: i32) -> (i32, i32) {
    %c0_i32 = arith.constant 0 : i32
    %c0_i32_0 = arith.constant 0 : i32
    return %arg0, %c0_i32 : i32, i32
  }
}

</mosaic_0001>

<llo_original>
// kernel: forward_impl.1
$region0: #{forward_impl.1}
  #allocation0 [shape = 'u32[]', space=smem, size = 0x4, offset = 0x4, fixed_abs, tag = 'smem constant byte address 0x4 - core index']
  #allocation1 [shape = 'u32[72,128]{1,0:T(1,128)}', space=vmem, size = 0x9000, scoped, tag = 'internal scratch']
  #allocation2 [shape = 'bf16[8,5120]{1,0:T(8,128)(2,1)}', space=vmem, size = 0x14000, scoped, tag = 'scratch operand']
  #allocation3 [shape = 'bf16[72,4864]{1,0:T(8,128)(2,1)}', space=vmem, size = 0xab000, scoped, tag = 'scratch operand']
  #allocation4 [shape = 'bf16[8,3072]{1,0:T(8,128)(2,1)}', space=vmem, size = 0xc000, scoped, tag = 'scratch operand']
  %s0 = inlined_call_operand.vmem [shape: bf16[2,4,5120], index: 0, kind: input, shape index: {}]
  %s1 = inlined_call_operand.vmem [shape: f32[1,4864], index: 1, kind: input, shape index: {}]
  %s2 = inlined_call_operand.vmem [shape: bf16[8,36], index: 2, kind: input, shape index: {}]
  %s3 = inlined_call_operand.vmem [shape: f32[8,1], index: 3, kind: input, shape index: {}]
  %s4 = inlined_call_operand.vmem [shape: bf16[8,72], index: 4, kind: input, shape index: {}]
  %s5 = inlined_call_operand.vmem [shape: f32[8,1], index: 5, kind: input, shape index: {}]
  %s6 = inlined_call_operand.vmem [shape: bf16[3072,32], index: 6, kind: input, shape index: {}]
  %s7 = inlined_call_operand.vmem [shape: f32[1,32], index: 7, kind: input, shape index: {}]
  %s8 = inlined_call_operand.vmem [shape: bf16[32,6], index: 8, kind: input, shape index: {}]
  %s9 = inlined_call_operand.vmem [shape: f32[1,6], index: 9, kind: input, shape index: {}]
  %s10 = inlined_call_operand.vmem [shape: f32[16,6], index: 10, kind: output, shape index: {}]
  %s11 = sld [smem:[#allocation0]]
  $region73: #{forward_impl.1} parent=0
    _
  %s13 = ssub.s32 1, %s11
  %s14 = scalar_select 0, %s13, %s11
  loop: start=0, step=1, limit=4
  $region2: #{forward_impl.1} parent=0 // loop_pre_header
    _
  $region3: #{forward_impl.1} parent=0 // loop_header
    %s16 = sphi 0, %s20
    %p17 = scmp.ge.s32.totalorder %s16, 4
    %s26 = sphi 0, %s28
    %s29 = sphi 0, %s26
    %s30 = sphi 0, %s29
    %s46 = sphi 0, %s30
    %s50 = sphi 0, %s50
    %s52 = sphi 0, %s50
    %s53 = sphi 0, %s52
    %s67 = sphi 0, %s53
    %s71 = sphi 0, %s71
    %s73 = sphi 0, %s71
    %s74 = sphi 0, %s73
    %s88 = sphi 0, %s74
    %s92 = sphi 0, %s92
    %s94 = sphi 0, %s92
    %s95 = sphi 0, %s94
    %s109 = sphi 0, %s95
    %s113 = sphi 0, %s113
    %s115 = sphi 0, %s113
    %s116 = sphi 0, %s115
    %s130 = sphi 0, %s116
    %s134 = sphi 0, %s134
    %s136 = sphi 0, %s134
    %s137 = sphi 0, %s136
    %s151 = sphi 0, %s137
    %s155 = sphi 0, %s155
    %s157 = sphi 0, %s155
    %s158 = sphi 0, %s157
    %s172 = sphi 0, %s158
    %s176 = sphi 0, %s176
    %s178 = sphi 0, %s176
    %s179 = sphi 0, %s178
    %s193 = sphi 0, %s179
    %s197 = sphi 0, %s197
    %s199 = sphi 0, %s197
    %s200 = sphi 0, %s199
    %s214 = sphi 0, %s200
    %s218 = sphi 0, %s218
    %s220 = sphi 0, %s218
    %s221 = sphi 0, %s220
    %s235 = sphi 0, %s221
    %s241 = sphi 0, %s243
    %s244 = sphi 0, %s241
    %s245 = sphi 0, %s244
    %s261 = sphi 0, %s245
  $region4: #{forward_impl.1} parent=0 // loop_header_branch
    %19 = sbr.rel (%p17) target = $region8
  $region5: #{forward_impl.1} parent=0 // loop_body
    %s21 = ssub.s32 %s16, 1
    %s22 = ssub.s32 %s16, 2
    %s23 = sadd.s32 %s16, 1
    %s24 = ssub.s32 %s16, %s23
    %p25 = scmp.eq.s32.totalorder %s24, 0
    %s27 = sadd.s32 %s26, 1
    %s28 = scalar_select %p25, %s26, %s27
    %p31 = pneg %p25
    %p32 = scmp.eq.s32.totalorder %s16, 1
    %p33 = por %p31, %p32
    %p34 = scmp.ne.s32.totalorder %s26, %s29
    %p35 = scmp.eq.s32.totalorder %s16, 0
    %p36 = por %p34, %p35
    %p37 = scmp.ne.s32.totalorder %s26, %s29
    %p38 = scmp.eq.s32.totalorder %s21, 1
    %p39 = por %p37, %p38
    %p40 = scmp.ne.s32.totalorder %s29, %s30
    %p41 = scmp.eq.s32.totalorder %s21, 0
    %p42 = por %p40, %p41
    %p43 = scmp.ne.s32.totalorder %s29, %s30
    %p44 = scmp.eq.s32.totalorder %s22, 1
    %p45 = por %p43, %p44
    %p47 = scmp.ne.s32.totalorder %s30, %s46
    %p48 = scmp.eq.s32.totalorder %s22, 0
    %p49 = por %p47, %p48
    %s51 = sadd.s32 %s50, 1
    %p54 = scmp.eq.s32.totalorder %s16, 1
    %p55 = scmp.ne.s32.totalorder %s50, %s52
    %p56 = scmp.eq.s32.totalorder %s16, 0
    %p57 = por %p55, %p56
    %p58 = scmp.ne.s32.totalorder %s50, %s52
    %p59 = scmp.eq.s32.totalorder %s21, 1
    %p60 = por %p58, %p59
    %p61 = scmp.ne.s32.totalorder %s52, %s53
    %p62 = scmp.eq.s32.totalorder %s21, 0
    %p63 = por %p61, %p62
    %p64 = scmp.ne.s32.totalorder %s52, %s53
    %p65 = scmp.eq.s32.totalorder %s22, 1
    %p66 = por %p64, %p65
    %p68 = scmp.ne.s32.totalorder %s53, %s67
    %p69 = scmp.eq.s32.totalorder %s22, 0
    %p70 = por %p68, %p69
    %s72 = sadd.s32 %s71, 1
    %p75 = scmp.eq.s32.totalorder %s16, 1
    %p76 = scmp.ne.s32.totalorder %s71, %s73
    %p77 = scmp.eq.s32.totalorder %s16, 0
    %p78 = por %p76, %p77
    %p79 = scmp.ne.s32.totalorder %s71, %s73
    %p80 = scmp.eq.s32.totalorder %s21, 1
    %p81 = por %p79, %p80
    %p82 = scmp.ne.s32.totalorder %s73, %s74
    %p83 = scmp.eq.s32.totalorder %s21, 0
    %p84 = por %p82, %p83
    %p85 = scmp.ne.s32.totalorder %s73, %s74
    %p86 = scmp.eq.s32.totalorder %s22, 1
    %p87 = por %p85, %p86
    %p89 = scmp.ne.s32.totalorder %s74, %s88
    %p90 = scmp.eq.s32.totalorder %s22, 0
    %p91 = por %p89, %p90
    %s93 = sadd.s32 %s92, 1
    %p96 = scmp.eq.s32.totalorder %s16, 1
    %p97 = scmp.ne.s32.totalorder %s92, %s94
    %p98 = scmp.eq.s32.totalorder %s16, 0
    %p99 = por %p97, %p98
    %p100 = scmp.ne.s32.totalorder %s92, %s94
    %p101 = scmp.eq.s32.totalorder %s21, 1
    %p102 = por %p100, %p101
    %p103 = scmp.ne.s32.totalorder %s94, %s95
    %p104 = scmp.eq.s32.totalorder %s21, 0
    %p105 = por %p103, %p104
    %p106 = scmp.ne.s32.totalorder %s94, %s95
    %p107 = scmp.eq.s32.totalorder %s22, 1
    %p108 = por %p106, %p107
    %p110 = scmp.ne.s32.totalorder %s95, %s109
    %p111 = scmp.eq.s32.totalorder %s22, 0
    %p112 = por %p110, %p111
    %s114 = sadd.s32 %s113, 1
    %p117 = scmp.eq.s32.totalorder %s16, 1
    %p118 = scmp.ne.s32.totalorder %s113, %s115
    %p119 = scmp.eq.s32.totalorder %s16, 0
    %p120 = por %p118, %p119
    %p121 = scmp.ne.s32.totalorder %s113, %s115
    %p122 = scmp.eq.s32.totalorder %s21, 1
    %p123 = por %p121, %p122
    %p124 = scmp.ne.s32.totalorder %s115, %s116
    %p125 = scmp.eq.s32.totalorder %s21, 0
    %p126 = por %p124, %p125
    %p127 = scmp.ne.s32.totalorder %s115, %s116
    %p128 = scmp.eq.s32.totalorder %s22, 1
    %p129 = por %p127, %p128
    %p131 = scmp.ne.s32.totalorder %s116, %s130
    %p132 = scmp.eq.s32.totalorder %s22, 0
    %p133 = por %p131, %p132
    %s135 = sadd.s32 %s134, 1
    %p138 = scmp.eq.s32.totalorder %s16, 1
    %p139 = scmp.ne.s32.totalorder %s134, %s136
    %p140 = scmp.eq.s32.totalorder %s16, 0
    %p141 = por %p139, %p140
    %p142 = scmp.ne.s32.totalorder %s134, %s136
    %p143 = scmp.eq.s32.totalorder %s21, 1
    %p144 = por %p142, %p143
    %p145 = scmp.ne.s32.totalorder %s136, %s137
    %p146 = scmp.eq.s32.totalorder %s21, 0
    %p147 = por %p145, %p146
    %p148 = scmp.ne.s32.totalorder %s136, %s137
    %p149 = scmp.eq.s32.totalorder %s22, 1
    %p150 = por %p148, %p149
    %p152 = scmp.ne.s32.totalorder %s137, %s151
    %p153 = scmp.eq.s32.totalorder %s22, 0
    %p154 = por %p152, %p153
    %s156 = sadd.s32 %s155, 1
    %p159 = scmp.eq.s32.totalorder %s16, 1
    %p160 = scmp.ne.s32.totalorder %s155, %s157
    %p161 = scmp.eq.s32.totalorder %s16, 0
    %p162 = por %p160, %p161
    %p163 = scmp.ne.s32.totalorder %s155, %s157
    %p164 = scmp.eq.s32.totalorder %s21, 1
    %p165 = por %p163, %p164
    %p166 = scmp.ne.s32.totalorder %s157, %s158
    %p167 = scmp.eq.s32.totalorder %s21, 0
    %p168 = por %p166, %p167
    %p169 = scmp.ne.s32.totalorder %s157, %s158
    %p170 = scmp.eq.s32.totalorder %s22, 1
    %p171 = por %p169, %p170
    %p173 = scmp.ne.s32.totalorder %s158, %s172
    %p174 = scmp.eq.s32.totalorder %s22, 0
    %p175 = por %p173, %p174
    %s177 = sadd.s32 %s176, 1
    %p180 = scmp.eq.s32.totalorder %s16, 1
    %p181 = scmp.ne.s32.totalorder %s176, %s178
    %p182 = scmp.eq.s32.totalorder %s16, 0
    %p183 = por %p181, %p182
    %p184 = scmp.ne.s32.totalorder %s176, %s178
    %p185 = scmp.eq.s32.totalorder %s21, 1
    %p186 = por %p184, %p185
    %p187 = scmp.ne.s32.totalorder %s178, %s179
    %p188 = scmp.eq.s32.totalorder %s21, 0
    %p189 = por %p187, %p188
    %p190 = scmp.ne.s32.totalorder %s178, %s179
    %p191 = scmp.eq.s32.totalorder %s22, 1
    %p192 = por %p190, %p191
    %p194 = scmp.ne.s32.totalorder %s179, %s193
    %p195 = scmp.eq.s32.totalorder %s22, 0
    %p196 = por %p194, %p195
    %s198 = sadd.s32 %s197, 1
    %p201 = scmp.eq.s32.totalorder %s16, 1
    %p202 = scmp.ne.s32.totalorder %s197, %s199
    %p203 = scmp.eq.s32.totalorder %s16, 0
    %p204 = por %p202, %p203
    %p205 = scmp.ne.s32.totalorder %s197, %s199
    %p206 = scmp.eq.s32.totalorder %s21, 1
    %p207 = por %p205, %p206
    %p208 = scmp.ne.s32.totalorder %s199, %s200
    %p209 = scmp.eq.s32.totalorder %s21, 0
    %p210 = por %p208, %p209
    %p211 = scmp.ne.s32.totalorder %s199, %s200
    %p212 = scmp.eq.s32.totalorder %s22, 1
    %p213 = por %p211, %p212
    %p215 = scmp.ne.s32.totalorder %s200, %s214
    %p216 = scmp.eq.s32.totalorder %s22, 0
    %p217 = por %p215, %p216
    %s219 = sadd.s32 %s218, 1
    %p222 = scmp.eq.s32.totalorder %s16, 1
    %p223 = scmp.ne.s32.totalorder %s218, %s220
    %p224 = scmp.eq.s32.totalorder %s16, 0
    %p225 = por %p223, %p224
    %p226 = scmp.ne.s32.totalorder %s218, %s220
    %p227 = scmp.eq.s32.totalorder %s21, 1
    %p228 = por %p226, %p227
    %p229 = scmp.ne.s32.totalorder %s220, %s221
    %p230 = scmp.eq.s32.totalorder %s21, 0
    %p231 = por %p229, %p230
    %p232 = scmp.ne.s32.totalorder %s220, %s221
    %p233 = scmp.eq.s32.totalorder %s22, 1
    %p234 = por %p232, %p233
    %p236 = scmp.ne.s32.totalorder %s221, %s235
    %p237 = scmp.eq.s32.totalorder %s22, 0
    %p238 = por %p236, %p237
    %s239 = ssub.s32 %s16, %s23
    %p240 = scmp.eq.s32.totalorder %s239, 0
    %s242 = sadd.s32 %s241, 1
    %s243 = scalar_select %p240, %s241, %s242
    %p246 = pneg %p240
    %p247 = scmp.eq.s32.totalorder %s16, 1
    %p248 = por %p246, %p247
    %p249 = scmp.ne.s32.totalorder %s241, %s244
    %p250 = scmp.eq.s32.totalorder %s16, 0
    %p251 = por %p249, %p250
    %p252 = scmp.ne.s32.totalorder %s241, %s244
    %p253 = scmp.eq.s32.totalorder %s21, 1
    %p254 = por %p252, %p253
    %p255 = scmp.ne.s32.totalorder %s244, %s245
    %p256 = scmp.eq.s32.totalorder %s21, 0
    %p257 = por %p255, %p256
    %p258 = scmp.ne.s32.totalorder %s244, %s245
    %p259 = scmp.eq.s32.totalorder %s22, 1
    %p260 = por %p258, %p259
    %p262 = scmp.ne.s32.totalorder %s245, %s261
    %p263 = scmp.eq.s32.totalorder %s22, 0
    %p264 = por %p262, %p263
    %p265 = scmp.le.s32.totalorder 1, %s16
    %p266 = scmp.lt.s32.totalorder %s16, 3
    %p267 = pnand %p265, %p266
    %p268 = pneg %p267
    // Predicated region
    $region9: #{forward_impl.1} parent=5 // pred_check
      _
    $region10: #{forward_impl.1} parent=5 // pred_check_branch
      %270 = sbr.rel (%p267) target = $region12
    $region11: #{forward_impl.1} parent=5 // pred_region
      %s271 = ssub.s32 %s16, 1
      // Predicated region
      $region13: #{forward_impl.1} parent=11 // pred_check
        %p272 = pneg %p63
      $region14: #{forward_impl.1} parent=11 // pred_check_branch
        %274 = sbr.rel (%p272) target = $region16
      $region15: #{forward_impl.1} parent=11 // pred_region
        _
      $region16: #{forward_impl.1} parent=11 // pred_fallthru
        _
      // Predicated region
      $region17: #{forward_impl.1} parent=11 // pred_check
        %p275 = pneg %p84
      $region18: #{forward_impl.1} parent=11 // pred_check_branch
        %277 = sbr.rel (%p275) target = $region20
      $region19: #{forward_impl.1} parent=11 // pred_region
        _
      $region20: #{forward_impl.1} parent=11 // pred_fallthru
        _
      // Predicated region
      $region21: #{forward_impl.1} parent=11 // pred_check
        %p278 = pneg %p105
      $region22: #{forward_impl.1} parent=11 // pred_check_branch
        %280 = sbr.rel (%p278) target = $region24
      $region23: #{forward_impl.1} parent=11 // pred_region
        _
      $region24: #{forward_impl.1} parent=11 // pred_fallthru
        _
      // Predicated region
      $region25: #{forward_impl.1} parent=11 // pred_check
        %p281 = pneg %p126
      $region26: #{forward_impl.1} parent=11 // pred_check_branch
        %283 = sbr.rel (%p281) target = $region28
      $region27: #{forward_impl.1} parent=11 // pred_region
        _
      $region28: #{forward_impl.1} parent=11 // pred_fallthru
        _
      // Predicated region
      $region29: #{forward_impl.1} parent=11 // pred_check
        %p284 = pneg %p147
      $region30: #{forward_impl.1} parent=11 // pred_check_branch
        %286 = sbr.rel (%p284) target = $region32
      $region31: #{forward_impl.1} parent=11 // pred_region
        _
      $region32: #{forward_impl.1} parent=11 // pred_fallthru
        _
      // Predicated region
      $region33: #{forward_impl.1} parent=11 // pred_check
        %p287 = pneg %p168
      $region34: #{forward_impl.1} parent=11 // pred_check_branch
        %289 = sbr.rel (%p287) target = $region36
      $region35: #{forward_impl.1} parent=11 // pred_region
        _
      $region36: #{forward_impl.1} parent=11 // pred_fallthru
        _
      // Predicated region
      $region37: #{forward_impl.1} parent=11 // pred_check
        %p290 = pneg %p189
      $region38: #{forward_impl.1} parent=11 // pred_check_branch
        %292 = sbr.rel (%p290) target = $region40
      $region39: #{forward_impl.1} parent=11 // pred_region
        _
      $region40: #{forward_impl.1} parent=11 // pred_fallthru
        _
      // Predicated region
      $region41: #{forward_impl.1} parent=11 // pred_check
        %p293 = pneg %p210
      $region42: #{forward_impl.1} parent=11 // pred_check_branch
        %295 = sbr.rel (%p293) target = $region44
      $region43: #{forward_impl.1} parent=11 // pred_region
        _
      $region44: #{forward_impl.1} parent=11 // pred_fallthru
        _
      // Predicated region
      $region45: #{forward_impl.1} parent=11 // pred_check
        %p296 = pneg %p231
      $region46: #{forward_impl.1} parent=11 // pred_check_branch
        %298 = sbr.rel (%p296) target = $region48
      $region47: #{forward_impl.1} parent=11 // pred_region
        _
      $region48: #{forward_impl.1} parent=11 // pred_fallthru
        _
    $region12: #{forward_impl.1} parent=5 // pred_fallthru
      _
    %p299 = scmp.lt.s32.totalorder %s16, 2
    // Predicated region
    $region49: #{forward_impl.1} parent=5 // pred_check
      %p300 = pneg %p299
    $region50: #{forward_impl.1} parent=5 // pred_check_branch
      %302 = sbr.rel (%p300) target = $region52
    $region51: #{forward_impl.1} parent=5 // pred_region
      // Predicated region
      $region53: #{forward_impl.1} parent=51 // pred_check
        %p303 = pneg %p36
      $region54: #{forward_impl.1} parent=51 // pred_check_branch
        %305 = sbr.rel (%p303) target = $region56
      $region55: #{forward_impl.1} parent=51 // pred_region
        %p306 = scmp.lt.s32.totalorder %s16, 1
        %s307 = scalar_select %p306, %s16, 1
        %s308 = smul.addr %s307, 40
        %s309 = smul.addr %s308, 2
        %s310 = scalar_lea.vmem %s0, %s309
      $region56: #{forward_impl.1} parent=51 // pred_fallthru
        _
    $region52: #{forward_impl.1} parent=5 // pred_fallthru
      _
    %p311 = scmp.le.s32.totalorder 1, %s16
    %p312 = scmp.lt.s32.totalorder %s16, 3
    %p313 = pnand %p311, %p312
    %p314 = pneg %p313
    // Predicated region
    $region57: #{forward_impl.1} parent=5 // pred_check
      _
    $region58: #{forward_impl.1} parent=5 // pred_check_branch
      %316 = sbr.rel (%p313) target = $region60
    $region59: #{forward_impl.1} parent=5 // pred_region
      %s317 = ssub.s32 %s16, 1
      %p318 = scmp.lt.s32.totalorder %s21, 1
      %s319 = scalar_select %p318, %s21, 1
      %s320 = smul.addr %s319, 40
      %s321 = smul.addr %s320, 2
      %s322 = scalar_lea.vmem %s0, %s321
      %p323 = pneg %p42
      %p324 = pneg %p39
      %p325 = pneg %p63
      %p326 = pneg %p60
      %p327 = pneg %p84
      %p328 = pneg %p81
      %p329 = pneg %p105
      %p330 = pneg %p102
      %p331 = pneg %p126
      %p332 = pneg %p123
      %p333 = pneg %p147
      %p334 = pneg %p144
      %p335 = pneg %p168
      %p336 = pneg %p165
      %p337 = pneg %p189
      %p338 = pneg %p186
      %p339 = pneg %p210
      %p340 = pneg %p207
      %p341 = pneg %p231
      %p342 = pneg %p228
      %p343 = pneg %p257
      %p344 = pneg %p254
      %p345 = scmp.lt.s32.totalorder %s21, 1
      %s346 = scalar_select %p345, %s21, 1
      %s347 = smul.addr %s346, 8
      %s348 = scalar_lea.vmem %s10, %s347
      %p349 = scmp.lt.s32.totalorder %s21, 1
      %s350 = scalar_select %p349, %s21, 1
      %s351 = smul.addr %s350, 40
      %s352 = smul.addr %s351, 2
      %s353 = scalar_lea.vmem %s0, %s352
      %p354 = scmp.lt.s32.totalorder %s21, 1
      %s355 = scalar_select %p354, %s21, 1
      %s356 = smul.addr %s355, 8
      %s357 = scalar_lea.vmem %s10, %s356
      %v359 = vld [vmem:[%s1] sm:$0xff]
      %v360 = vld [vmem:[%s1 + $0x8] sm:$0xff]
      %v361 = vld [vmem:[%s1 + $0x10] sm:$0xff]
      %v362 = vld [vmem:[%s1 + $0x18] sm:$0xff]
      %v363 = vld [vmem:[%s1 + $0x20] sm:$0x3f]
      %vm364 = vcmp.gt.f32.partialorder %v359, 0.5
      %vm365 = vcmp.gt.f32.partialorder %v360, 0.5
      %vm366 = vcmp.gt.f32.partialorder %v361, 0.5
      %vm367 = vcmp.gt.f32.partialorder %v362, 0.5
      %vm368 = vcmp.gt.f32.partialorder %v363, 0.5
      %v369 = vld [vmem:[%s353] sm:$0xff]
      %v370 = vld [vmem:[%s353 + $0x8] sm:$0xff]
      %v371 = vld [vmem:[%s353 + $0x10] sm:$0xff]
      %v372 = vld [vmem:[%s353 + $0x18] sm:$0xff]
      %v373 = vld [vmem:[%s353 + $0x20] sm:$0xff]
      %v374 = vld [vmem:[%s353 + $0x28] sm:$0xff]
      %v375 = vld [vmem:[%s353 + $0x30] sm:$0xff]
      %v376 = vld [vmem:[%s353 + $0x38] sm:$0xff]
      %v377 = vld [vmem:[%s353 + $0x40] sm:$0xff]
      %v378 = vld [vmem:[%s353 + $0x48] sm:$0x3f]
      %380 = vst [vmem:[#allocation1] ss:$2 sm:$0xff] %v369
      %s382 = scalar_lea.vmem [#allocation1], 16
      %383 = vst [vmem:[%s382] ss:$2 sm:$0xff] %v370
      %s385 = scalar_lea.vmem [#allocation1], 32
      %386 = vst [vmem:[%s385] ss:$2 sm:$0xff] %v371
      %s388 = scalar_lea.vmem [#allocation1], 48
      %389 = vst [vmem:[%s388] ss:$2 sm:$0xff] %v372
      %v390 = vld.sshfl [vmem:[#allocation1] sm:$0xff pattern:$0x75643120]
      %v392 = vld.sshfl [vmem:[#allocation1 + $0x8] sm:$0xff pattern:$0x75643120]
      %v394 = vld.sshfl [vmem:[#allocation1 + $0x10] sm:$0xff pattern:$0x75643120]
      %v396 = vld.sshfl [vmem:[#allocation1 + $0x18] sm:$0xff pattern:$0x75643120]
      %v398 = vld.sshfl [vmem:[#allocation1 + $0x20] sm:$0xff pattern:$0x75643120]
      %v400 = vld.sshfl [vmem:[#allocation1 + $0x28] sm:$0xff pattern:$0x75643120]
      %v402 = vld.sshfl [vmem:[#allocation1 + $0x30] sm:$0xff pattern:$0x75643120]
      %v404 = vld.sshfl [vmem:[#allocation1 + $0x38] sm:$0xff pattern:$0x75643120]
      %407 = vst [vmem:[#allocation1] ss:$2 sm:$0xff] %v373
      %409 = vst [vmem:[%s382] ss:$2 sm:$0xff] %v374
      %411 = vst [vmem:[%s385] ss:$2 sm:$0xff] %v375
      %413 = vst [vmem:[%s388] ss:$2 sm:$0xff] %v376
      %v414 = vld.sshfl [vmem:[#allocation1] sm:$0xff pattern:$0x75643120]
      %v416 = vld.sshfl [vmem:[#allocation1 + $0x8] sm:$0xff pattern:$0x75643120]
      %v418 = vld.sshfl [vmem:[#allocation1 + $0x10] sm:$0xff pattern:$0x75643120]
      %v420 = vld.sshfl [vmem:[#allocation1 + $0x18] sm:$0xff pattern:$0x75643120]
      %v422 = vld.sshfl [vmem:[#allocation1 + $0x20] sm:$0xff pattern:$0x75643120]
      %v424 = vld.sshfl [vmem:[#allocation1 + $0x28] sm:$0xff pattern:$0x75643120]
      %v426 = vld.sshfl [vmem:[#allocation1 + $0x30] sm:$0xff pattern:$0x75643120]
      %v428 = vld.sshfl [vmem:[#allocation1 + $0x38] sm:$0xff pattern:$0x75643120]
      %431 = vst [vmem:[#allocation1] ss:$2 sm:$0xff] %v377
      %433 = vst [vmem:[%s382] ss:$2 sm:$0xff] %v378
      %v434 = vld.sshfl [vmem:[#allocation1] sm:$0xff pattern:$0x75643120]
      %v436 = vld.sshfl [vmem:[#allocation1 + $0x8] sm:$0xff pattern:$0x75643120]
      %v438 = vld.sshfl [vmem:[#allocation1 + $0x10] sm:$0xff pattern:$0x75643120]
      %v440 = vld.sshfl [vmem:[#allocation1 + $0x18] sm:$0xff pattern:$0x75643120]
      %442 = vrot.lane.b32.xlu0 %v390, 19
      %v443 = vpop.permute.xlu0 %442
      %444 = vrot.lane.b32.xlu0 %v392, 19
      %v445 = vpop.permute.xlu0 %444
      %446 = vrot.lane.b32.xlu0 %v394, 19
      %v447 = vpop.permute.xlu0 %446
      %448 = vrot.lane.b32.xlu0 %v396, 19
      %v449 = vpop.permute.xlu0 %448
      %450 = vrot.lane.b32.xlu0 %v398, 19
      %v451 = vpop.permute.xlu0 %450
      %452 = vrot.lane.b32.xlu0 %v400, 19
      %v453 = vpop.permute.xlu0 %452
      %454 = vrot.lane.b32.xlu0 %v402, 19
      %v455 = vpop.permute.xlu0 %454
      %456 = vrot.lane.b32.xlu0 %v404, 19
      %v457 = vpop.permute.xlu0 %456
      %458 = vrot.lane.b32.xlu0 %v414, 19
      %v459 = vpop.permute.xlu0 %458
      %460 = vrot.lane.b32.xlu0 %v416, 19
      %v461 = vpop.permute.xlu0 %460
      %462 = vrot.lane.b32.xlu0 %v418, 19
      %v463 = vpop.permute.xlu0 %462
      %464 = vrot.lane.b32.xlu0 %v420, 19
      %v465 = vpop.permute.xlu0 %464
      %466 = vrot.lane.b32.xlu0 %v422, 19
      %v467 = vpop.permute.xlu0 %466
      %468 = vrot.lane.b32.xlu0 %v424, 19
      %v469 = vpop.permute.xlu0 %468
      %470 = vrot.lane.b32.xlu0 %v426, 19
      %v471 = vpop.permute.xlu0 %470
      %472 = vrot.lane.b32.xlu0 %v428, 19
      %v473 = vpop.permute.xlu0 %472
      %474 = vrot.lane.b32.xlu0 %v434, 19
      %v475 = vpop.permute.xlu0 %474
      %476 = vrot.lane.b32.xlu0 %v436, 19
      %v477 = vpop.permute.xlu0 %476
      %478 = vrot.lane.b32.xlu0 %v438, 19
      %v479 = vpop.permute.xlu0 %478
      %480 = vrot.lane.b32.xlu0 %v440, 19
      %v481 = vpop.permute.xlu0 %480
      %v482 = vrot.slane %v443, 4
      %v483 = vrot.slane %v445, 4
      %v484 = vrot.slane %v447, 4
      %v485 = vrot.slane %v449, 4
      %v486 = vrot.slane %v451, 4
      %v487 = vrot.slane %v453, 4
      %v488 = vrot.slane %v455, 4
      %v489 = vrot.slane %v457, 4
      %v490 = vrot.slane %v459, 4
      %v491 = vrot.slane %v461, 4
      %v492 = vrot.slane %v463, 4
      %v493 = vrot.slane %v465, 4
      %v494 = vrot.slane %v467, 4
      %v495 = vrot.slane %v469, 4
      %v496 = vrot.slane %v471, 4
      %v497 = vrot.slane %v473, 4
      %v498 = vrot.slane %v475, 4
      %v499 = vrot.slane %v477, 4
      %v500 = vrot.slane %v479, 4
      %v501 = vrot.slane %v481, 4
      %vm502 = vcmask 1043456
      %v503 = vsel %vm502, %v482, %v483
      %vm504 = vcmask 154624
      %v505 = vsel %vm504, %v443, %v503
      %v506 = vsel %vm502, %v483, %v484
      %v507 = vsel %vm504, %v445, %v506
      %v508 = vsel %vm502, %v484, %v485
      %v509 = vsel %vm504, %v447, %v508
      %v510 = vsel %vm502, %v485, %v486
      %v511 = vsel %vm504, %v449, %v510
      %v512 = vsel %vm502, %v486, %v487
      %v513 = vsel %vm504, %v451, %v512
      %v514 = vsel %vm502, %v487, %v488
      %v515 = vsel %vm504, %v453, %v514
      %v516 = vsel %vm502, %v488, %v489
      %v517 = vsel %vm504, %v455, %v516
      %v518 = vsel %vm502, %v489, %v490
      %v519 = vsel %vm504, %v457, %v518
      %v520 = vsel %vm502, %v490, %v491
      %v521 = vsel %vm504, %v459, %v520
      %v522 = vsel %vm502, %v491, %v492
      %v523 = vsel %vm504, %v461, %v522
      %v524 = vsel %vm502, %v492, %v493
      %v525 = vsel %vm504, %v463, %v524
      %v526 = vsel %vm502, %v493, %v494
      %v527 = vsel %vm504, %v465, %v526
      %v528 = vsel %vm502, %v494, %v495
      %v529 = vsel %vm504, %v467, %v528
      %v530 = vsel %vm502, %v495, %v496
      %v531 = vsel %vm504, %v469, %v530
      %v532 = vsel %vm502, %v496, %v497
      %v533 = vsel %vm504, %v471, %v532
      %v534 = vsel %vm502, %v497, %v498
      %v535 = vsel %vm504, %v473, %v534
      %v536 = vsel %vm502, %v498, %v499
      %v537 = vsel %vm504, %v475, %v536
      %v538 = vsel %vm502, %v499, %v500
      %v539 = vsel %vm504, %v477, %v538
      %v540 = vsel %vm502, %v500, %v501
      %v541 = vsel %vm504, %v479, %v540
      %561 = vst [vmem:[#allocation3] sm:$0x33] %v505
      %562 = vst [vmem:[#allocation3 + $0x8] sm:$0x33] %v507
      %563 = vst [vmem:[#allocation3 + $0x10] sm:$0x33] %v509
      %564 = vst [vmem:[#allocation3 + $0x18] sm:$0x33] %v511
      %565 = vst [vmem:[#allocation3 + $0x20] sm:$0x33] %v513
      %566 = vst [vmem:[#allocation3 + $0x28] sm:$0x33] %v515
      %567 = vst [vmem:[#allocation3 + $0x30] sm:$0x33] %v517
      %568 = vst [vmem:[#allocation3 + $0x38] sm:$0x33] %v519
      %569 = vst [vmem:[#allocation3 + $0x40] sm:$0x33] %v521
      %570 = vst [vmem:[#allocation3 + $0x48] sm:$0x33] %v523
      %571 = vst [vmem:[#allocation3 + $0x50] sm:$0x33] %v525
      %572 = vst [vmem:[#allocation3 + $0x58] sm:$0x33] %v527
      %573 = vst [vmem:[#allocation3 + $0x60] sm:$0x33] %v529
      %574 = vst [vmem:[#allocation3 + $0x68] sm:$0x33] %v531
      %575 = vst [vmem:[#allocation3 + $0x70] sm:$0x33] %v533
      %576 = vst [vmem:[#allocation3 + $0x78] sm:$0x33] %v535
      %577 = vst [vmem:[#allocation3 + $0x80] sm:$0x33] %v537
      %578 = vst [vmem:[#allocation3 + $0x88] sm:$0x33] %v539
      %579 = vst [vmem:[#allocation3 + $0x90] sm:$0x33] %v541
      %v580 = vld [vmem:[%s353] sm:$0xff]
      %v581 = vld [vmem:[%s353 + $0x8] sm:$0xff]
      %v582 = vld [vmem:[%s353 + $0x10] sm:$0xff]
      %v583 = vld [vmem:[%s353 + $0x18] sm:$0xff]
      %v584 = vld [vmem:[%s353 + $0x20] sm:$0xff]
      %v585 = vld [vmem:[%s353 + $0x28] sm:$0xff]
      %v586 = vld [vmem:[%s353 + $0x30] sm:$0xff]
      %v587 = vld [vmem:[%s353 + $0x38] sm:$0xff]
      %v588 = vld [vmem:[%s353 + $0x40] sm:$0xff]
      %v589 = vld [vmem:[%s353 + $0x48] sm:$0x3f]
      %s591 = scalar_lea.vmem [#allocation1], 1
      %592 = vst [vmem:[%s591] ss:$2 sm:$0xff] %v580
      %s594 = scalar_lea.vmem [#allocation1], 17
      %595 = vst [vmem:[%s594] ss:$2 sm:$0xff] %v581
      %s597 = scalar_lea.vmem [#allocation1], 33
      %598 = vst [vmem:[%s597] ss:$2 sm:$0xff] %v582
      %s600 = scalar_lea.vmem [#allocation1], 49
      %601 = vst [vmem:[%s600] ss:$2 sm:$0xff] %v583
      %v602 = vld.sshfl [vmem:[#allocation1] sm:$0xff pattern:$0x75643120]
      %v604 = vld.sshfl [vmem:[#allocation1 + $0x8] sm:$0xff pattern:$0x75643120]
      %v606 = vld.sshfl [vmem:[#allocation1 + $0x10] sm:$0xff pattern:$0x75643120]
      %v608 = vld.sshfl [vmem:[#allocation1 + $0x18] sm:$0xff pattern:$0x75643120]
      %v610 = vld.sshfl [vmem:[#allocation1 + $0x20] sm:$0xff pattern:$0x75643120]
      %v612 = vld.sshfl [vmem:[#allocation1 + $0x28] sm:$0xff pattern:$0x75643120]
      %v614 = vld.sshfl [vmem:[#allocation1 + $0x30] sm:$0xff pattern:$0x75643120]
      %v616 = vld.sshfl [vmem:[#allocation1 + $0x38] sm:$0xff pattern:$0x75643120]
      %619 = vst [vmem:[%s591] ss:$2 sm:$0xff] %v584
      %621 = vst [vmem:[%s594] ss:$2 sm:$0xff] %v585
      %623 = vst [vmem:[%s597] ss:$2 sm:$0xff] %v586
      %625 = vst [vmem:[%s600] ss:$2 sm:$0xff] %v587
      %v626 = vld.sshfl [vmem:[#allocation1] sm:$0xff pattern:$0x75643120]
      %v628 = vld.sshfl [vmem:[#allocation1 + $0x8] sm:$0xff pattern:$0x75643120]
      %v630 = vld.sshfl [vmem:[#allocation1 + $0x10] sm:$0xff pattern:$0x75643120]
      %v632 = vld.sshfl [vmem:[#allocation1 + $0x18] sm:$0xff pattern:$0x75643120]
      %v634 = vld.sshfl [vmem:[#allocation1 + $0x20] sm:$0xff pattern:$0x75643120]
      %v636 = vld.sshfl [vmem:[#allocation1 + $0x28] sm:$0xff pattern:$0x75643120]
      %v638 = vld.sshfl [vmem:[#allocation1 + $0x30] sm:$0xff pattern:$0x75643120]
      %v640 = vld.sshfl [vmem:[#allocation1 + $0x38] sm:$0xff pattern:$0x75643120]
      %643 = vst [vmem:[%s591] ss:$2 sm:$0xff] %v588
      %645 = vst [vmem:[%s594] ss:$2 sm:$0xff] %v589
      %v646 = vld.sshfl [vmem:[#allocation1] sm:$0xff pattern:$0x75643120]
      %v648 = vld.sshfl [vmem:[#allocation1 + $0x8] sm:$0xff pattern:$0x75643120]
      %v650 = vld.sshfl [vmem:[#allocation1 + $0x10] sm:$0xff pattern:$0x75643120]
      %v652 = vld.sshfl [vmem:[#allocation1 + $0x18] sm:$0xff pattern:$0x75643120]
      %654 = vrot.lane.b32.xlu0 %v602, 18
      %v655 = vpop.permute.xlu0 %654
      %656 = vrot.lane.b32.xlu0 %v604, 18
      %v657 = vpop.permute.xlu0 %656
      %658 = vrot.lane.b32.xlu0 %v606, 18
      %v659 = vpop.permute.xlu0 %658
      %660 = vrot.lane.b32.xlu0 %v608, 18
      %v661 = vpop.permute.xlu0 %660
      %662 = vrot.lane.b32.xlu0 %v610, 18
      %v663 = vpop.permute.xlu0 %662
      %664 = vrot.lane.b32.xlu0 %v612, 18
      %v665 = vpop.permute.xlu0 %664
      %666 = vrot.lane.b32.xlu0 %v614, 18
      %v667 = vpop.permute.xlu0 %666
      %668 = vrot.lane.b32.xlu0 %v616, 18
      %v669 = vpop.permute.xlu0 %668
      %670 = vrot.lane.b32.xlu0 %v626, 18
      %v671 = vpop.permute.xlu0 %670
      %672 = vrot.lane.b32.xlu0 %v628, 18
      %v673 = vpop.permute.xlu0 %672
      %674 = vrot.lane.b32.xlu0 %v630, 18
      %v675 = vpop.permute.xlu0 %674
      %676 = vrot.lane.b32.xlu0 %v632, 18
      %v677 = vpop.permute.xlu0 %676
      %678 = vrot.lane.b32.xlu0 %v634, 18
      %v679 = vpop.permute.xlu0 %678
      %680 = vrot.lane.b32.xlu0 %v636, 18
      %v681 = vpop.permute.xlu0 %680
      %682 = vrot.lane.b32.xlu0 %v638, 18
      %v683 = vpop.permute.xlu0 %682
      %684 = vrot.lane.b32.xlu0 %v640, 18
      %v685 = vpop.permute.xlu0 %684
      %686 = vrot.lane.b32.xlu0 %v646, 18
      %v687 = vpop.permute.xlu0 %686
      %688 = vrot.lane.b32.xlu0 %v648, 18
      %v689 = vpop.permute.xlu0 %688
      %690 = vrot.lane.b32.xlu0 %v650, 18
      %v691 = vpop.permute.xlu0 %690
      %692 = vrot.lane.b32.xlu0 %v652, 18
      %v693 = vpop.permute.xlu0 %692
      %v694 = vrot.slane %v655, 4
      %v695 = vrot.slane %v657, 4
      %v696 = vrot.slane %v659, 4
      %v697 = vrot.slane %v661, 4
      %v698 = vrot.slane %v663, 4
      %v699 = vrot.slane %v665, 4
      %v700 = vrot.slane %v667, 4
      %v701 = vrot.slane %v669, 4
      %v702 = vrot.slane %v671, 4
      %v703 = vrot.slane %v673, 4
      %v704 = vrot.slane %v675, 4
      %v705 = vrot.slane %v677, 4
      %v706 = vrot.slane %v679, 4
      %v707 = vrot.slane %v681, 4
      %v708 = vrot.slane %v683, 4
      %v709 = vrot.slane %v685, 4
      %v710 = vrot.slane %v687, 4
      %v711 = vrot.slane %v689, 4
      %v712 = vrot.slane %v691, 4
      %v713 = vrot.slane %v693, 4
      %v714 = vsel %vm502, %v694, %v695
      %vm715 = vcmask 146432
      %v716 = vsel %vm715, %v655, %v714
      %v717 = vsel %vm502, %v695, %v696
      %v718 = vsel %vm715, %v657, %v717
      %v719 = vsel %vm502, %v696, %v697
      %v720 = vsel %vm715, %v659, %v719
      %v721 = vsel %vm502, %v697, %v698
      %v722 = vsel %vm715, %v661, %v721
      %v723 = vsel %vm502, %v698, %v699
      %v724 = vsel %vm715, %v663, %v723
      %v725 = vsel %vm502, %v699, %v700
      %v726 = vsel %vm715, %v665, %v725
      %v727 = vsel %vm502, %v700, %v701
      %v728 = vsel %vm715, %v667, %v727
      %v729 = vsel %vm502, %v701, %v702
      %v730 = vsel %vm715, %v669, %v729
      %v731 = vsel %vm502, %v702, %v703
      %v732 = vsel %vm715, %v671, %v731
      %v733 = vsel %vm502, %v703, %v704
      %v734 = vsel %vm715, %v673, %v733
      %v735 = vsel %vm502, %v704, %v705
      %v736 = vsel %vm715, %v675, %v735
      %v737 = vsel %vm502, %v705, %v706
      %v738 = vsel %vm715, %v677, %v737
      %v739 = vsel %vm502, %v706, %v707
      %v740 = vsel %vm715, %v679, %v739
      %v741 = vsel %vm502, %v707, %v708
      %v742 = vsel %vm715, %v681, %v741
      %v743 = vsel %vm502, %v708, %v709
      %v744 = vsel %vm715, %v683, %v743
      %v745 = vsel %vm502, %v709, %v710
      %v746 = vsel %vm715, %v685, %v745
      %v747 = vsel %vm502, %v710, %v711
      %v748 = vsel %vm715, %v687, %v747
      %v749 = vsel %vm502, %v711, %v712
      %v750 = vsel %vm715, %v689, %v749
      %v751 = vsel %vm502, %v712, %v713
      %v752 = vsel %vm715, %v691, %v751
      %772 = vst [vmem:[#allocation3] sm:$0xcc] %v716
      %773 = vst [vmem:[#allocation3 + $0x8] sm:$0xcc] %v718
      %774 = vst [vmem:[#allocation3 + $0x10] sm:$0xcc] %v720
      %775 = vst [vmem:[#allocation3 + $0x18] sm:$0xcc] %v722
      %776 = vst [vmem:[#allocation3 + $0x20] sm:$0xcc] %v724
      %777 = vst [vmem:[#allocation3 + $0x28] sm:$0xcc] %v726
      %778 = vst [vmem:[#allocation3 + $0x30] sm:$0xcc] %v728
      %779 = vst [vmem:[#allocation3 + $0x38] sm:$0xcc] %v730
      %780 = vst [vmem:[#allocation3 + $0x40] sm:$0xcc] %v732
      %781 = vst [vmem:[#allocation3 + $0x48] sm:$0xcc] %v734
      %782 = vst [vmem:[#allocation3 + $0x50] sm:$0xcc] %v736
      %783 = vst [vmem:[#allocation3 + $0x58] sm:$0xcc] %v738
      %784 = vst [vmem:[#allocation3 + $0x60] sm:$0xcc] %v740
      %785 = vst [vmem:[#allocation3 + $0x68] sm:$0xcc] %v742
      %786 = vst [vmem:[#allocation3 + $0x70] sm:$0xcc] %v744
      %787 = vst [vmem:[#allocation3 + $0x78] sm:$0xcc] %v746
      %788 = vst [vmem:[#allocation3 + $0x80] sm:$0xcc] %v748
      %789 = vst [vmem:[#allocation3 + $0x88] sm:$0xcc] %v750
      %790 = vst [vmem:[#allocation3 + $0x90] sm:$0xcc] %v752
      %v791 = vld [vmem:[%s353] sm:$0xff]
      %v792 = vld [vmem:[%s353 + $0x8] sm:$0xff]
      %v793 = vld [vmem:[%s353 + $0x10] sm:$0xff]
      %v794 = vld [vmem:[%s353 + $0x18] sm:$0xff]
      %v795 = vld [vmem:[%s353 + $0x20] sm:$0xff]
      %v796 = vld [vmem:[%s353 + $0x28] sm:$0xff]
      %v797 = vld [vmem:[%s353 + $0x30] sm:$0xff]
      %v798 = vld [vmem:[%s353 + $0x38] sm:$0xff]
      %v799 = vld [vmem:[%s353 + $0x40] sm:$0xff]
      %v800 = vld [vmem:[%s353 + $0x48] sm:$0x3f]
      %802 = vst [vmem:[#allocation1] ss:$2 sm:$0xff] %v791
      %s804 = scalar_lea.vmem [#allocation1], 16
      %805 = vst [vmem:[%s804] ss:$2 sm:$0xff] %v792
      %s807 = scalar_lea.vmem [#allocation1], 32
      %808 = vst [vmem:[%s807] ss:$2 sm:$0xff] %v793
      %s810 = scalar_lea.vmem [#allocation1], 48
      %811 = vst [vmem:[%s810] ss:$2 sm:$0xff] %v794
      %v812 = vld.sshfl [vmem:[#allocation1] sm:$0xff pattern:$0x75643120]
      %v814 = vld.sshfl [vmem:[#allocation1 + $0x8] sm:$0xff pattern:$0x75643120]
      %v816 = vld.sshfl [vmem:[#allocation1 + $0x10] sm:$0xff pattern:$0x75643120]
      %v818 = vld.sshfl [vmem:[#allocation1 + $0x18] sm:$0xff pattern:$0x75643120]
      %v820 = vld.sshfl [vmem:[#allocation1 + $0x20] sm:$0xff pattern:$0x75643120]
      %v822 = vld.sshfl [vmem:[#allocation1 + $0x28] sm:$0xff pattern:$0x75643120]
      %v824 = vld.sshfl [vmem:[#allocation1 + $0x30] sm:$0xff pattern:$0x75643120]
      %v826 = vld.sshfl [vmem:[#allocation1 + $0x38] sm:$0xff pattern:$0x75643120]
      %829 = vst [vmem:[#allocation1] ss:$2 sm:$0xff] %v795
      %831 = vst [vmem:[%s804] ss:$2 sm:$0xff] %v796
      %833 = vst [vmem:[%s807] ss:$2 sm:$0xff] %v797
      %835 = vst [vmem:[%s810] ss:$2 sm:$0xff] %v798
      %v836 = vld.sshfl [vmem:[#allocation1] sm:$0xff pattern:$0x75643120]
      %v838 = vld.sshfl [vmem:[#allocation1 + $0x8] sm:$0xff pattern:$0x75643120]
      %v840 = vld.sshfl [vmem:[#allocation1 + $0x10] sm:$0xff pattern:$0x75643120]
      %v842 = vld.sshfl [vmem:[#allocation1 + $0x18] sm:$0xff pattern:$0x75643120]
      %v844 = vld.sshfl [vmem:[#allocation1 + $0x20] sm:$0xff pattern:$0x75643120]
      %v846 = vld.sshfl [vmem:[#allocation1 + $0x28] sm:$0xff pattern:$0x75643120]
      %v848 = vld.sshfl [vmem:[#allocation1 + $0x30] sm:$0xff pattern:$0x75643120]
      %v850 = vld.sshfl [vmem:[#allocation1 + $0x38] sm:$0xff pattern:$0x75643120]
      %853 = vst [vmem:[#allocation1] ss:$2 sm:$0xff] %v799
      %855 = vst [vmem:[%s804] ss:$2 sm:$0xff] %v800
      %v856 = vld.sshfl [vmem:[#allocation1] sm:$0xff pattern:$0x75643120]
      %v858 = vld.sshfl [vmem:[#allocation1 + $0x8] sm:$0xff pattern:$0x75643120]
      %v860 = vld.sshfl [vmem:[#allocation1 + $0x10] sm:$0xff pattern:$0x75643120]
      %v862 = vld.sshfl [vmem:[#allocation1 + $0x18] sm:$0xff pattern:$0x75643120]
      %864 = vrot.lane.b32.xlu0 %v812, 17
      %v865 = vpop.permute.xlu0 %864
      %866 = vrot.lane.b32.xlu0 %v814, 17
      %v867 = vpop.permute.xlu0 %866
      %868 = vrot.lane.b32.xlu0 %v816, 17
      %v869 = vpop.permute.xlu0 %868
      %870 = vrot.lane.b32.xlu0 %v818, 17
      %v871 = vpop.permute.xlu0 %870
      %872 = vrot.lane.b32.xlu0 %v820, 17
      %v873 = vpop.permute.xlu0 %872
      %874 = vrot.lane.b32.xlu0 %v822, 17
      %v875 = vpop.permute.xlu0 %874
      %876 = vrot.lane.b32.xlu0 %v824, 17
      %v877 = vpop.permute.xlu0 %876
      %878 = vrot.lane.b32.xlu0 %v826, 17
      %v879 = vpop.permute.xlu0 %878
      %880 = vrot.lane.b32.xlu0 %v836, 17
      %v881 = vpop.permute.xlu0 %880
      %882 = vrot.lane.b32.xlu0 %v838, 17
      %v883 = vpop.permute.xlu0 %882
      %884 = vrot.lane.b32.xlu0 %v840, 17
      %v885 = vpop.permute.xlu0 %884
      %886 = vrot.lane.b32.xlu0 %v842, 17
      %v887 = vpop.permute.xlu0 %886
      %888 = vrot.lane.b32.xlu0 %v844, 17
      %v889 = vpop.permute.xlu0 %888
      %890 = vrot.lane.b32.xlu0 %v846, 17
      %v891 = vpop.permute.xlu0 %890
      %892 = vrot.lane.b32.xlu0 %v848, 17
      %v893 = vpop.permute.xlu0 %892
      %894 = vrot.lane.b32.xlu0 %v850, 17
      %v895 = vpop.permute.xlu0 %894
      %896 = vrot.lane.b32.xlu0 %v856, 17
      %v897 = vpop.permute.xlu0 %896
      %898 = vrot.lane.b32.xlu0 %v858, 17
      %v899 = vpop.permute.xlu0 %898
      %900 = vrot.lane.b32.xlu0 %v860, 17
      %v901 = vpop.permute.xlu0 %900
      %902 = vrot.lane.b32.xlu0 %v862, 17
      %v903 = vpop.permute.xlu0 %902
      %v904 = vrot.slane %v865, 4
      %v905 = vrot.slane %v867, 4
      %v906 = vrot.slane %v869, 4
      %v907 = vrot.slane %v871, 4
      %v908 = vrot.slane %v873, 4
      %v909 = vrot.slane %v875, 4
      %v910 = vrot.slane %v877, 4
      %v911 = vrot.slane %v879, 4
      %v912 = vrot.slane %v881, 4
      %v913 = vrot.slane %v883, 4
      %v914 = vrot.slane %v885, 4
      %v915 = vrot.slane %v887, 4
      %v916 = vrot.slane %v889, 4
      %v917 = vrot.slane %v891, 4
      %v918 = vrot.slane %v893, 4
      %v919 = vrot.slane %v895, 4
      %v920 = vrot.slane %v897, 4
      %v921 = vrot.slane %v899, 4
      %v922 = vrot.slane %v901, 4
      %v923 = vrot.slane %v903, 4
      %v924 = vsel %vm502, %v904, %v905
      %vm925 = vcmask 138240
      %v926 = vsel %vm925, %v865, %v924
      %v927 = vsel %vm502, %v905, %v906
      %v928 = vsel %vm925, %v867, %v927
      %v929 = vsel %vm502, %v906, %v907
      %v930 = vsel %vm925, %v869, %v929
      %v931 = vsel %vm502, %v907, %v908
      %v932 = vsel %vm925, %v871, %v931
      %v933 = vsel %vm502, %v908, %v909
      %v934 = vsel %vm925, %v873, %v933
      %v935 = vsel %vm502, %v909, %v910
      %v936 = vsel %vm925, %v875, %v935
      %v937 = vsel %vm502, %v910, %v911
      %v938 = vsel %vm925, %v877, %v937
      %v939 = vsel %vm502, %v911, %v912
      %v940 = vsel %vm925, %v879, %v939
      %v941 = vsel %vm502, %v912, %v913
      %v942 = vsel %vm925, %v881, %v941
      %v943 = vsel %vm502, %v913, %v914
      %v944 = vsel %vm925, %v883, %v943
      %v945 = vsel %vm502, %v914, %v915
      %v946 = vsel %vm925, %v885, %v945
      %v947 = vsel %vm502, %v915, %v916
      %v948 = vsel %vm925, %v887, %v947
      %v949 = vsel %vm502, %v916, %v917
      %v950 = vsel %vm925, %v889, %v949
      %v951 = vsel %vm502, %v917, %v918
      %v952 = vsel %vm925, %v891, %v951
      %v953 = vsel %vm502, %v918, %v919
      %v954 = vsel %vm925, %v893, %v953
      %v955 = vsel %vm502, %v919, %v920
      %v956 = vsel %vm925, %v895, %v955
      %v957 = vsel %vm502, %v920, %v921
      %v958 = vsel %vm925, %v897, %v957
      %v959 = vsel %vm502, %v921, %v922
      %v960 = vsel %vm925, %v899, %v959
      %v961 = vsel %vm502, %v922, %v923
      %v962 = vsel %vm925, %v901, %v961
      %982 = vst [vmem:[#allocation3 + $0x98] sm:$0x33] %v926
      %983 = vst [vmem:[#allocation3 + $0xa0] sm:$0x33] %v928
      %984 = vst [vmem:[#allocation3 + $0xa8] sm:$0x33] %v930
      %985 = vst [vmem:[#allocation3 + $0xb0] sm:$0x33] %v932
      %986 = vst [vmem:[#allocation3 + $0xb8] sm:$0x33] %v934
      %987 = vst [vmem:[#allocation3 + $0xc0] sm:$0x33] %v936
      %988 = vst [vmem:[#allocation3 + $0xc8] sm:$0x33] %v938
      %989 = vst [vmem:[#allocation3 + $0xd0] sm:$0x33] %v940
      %990 = vst [vmem:[#allocation3 + $0xd8] sm:$0x33] %v942
      %991 = vst [vmem:[#allocation3 + $0xe0] sm:$0x33] %v944
      %992 = vst [vmem:[#allocation3 + $0xe8] sm:$0x33] %v946
      %993 = vst [vmem:[#allocation3 + $0xf0] sm:$0x33] %v948
      %994 = vst [vmem:[#allocation3 + $0xf8] sm:$0x33] %v950
      %995 = vst [vmem:[#allocation3 + $0x100] sm:$0x33] %v952
      %996 = vst [vmem:[#allocation3 + $0x108] sm:$0x33] %v954
      %997 = vst [vmem:[#allocation3 + $0x110] sm:$0x33] %v956
      %998 = vst [vmem:[#allocation3 + $0x118] sm:$0x33] %v958
      %999 = vst [vmem:[#allocation3 + $0x120] sm:$0x33] %v960
      %1000 = vst [vmem:[#allocation3 + $0x128] sm:$0x33] %v962
      %v1001 = vld [vmem:[%s353] sm:$0xff]
      %v1002 = vld [vmem:[%s353 + $0x8] sm:$0xff]
      %v1003 = vld [vmem:[%s353 + $0x10] sm:$0xff]
      %v1004 = vld [vmem:[%s353 + $0x18] sm:$0xff]
      %v1005 = vld [vmem:[%s353 + $0x20] sm:$0xff]
      %v1006 = vld [vmem:[%s353 + $0x28] sm:$0xff]
      %v1007 = vld [vmem:[%s353 + $0x30] sm:$0xff]
      %v1008 = vld [vmem:[%s353 + $0x38] sm:$0xff]
      %v1009 = vld [vmem:[%s353 + $0x40] sm:$0xff]
      %v1010 = vld [vmem:[%s353 + $0x48] sm:$0x3f]
      %s1012 = scalar_lea.vmem [#allocation1], 1
      %1013 = vst [vmem:[%s1012] ss:$2 sm:$0xff] %v1001
      %s1015 = scalar_lea.vmem [#allocation1], 17
      %1016 = vst [vmem:[%s1015] ss:$2 sm:$0xff] %v1002
      %s1018 = scalar_lea.vmem [#allocation1], 33
      %1019 = vst [vmem:[%s1018] ss:$2 sm:$0xff] %v1003
      %s1021 = scalar_lea.vmem [#allocation1], 49
      %1022 = vst [vmem:[%s1021] ss:$2 sm:$0xff] %v1004
      %v1023 = vld.sshfl [vmem:[#allocation1] sm:$0xff pattern:$0x75643120]
      %v1025 = vld.sshfl [vmem:[#allocation1 + $0x8] sm:$0xff pattern:$0x75643120]
      %v1027 = vld.sshfl [vmem:[#allocation1 + $0x10] sm:$0xff pattern:$0x75643120]
      %v1029 = vld.sshfl [vmem:[#allocation1 + $0x18] sm:$0xff pattern:$0x75643120]
      %v1031 = vld.sshfl [vmem:[#allocation1 + $0x20] sm:$0xff pattern:$0x75643120]
      %v1033 = vld.sshfl [vmem:[#allocation1 + $0x28] sm:$0xff pattern:$0x75643120]
      %v1035 = vld.sshfl [vmem:[#allocation1 + $0x30] sm:$0xff pattern:$0x75643120]
      %v1037 = vld.sshfl [vmem:[#allocation1 + $0x38] sm:$0xff pattern:$0x75643120]
      %1040 = vst [vmem:[%s1012] ss:$2 sm:$0xff] %v1005
      %1042 = vst [vmem:[%s1015] ss:$2 sm:$0xff] %v1006
      %1044 = vst [vmem:[%s1018] ss:$2 sm:$0xff] %v1007
      %1046 = vst [vmem:[%s1021] ss:$2 sm:$0xff] %v1008
      %v1047 = vld.sshfl [vmem:[#allocation1] sm:$0xff pattern:$0x75643120]
      %v1049 = vld.sshfl [vmem:[#allocation1 + $0x8] sm:$0xff pattern:$0x75643120]
      %v1051 = vld.sshfl [vmem:[#allocation1 + $0x10] sm:$0xff pattern:$0x75643120]
      %v1053 = vld.sshfl [vmem:[#allocation1 + $0x18] sm:$0xff pattern:$0x75643120]
      %v1055 = vld.sshfl [vmem:[#allocation1 + $0x20] sm:$0xff pattern:$0x75643120]
      %v1057 = vld.sshfl [vmem:[#allocation1 + $0x28] sm:$0xff pattern:$0x75643120]
      %v1059 = vld.sshfl [vmem:[#allocation1 + $0x30] sm:$0xff pattern:$0x75643120]
      %v1061 = vld.sshfl [vmem:[#allocation1 + $0x38] sm:$0xff pattern:$0x75643120]
      %1064 = vst [vmem:[%s1012] ss:$2 sm:$0xff] %v1009
      %1066 = vst [vmem:[%s1015] ss:$2 sm:$0xff] %v1010
      %v1067 = vld.sshfl [vmem:[#allocation1] sm:$0xff pattern:$0x75643120]
      %v1069 = vld.sshfl [vmem:[#allocation1 + $0x8] sm:$0xff pattern:$0x75643120]
      %v1071 = vld.sshfl [vmem:[#allocation1 + $0x10] sm:$0xff pattern:$0x75643120]
      %v1073 = vld.sshfl [vmem:[#allocation1 + $0x18] sm:$0xff pattern:$0x75643120]
      %1075 = vrot.lane.b32.xlu0 %v1023, 1
      %v1076 = vpop.permute.xlu0 %1075
      %1077 = vrot.lane.b32.xlu0 %v1025, 1
      %v1078 = vpop.permute.xlu0 %1077
      %1079 = vrot.lane.b32.xlu0 %v1027, 1
      %v1080 = vpop.permute.xlu0 %1079
      %1081 = vrot.lane.b32.xlu0 %v1029, 1
      %v1082 = vpop.permute.xlu0 %1081
      %1083 = vrot.lane.b32.xlu0 %v1031, 1
      %v1084 = vpop.permute.xlu0 %1083
      %1085 = vrot.lane.b32.xlu0 %v1033, 1
      %v1086 = vpop.permute.xlu0 %1085
      %1087 = vrot.lane.b32.xlu0 %v1035, 1
      %v1088 = vpop.permute.xlu0 %1087
      %1089 = vrot.lane.b32.xlu0 %v1037, 1
      %v1090 = vpop.permute.xlu0 %1089
      %1091 = vrot.lane.b32.xlu0 %v1047, 1
      %v1092 = vpop.permute.xlu0 %1091
      %1093 = vrot.lane.b32.xlu0 %v1049, 1
      %v1094 = vpop.permute.xlu0 %1093
      %1095 = vrot.lane.b32.xlu0 %v1051, 1
      %v1096 = vpop.permute.xlu0 %1095
      %1097 = vrot.lane.b32.xlu0 %v1053, 1
      %v1098 = vpop.permute.xlu0 %1097
      %1099 = vrot.lane.b32.xlu0 %v1055, 1
      %v1100 = vpop.permute.xlu0 %1099
      %1101 = vrot.lane.b32.xlu0 %v1057, 1
      %v1102 = vpop.permute.xlu0 %1101
      %1103 = vrot.lane.b32.xlu0 %v1059, 1
      %v1104 = vpop.permute.xlu0 %1103
      %1105 = vrot.lane.b32.xlu0 %v1061, 1
      %v1106 = vpop.permute.xlu0 %1105
      %1107 = vrot.lane.b32.xlu0 %v1067, 1
      %v1108 = vpop.permute.xlu0 %1107
      %1109 = vrot.lane.b32.xlu0 %v1069, 1
      %v1110 = vpop.permute.xlu0 %1109
      %1111 = vrot.lane.b32.xlu0 %v1071, 1
      %v1112 = vpop.permute.xlu0 %1111
      %1113 = vrot.lane.b32.xlu0 %v1073, 1
      %v1114 = vpop.permute.xlu0 %1113
      %v1115 = vrot.slane %v1076, 4
      %v1116 = vrot.slane %v1078, 4
      %v1117 = vrot.slane %v1080, 4
      %v1118 = vrot.slane %v1082, 4
      %v1119 = vrot.slane %v1084, 4
      %v1120 = vrot.slane %v1086, 4
      %v1121 = vrot.slane %v1088, 4
      %v1122 = vrot.slane %v1090, 4
      %v1123 = vrot.slane %v1092, 4
      %v1124 = vrot.slane %v1094, 4
      %v1125 = vrot.slane %v1096, 4
      %v1126 = vrot.slane %v1098, 4
      %v1127 = vrot.slane %v1100, 4
      %v1128 = vrot.slane %v1102, 4
      %v1129 = vrot.slane %v1104, 4
      %v1130 = vrot.slane %v1106, 4
      %v1131 = vrot.slane %v1108, 4
      %v1132 = vrot.slane %v1110, 4
      %v1133 = vrot.slane %v1112, 4
      %v1134 = vrot.slane %v1114, 4
      %v1135 = vsel %vm502, %v1115, %v1116
      %vm1136 = vcmask 7168
      %v1137 = vsel %vm1136, %v1076, %v1135
      %v1138 = vsel %vm502, %v1116, %v1117
      %v1139 = vsel %vm1136, %v1078, %v1138
      %v1140 = vsel %vm502, %v1117, %v1118
      %v1141 = vsel %vm1136, %v1080, %v1140
      %v1142 = vsel %vm502, %v1118, %v1119
      %v1143 = vsel %vm1136, %v1082, %v1142
      %v1144 = vsel %vm502, %v1119, %v1120
      %v1145 = vsel %vm1136, %v1084, %v1144
      %v1146 = vsel %vm502, %v1120, %v1121
      %v1147 = vsel %vm1136, %v1086, %v1146
      %v1148 = vsel %vm502, %v1121, %v1122
      %v1149 = vsel %vm1136, %v1088, %v1148
      %v1150 = vsel %vm502, %v1122, %v1123
      %v1151 = vsel %vm1136, %v1090, %v1150
      %v1152 = vsel %vm502, %v1123, %v1124
      %v1153 = vsel %vm1136, %v1092, %v1152
      %v1154 = vsel %vm502, %v1124, %v1125
      %v1155 = vsel %vm1136, %v1094, %v1154
      %v1156 = vsel %vm502, %v1125, %v1126
      %v1157 = vsel %vm1136, %v1096, %v1156
      %v1158 = vsel %vm502, %v1126, %v1127
      %v1159 = vsel %vm1136, %v1098, %v1158
      %v1160 = vsel %vm502, %v1127, %v1128
      %v1161 = vsel %vm1136, %v1100, %v1160
      %v1162 = vsel %vm502, %v1128, %v1129
      %v1163 = vsel %vm1136, %v1102, %v1162
      %v1164 = vsel %vm502, %v1129, %v1130
      %v1165 = vsel %vm1136, %v1104, %v1164
      %v1166 = vsel %vm502, %v1130, %v1131
      %v1167 = vsel %vm1136, %v1106, %v1166
      %v1168 = vsel %vm502, %v1131, %v1132
      %v1169 = vsel %vm1136, %v1108, %v1168
      %v1170 = vsel %vm502, %v1132, %v1133
      %v1171 = vsel %vm1136, %v1110, %v1170
      %v1172 = vsel %vm502, %v1133, %v1134
      %v1173 = vsel %vm1136, %v1112, %v1172
      %1193 = vst [vmem:[#allocation3 + $0x98] sm:$0xcc] %v1137
      %1194 = vst [vmem:[#allocation3 + $0xa0] sm:$0xcc] %v1139
      %1195 = vst [vmem:[#allocation3 + $0xa8] sm:$0xcc] %v1141
      %1196 = vst [vmem:[#allocation3 + $0xb0] sm:$0xcc] %v1143
      %1197 = vst [vmem:[#allocation3 + $0xb8] sm:$0xcc] %v1145
      %1198 = vst [vmem:[#allocation3 + $0xc0] sm:$0xcc] %v1147
      %1199 = vst [vmem:[#allocation3 + $0xc8] sm:$0xcc] %v1149
      %1200 = vst [vmem:[#allocation3 + $0xd0] sm:$0xcc] %v1151
      %1201 = vst [vmem:[#allocation3 + $0xd8] sm:$0xcc] %v1153
      %1202 = vst [vmem:[#allocation3 + $0xe0] sm:$0xcc] %v1155
      %1203 = vst [vmem:[#allocation3 + $0xe8] sm:$0xcc] %v1157
      %1204 = vst [vmem:[#allocation3 + $0xf0] sm:$0xcc] %v1159
      %1205 = vst [vmem:[#allocation3 + $0xf8] sm:$0xcc] %v1161
      %1206 = vst [vmem:[#allocation3 + $0x100] sm:$0xcc] %v1163
      %1207 = vst [vmem:[#allocation3 + $0x108] sm:$0xcc] %v1165
      %1208 = vst [vmem:[#allocation3 + $0x110] sm:$0xcc] %v1167
      %1209 = vst [vmem:[#allocation3 + $0x118] sm:$0xcc] %v1169
      %1210 = vst [vmem:[#allocation3 + $0x120] sm:$0xcc] %v1171
      %1211 = vst [vmem:[#allocation3 + $0x128] sm:$0xcc] %v1173
      %v1212 = vld [vmem:[%s353 + $0x2] sm:$0xff]
      %v1213 = vld [vmem:[%s353 + $0xa] sm:$0xff]
      %v1214 = vld [vmem:[%s353 + $0x12] sm:$0xff]
      %v1215 = vld [vmem:[%s353 + $0x1a] sm:$0xff]
      %v1216 = vld [vmem:[%s353 + $0x22] sm:$0xff]
      %v1217 = vld [vmem:[%s353 + $0x2a] sm:$0xff]
      %v1218 = vld [vmem:[%s353 + $0x32] sm:$0xff]
      %v1219 = vld [vmem:[%s353 + $0x3a] sm:$0xff]
      %v1220 = vld [vmem:[%s353 + $0x42] sm:$0xff]
      %v1221 = vld [vmem:[%s353 + $0x4a] sm:$0xf]
      %1223 = vst [vmem:[#allocation1] ss:$2 sm:$0xff] %v1212
      %s1225 = scalar_lea.vmem [#allocation1], 16
      %1226 = vst [vmem:[%s1225] ss:$2 sm:$0xff] %v1213
      %s1228 = scalar_lea.vmem [#allocation1], 32
      %1229 = vst [vmem:[%s1228] ss:$2 sm:$0xff] %v1214
      %s1231 = scalar_lea.vmem [#allocation1], 48
      %1232 = vst [vmem:[%s1231] ss:$2 sm:$0xff] %v1215
      %v1233 = vld.sshfl [vmem:[#allocation1] sm:$0xff pattern:$0x75643120]
      %v1234 = vld.sshfl [vmem:[#allocation1 + $0x8] sm:$0xff pattern:$0x75643120]
      %v1235 = vld.sshfl [vmem:[#allocation1 + $0x10] sm:$0xff pattern:$0x75643120]
      %v1236 = vld.sshfl [vmem:[#allocation1 + $0x18] sm:$0xff pattern:$0x75643120]
      %v1237 = vld.sshfl [vmem:[#allocation1 + $0x20] sm:$0xff pattern:$0x75643120]
      %v1238 = vld.sshfl [vmem:[#allocation1 + $0x28] sm:$0xff pattern:$0x75643120]
      %v1239 = vld.sshfl [vmem:[#allocation1 + $0x30] sm:$0xff pattern:$0x75643120]
      %v1240 = vld.sshfl [vmem:[#allocation1 + $0x38] sm:$0xff pattern:$0x75643120]
      %1242 = vst [vmem:[#allocation1] ss:$2 sm:$0xff] %v1216
      %1244 = vst [vmem:[%s1225] ss:$2 sm:$0xff] %v1217
      %1246 = vst [vmem:[%s1228] ss:$2 sm:$0xff] %v1218
      %1248 = vst [vmem:[%s1231] ss:$2 sm:$0xff] %v1219
      %v1249 = vld.sshfl [vmem:[#allocation1] sm:$0xff pattern:$0x75643120]
      %v1250 = vld.sshfl [vmem:[#allocation1 + $0x8] sm:$0xff pattern:$0x75643120]
      %v1251 = vld.sshfl [vmem:[#allocation1 + $0x10] sm:$0xff pattern:$0x75643120]
      %v1252 = vld.sshfl [vmem:[#allocation1 + $0x18] sm:$0xff pattern:$0x75643120]
      %v1253 = vld.sshfl [vmem:[#allocation1 + $0x20] sm:$0xff pattern:$0x75643120]
      %v1254 = vld.sshfl [vmem:[#allocation1 + $0x28] sm:$0xff pattern:$0x75643120]
      %v1255 = vld.sshfl [vmem:[#allocation1 + $0x30] sm:$0xff pattern:$0x75643120]
      %v1256 = vld.sshfl [vmem:[#allocation1 + $0x38] sm:$0xff pattern:$0x75643120]
      %1258 = vst [vmem:[#allocation1] ss:$2 sm:$0xff] %v1220
      %1260 = vst [vmem:[%s1225] ss:$2 sm:$0xff] %v1221
      %v1261 = vld.sshfl [vmem:[#allocation1] sm:$0xff pattern:$0x75643120]
      %v1262 = vld.sshfl [vmem:[#allocation1 + $0x8] sm:$0xff pattern:$0x75643120]
      %v1263 = vld.sshfl [vmem:[#allocation1 + $0x10] sm:$0xff pattern:$0x75643120]
      %1283 = vst [vmem:[#allocation3 + $0x130] sm:$0x33] %v1233
      %1284 = vst [vmem:[#allocation3 + $0x138] sm:$0x33] %v1234
      %1285 = vst [vmem:[#allocation3 + $0x140] sm:$0x33] %v1235
      %1286 = vst [vmem:[#allocation3 + $0x148] sm:$0x33] %v1236
      %1287 = vst [vmem:[#allocation3 + $0x150] sm:$0x33] %v1237
      %1288 = vst [vmem:[#allocation3 + $0x158] sm:$0x33] %v1238
      %1289 = vst [vmem:[#allocation3 + $0x160] sm:$0x33] %v1239
      %1290 = vst [vmem:[#allocation3 + $0x168] sm:$0x33] %v1240
      %1291 = vst [vmem:[#allocation3 + $0x170] sm:$0x33] %v1249
      %1292 = vst [vmem:[#allocation3 + $0x178] sm:$0x33] %v1250
      %1293 = vst [vmem:[#allocation3 + $0x180] sm:$0x33] %v1251
      %1294 = vst [vmem:[#allocation3 + $0x188] sm:$0x33] %v1252
      %1295 = vst [vmem:[#allocation3 + $0x190] sm:$0x33] %v1253
      %1296 = vst [vmem:[#allocation3 + $0x198] sm:$0x33] %v1254
      %1297 = vst [vmem:[#allocation3 + $0x1a0] sm:$0x33] %v1255
      %1298 = vst [vmem:[#allocation3 + $0x1a8] sm:$0x33] %v1256
      %1299 = vst [vmem:[#allocation3 + $0x1b0] sm:$0x33] %v1261
      %1300 = vst [vmem:[#allocation3 + $0x1b8] sm:$0x33] %v1262
      %1301 = vst [vmem:[#allocation3 + $0x1c0] sm:$0x33] %v1263
      %v1302 = vld [vmem:[%s353 + $0x2] sm:$0xff]
      %v1303 = vld [vmem:[%s353 + $0xa] sm:$0xff]
      %v1304 = vld [vmem:[%s353 + $0x12] sm:$0xff]
      %v1305 = vld [vmem:[%s353 + $0x1a] sm:$0xff]
      %v1306 = vld [vmem:[%s353 + $0x22] sm:$0xff]
      %v1307 = vld [vmem:[%s353 + $0x2a] sm:$0xff]
      %v1308 = vld [vmem:[%s353 + $0x32] sm:$0xff]
      %v1309 = vld [vmem:[%s353 + $0x3a] sm:$0xff]
      %v1310 = vld [vmem:[%s353 + $0x42] sm:$0xff]
      %v1311 = vld [vmem:[%s353 + $0x4a] sm:$0x3f]
      %s1313 = scalar_lea.vmem [#allocation1], 1
      %1314 = vst [vmem:[%s1313] ss:$2 sm:$0xff] %v1302
      %s1316 = scalar_lea.vmem [#allocation1], 17
      %1317 = vst [vmem:[%s1316] ss:$2 sm:$0xff] %v1303
      %s1319 = scalar_lea.vmem [#allocation1], 33
      %1320 = vst [vmem:[%s1319] ss:$2 sm:$0xff] %v1304
      %s1322 = scalar_lea.vmem [#allocation1], 49
      %1323 = vst [vmem:[%s1322] ss:$2 sm:$0xff] %v1305
      %v1324 = vld.sshfl [vmem:[#allocation1] sm:$0xff pattern:$0x75643120]
      %v1326 = vld.sshfl [vmem:[#allocation1 + $0x8] sm:$0xff pattern:$0x75643120]
      %v1328 = vld.sshfl [vmem:[#allocation1 + $0x10] sm:$0xff pattern:$0x75643120]
      %v1330 = vld.sshfl [vmem:[#allocation1 + $0x18] sm:$0xff pattern:$0x75643120]
      %v1332 = vld.sshfl [vmem:[#allocation1 + $0x20] sm:$0xff pattern:$0x75643120]
      %v1334 = vld.sshfl [vmem:[#allocation1 + $0x28] sm:$0xff pattern:$0x75643120]
      %v1336 = vld.sshfl [vmem:[#allocation1 + $0x30] sm:$0xff pattern:$0x75643120]
      %v1338 = vld.sshfl [vmem:[#allocation1 + $0x38] sm:$0xff pattern:$0x75643120]
      %1341 = vst [vmem:[%s1313] ss:$2 sm:$0xff] %v1306
      %1343 = vst [vmem:[%s1316] ss:$2 sm:$0xff] %v1307
      %1345 = vst [vmem:[%s1319] ss:$2 sm:$0xff] %v1308
      %1347 = vst [vmem:[%s1322] ss:$2 sm:$0xff] %v1309
      %v1348 = vld.sshfl [vmem:[#allocation1] sm:$0xff pattern:$0x75643120]
      %v1350 = vld.sshfl [vmem:[#allocation1 + $0x8] sm:$0xff pattern:$0x75643120]
      %v1352 = vld.sshfl [vmem:[#allocation1 + $0x10] sm:$0xff pattern:$0x75643120]
      %v1354 = vld.sshfl [vmem:[#allocation1 + $0x18] sm:$0xff pattern:$0x75643120]
      %v1356 = vld.sshfl [vmem:[#allocation1 + $0x20] sm:$0xff pattern:$0x75643120]
      %v1358 = vld.sshfl [vmem:[#allocation1 + $0x28] sm:$0xff pattern:$0x75643120]
      %v1360 = vld.sshfl [vmem:[#allocation1 + $0x30] sm:$0xff pattern:$0x75643120]
      %v1362 = vld.sshfl [vmem:[#allocation1 + $0x38] sm:$0xff pattern:$0x75643120]
      %1365 = vst [vmem:[%s1313] ss:$2 sm:$0xff] %v1310
      %1367 = vst [vmem:[%s1316] ss:$2 sm:$0xff] %v1311
      %v1368 = vld.sshfl [vmem:[#allocation1] sm:$0xff pattern:$0x75643120]
      %v1370 = vld.sshfl [vmem:[#allocation1 + $0x8] sm:$0xff pattern:$0x75643120]
      %v1372 = vld.sshfl [vmem:[#allocation1 + $0x10] sm:$0xff pattern:$0x75643120]
      %v1374 = vld.sshfl [vmem:[#allocation1 + $0x18] sm:$0xff pattern:$0x75643120]
      %1376 = vrot.lane.b32.xlu0 %v1324, 127
      %v1377 = vpop.permute.xlu0 %1376
      %1378 = vrot.lane.b32.xlu0 %v1326, 127
      %v1379 = vpop.permute.xlu0 %1378
      %1380 = vrot.lane.b32.xlu0 %v1328, 127
      %v1381 = vpop.permute.xlu0 %1380
      %1382 = vrot.lane.b32.xlu0 %v1330, 127
      %v1383 = vpop.permute.xlu0 %1382
      %1384 = vrot.lane.b32.xlu0 %v1332, 127
      %v1385 = vpop.permute.xlu0 %1384
      %1386 = vrot.lane.b32.xlu0 %v1334, 127
      %v1387 = vpop.permute.xlu0 %1386
      %1388 = vrot.lane.b32.xlu0 %v1336, 127
      %v1389 = vpop.permute.xlu0 %1388
      %1390 = vrot.lane.b32.xlu0 %v1338, 127
      %v1391 = vpop.permute.xlu0 %1390
      %1392 = vrot.lane.b32.xlu0 %v1348, 127
      %v1393 = vpop.permute.xlu0 %1392
      %1394 = vrot.lane.b32.xlu0 %v1350, 127
      %v1395 = vpop.permute.xlu0 %1394
      %1396 = vrot.lane.b32.xlu0 %v1352, 127
      %v1397 = vpop.permute.xlu0 %1396
      %1398 = vrot.lane.b32.xlu0 %v1354, 127
      %v1399 = vpop.permute.xlu0 %1398
      %1400 = vrot.lane.b32.xlu0 %v1356, 127
      %v1401 = vpop.permute.xlu0 %1400
      %1402 = vrot.lane.b32.xlu0 %v1358, 127
      %v1403 = vpop.permute.xlu0 %1402
      %1404 = vrot.lane.b32.xlu0 %v1360, 127
      %v1405 = vpop.permute.xlu0 %1404
      %1406 = vrot.lane.b32.xlu0 %v1362, 127
      %v1407 = vpop.permute.xlu0 %1406
      %1408 = vrot.lane.b32.xlu0 %v1368, 127
      %v1409 = vpop.permute.xlu0 %1408
      %1410 = vrot.lane.b32.xlu0 %v1370, 127
      %v1411 = vpop.permute.xlu0 %1410
      %1412 = vrot.lane.b32.xlu0 %v1372, 127
      %v1413 = vpop.permute.xlu0 %1412
      %1414 = vrot.lane.b32.xlu0 %v1374, 127
      %v1415 = vpop.permute.xlu0 %1414
      %v1416 = vrot.slane %v1377, 4
      %v1417 = vrot.slane %v1379, 4
      %v1418 = vrot.slane %v1381, 4
      %v1419 = vrot.slane %v1383, 4
      %v1420 = vrot.slane %v1385, 4
      %v1421 = vrot.slane %v1387, 4
      %v1422 = vrot.slane %v1389, 4
      %v1423 = vrot.slane %v1391, 4
      %v1424 = vrot.slane %v1393, 4
      %v1425 = vrot.slane %v1395, 4
      %v1426 = vrot.slane %v1397, 4
      %v1427 = vrot.slane %v1399, 4
      %v1428 = vrot.slane %v1401, 4
      %v1429 = vrot.slane %v1403, 4
      %v1430 = vrot.slane %v1405, 4
      %v1431 = vrot.slane %v1407, 4
      %v1432 = vrot.slane %v1409, 4
      %v1433 = vrot.slane %v1411, 4
      %v1434 = vrot.slane %v1413, 4
      %v1435 = vrot.slane %v1415, 4
      %v1436 = vsel %vm502, %v1416, %v1417
      %vm1437 = vcmask 1039360
      %v1438 = vsel %vm1437, %v1377, %v1436
      %v1439 = vsel %vm502, %v1417, %v1418
      %v1440 = vsel %vm1437, %v1379, %v1439
      %v1441 = vsel %vm502, %v1418, %v1419
      %v1442 = vsel %vm1437, %v1381, %v1441
      %v1443 = vsel %vm502, %v1419, %v1420
      %v1444 = vsel %vm1437, %v1383, %v1443
      %v1445 = vsel %vm502, %v1420, %v1421
      %v1446 = vsel %vm1437, %v1385, %v1445
      %v1447 = vsel %vm502, %v1421, %v1422
      %v1448 = vsel %vm1437, %v1387, %v1447
      %v1449 = vsel %vm502, %v1422, %v1423
      %v1450 = vsel %vm1437, %v1389, %v1449
      %v1451 = vsel %vm502, %v1423, %v1424
      %v1452 = vsel %vm1437, %v1391, %v1451
      %v1453 = vsel %vm502, %v1424, %v1425
      %v1454 = vsel %vm1437, %v1393, %v1453
      %v1455 = vsel %vm502, %v1425, %v1426
      %v1456 = vsel %vm1437, %v1395, %v1455
      %v1457 = vsel %vm502, %v1426, %v1427
      %v1458 = vsel %vm1437, %v1397, %v1457
      %v1459 = vsel %vm502, %v1427, %v1428
      %v1460 = vsel %vm1437, %v1399, %v1459
      %v1461 = vsel %vm502, %v1428, %v1429
      %v1462 = vsel %vm1437, %v1401, %v1461
      %v1463 = vsel %vm502, %v1429, %v1430
      %v1464 = vsel %vm1437, %v1403, %v1463
      %v1465 = vsel %vm502, %v1430, %v1431
      %v1466 = vsel %vm1437, %v1405, %v1465
      %v1467 = vsel %vm502, %v1431, %v1432
      %v1468 = vsel %vm1437, %v1407, %v1467
      %v1469 = vsel %vm502, %v1432, %v1433
      %v1470 = vsel %vm1437, %v1409, %v1469
      %v1471 = vsel %vm502, %v1433, %v1434
      %v1472 = vsel %vm1437, %v1411, %v1471
      %v1473 = vsel %vm502, %v1434, %v1435
      %v1474 = vsel %vm1437, %v1413, %v1473
      %1494 = vst [vmem:[#allocation3 + $0x130] sm:$0xcc] %v1438
      %1495 = vst [vmem:[#allocation3 + $0x138] sm:$0xcc] %v1440
      %1496 = vst [vmem:[#allocation3 + $0x140] sm:$0xcc] %v1442
      %1497 = vst [vmem:[#allocation3 + $0x148] sm:$0xcc] %v1444
      %1498 = vst [vmem:[#allocation3 + $0x150] sm:$0xcc] %v1446
      %1499 = vst [vmem:[#allocation3 + $0x158] sm:$0xcc] %v1448
      %1500 = vst [vmem:[#allocation3 + $0x160] sm:$0xcc] %v1450
      %1501 = vst [vmem:[#allocation3 + $0x168] sm:$0xcc] %v1452
      %1502 = vst [vmem:[#allocation3 + $0x170] sm:$0xcc] %v1454
      %1503 = vst [vmem:[#allocation3 + $0x178] sm:$0xcc] %v1456
      %1504 = vst [vmem:[#allocation3 + $0x180] sm:$0xcc] %v1458
      %1505 = vst [vmem:[#allocation3 + $0x188] sm:$0xcc] %v1460
      %1506 = vst [vmem:[#allocation3 + $0x190] sm:$0xcc] %v1462
      %1507 = vst [vmem:[#allocation3 + $0x198] sm:$0xcc] %v1464
      %1508 = vst [vmem:[#allocation3 + $0x1a0] sm:$0xcc] %v1466
      %1509 = vst [vmem:[#allocation3 + $0x1a8] sm:$0xcc] %v1468
      %1510 = vst [vmem:[#allocation3 + $0x1b0] sm:$0xcc] %v1470
      %1511 = vst [vmem:[#allocation3 + $0x1b8] sm:$0xcc] %v1472
      %1512 = vst [vmem:[#allocation3 + $0x1c0] sm:$0xcc] %v1474
      %v1513 = vld [vmem:[%s353 + $0x2] sm:$0xff]
      %v1514 = vld [vmem:[%s353 + $0xa] sm:$0xff]
      %v1515 = vld [vmem:[%s353 + $0x12] sm:$0xff]
      %v1516 = vld [vmem:[%s353 + $0x1a] sm:$0xff]
      %v1517 = vld [vmem:[%s353 + $0x22] sm:$0xff]
      %v1518 = vld [vmem:[%s353 + $0x2a] sm:$0xff]
      %v1519 = vld [vmem:[%s353 + $0x32] sm:$0xff]
      %v1520 = vld [vmem:[%s353 + $0x3a] sm:$0xff]
      %v1521 = vld [vmem:[%s353 + $0x42] sm:$0xff]
      %v1522 = vld [vmem:[%s353 + $0x4a] sm:$0x3f]
      %1524 = vst [vmem:[#allocation1] ss:$2 sm:$0xff] %v1513
      %s1526 = scalar_lea.vmem [#allocation1], 16
      %1527 = vst [vmem:[%s1526] ss:$2 sm:$0xff] %v1514
      %s1529 = scalar_lea.vmem [#allocation1], 32
      %1530 = vst [vmem:[%s1529] ss:$2 sm:$0xff] %v1515
      %s1532 = scalar_lea.vmem [#allocation1], 48
      %1533 = vst [vmem:[%s1532] ss:$2 sm:$0xff] %v1516
      %v1534 = vld.sshfl [vmem:[#allocation1] sm:$0xff pattern:$0x75643120]
      %v1536 = vld.sshfl [vmem:[#allocation1 + $0x8] sm:$0xff pattern:$0x75643120]
      %v1538 = vld.sshfl [vmem:[#allocation1 + $0x10] sm:$0xff pattern:$0x75643120]
      %v1540 = vld.sshfl [vmem:[#allocation1 + $0x18] sm:$0xff pattern:$0x75643120]
      %v1542 = vld.sshfl [vmem:[#allocation1 + $0x20] sm:$0xff pattern:$0x75643120]
      %v1544 = vld.sshfl [vmem:[#allocation1 + $0x28] sm:$0xff pattern:$0x75643120]
      %v1546 = vld.sshfl [vmem:[#allocation1 + $0x30] sm:$0xff pattern:$0x75643120]
      %v1548 = vld.sshfl [vmem:[#allocation1 + $0x38] sm:$0xff pattern:$0x75643120]
      %1551 = vst [vmem:[#allocation1] ss:$2 sm:$0xff] %v1517
      %1553 = vst [vmem:[%s1526] ss:$2 sm:$0xff] %v1518
      %1555 = vst [vmem:[%s1529] ss:$2 sm:$0xff] %v1519
      %1557 = vst [vmem:[%s1532] ss:$2 sm:$0xff] %v1520
      %v1558 = vld.sshfl [vmem:[#allocation1] sm:$0xff pattern:$0x75643120]
      %v1560 = vld.sshfl [vmem:[#allocation1 + $0x8] sm:$0xff pattern:$0x75643120]
      %v1562 = vld.sshfl [vmem:[#allocation1 + $0x10] sm:$0xff pattern:$0x75643120]
      %v1564 = vld.sshfl [vmem:[#allocation1 + $0x18] sm:$0xff pattern:$0x75643120]
      %v1566 = vld.sshfl [vmem:[#allocation1 + $0x20] sm:$0xff pattern:$0x75643120]
      %v1568 = vld.sshfl [vmem:[#allocation1 + $0x28] sm:$0xff pattern:$0x75643120]
      %v1570 = vld.sshfl [vmem:[#allocation1 + $0x30] sm:$0xff pattern:$0x75643120]
      %v1572 = vld.sshfl [vmem:[#allocation1 + $0x38] sm:$0xff pattern:$0x75643120]
      %1575 = vst [vmem:[#allocation1] ss:$2 sm:$0xff] %v1521
      %1577 = vst [vmem:[%s1526] ss:$2 sm:$0xff] %v1522
      %v1578 = vld.sshfl [vmem:[#allocation1] sm:$0xff pattern:$0x75643120]
      %v1580 = vld.sshfl [vmem:[#allocation1 + $0x8] sm:$0xff pattern:$0x75643120]
      %v1582 = vld.sshfl [vmem:[#allocation1 + $0x10] sm:$0xff pattern:$0x75643120]
      %v1584 = vld.sshfl [vmem:[#allocation1 + $0x18] sm:$0xff pattern:$0x75643120]
      %1586 = vrot.lane.b32.xlu0 %v1534, 111
      %v1587 = vpop.permute.xlu0 %1586
      %1588 = vrot.lane.b32.xlu0 %v1536, 111
      %v1589 = vpop.permute.xlu0 %1588
      %1590 = vrot.lane.b32.xlu0 %v1538, 111
      %v1591 = vpop.permute.xlu0 %1590
      %1592 = vrot.lane.b32.xlu0 %v1540, 111
      %v1593 = vpop.permute.xlu0 %1592
      %1594 = vrot.lane.b32.xlu0 %v1542, 111
      %v1595 = vpop.permute.xlu0 %1594
      %1596 = vrot.lane.b32.xlu0 %v1544, 111
      %v1597 = vpop.permute.xlu0 %1596
      %1598 = vrot.lane.b32.xlu0 %v1546, 111
      %v1599 = vpop.permute.xlu0 %1598
      %1600 = vrot.lane.b32.xlu0 %v1548, 111
      %v1601 = vpop.permute.xlu0 %1600
      %1602 = vrot.lane.b32.xlu0 %v1558, 111
      %v1603 = vpop.permute.xlu0 %1602
      %1604 = vrot.lane.b32.xlu0 %v1560, 111
      %v1605 = vpop.permute.xlu0 %1604
      %1606 = vrot.lane.b32.xlu0 %v1562, 111
      %v1607 = vpop.permute.xlu0 %1606
      %1608 = vrot.lane.b32.xlu0 %v1564, 111
      %v1609 = vpop.permute.xlu0 %1608
      %1610 = vrot.lane.b32.xlu0 %v1566, 111
      %v1611 = vpop.permute.xlu0 %1610
      %1612 = vrot.lane.b32.xlu0 %v1568, 111
      %v1613 = vpop.permute.xlu0 %1612
      %1614 = vrot.lane.b32.xlu0 %v1570, 111
      %v1615 = vpop.permute.xlu0 %1614
      %1616 = vrot.lane.b32.xlu0 %v1572, 111
      %v1617 = vpop.permute.xlu0 %1616
      %1618 = vrot.lane.b32.xlu0 %v1578, 111
      %v1619 = vpop.permute.xlu0 %1618
      %1620 = vrot.lane.b32.xlu0 %v1580, 111
      %v1621 = vpop.permute.xlu0 %1620
      %1622 = vrot.lane.b32.xlu0 %v1582, 111
      %v1623 = vpop.permute.xlu0 %1622
      %1624 = vrot.lane.b32.xlu0 %v1584, 111
      %v1625 = vpop.permute.xlu0 %1624
      %v1626 = vrot.slane %v1587, 4
      %v1627 = vrot.slane %v1589, 4
      %v1628 = vrot.slane %v1591, 4
      %v1629 = vrot.slane %v1593, 4
      %v1630 = vrot.slane %v1595, 4
      %v1631 = vrot.slane %v1597, 4
      %v1632 = vrot.slane %v1599, 4
      %v1633 = vrot.slane %v1601, 4
      %v1634 = vrot.slane %v1603, 4
      %v1635 = vrot.slane %v1605, 4
      %v1636 = vrot.slane %v1607, 4
      %v1637 = vrot.slane %v1609, 4
      %v1638 = vrot.slane %v1611, 4
      %v1639 = vrot.slane %v1613, 4
      %v1640 = vrot.slane %v1615, 4
      %v1641 = vrot.slane %v1617, 4
      %v1642 = vrot.slane %v1619, 4
      %v1643 = vrot.slane %v1621, 4
      %v1644 = vrot.slane %v1623, 4
      %v1645 = vrot.slane %v1625, 4
      %v1646 = vsel %vm502, %v1626, %v1627
      %vm1647 = vcmask 908288
      %v1648 = vsel %vm1647, %v1587, %v1646
      %v1649 = vsel %vm502, %v1627, %v1628
      %v1650 = vsel %vm1647, %v1589, %v1649
      %v1651 = vsel %vm502, %v1628, %v1629
      %v1652 = vsel %vm1647, %v1591, %v1651
      %v1653 = vsel %vm502, %v1629, %v1630
      %v1654 = vsel %vm1647, %v1593, %v1653
      %v1655 = vsel %vm502, %v1630, %v1631
      %v1656 = vsel %vm1647, %v1595, %v1655
      %v1657 = vsel %vm502, %v1631, %v1632
      %v1658 = vsel %vm1647, %v1597, %v1657
      %v1659 = vsel %vm502, %v1632, %v1633
      %v1660 = vsel %vm1647, %v1599, %v1659
      %v1661 = vsel %vm502, %v1633, %v1634
      %v1662 = vsel %vm1647, %v1601, %v1661
      %v1663 = vsel %vm502, %v1634, %v1635
      %v1664 = vsel %vm1647, %v1603, %v1663
      %v1665 = vsel %vm502, %v1635, %v1636
      %v1666 = vsel %vm1647, %v1605, %v1665
      %v1667 = vsel %vm502, %v1636, %v1637
      %v1668 = vsel %vm1647, %v1607, %v1667
      %v1669 = vsel %vm502, %v1637, %v1638
      %v1670 = vsel %vm1647, %v1609, %v1669
      %v1671 = vsel %vm502, %v1638, %v1639
      %v1672 = vsel %vm1647, %v1611, %v1671
      %v1673 = vsel %vm502, %v1639, %v1640
      %v1674 = vsel %vm1647, %v1613, %v1673
      %v1675 = vsel %vm502, %v1640, %v1641
      %v1676 = vsel %vm1647, %v1615, %v1675
      %v1677 = vsel %vm502, %v1641, %v1642
      %v1678 = vsel %vm1647, %v1617, %v1677
      %v1679 = vsel %vm502, %v1642, %v1643
      %v1680 = vsel %vm1647, %v1619, %v1679
      %v1681 = vsel %vm502, %v1643, %v1644
      %v1682 = vsel %vm1647, %v1621, %v1681
      %v1683 = vsel %vm502, %v1644, %v1645
      %v1684 = vsel %vm1647, %v1623, %v1683
      %1704 = vst [vmem:[#allocation3 + $0x1c8] sm:$0x33] %v1648
      %1705 = vst [vmem:[#allocation3 + $0x1d0] sm:$0x33] %v1650
      %1706 = vst [vmem:[#allocation3 + $0x1d8] sm:$0x33] %v1652
      %1707 = vst [vmem:[#allocation3 + $0x1e0] sm:$0x33] %v1654
      %1708 = vst [vmem:[#allocation3 + $0x1e8] sm:$0x33] %v1656
      %1709 = vst [vmem:[#allocation3 + $0x1f0] sm:$0x33] %v1658
      %1710 = vst [vmem:[#allocation3 + $0x1f8] sm:$0x33] %v1660
      %1711 = vst [vmem:[#allocation3 + $0x200] sm:$0x33] %v1662
      %1712 = vst [vmem:[#allocation3 + $0x208] sm:$0x33] %v1664
      %1713 = vst [vmem:[#allocation3 + $0x210] sm:$0x33] %v1666
      %1714 = vst [vmem:[#allocation3 + $0x218] sm:$0x33] %v1668
      %1715 = vst [vmem:[#allocation3 + $0x220] sm:$0x33] %v1670
      %1716 = vst [vmem:[#allocation3 + $0x228] sm:$0x33] %v1672
      %1717 = vst [vmem:[#allocation3 + $0x230] sm:$0x33] %v1674
      %1718 = vst [vmem:[#allocation3 + $0x238] sm:$0x33] %v1676
      %1719 = vst [vmem:[#allocation3 + $0x240] sm:$0x33] %v1678
      %1720 = vst [vmem:[#allocation3 + $0x248] sm:$0x33] %v1680
      %1721 = vst [vmem:[#allocation3 + $0x250] sm:$0x33] %v1682
      %1722 = vst [vmem:[#allocation3 + $0x258] sm:$0x33] %v1684
      %v1723 = vld [vmem:[%s353 + $0x2] sm:$0xff]
      %v1724 = vld [vmem:[%s353 + $0xa] sm:$0xff]
      %v1725 = vld [vmem:[%s353 + $0x12] sm:$0xff]
      %v1726 = vld [vmem:[%s353 + $0x1a] sm:$0xff]
      %v1727 = vld [vmem:[%s353 + $0x22] sm:$0xff]
      %v1728 = vld [vmem:[%s353 + $0x2a] sm:$0xff]
      %v1729 = vld [vmem:[%s353 + $0x32] sm:$0xff]
      %v1730 = vld [vmem:[%s353 + $0x3a] sm:$0xff]
      %v1731 = vld [vmem:[%s353 + $0x42] sm:$0xff]
      %v1732 = vld [vmem:[%s353 + $0x4a] sm:$0x3f]
      %s1734 = scalar_lea.vmem [#allocation1], 1
      %1735 = vst [vmem:[%s1734] ss:$2 sm:$0xff] %v1723
      %s1737 = scalar_lea.vmem [#allocation1], 17
      %1738 = vst [vmem:[%s1737] ss:$2 sm:$0xff] %v1724
      %s1740 = scalar_lea.vmem [#allocation1], 33
      %1741 = vst [vmem:[%s1740] ss:$2 sm:$0xff] %v1725
      %s1743 = scalar_lea.vmem [#allocation1], 49
      %1744 = vst [vmem:[%s1743] ss:$2 sm:$0xff] %v1726
      %v1745 = vld.sshfl [vmem:[#allocation1] sm:$0xff pattern:$0x75643120]
      %v1747 = vld.sshfl [vmem:[#allocation1 + $0x8] sm:$0xff pattern:$0x75643120]
      %v1749 = vld.sshfl [vmem:[#allocation1 + $0x10] sm:$0xff pattern:$0x75643120]
      %v1751 = vld.sshfl [vmem:[#allocation1 + $0x18] sm:$0xff pattern:$0x75643120]
      %v1753 = vld.sshfl [vmem:[#allocation1 + $0x20] sm:$0xff pattern:$0x75643120]
      %v1755 = vld.sshfl [vmem:[#allocation1 + $0x28] sm:$0xff pattern:$0x75643120]
      %v1757 = vld.sshfl [vmem:[#allocation1 + $0x30] sm:$0xff pattern:$0x75643120]
      %v1759 = vld.sshfl [vmem:[#allocation1 + $0x38] sm:$0xff pattern:$0x75643120]
      %1762 = vst [vmem:[%s1734] ss:$2 sm:$0xff] %v1727
      %1764 = vst [vmem:[%s1737] ss:$2 sm:$0xff] %v1728
      %1766 = vst [vmem:[%s1740] ss:$2 sm:$0xff] %v1729
      %1768 = vst [vmem:[%s1743] ss:$2 sm:$0xff] %v1730
      %v1769 = vld.sshfl [vmem:[#allocation1] sm:$0xff pattern:$0x75643120]
      %v1771 = vld.sshfl [vmem:[#allocation1 + $0x8] sm:$0xff pattern:$0x75643120]
      %v1773 = vld.sshfl [vmem:[#allocation1 + $0x10] sm:$0xff pattern:$0x75643120]
      %v1775 = vld.sshfl [vmem:[#allocation1 + $0x18] sm:$0xff pattern:$0x75643120]
      %v1777 = vld.sshfl [vmem:[#allocation1 + $0x20] sm:$0xff pattern:$0x75643120]
      %v1779 = vld.sshfl [vmem:[#allocation1 + $0x28] sm:$0xff pattern:$0x75643120]
      %v1781 = vld.sshfl [vmem:[#allocation1 + $0x30] sm:$0xff pattern:$0x75643120]
      %v1783 = vld.sshfl [vmem:[#allocation1 + $0x38] sm:$0xff pattern:$0x75643120]
      %1786 = vst [vmem:[%s1734] ss:$2 sm:$0xff] %v1731
      %1788 = vst [vmem:[%s1737] ss:$2 sm:$0xff] %v1732
      %v1789 = vld.sshfl [vmem:[#allocation1] sm:$0xff pattern:$0x75643120]
      %v1791 = vld.sshfl [vmem:[#allocation1 + $0x8] sm:$0xff pattern:$0x75643120]
      %v1793 = vld.sshfl [vmem:[#allocation1 + $0x10] sm:$0xff pattern:$0x75643120]
      %v1795 = vld.sshfl [vmem:[#allocation1 + $0x18] sm:$0xff pattern:$0x75643120]
      %1797 = vrot.lane.b32.xlu0 %v1745, 110
      %v1798 = vpop.permute.xlu0 %1797
      %1799 = vrot.lane.b32.xlu0 %v1747, 110
      %v1800 = vpop.permute.xlu0 %1799
      %1801 = vrot.lane.b32.xlu0 %v1749, 110
      %v1802 = vpop.permute.xlu0 %1801
      %1803 = vrot.lane.b32.xlu0 %v1751, 110
      %v1804 = vpop.permute.xlu0 %1803
      %1805 = vrot.lane.b32.xlu0 %v1753, 110
      %v1806 = vpop.permute.xlu0 %1805
      %1807 = vrot.lane.b32.xlu0 %v1755, 110
      %v1808 = vpop.permute.xlu0 %1807
      %1809 = vrot.lane.b32.xlu0 %v1757, 110
      %v1810 = vpop.permute.xlu0 %1809
      %1811 = vrot.lane.b32.xlu0 %v1759, 110
      %v1812 = vpop.permute.xlu0 %1811
      %1813 = vrot.lane.b32.xlu0 %v1769, 110
      %v1814 = vpop.permute.xlu0 %1813
      %1815 = vrot.lane.b32.xlu0 %v1771, 110
      %v1816 = vpop.permute.xlu0 %1815
      %1817 = vrot.lane.b32.xlu0 %v1773, 110
      %v1818 = vpop.permute.xlu0 %1817
      %1819 = vrot.lane.b32.xlu0 %v1775, 110
      %v1820 = vpop.permute.xlu0 %1819
      %1821 = vrot.lane.b32.xlu0 %v1777, 110
      %v1822 = vpop.permute.xlu0 %1821
      %1823 = vrot.lane.b32.xlu0 %v1779, 110
      %v1824 = vpop.permute.xlu0 %1823
      %1825 = vrot.lane.b32.xlu0 %v1781, 110
      %v1826 = vpop.permute.xlu0 %1825
      %1827 = vrot.lane.b32.xlu0 %v1783, 110
      %v1828 = vpop.permute.xlu0 %1827
      %1829 = vrot.lane.b32.xlu0 %v1789, 110
      %v1830 = vpop.permute.xlu0 %1829
      %1831 = vrot.lane.b32.xlu0 %v1791, 110
      %v1832 = vpop.permute.xlu0 %1831
      %1833 = vrot.lane.b32.xlu0 %v1793, 110
      %v1834 = vpop.permute.xlu0 %1833
      %1835 = vrot.lane.b32.xlu0 %v1795, 110
      %v1836 = vpop.permute.xlu0 %1835
      %v1837 = vrot.slane %v1798, 4
      %v1838 = vrot.slane %v1800, 4
      %v1839 = vrot.slane %v1802, 4
      %v1840 = vrot.slane %v1804, 4
      %v1841 = vrot.slane %v1806, 4
      %v1842 = vrot.slane %v1808, 4
      %v1843 = vrot.slane %v1810, 4
      %v1844 = vrot.slane %v1812, 4
      %v1845 = vrot.slane %v1814, 4
      %v1846 = vrot.slane %v1816, 4
      %v1847 = vrot.slane %v1818, 4
      %v1848 = vrot.slane %v1820, 4
      %v1849 = vrot.slane %v1822, 4
      %v1850 = vrot.slane %v1824, 4
      %v1851 = vrot.slane %v1826, 4
      %v1852 = vrot.slane %v1828, 4
      %v1853 = vrot.slane %v1830, 4
      %v1854 = vrot.slane %v1832, 4
      %v1855 = vrot.slane %v1834, 4
      %v1856 = vrot.slane %v1836, 4
      %v1857 = vsel %vm502, %v1837, %v1838
      %vm1858 = vcmask 900096
      %v1859 = vsel %vm1858, %v1798, %v1857
      %v1860 = vsel %vm502, %v1838, %v1839
      %v1861 = vsel %vm1858, %v1800, %v1860
      %v1862 = vsel %vm502, %v1839, %v1840
      %v1863 = vsel %vm1858, %v1802, %v1862
      %v1864 = vsel %vm502, %v1840, %v1841
      %v1865 = vsel %vm1858, %v1804, %v1864
      %v1866 = vsel %vm502, %v1841, %v1842
      %v1867 = vsel %vm1858, %v1806, %v1866
      %v1868 = vsel %vm502, %v1842, %v1843
      %v1869 = vsel %vm1858, %v1808, %v1868
      %v1870 = vsel %vm502, %v1843, %v1844
      %v1871 = vsel %vm1858, %v1810, %v1870
      %v1872 = vsel %vm502, %v1844, %v1845
      %v1873 = vsel %vm1858, %v1812, %v1872
      %v1874 = vsel %vm502, %v1845, %v1846
      %v1875 = vsel %vm1858, %v1814, %v1874
      %v1876 = vsel %vm502, %v1846, %v1847
      %v1877 = vsel %vm1858, %v1816, %v1876
      %v1878 = vsel %vm502, %v1847, %v1848
      %v1879 = vsel %vm1858, %v1818, %v1878
      %v1880 = vsel %vm502, %v1848, %v1849
      %v1881 = vsel %vm1858, %v1820, %v1880
      %v1882 = vsel %vm502, %v1849, %v1850
      %v1883 = vsel %vm1858, %v1822, %v1882
      %v1884 = vsel %vm502, %v1850, %v1851
      %v1885 = vsel %vm1858, %v1824, %v1884
      %v1886 = vsel %vm502, %v1851, %v1852
      %v1887 = vsel %vm1858, %v1826, %v1886
      %v1888 = vsel %vm502, %v1852, %v1853
      %v1889 = vsel %vm1858, %v1828, %v1888
      %v1890 = vsel %vm502, %v1853, %v1854
      %v1891 = vsel %vm1858, %v1830, %v1890
      %v1892 = vsel %vm502, %v1854, %v1855
      %v1893 = vsel %vm1858, %v1832, %v1892
      %v1894 = vsel %vm502, %v1855, %v1856
      %v1895 = vsel %vm1858, %v1834, %v1894
      %1915 = vst [vmem:[#allocation3 + $0x1c8] sm:$0xcc] %v1859
      %1916 = vst [vmem:[#allocation3 + $0x1d0] sm:$0xcc] %v1861
      %1917 = vst [vmem:[#allocation3 + $0x1d8] sm:$0xcc] %v1863
      %1918 = vst [vmem:[#allocation3 + $0x1e0] sm:$0xcc] %v1865
      %1919 = vst [vmem:[#allocation3 + $0x1e8] sm:$0xcc] %v1867
      %1920 = vst [vmem:[#allocation3 + $0x1f0] sm:$0xcc] %v1869
      %1921 = vst [vmem:[#allocation3 + $0x1f8] sm:$0xcc] %v1871
      %1922 = vst [vmem:[#allocation3 + $0x200] sm:$0xcc] %v1873
      %1923 = vst [vmem:[#allocation3 + $0x208] sm:$0xcc] %v1875
      %1924 = vst [vmem:[#allocation3 + $0x210] sm:$0xcc] %v1877
      %1925 = vst [vmem:[#allocation3 + $0x218] sm:$0xcc] %v1879
      %1926 = vst [vmem:[#allocation3 + $0x220] sm:$0xcc] %v1881
      %1927 = vst [vmem:[#allocation3 + $0x228] sm:$0xcc] %v1883
      %1928 = vst [vmem:[#allocation3 + $0x230] sm:$0xcc] %v1885
      %1929 = vst [vmem:[#allocation3 + $0x238] sm:$0xcc] %v1887
      %1930 = vst [vmem:[#allocation3 + $0x240] sm:$0xcc] %v1889
      %1931 = vst [vmem:[#allocation3 + $0x248] sm:$0xcc] %v1891
      %1932 = vst [vmem:[#allocation3 + $0x250] sm:$0xcc] %v1893
      %1933 = vst [vmem:[#allocation3 + $0x258] sm:$0xcc] %v1895
      %v1934 = vld [vmem:[%s353 + $0x2] sm:$0xff]
      %v1935 = vld [vmem:[%s353 + $0xa] sm:$0xff]
      %v1936 = vld [vmem:[%s353 + $0x12] sm:$0xff]
      %v1937 = vld [vmem:[%s353 + $0x1a] sm:$0xff]
      %v1938 = vld [vmem:[%s353 + $0x22] sm:$0xff]
      %v1939 = vld [vmem:[%s353 + $0x2a] sm:$0xff]
      %v1940 = vld [vmem:[%s353 + $0x32] sm:$0xff]
      %v1941 = vld [vmem:[%s353 + $0x3a] sm:$0xff]
      %v1942 = vld [vmem:[%s353 + $0x42] sm:$0xff]
      %v1943 = vld [vmem:[%s353 + $0x4a] sm:$0x3f]
      %1945 = vst [vmem:[#allocation1] ss:$2 sm:$0xff] %v1934
      %s1947 = scalar_lea.vmem [#allocation1], 16
      %1948 = vst [vmem:[%s1947] ss:$2 sm:$0xff] %v1935
      %s1950 = scalar_lea.vmem [#allocation1], 32
      %1951 = vst [vmem:[%s1950] ss:$2 sm:$0xff] %v1936
      %s1953 = scalar_lea.vmem [#allocation1], 48
      %1954 = vst [vmem:[%s1953] ss:$2 sm:$0xff] %v1937
      %v1955 = vld.sshfl [vmem:[#allocation1] sm:$0xff pattern:$0x75643120]
      %v1957 = vld.sshfl [vmem:[#allocation1 + $0x8] sm:$0xff pattern:$0x75643120]
      %v1959 = vld.sshfl [vmem:[#allocation1 + $0x10] sm:$0xff pattern:$0x75643120]
      %v1961 = vld.sshfl [vmem:[#allocation1 + $0x18] sm:$0xff pattern:$0x75643120]
      %v1963 = vld.sshfl [vmem:[#allocation1 + $0x20] sm:$0xff pattern:$0x75643120]
      %v1965 = vld.sshfl [vmem:[#allocation1 + $0x28] sm:$0xff pattern:$0x75643120]
      %v1967 = vld.sshfl [vmem:[#allocation1 + $0x30] sm:$0xff pattern:$0x75643120]
      %v1969 = vld.sshfl [vmem:[#allocation1 + $0x38] sm:$0xff pattern:$0x75643120]
      %1972 = vst [vmem:[#allocation1] ss:$2 sm:$0xff] %v1938
      %1974 = vst [vmem:[%s1947] ss:$2 sm:$0xff] %v1939
      %1976 = vst [vmem:[%s1950] ss:$2 sm:$0xff] %v1940
      %1978 = vst [vmem:[%s1953] ss:$2 sm:$0xff] %v1941
      %v1979 = vld.sshfl [vmem:[#allocation1] sm:$0xff pattern:$0x75643120]
      %v1981 = vld.sshfl [vmem:[#allocation1 + $0x8] sm:$0xff pattern:$0x75643120]
      %v1983 = vld.sshfl [vmem:[#allocation1 + $0x10] sm:$0xff pattern:$0x75643120]
      %v1985 = vld.sshfl [vmem:[#allocation1 + $0x18] sm:$0xff pattern:$0x75643120]
      %v1987 = vld.sshfl [vmem:[#allocation1 + $0x20] sm:$0xff pattern:$0x75643120]
      %v1989 = vld.sshfl [vmem:[#allocation1 + $0x28] sm:$0xff pattern:$0x75643120]
      %v1991 = vld.sshfl [vmem:[#allocation1 + $0x30] sm:$0xff pattern:$0x75643120]
      %v1993 = vld.sshfl [vmem:[#allocation1 + $0x38] sm:$0xff pattern:$0x75643120]
      %1996 = vst [vmem:[#allocation1] ss:$2 sm:$0xff] %v1942
      %1998 = vst [vmem:[%s1947] ss:$2 sm:$0xff] %v1943
      %v1999 = vld.sshfl [vmem:[#allocation1] sm:$0xff pattern:$0x75643120]
      %v2001 = vld.sshfl [vmem:[#allocation1 + $0x8] sm:$0xff pattern:$0x75643120]
      %v2003 = vld.sshfl [vmem:[#allocation1 + $0x10] sm:$0xff pattern:$0x75643120]
      %v2005 = vld.sshfl [vmem:[#allocation1 + $0x18] sm:$0xff pattern:$0x75643120]
      %2007 = vrot.lane.b32.xlu0 %v1955, 109
      %v2008 = vpop.permute.xlu0 %2007
      %2009 = vrot.lane.b32.xlu0 %v1957, 109
      %v2010 = vpop.permute.xlu0 %2009
      %2011 = vrot.lane.b32.xlu0 %v1959, 109
      %v2012 = vpop.permute.xlu0 %2011
      %2013 = vrot.lane.b32.xlu0 %v1961, 109
      %v2014 = vpop.permute.xlu0 %2013
      %2015 = vrot.lane.b32.xlu0 %v1963, 109
      %v2016 = vpop.permute.xlu0 %2015
      %2017 = vrot.lane.b32.xlu0 %v1965, 109
      %v2018 = vpop.permute.xlu0 %2017
      %2019 = vrot.lane.b32.xlu0 %v1967, 109
      %v2020 = vpop.permute.xlu0 %2019
      %2021 = vrot.lane.b32.xlu0 %v1969, 109
      %v2022 = vpop.permute.xlu0 %2021
      %2023 = vrot.lane.b32.xlu0 %v1979, 109
      %v2024 = vpop.permute.xlu0 %2023
      %2025 = vrot.lane.b32.xlu0 %v1981, 109
      %v2026 = vpop.permute.xlu0 %2025
      %2027 = vrot.lane.b32.xlu0 %v1983, 109
      %v2028 = vpop.permute.xlu0 %2027
      %2029 = vrot.lane.b32.xlu0 %v1985, 109
      %v2030 = vpop.permute.xlu0 %2029
      %2031 = vrot.lane.b32.xlu0 %v1987, 109
      %v2032 = vpop.permute.xlu0 %2031
      %2033 = vrot.lane.b32.xlu0 %v1989, 109
      %v2034 = vpop.permute.xlu0 %2033
      %2035 = vrot.lane.b32.xlu0 %v1991, 109
      %v2036 = vpop.permute.xlu0 %2035
      %2037 = vrot.lane.b32.xlu0 %v1993, 109
      %v2038 = vpop.permute.xlu0 %2037
      %2039 = vrot.lane.b32.xlu0 %v1999, 109
      %v2040 = vpop.permute.xlu0 %2039
      %2041 = vrot.lane.b32.xlu0 %v2001, 109
      %v2042 = vpop.permute.xlu0 %2041
      %2043 = vrot.lane.b32.xlu0 %v2003, 109
      %v2044 = vpop.permute.xlu0 %2043
      %2045 = vrot.lane.b32.xlu0 %v2005, 109
      %v2046 = vpop.permute.xlu0 %2045
      %v2047 = vrot.slane %v2008, 4
      %v2048 = vrot.slane %v2010, 4
      %v2049 = vrot.slane %v2012, 4
      %v2050 = vrot.slane %v2014, 4
      %v2051 = vrot.slane %v2016, 4
      %v2052 = vrot.slane %v2018, 4
      %v2053 = vrot.slane %v2020, 4
      %v2054 = vrot.slane %v2022, 4
      %v2055 = vrot.slane %v2024, 4
      %v2056 = vrot.slane %v2026, 4
      %v2057 = vrot.slane %v2028, 4
      %v2058 = vrot.slane %v2030, 4
      %v2059 = vrot.slane %v2032, 4
      %v2060 = vrot.slane %v2034, 4
      %v2061 = vrot.slane %v2036, 4
      %v2062 = vrot.slane %v2038, 4
      %v2063 = vrot.slane %v2040, 4
      %v2064 = vrot.slane %v2042, 4
      %v2065 = vrot.slane %v2044, 4
      %v2066 = vrot.slane %v2046, 4
      %v2067 = vsel %vm502, %v2047, %v2048
      %vm2068 = vcmask 891904
      %v2069 = vsel %vm2068, %v2008, %v2067
      %v2070 = vsel %vm502, %v2048, %v2049
      %v2071 = vsel %vm2068, %v2010, %v2070
      %v2072 = vsel %vm502, %v2049, %v2050
      %v2073 = vsel %vm2068, %v2012, %v2072
      %v2074 = vsel %vm502, %v2050, %v2051
      %v2075 = vsel %vm2068, %v2014, %v2074
      %v2076 = vsel %vm502, %v2051, %v2052
      %v2077 = vsel %vm2068, %v2016, %v2076
      %v2078 = vsel %vm502, %v2052, %v2053
      %v2079 = vsel %vm2068, %v2018, %v2078
      %v2080 = vsel %vm502, %v2053, %v2054
      %v2081 = vsel %vm2068, %v2020, %v2080
      %v2082 = vsel %vm502, %v2054, %v2055
      %v2083 = vsel %vm2068, %v2022, %v2082
      %v2084 = vsel %vm502, %v2055, %v2056
      %v2085 = vsel %vm2068, %v2024, %v2084
      %v2086 = vsel %vm502, %v2056, %v2057
      %v2087 = vsel %vm2068, %v2026, %v2086
      %v2088 = vsel %vm502, %v2057, %v2058
      %v2089 = vsel %vm2068, %v2028, %v2088
      %v2090 = vsel %vm502, %v2058, %v2059
      %v2091 = vsel %vm2068, %v2030, %v2090
      %v2092 = vsel %vm502, %v2059, %v2060
      %v2093 = vsel %vm2068, %v2032, %v2092
      %v2094 = vsel %vm502, %v2060, %v2061
      %v2095 = vsel %vm2068, %v2034, %v2094
      %v2096 = vsel %vm502, %v2061, %v2062
      %v2097 = vsel %vm2068, %v2036, %v2096
      %v2098 = vsel %vm502, %v2062, %v2063
      %v2099 = vsel %vm2068, %v2038, %v2098
      %v2100 = vsel %vm502, %v2063, %v2064
      %v2101 = vsel %vm2068, %v2040, %v2100
      %v2102 = vsel %vm502, %v2064, %v2065
      %v2103 = vsel %vm2068, %v2042, %v2102
      %v2104 = vsel %vm502, %v2065, %v2066
      %v2105 = vsel %vm2068, %v2044, %v2104
      %2125 = vst [vmem:[#allocation3 + $0x260] sm:$0x33] %v2069
      %2126 = vst [vmem:[#allocation3 + $0x268] sm:$0x33] %v2071
      %2127 = vst [vmem:[#allocation3 + $0x270] sm:$0x33] %v2073
      %2128 = vst [vmem:[#allocation3 + $0x278] sm:$0x33] %v2075
      %2129 = vst [vmem:[#allocation3 + $0x280] sm:$0x33] %v2077
      %2130 = vst [vmem:[#allocation3 + $0x288] sm:$0x33] %v2079
      %2131 = vst [vmem:[#allocation3 + $0x290] sm:$0x33] %v2081
      %2132 = vst [vmem:[#allocation3 + $0x298] sm:$0x33] %v2083
      %2133 = vst [vmem:[#allocation3 + $0x2a0] sm:$0x33] %v2085
      %2134 = vst [vmem:[#allocation3 + $0x2a8] sm:$0x33] %v2087
      %2135 = vst [vmem:[#allocation3 + $0x2b0] sm:$0x33] %v2089
      %2136 = vst [vmem:[#allocation3 + $0x2b8] sm:$0x33] %v2091
      %2137 = vst [vmem:[#allocation3 + $0x2c0] sm:$0x33] %v2093
      %2138 = vst [vmem:[#allocation3 + $0x2c8] sm:$0x33] %v2095
      %2139 = vst [vmem:[#allocation3 + $0x2d0] sm:$0x33] %v2097
      %2140 = vst [vmem:[#allocation3 + $0x2d8] sm:$0x33] %v2099
      %2141 = vst [vmem:[#allocation3 + $0x2e0] sm:$0x33] %v2101
      %2142 = vst [vmem:[#allocation3 + $0x2e8] sm:$0x33] %v2103
      %2143 = vst [vmem:[#allocation3 + $0x2f0] sm:$0x33] %v2105
      %v2144 = vld [vmem:[%s2] sm:$0xf]
      %v2145 = vld [vmem:[#allocation3] sm:$0xff]
      %v2146 = vld [vmem:[#allocation3 + $0x8] sm:$0xff]
      %v2147 = vld [vmem:[#allocation3 + $0x10] sm:$0xff]
      %v2148 = vld [vmem:[#allocation3 + $0x18] sm:$0xff]
      %v2149 = vld [vmem:[#allocation3 + $0x20] sm:$0xff]
      %v2150 = vld [vmem:[#allocation3 + $0x28] sm:$0xff]
      %v2151 = vld [vmem:[#allocation3 + $0x30] sm:$0xff]
      %v2152 = vld [vmem:[#allocation3 + $0x38] sm:$0xff]
      %v2153 = vld [vmem:[#allocation3 + $0x40] sm:$0xff]
      %v2154 = vld [vmem:[#allocation3 + $0x48] sm:$0xff]
      %v2155 = vld [vmem:[#allocation3 + $0x50] sm:$0xff]
      %v2156 = vld [vmem:[#allocation3 + $0x58] sm:$0xff]
      %v2157 = vld [vmem:[#allocation3 + $0x60] sm:$0xff]
      %v2158 = vld [vmem:[#allocation3 + $0x68] sm:$0xff]
      %v2159 = vld [vmem:[#allocation3 + $0x70] sm:$0xff]
      %v2160 = vld [vmem:[#allocation3 + $0x78] sm:$0xff]
      %v2161 = vld [vmem:[#allocation3 + $0x80] sm:$0xff]
      %v2162 = vld [vmem:[#allocation3 + $0x88] sm:$0xff]
      %v2163 = vld [vmem:[#allocation3 + $0x90] sm:$0xff]
      %v2164 = vld [vmem:[#allocation3 + $0x98] sm:$0xff]
      %v2165 = vld [vmem:[#allocation3 + $0xa0] sm:$0xff]
      %v2166 = vld [vmem:[#allocation3 + $0xa8] sm:$0xff]
      %v2167 = vld [vmem:[#allocation3 + $0xb0] sm:$0xff]
      %v2168 = vld [vmem:[#allocation3 + $0xb8] sm:$0xff]
      %v2169 = vld [vmem:[#allocation3 + $0xc0] sm:$0xff]
      %v2170 = vld [vmem:[#allocation3 + $0xc8] sm:$0xff]
      %v2171 = vld [vmem:[#allocation3 + $0xd0] sm:$0xff]
      %v2172 = vld [vmem:[#allocation3 + $0xd8] sm:$0xff]
      %v2173 = vld [vmem:[#allocation3 + $0xe0] sm:$0xff]
      %v2174 = vld [vmem:[#allocation3 + $0xe8] sm:$0xff]
      %v2175 = vld [vmem:[#allocation3 + $0xf0] sm:$0xff]
      %v2176 = vld [vmem:[#allocation3 + $0xf8] sm:$0xff]
      %v2177 = vld [vmem:[#allocation3 + $0x100] sm:$0xff]
      %v2178 = vld [vmem:[#allocation3 + $0x108] sm:$0xff]
      %v2179 = vld [vmem:[#allocation3 + $0x110] sm:$0xff]
      %v2180 = vld [vmem:[#allocation3 + $0x118] sm:$0xff]
      %v2181 = vld [vmem:[#allocation3 + $0x120] sm:$0xff]
      %v2182 = vld [vmem:[#allocation3 + $0x128] sm:$0xff]
      %v2183 = vld [vmem:[#allocation3 + $0x130] sm:$0xff]
      %v2184 = vld [vmem:[#allocation3 + $0x138] sm:$0xff]
      %v2185 = vld [vmem:[#allocation3 + $0x140] sm:$0xff]
      %v2186 = vld [vmem:[#allocation3 + $0x148] sm:$0xff]
      %v2187 = vld [vmem:[#allocation3 + $0x150] sm:$0xff]
      %v2188 = vld [vmem:[#allocation3 + $0x158] sm:$0xff]
      %v2189 = vld [vmem:[#allocation3 + $0x160] sm:$0xff]
      %v2190 = vld [vmem:[#allocation3 + $0x168] sm:$0xff]
      %v2191 = vld [vmem:[#allocation3 + $0x170] sm:$0xff]
      %v2192 = vld [vmem:[#allocation3 + $0x178] sm:$0xff]
      %v2193 = vld [vmem:[#allocation3 + $0x180] sm:$0xff]
      %v2194 = vld [vmem:[#allocation3 + $0x188] sm:$0xff]
      %v2195 = vld [vmem:[#allocation3 + $0x190] sm:$0xff]
      %v2196 = vld [vmem:[#allocation3 + $0x198] sm:$0xff]
      %v2197 = vld [vmem:[#allocation3 + $0x1a0] sm:$0xff]
      %v2198 = vld [vmem:[#allocation3 + $0x1a8] sm:$0xff]
      %v2199 = vld [vmem:[#allocation3 + $0x1b0] sm:$0xff]
      %v2200 = vld [vmem:[#allocation3 + $0x1b8] sm:$0xff]
      %v2201 = vld [vmem:[#allocation3 + $0x1c0] sm:$0xff]
      %v2202 = vld [vmem:[#allocation3 + $0x1c8] sm:$0xff]
      %v2203 = vld [vmem:[#allocation3 + $0x1d0] sm:$0xff]
      %v2204 = vld [vmem:[#allocation3 + $0x1d8] sm:$0xff]
      %v2205 = vld [vmem:[#allocation3 + $0x1e0] sm:$0xff]
      %v2206 = vld [vmem:[#allocation3 + $0x1e8] sm:$0xff]
      %v2207 = vld [vmem:[#allocation3 + $0x1f0] sm:$0xff]
      %v2208 = vld [vmem:[#allocation3 + $0x1f8] sm:$0xff]
      %v2209 = vld [vmem:[#allocation3 + $0x200] sm:$0xff]
      %v2210 = vld [vmem:[#allocation3 + $0x208] sm:$0xff]
      %v2211 = vld [vmem:[#allocation3 + $0x210] sm:$0xff]
      %v2212 = vld [vmem:[#allocation3 + $0x218] sm:$0xff]
      %v2213 = vld [vmem:[#allocation3 + $0x220] sm:$0xff]
      %v2214 = vld [vmem:[#allocation3 + $0x228] sm:$0xff]
      %v2215 = vld [vmem:[#allocation3 + $0x230] sm:$0xff]
      %v2216 = vld [vmem:[#allocation3 + $0x238] sm:$0xff]
      %v2217 = vld [vmem:[#allocation3 + $0x240] sm:$0xff]
      %v2218 = vld [vmem:[#allocation3 + $0x248] sm:$0xff]
      %v2219 = vld [vmem:[#allocation3 + $0x250] sm:$0xff]
      %v2220 = vld [vmem:[#allocation3 + $0x258] sm:$0xff]
      %v2221 = vld [vmem:[#allocation3 + $0x260] sm:$0x33]
      %v2222 = vld [vmem:[#allocation3 + $0x268] sm:$0x33]
      %v2223 = vld [vmem:[#allocation3 + $0x270] sm:$0x33]
      %v2224 = vld [vmem:[#allocation3 + $0x278] sm:$0x33]
      %v2225 = vld [vmem:[#allocation3 + $0x280] sm:$0x33]
      %v2226 = vld [vmem:[#allocation3 + $0x288] sm:$0x33]
      %v2227 = vld [vmem:[#allocation3 + $0x290] sm:$0x33]
      %v2228 = vld [vmem:[#allocation3 + $0x298] sm:$0x33]
      %v2229 = vld [vmem:[#allocation3 + $0x2a0] sm:$0x33]
      %v2230 = vld [vmem:[#allocation3 + $0x2a8] sm:$0x33]
      %v2231 = vld [vmem:[#allocation3 + $0x2b0] sm:$0x33]
      %v2232 = vld [vmem:[#allocation3 + $0x2b8] sm:$0x33]
      %v2233 = vld [vmem:[#allocation3 + $0x2c0] sm:$0x33]
      %v2234 = vld [vmem:[#allocation3 + $0x2c8] sm:$0x33]
      %v2235 = vld [vmem:[#allocation3 + $0x2d0] sm:$0x33]
      %v2236 = vld [vmem:[#allocation3 + $0x2d8] sm:$0x33]
      %v2237 = vld [vmem:[#allocation3 + $0x2e0] sm:$0x33]
      %v2238 = vld [vmem:[#allocation3 + $0x2e8] sm:$0x33]
      %v2239 = vld [vmem:[#allocation3 + $0x2f0] sm:$0x33]
      %v2240 = vld [vmem:[%s3] sm:$0xff]
      %2242 = vset.pattern.permute.xlu0 0
      %2243 = vperm.xlu0 %2242, %v2240
      %v2244 = vpop.permute.xlu0 %2243
      %v2341 = vunpack.c.l.b16 %v2145
      %v2342 = vunpack.c.h.b16 %v2145
      %v2343 = vunpack.c.l.b16 %v2146
      %v2344 = vunpack.c.h.b16 %v2146
      %v2345 = vunpack.c.l.b16 %v2147
      %v2346 = vunpack.c.h.b16 %v2147
      %v2347 = vunpack.c.l.b16 %v2148
      %v2348 = vunpack.c.h.b16 %v2148
      %v2349 = vunpack.c.l.b16 %v2149
      %v2350 = vunpack.c.h.b16 %v2149
      %v2351 = vunpack.c.l.b16 %v2150
      %v2352 = vunpack.c.h.b16 %v2150
      %v2353 = vunpack.c.l.b16 %v2151
      %v2354 = vunpack.c.h.b16 %v2151
      %v2355 = vunpack.c.l.b16 %v2152
      %v2356 = vunpack.c.h.b16 %v2152
      %v2357 = vunpack.c.l.b16 %v2153
      %v2358 = vunpack.c.h.b16 %v2153
      %v2359 = vunpack.c.l.b16 %v2154
      %v2360 = vunpack.c.h.b16 %v2154
      %v2361 = vunpack.c.l.b16 %v2155
      %v2362 = vunpack.c.h.b16 %v2155
      %v2363 = vunpack.c.l.b16 %v2156
      %v2364 = vunpack.c.h.b16 %v2156
      %v2365 = vunpack.c.l.b16 %v2157
      %v2366 = vunpack.c.h.b16 %v2157
      %v2367 = vunpack.c.l.b16 %v2158
      %v2368 = vunpack.c.h.b16 %v2158
      %v2369 = vunpack.c.l.b16 %v2159
      %v2370 = vunpack.c.h.b16 %v2159
      %v2371 = vunpack.c.l.b16 %v2160
      %v2372 = vunpack.c.h.b16 %v2160
      %v2373 = vunpack.c.l.b16 %v2161
      %v2374 = vunpack.c.h.b16 %v2161
      %v2375 = vunpack.c.l.b16 %v2162
      %v2376 = vunpack.c.h.b16 %v2162
      %v2377 = vunpack.c.l.b16 %v2163
      %v2378 = vunpack.c.h.b16 %v2163
      %v2379 = vunpack.c.l.b16 %v2164
      %v2380 = vunpack.c.h.b16 %v2164
      %v2381 = vunpack.c.l.b16 %v2165
      %v2382 = vunpack.c.h.b16 %v2165
      %v2383 = vunpack.c.l.b16 %v2166
      %v2384 = vunpack.c.h.b16 %v2166
      %v2385 = vunpack.c.l.b16 %v2167
      %v2386 = vunpack.c.h.b16 %v2167
      %v2387 = vunpack.c.l.b16 %v2168
      %v2388 = vunpack.c.h.b16 %v2168
      %v2389 = vunpack.c.l.b16 %v2169
      %v2390 = vunpack.c.h.b16 %v2169
      %v2391 = vunpack.c.l.b16 %v2170
      %v2392 = vunpack.c.h.b16 %v2170
      %v2393 = vunpack.c.l.b16 %v2171
      %v2394 = vunpack.c.h.b16 %v2171
      %v2395 = vunpack.c.l.b16 %v2172
      %v2396 = vunpack.c.h.b16 %v2172
      %v2397 = vunpack.c.l.b16 %v2173
      %v2398 = vunpack.c.h.b16 %v2173
      %v2399 = vunpack.c.l.b16 %v2174
      %v2400 = vunpack.c.h.b16 %v2174
      %v2401 = vunpack.c.l.b16 %v2175
      %v2402 = vunpack.c.h.b16 %v2175
      %v2403 = vunpack.c.l.b16 %v2176
      %v2404 = vunpack.c.h.b16 %v2176
      %v2405 = vunpack.c.l.b16 %v2177
      %v2406 = vunpack.c.h.b16 %v2177
      %v2407 = vunpack.c.l.b16 %v2178
      %v2408 = vunpack.c.h.b16 %v2178
      %v2409 = vunpack.c.l.b16 %v2179
      %v2410 = vunpack.c.h.b16 %v2179
      %v2411 = vunpack.c.l.b16 %v2180
      %v2412 = vunpack.c.h.b16 %v2180
      %v2413 = vunpack.c.l.b16 %v2181
      %v2414 = vunpack.c.h.b16 %v2181
      %v2415 = vunpack.c.l.b16 %v2182
      %v2416 = vunpack.c.h.b16 %v2182
      %v2417 = vunpack.c.l.b16 %v2183
      %v2418 = vunpack.c.h.b16 %v2183
      %v2419 = vunpack.c.l.b16 %v2184
      %v2420 = vunpack.c.h.b16 %v2184
      %v2421 = vunpack.c.l.b16 %v2185
      %v2422 = vunpack.c.h.b16 %v2185
      %v2423 = vunpack.c.l.b16 %v2186
      %v2424 = vunpack.c.h.b16 %v2186
      %v2425 = vunpack.c.l.b16 %v2187
      %v2426 = vunpack.c.h.b16 %v2187
      %v2427 = vunpack.c.l.b16 %v2188
      %v2428 = vunpack.c.h.b16 %v2188
      %v2429 = vunpack.c.l.b16 %v2189
      %v2430 = vunpack.c.h.b16 %v2189
      %v2431 = vunpack.c.l.b16 %v2190
      %v2432 = vunpack.c.h.b16 %v2190
      %v2433 = vunpack.c.l.b16 %v2191
      %v2434 = vunpack.c.h.b16 %v2191
      %v2435 = vunpack.c.l.b16 %v2192
      %v2436 = vunpack.c.h.b16 %v2192
      %v2437 = vunpack.c.l.b16 %v2193
      %v2438 = vunpack.c.h.b16 %v2193
      %v2439 = vunpack.c.l.b16 %v2194
      %v2440 = vunpack.c.h.b16 %v2194
      %v2441 = vunpack.c.l.b16 %v2195
      %v2442 = vunpack.c.h.b16 %v2195
      %v2443 = vunpack.c.l.b16 %v2196
      %v2444 = vunpack.c.h.b16 %v2196
      %v2445 = vunpack.c.l.b16 %v2197
      %v2446 = vunpack.c.h.b16 %v2197
      %v2447 = vunpack.c.l.b16 %v2198
      %v2448 = vunpack.c.h.b16 %v2198
      %v2449 = vunpack.c.l.b16 %v2199
      %v2450 = vunpack.c.h.b16 %v2199
      %v2451 = vunpack.c.l.b16 %v2200
      %v2452 = vunpack.c.h.b16 %v2200
      %v2453 = vunpack.c.l.b16 %v2201
      %v2454 = vunpack.c.h.b16 %v2201
      %v2455 = vunpack.c.l.b16 %v2202
      %v2456 = vunpack.c.h.b16 %v2202
      %v2457 = vunpack.c.l.b16 %v2203
      %v2458 = vunpack.c.h.b16 %v2203
      %v2459 = vunpack.c.l.b16 %v2204
      %v2460 = vunpack.c.h.b16 %v2204
      %v2461 = vunpack.c.l.b16 %v2205
      %v2462 = vunpack.c.h.b16 %v2205
      %v2463 = vunpack.c.l.b16 %v2206
      %v2464 = vunpack.c.h.b16 %v2206
      %v2465 = vunpack.c.l.b16 %v2207
      %v2466 = vunpack.c.h.b16 %v2207
      %v2467 = vunpack.c.l.b16 %v2208
      %v2468 = vunpack.c.h.b16 %v2208
      %v2469 = vunpack.c.l.b16 %v2209
      %v2470 = vunpack.c.h.b16 %v2209
      %v2471 = vunpack.c.l.b16 %v2210
      %v2472 = vunpack.c.h.b16 %v2210
      %v2473 = vunpack.c.l.b16 %v2211
      %v2474 = vunpack.c.h.b16 %v2211
      %v2475 = vunpack.c.l.b16 %v2212
      %v2476 = vunpack.c.h.b16 %v2212
      %v2477 = vunpack.c.l.b16 %v2213
      %v2478 = vunpack.c.h.b16 %v2213
      %v2479 = vunpack.c.l.b16 %v2214
      %v2480 = vunpack.c.h.b16 %v2214
      %v2481 = vunpack.c.l.b16 %v2215
      %v2482 = vunpack.c.h.b16 %v2215
      %v2483 = vunpack.c.l.b16 %v2216
      %v2484 = vunpack.c.h.b16 %v2216
      %v2485 = vunpack.c.l.b16 %v2217
      %v2486 = vunpack.c.h.b16 %v2217
      %v2487 = vunpack.c.l.b16 %v2218
      %v2488 = vunpack.c.h.b16 %v2218
      %v2489 = vunpack.c.l.b16 %v2219
      %v2490 = vunpack.c.h.b16 %v2219
      %v2491 = vunpack.c.l.b16 %v2220
      %v2492 = vunpack.c.h.b16 %v2220
      %v2493 = vunpack.c.l.b16 %v2221
      %v2494 = vunpack.c.h.b16 %v2221
      %v2495 = vunpack.c.l.b16 %v2222
      %v2496 = vunpack.c.h.b16 %v2222
      %v2497 = vunpack.c.l.b16 %v2223
      %v2498 = vunpack.c.h.b16 %v2223
      %v2499 = vunpack.c.l.b16 %v2224
      %v2500 = vunpack.c.h.b16 %v2224
      %v2501 = vunpack.c.l.b16 %v2225
      %v2502 = vunpack.c.h.b16 %v2225
      %v2503 = vunpack.c.l.b16 %v2226
      %v2504 = vunpack.c.h.b16 %v2226
      %v2505 = vunpack.c.l.b16 %v2227
      %v2506 = vunpack.c.h.b16 %v2227
      %v2507 = vunpack.c.l.b16 %v2228
      %v2508 = vunpack.c.h.b16 %v2228
      %v2509 = vunpack.c.l.b16 %v2229
      %v2510 = vunpack.c.h.b16 %v2229
      %v2511 = vunpack.c.l.b16 %v2230
      %v2512 = vunpack.c.h.b16 %v2230
      %v2513 = vunpack.c.l.b16 %v2231
      %v2514 = vunpack.c.h.b16 %v2231
      %v2515 = vunpack.c.l.b16 %v2232
      %v2516 = vunpack.c.h.b16 %v2232
      %v2517 = vunpack.c.l.b16 %v2233
      %v2518 = vunpack.c.h.b16 %v2233
      %v2519 = vunpack.c.l.b16 %v2234
      %v2520 = vunpack.c.h.b16 %v2234
      %v2521 = vunpack.c.l.b16 %v2235
      %v2522 = vunpack.c.h.b16 %v2235
      %v2523 = vunpack.c.l.b16 %v2236
      %v2524 = vunpack.c.h.b16 %v2236
      %v2525 = vunpack.c.l.b16 %v2237
      %v2526 = vunpack.c.h.b16 %v2237
      %v2527 = vunpack.c.l.b16 %v2238
      %v2528 = vunpack.c.h.b16 %v2238
      %v2529 = vunpack.c.l.b16 %v2239
      %v2530 = vunpack.c.h.b16 %v2239
      %v2531 = vpack.c.b16 %v2379, %v2341
      %v2532 = vpack.c.b16 %v2380, %v2342
      %v2533 = vpack.c.b16 %v2381, %v2343
      %v2534 = vpack.c.b16 %v2382, %v2344
      %v2535 = vpack.c.b16 %v2383, %v2345
      %v2536 = vpack.c.b16 %v2384, %v2346
      %v2537 = vpack.c.b16 %v2385, %v2347
      %v2538 = vpack.c.b16 %v2386, %v2348
      %v2539 = vpack.c.b16 %v2387, %v2349
      %v2540 = vpack.c.b16 %v2388, %v2350
      %v2541 = vpack.c.b16 %v2389, %v2351
      %v2542 = vpack.c.b16 %v2390, %v2352
      %v2543 = vpack.c.b16 %v2391, %v2353
      %v2544 = vpack.c.b16 %v2392, %v2354
      %v2545 = vpack.c.b16 %v2393, %v2355
      %v2546 = vpack.c.b16 %v2394, %v2356
      %v2547 = vpack.c.b16 %v2395, %v2357
      %v2548 = vpack.c.b16 %v2396, %v2358
      %v2549 = vpack.c.b16 %v2397, %v2359
      %v2550 = vpack.c.b16 %v2398, %v2360
      %v2551 = vpack.c.b16 %v2399, %v2361
      %v2552 = vpack.c.b16 %v2400, %v2362
      %v2553 = vpack.c.b16 %v2401, %v2363
      %v2554 = vpack.c.b16 %v2402, %v2364
      %v2555 = vpack.c.b16 %v2403, %v2365
      %v2556 = vpack.c.b16 %v2404, %v2366
      %v2557 = vpack.c.b16 %v2405, %v2367
      %v2558 = vpack.c.b16 %v2406, %v2368
      %v2559 = vpack.c.b16 %v2407, %v2369
      %v2560 = vpack.c.b16 %v2408, %v2370
      %v2561 = vpack.c.b16 %v2409, %v2371
      %v2562 = vpack.c.b16 %v2410, %v2372
      %v2563 = vpack.c.b16 %v2411, %v2373
      %v2564 = vpack.c.b16 %v2412, %v2374
      %v2565 = vpack.c.b16 %v2413, %v2375
      %v2566 = vpack.c.b16 %v2414, %v2376
      %v2567 = vpack.c.b16 %v2415, %v2377
      %v2568 = vpack.c.b16 %v2416, %v2378
      %v2569 = vpack.c.b16 %v2455, %v2417
      %v2570 = vpack.c.b16 %v2456, %v2418
      %v2571 = vpack.c.b16 %v2457, %v2419
      %v2572 = vpack.c.b16 %v2458, %v2420
      %v2573 = vpack.c.b16 %v2459, %v2421
      %v2574 = vpack.c.b16 %v2460, %v2422
      %v2575 = vpack.c.b16 %v2461, %v2423
      %v2576 = vpack.c.b16 %v2462, %v2424
      %v2577 = vpack.c.b16 %v2463, %v2425
      %v2578 = vpack.c.b16 %v2464, %v2426
      %v2579 = vpack.c.b16 %v2465, %v2427
      %v2580 = vpack.c.b16 %v2466, %v2428
      %v2581 = vpack.c.b16 %v2467, %v2429
      %v2582 = vpack.c.b16 %v2468, %v2430
      %v2583 = vpack.c.b16 %v2469, %v2431
      %v2584 = vpack.c.b16 %v2470, %v2432
      %v2585 = vpack.c.b16 %v2471, %v2433
      %v2586 = vpack.c.b16 %v2472, %v2434
      %v2587 = vpack.c.b16 %v2473, %v2435
      %v2588 = vpack.c.b16 %v2474, %v2436
      %v2589 = vpack.c.b16 %v2475, %v2437
      %v2590 = vpack.c.b16 %v2476, %v2438
      %v2591 = vpack.c.b16 %v2477, %v2439
      %v2592 = vpack.c.b16 %v2478, %v2440
      %v2593 = vpack.c.b16 %v2479, %v2441
      %v2594 = vpack.c.b16 %v2480, %v2442
      %v2595 = vpack.c.b16 %v2481, %v2443
      %v2596 = vpack.c.b16 %v2482, %v2444
      %v2597 = vpack.c.b16 %v2483, %v2445
      %v2598 = vpack.c.b16 %v2484, %v2446
      %v2599 = vpack.c.b16 %v2485, %v2447
      %v2600 = vpack.c.b16 %v2486, %v2448
      %v2601 = vpack.c.b16 %v2487, %v2449
      %v2602 = vpack.c.b16 %v2488, %v2450
      %v2603 = vpack.c.b16 %v2489, %v2451
      %v2604 = vpack.c.b16 %v2490, %v2452
      %v2605 = vpack.c.b16 %v2491, %v2453
      %v2606 = vpack.c.b16 %v2492, %v2454
      %v2607 = vpack.c.b16 %v2493, %v2493
      %v2608 = vpack.c.b16 %v2494, %v2494
      %v2609 = vpack.c.b16 %v2495, %v2495
      %v2610 = vpack.c.b16 %v2496, %v2496
      %v2611 = vpack.c.b16 %v2497, %v2497
      %v2612 = vpack.c.b16 %v2498, %v2498
      %v2613 = vpack.c.b16 %v2499, %v2499
      %v2614 = vpack.c.b16 %v2500, %v2500
      %v2615 = vpack.c.b16 %v2501, %v2501
      %v2616 = vpack.c.b16 %v2502, %v2502
      %v2617 = vpack.c.b16 %v2503, %v2503
      %v2618 = vpack.c.b16 %v2504, %v2504
      %v2619 = vpack.c.b16 %v2505, %v2505
      %v2620 = vpack.c.b16 %v2506, %v2506
      %v2621 = vpack.c.b16 %v2507, %v2507
      %v2622 = vpack.c.b16 %v2508, %v2508
      %v2623 = vpack.c.b16 %v2509, %v2509
      %v2624 = vpack.c.b16 %v2510, %v2510
      %v2625 = vpack.c.b16 %v2511, %v2511
      %v2626 = vpack.c.b16 %v2512, %v2512
      %v2627 = vpack.c.b16 %v2513, %v2513
      %v2628 = vpack.c.b16 %v2514, %v2514
      %v2629 = vpack.c.b16 %v2515, %v2515
      %v2630 = vpack.c.b16 %v2516, %v2516
      %v2631 = vpack.c.b16 %v2517, %v2517
      %v2632 = vpack.c.b16 %v2518, %v2518
      %v2633 = vpack.c.b16 %v2519, %v2519
      %v2634 = vpack.c.b16 %v2520, %v2520
      %v2635 = vpack.c.b16 %v2521, %v2521
      %v2636 = vpack.c.b16 %v2522, %v2522
      %v2637 = vpack.c.b16 %v2523, %v2523
      %v2638 = vpack.c.b16 %v2524, %v2524
      %v2639 = vpack.c.b16 %v2525, %v2525
      %v2640 = vpack.c.b16 %v2526, %v2526
      %v2641 = vpack.c.b16 %v2527, %v2527
      %v2642 = vpack.c.b16 %v2528, %v2528
      %v2643 = vpack.c.b16 %v2529, %v2529
      %v2644 = vpack.c.b16 %v2530, %v2530
      %vm2721 = vcmask 293888
      %v2723 = vsel %vm2721, %v2144, 0
      %vm2725 = vcmask 1041408
      %v2727 = vsel %vm2725, %v2607, 0
      %v2730 = vsel %vm2725, %v2608, 0
      %v2733 = vsel %vm2725, %v2609, 0
      %v2736 = vsel %vm2725, %v2610, 0
      %v2739 = vsel %vm2725, %v2611, 0
      %v2742 = vsel %vm2725, %v2612, 0
      %v2745 = vsel %vm2725, %v2613, 0
      %v2748 = vsel %vm2725, %v2614, 0
      %v2751 = vsel %vm2725, %v2615, 0
      %v2754 = vsel %vm2725, %v2616, 0
      %v2757 = vsel %vm2725, %v2617, 0
      %v2760 = vsel %vm2725, %v2618, 0
      %v2763 = vsel %vm2725, %v2619, 0
      %v2766 = vsel %vm2725, %v2620, 0
      %v2769 = vsel %vm2725, %v2621, 0
      %v2772 = vsel %vm2725, %v2622, 0
      %v2775 = vsel %vm2725, %v2623, 0
      %v2778 = vsel %vm2725, %v2624, 0
      %v2781 = vsel %vm2725, %v2625, 0
      %v2784 = vsel %vm2725, %v2626, 0
      %v2787 = vsel %vm2725, %v2627, 0
      %v2790 = vsel %vm2725, %v2628, 0
      %v2793 = vsel %vm2725, %v2629, 0
      %v2796 = vsel %vm2725, %v2630, 0
      %v2799 = vsel %vm2725, %v2631, 0
      %v2802 = vsel %vm2725, %v2632, 0
      %v2805 = vsel %vm2725, %v2633, 0
      %v2808 = vsel %vm2725, %v2634, 0
      %v2811 = vsel %vm2725, %v2635, 0
      %v2814 = vsel %vm2725, %v2636, 0
      %v2817 = vsel %vm2725, %v2637, 0
      %v2820 = vsel %vm2725, %v2638, 0
      %v2823 = vsel %vm2725, %v2639, 0
      %v2826 = vsel %vm2725, %v2640, 0
      %v2829 = vsel %vm2725, %v2641, 0
      %v2832 = vsel %vm2725, %v2642, 0
      %v2835 = vsel %vm2725, %v2643, 0
      %v2838 = vsel %vm2725, %v2644, 0
      %2840 = vmatpush.bf16.msra.mxu0 0
      %2841 = vmatpush.bf16.msra.mxu0 0
      %2842 = vmatpush.bf16.msra.mxu0 0
      %2843 = vmatpush.bf16.msra.mxu0 0
      %2844 = vmatpush.bf16.msra.mxu0 0
      %2845 = vmatpush.bf16.msra.mxu0 %v2727
      %2846 = vmatpush.bf16.msra.mxu0 %v2569
      %2847 = vmatpush.bf16.msra.mxu0 %v2531
      %2848 = vmatmul.bf16.gmra.mxu0 %v2723
      %v2849 = vpop.f32.mrf.mxu0
      %v2850 = vadd.f32 %v2244, %v2849
      %v2851 = vpop.f32.mrf.mxu0
      %2852 = vdwg.mxu0
      %2853 = vmatpush.bf16.msra.mxu0 0
      %2854 = vmatpush.bf16.msra.mxu0 0
      %2855 = vmatpush.bf16.msra.mxu0 0
      %2856 = vmatpush.bf16.msra.mxu0 0
      %2857 = vmatpush.bf16.msra.mxu0 0
      %2858 = vmatpush.bf16.msra.mxu0 %v2730
      %2859 = vmatpush.bf16.msra.mxu0 %v2570
      %2860 = vmatpush.bf16.msra.mxu0 %v2532
      %2861 = vmatmul.bf16.gmra.mxu0 %v2723
      %v2862 = vpop.f32.mrf.mxu0
      %v2863 = vadd.f32 %v2244, %v2862
      %v2864 = vpop.f32.mrf.mxu0
      %2865 = vdwg.mxu0
      %2866 = vmatpush.bf16.msra.mxu0 0
      %2867 = vmatpush.bf16.msra.mxu0 0
      %2868 = vmatpush.bf16.msra.mxu0 0
      %2869 = vmatpush.bf16.msra.mxu0 0
      %2870 = vmatpush.bf16.msra.mxu0 0
      %2871 = vmatpush.bf16.msra.mxu0 %v2733
      %2872 = vmatpush.bf16.msra.mxu0 %v2571
      %2873 = vmatpush.bf16.msra.mxu0 %v2533
      %2874 = vmatmul.bf16.gmra.mxu0 %v2723
      %v2875 = vpop.f32.mrf.mxu0
      %v2876 = vadd.f32 %v2244, %v2875
      %v2877 = vpop.f32.mrf.mxu0
      %2878 = vdwg.mxu0
      %2879 = vmatpush.bf16.msra.mxu0 0
      %2880 = vmatpush.bf16.msra.mxu0 0
      %2881 = vmatpush.bf16.msra.mxu0 0
      %2882 = vmatpush.bf16.msra.mxu0 0
      %2883 = vmatpush.bf16.msra.mxu0 0
      %2884 = vmatpush.bf16.msra.mxu0 %v2736
      %2885 = vmatpush.bf16.msra.mxu0 %v2572
      %2886 = vmatpush.bf16.msra.mxu0 %v2534
      %2887 = vmatmul.bf16.gmra.mxu0 %v2723
      %v2888 = vpop.f32.mrf.mxu0
      %v2889 = vadd.f32 %v2244, %v2888
      %v2890 = vpop.f32.mrf.mxu0
      %2891 = vdwg.mxu0
      %2892 = vmatpush.bf16.msra.mxu0 0
      %2893 = vmatpush.bf16.msra.mxu0 0
      %2894 = vmatpush.bf16.msra.mxu0 0
      %2895 = vmatpush.bf16.msra.mxu0 0
      %2896 = vmatpush.bf16.msra.mxu0 0
      %2897 = vmatpush.bf16.msra.mxu0 %v2739
      %2898 = vmatpush.bf16.msra.mxu0 %v2573
      %2899 = vmatpush.bf16.msra.mxu0 %v2535
      %2900 = vmatmul.bf16.gmra.mxu0 %v2723
      %v2901 = vpop.f32.mrf.mxu0
      %v2902 = vadd.f32 %v2244, %v2901
      %v2903 = vpop.f32.mrf.mxu0
      %2904 = vdwg.mxu0
      %2905 = vmatpush.bf16.msra.mxu0 0
      %2906 = vmatpush.bf16.msra.mxu0 0
      %2907 = vmatpush.bf16.msra.mxu0 0
      %2908 = vmatpush.bf16.msra.mxu0 0
      %2909 = vmatpush.bf16.msra.mxu0 0
      %2910 = vmatpush.bf16.msra.mxu0 %v2742
      %2911 = vmatpush.bf16.msra.mxu0 %v2574
      %2912 = vmatpush.bf16.msra.mxu0 %v2536
      %2913 = vmatmul.bf16.gmra.mxu0 %v2723
      %v2914 = vpop.f32.mrf.mxu0
      %v2915 = vadd.f32 %v2244, %v2914
      %v2916 = vpop.f32.mrf.mxu0
      %2917 = vdwg.mxu0
      %2918 = vmatpush.bf16.msra.mxu0 0
      %2919 = vmatpush.bf16.msra.mxu0 0
      %2920 = vmatpush.bf16.msra.mxu0 0
      %2921 = vmatpush.bf16.msra.mxu0 0
      %2922 = vmatpush.bf16.msra.mxu0 0
      %2923 = vmatpush.bf16.msra.mxu0 %v2745
      %2924 = vmatpush.bf16.msra.mxu0 %v2575
      %2925 = vmatpush.bf16.msra.mxu0 %v2537
      %2926 = vmatmul.bf16.gmra.mxu0 %v2723
      %v2927 = vpop.f32.mrf.mxu0
      %v2928 = vadd.f32 %v2244, %v2927
      %v2929 = vpop.f32.mrf.mxu0
      %2930 = vdwg.mxu0
      %2931 = vmatpush.bf16.msra.mxu0 0
      %2932 = vmatpush.bf16.msra.mxu0 0
      %2933 = vmatpush.bf16.msra.mxu0 0
      %2934 = vmatpush.bf16.msra.mxu0 0
      %2935 = vmatpush.bf16.msra.mxu0 0
      %2936 = vmatpush.bf16.msra.mxu0 %v2748
      %2937 = vmatpush.bf16.msra.mxu0 %v2576
      %2938 = vmatpush.bf16.msra.mxu0 %v2538
      %2939 = vmatmul.bf16.gmra.mxu0 %v2723
      %v2940 = vpop.f32.mrf.mxu0
      %v2941 = vadd.f32 %v2244, %v2940
      %v2942 = vpop.f32.mrf.mxu0
      %2943 = vdwg.mxu0
      %2944 = vmatpush.bf16.msra.mxu0 0
      %2945 = vmatpush.bf16.msra.mxu0 0
      %2946 = vmatpush.bf16.msra.mxu0 0
      %2947 = vmatpush.bf16.msra.mxu0 0
      %2948 = vmatpush.bf16.msra.mxu0 0
      %2949 = vmatpush.bf16.msra.mxu0 %v2751
      %2950 = vmatpush.bf16.msra.mxu0 %v2577
      %2951 = vmatpush.bf16.msra.mxu0 %v2539
      %2952 = vmatmul.bf16.gmra.mxu0 %v2723
      %v2953 = vpop.f32.mrf.mxu0
      %v2954 = vadd.f32 %v2244, %v2953
      %v2955 = vpop.f32.mrf.mxu0
      %2956 = vdwg.mxu0
      %2957 = vmatpush.bf16.msra.mxu0 0
      %2958 = vmatpush.bf16.msra.mxu0 0
      %2959 = vmatpush.bf16.msra.mxu0 0
      %2960 = vmatpush.bf16.msra.mxu0 0
      %2961 = vmatpush.bf16.msra.mxu0 0
      %2962 = vmatpush.bf16.msra.mxu0 %v2754
      %2963 = vmatpush.bf16.msra.mxu0 %v2578
      %2964 = vmatpush.bf16.msra.mxu0 %v2540
      %2965 = vmatmul.bf16.gmra.mxu0 %v2723
      %v2966 = vpop.f32.mrf.mxu0
      %v2967 = vadd.f32 %v2244, %v2966
      %v2968 = vpop.f32.mrf.mxu0
      %2969 = vdwg.mxu0
      %2970 = vmatpush.bf16.msra.mxu0 0
      %2971 = vmatpush.bf16.msra.mxu0 0
      %2972 = vmatpush.bf16.msra.mxu0 0
      %2973 = vmatpush.bf16.msra.mxu0 0
      %2974 = vmatpush.bf16.msra.mxu0 0
      %2975 = vmatpush.bf16.msra.mxu0 %v2757
      %2976 = vmatpush.bf16.msra.mxu0 %v2579
      %2977 = vmatpush.bf16.msra.mxu0 %v2541
      %2978 = vmatmul.bf16.gmra.mxu0 %v2723
      %v2979 = vpop.f32.mrf.mxu0
      %v2980 = vadd.f32 %v2244, %v2979
      %v2981 = vpop.f32.mrf.mxu0
      %2982 = vdwg.mxu0
      %2983 = vmatpush.bf16.msra.mxu0 0
      %2984 = vmatpush.bf16.msra.mxu0 0
      %2985 = vmatpush.bf16.msra.mxu0 0
      %2986 = vmatpush.bf16.msra.mxu0 0
      %2987 = vmatpush.bf16.msra.mxu0 0
      %2988 = vmatpush.bf16.msra.mxu0 %v2760
      %2989 = vmatpush.bf16.msra.mxu0 %v2580
      %2990 = vmatpush.bf16.msra.mxu0 %v2542
      %2991 = vmatmul.bf16.gmra.mxu0 %v2723
      %v2992 = vpop.f32.mrf.mxu0
      %v2993 = vadd.f32 %v2244, %v2992
      %v2994 = vpop.f32.mrf.mxu0
      %2995 = vdwg.mxu0
      %2996 = vmatpush.bf16.msra.mxu0 0
      %2997 = vmatpush.bf16.msra.mxu0 0
      %2998 = vmatpush.bf16.msra.mxu0 0
      %2999 = vmatpush.bf16.msra.mxu0 0
      %3000 = vmatpush.bf16.msra.mxu0 0
      %3001 = vmatpush.bf16.msra.mxu0 %v2763
      %3002 = vmatpush.bf16.msra.mxu0 %v2581
      %3003 = vmatpush.bf16.msra.mxu0 %v2543
      %3004 = vmatmul.bf16.gmra.mxu0 %v2723
      %v3005 = vpop.f32.mrf.mxu0
      %v3006 = vadd.f32 %v2244, %v3005
      %v3007 = vpop.f32.mrf.mxu0
      %3008 = vdwg.mxu0
      %3009 = vmatpush.bf16.msra.mxu0 0
      %3010 = vmatpush.bf16.msra.mxu0 0
      %3011 = vmatpush.bf16.msra.mxu0 0
      %3012 = vmatpush.bf16.msra.mxu0 0
      %3013 = vmatpush.bf16.msra.mxu0 0
      %3014 = vmatpush.bf16.msra.mxu0 %v2766
      %3015 = vmatpush.bf16.msra.mxu0 %v2582
      %3016 = vmatpush.bf16.msra.mxu0 %v2544
      %3017 = vmatmul.bf16.gmra.mxu0 %v2723
      %v3018 = vpop.f32.mrf.mxu0
      %v3019 = vadd.f32 %v2244, %v3018
      %v3020 = vpop.f32.mrf.mxu0
      %3021 = vdwg.mxu0
      %3022 = vmatpush.bf16.msra.mxu0 0
      %3023 = vmatpush.bf16.msra.mxu0 0
      %3024 = vmatpush.bf16.msra.mxu0 0
      %3025 = vmatpush.bf16.msra.mxu0 0
      %3026 = vmatpush.bf16.msra.mxu0 0
      %3027 = vmatpush.bf16.msra.mxu0 %v2769
      %3028 = vmatpush.bf16.msra.mxu0 %v2583
      %3029 = vmatpush.bf16.msra.mxu0 %v2545
      %3030 = vmatmul.bf16.gmra.mxu0 %v2723
      %v3031 = vpop.f32.mrf.mxu0
      %v3032 = vadd.f32 %v2244, %v3031
      %v3033 = vpop.f32.mrf.mxu0
      %3034 = vdwg.mxu0
      %3035 = vmatpush.bf16.msra.mxu0 0
      %3036 = vmatpush.bf16.msra.mxu0 0
      %3037 = vmatpush.bf16.msra.mxu0 0
      %3038 = vmatpush.bf16.msra.mxu0 0
      %3039 = vmatpush.bf16.msra.mxu0 0
      %3040 = vmatpush.bf16.msra.mxu0 %v2772
      %3041 = vmatpush.bf16.msra.mxu0 %v2584
      %3042 = vmatpush.bf16.msra.mxu0 %v2546
      %3043 = vmatmul.bf16.gmra.mxu0 %v2723
      %v3044 = vpop.f32.mrf.mxu0
      %v3045 = vadd.f32 %v2244, %v3044
      %v3046 = vpop.f32.mrf.mxu0
      %3047 = vdwg.mxu0
      %3048 = vmatpush.bf16.msra.mxu0 0
      %3049 = vmatpush.bf16.msra.mxu0 0
      %3050 = vmatpush.bf16.msra.mxu0 0
      %3051 = vmatpush.bf16.msra.mxu0 0
      %3052 = vmatpush.bf16.msra.mxu0 0
      %3053 = vmatpush.bf16.msra.mxu0 %v2775
      %3054 = vmatpush.bf16.msra.mxu0 %v2585
      %3055 = vmatpush.bf16.msra.mxu0 %v2547
      %3056 = vmatmul.bf16.gmra.mxu0 %v2723
      %v3057 = vpop.f32.mrf.mxu0
      %v3058 = vadd.f32 %v2244, %v3057
      %v3059 = vpop.f32.mrf.mxu0
      %3060 = vdwg.mxu0
      %3061 = vmatpush.bf16.msra.mxu0 0
      %3062 = vmatpush.bf16.msra.mxu0 0
      %3063 = vmatpush.bf16.msra.mxu0 0
      %3064 = vmatpush.bf16.msra.mxu0 0
      %3065 = vmatpush.bf16.msra.mxu0 0
      %3066 = vmatpush.bf16.msra.mxu0 %v2778
      %3067 = vmatpush.bf16.msra.mxu0 %v2586
      %3068 = vmatpush.bf16.msra.mxu0 %v2548
      %3069 = vmatmul.bf16.gmra.mxu0 %v2723
      %v3070 = vpop.f32.mrf.mxu0
      %v3071 = vadd.f32 %v2244, %v3070
      %v3072 = vpop.f32.mrf.mxu0
      %3073 = vdwg.mxu0
      %3074 = vmatpush.bf16.msra.mxu0 0
      %3075 = vmatpush.bf16.msra.mxu0 0
      %3076 = vmatpush.bf16.msra.mxu0 0
      %3077 = vmatpush.bf16.msra.mxu0 0
      %3078 = vmatpush.bf16.msra.mxu0 0
      %3079 = vmatpush.bf16.msra.mxu0 %v2781
      %3080 = vmatpush.bf16.msra.mxu0 %v2587
      %3081 = vmatpush.bf16.msra.mxu0 %v2549
      %3082 = vmatmul.bf16.gmra.mxu0 %v2723
      %v3083 = vpop.f32.mrf.mxu0
      %v3084 = vadd.f32 %v2244, %v3083
      %v3085 = vpop.f32.mrf.mxu0
      %3086 = vdwg.mxu0
      %3087 = vmatpush.bf16.msra.mxu0 0
      %3088 = vmatpush.bf16.msra.mxu0 0
      %3089 = vmatpush.bf16.msra.mxu0 0
      %3090 = vmatpush.bf16.msra.mxu0 0
      %3091 = vmatpush.bf16.msra.mxu0 0
      %3092 = vmatpush.bf16.msra.mxu0 %v2784
      %3093 = vmatpush.bf16.msra.mxu0 %v2588
      %3094 = vmatpush.bf16.msra.mxu0 %v2550
      %3095 = vmatmul.bf16.gmra.mxu0 %v2723
      %v3096 = vpop.f32.mrf.mxu0
      %v3097 = vadd.f32 %v2244, %v3096
      %v3098 = vpop.f32.mrf.mxu0
      %3099 = vdwg.mxu0
      %3100 = vmatpush.bf16.msra.mxu0 0
      %3101 = vmatpush.bf16.msra.mxu0 0
      %3102 = vmatpush.bf16.msra.mxu0 0
      %3103 = vmatpush.bf16.msra.mxu0 0
      %3104 = vmatpush.bf16.msra.mxu0 0
      %3105 = vmatpush.bf16.msra.mxu0 %v2787
      %3106 = vmatpush.bf16.msra.mxu0 %v2589
      %3107 = vmatpush.bf16.msra.mxu0 %v2551
      %3108 = vmatmul.bf16.gmra.mxu0 %v2723
      %v3109 = vpop.f32.mrf.mxu0
      %v3110 = vadd.f32 %v2244, %v3109
      %v3111 = vpop.f32.mrf.mxu0
      %3112 = vdwg.mxu0
      %3113 = vmatpush.bf16.msra.mxu0 0
      %3114 = vmatpush.bf16.msra.mxu0 0
      %3115 = vmatpush.bf16.msra.mxu0 0
      %3116 = vmatpush.bf16.msra.mxu0 0
      %3117 = vmatpush.bf16.msra.mxu0 0
      %3118 = vmatpush.bf16.msra.mxu0 %v2790
      %3119 = vmatpush.bf16.msra.mxu0 %v2590
      %3120 = vmatpush.bf16.msra.mxu0 %v2552
      %3121 = vmatmul.bf16.gmra.mxu0 %v2723
      %v3122 = vpop.f32.mrf.mxu0
      %v3123 = vadd.f32 %v2244, %v3122
      %v3124 = vpop.f32.mrf.mxu0
      %3125 = vdwg.mxu0
      %3126 = vmatpush.bf16.msra.mxu0 0
      %3127 = vmatpush.bf16.msra.mxu0 0
      %3128 = vmatpush.bf16.msra.mxu0 0
      %3129 = vmatpush.bf16.msra.mxu0 0
      %3130 = vmatpush.bf16.msra.mxu0 0
      %3131 = vmatpush.bf16.msra.mxu0 %v2793
      %3132 = vmatpush.bf16.msra.mxu0 %v2591
      %3133 = vmatpush.bf16.msra.mxu0 %v2553
      %3134 = vmatmul.bf16.gmra.mxu0 %v2723
      %v3135 = vpop.f32.mrf.mxu0
      %v3136 = vadd.f32 %v2244, %v3135
      %v3137 = vpop.f32.mrf.mxu0
      %3138 = vdwg.mxu0
      %3139 = vmatpush.bf16.msra.mxu0 0
      %3140 = vmatpush.bf16.msra.mxu0 0
      %3141 = vmatpush.bf16.msra.mxu0 0
      %3142 = vmatpush.bf16.msra.mxu0 0
      %3143 = vmatpush.bf16.msra.mxu0 0
      %3144 = vmatpush.bf16.msra.mxu0 %v2796
      %3145 = vmatpush.bf16.msra.mxu0 %v2592
      %3146 = vmatpush.bf16.msra.mxu0 %v2554
      %3147 = vmatmul.bf16.gmra.mxu0 %v2723
      %v3148 = vpop.f32.mrf.mxu0
      %v3149 = vadd.f32 %v2244, %v3148
      %v3150 = vpop.f32.mrf.mxu0
      %3151 = vdwg.mxu0
      %3152 = vmatpush.bf16.msra.mxu0 0
      %3153 = vmatpush.bf16.msra.mxu0 0
      %3154 = vmatpush.bf16.msra.mxu0 0
      %3155 = vmatpush.bf16.msra.mxu0 0
      %3156 = vmatpush.bf16.msra.mxu0 0
      %3157 = vmatpush.bf16.msra.mxu0 %v2799
      %3158 = vmatpush.bf16.msra.mxu0 %v2593
      %3159 = vmatpush.bf16.msra.mxu0 %v2555
      %3160 = vmatmul.bf16.gmra.mxu0 %v2723
      %v3161 = vpop.f32.mrf.mxu0
      %v3162 = vadd.f32 %v2244, %v3161
      %v3163 = vpop.f32.mrf.mxu0
      %3164 = vdwg.mxu0
      %3165 = vmatpush.bf16.msra.mxu0 0
      %3166 = vmatpush.bf16.msra.mxu0 0
      %3167 = vmatpush.bf16.msra.mxu0 0
      %3168 = vmatpush.bf16.msra.mxu0 0
      %3169 = vmatpush.bf16.msra.mxu0 0
      %3170 = vmatpush.bf16.msra.mxu0 %v2802
      %3171 = vmatpush.bf16.msra.mxu0 %v2594
      %3172 = vmatpush.bf16.msra.mxu0 %v2556
      %3173 = vmatmul.bf16.gmra.mxu0 %v2723
      %v3174 = vpop.f32.mrf.mxu0
      %v3175 = vadd.f32 %v2244, %v3174
      %v3176 = vpop.f32.mrf.mxu0
      %3177 = vdwg.mxu0
      %3178 = vmatpush.bf16.msra.mxu0 0
      %3179 = vmatpush.bf16.msra.mxu0 0
      %3180 = vmatpush.bf16.msra.mxu0 0
      %3181 = vmatpush.bf16.msra.mxu0 0
      %3182 = vmatpush.bf16.msra.mxu0 0
      %3183 = vmatpush.bf16.msra.mxu0 %v2805
      %3184 = vmatpush.bf16.msra.mxu0 %v2595
      %3185 = vmatpush.bf16.msra.mxu0 %v2557
      %3186 = vmatmul.bf16.gmra.mxu0 %v2723
      %v3187 = vpop.f32.mrf.mxu0
      %v3188 = vadd.f32 %v2244, %v3187
      %v3189 = vpop.f32.mrf.mxu0
      %3190 = vdwg.mxu0
      %3191 = vmatpush.bf16.msra.mxu0 0
      %3192 = vmatpush.bf16.msra.mxu0 0
      %3193 = vmatpush.bf16.msra.mxu0 0
      %3194 = vmatpush.bf16.msra.mxu0 0
      %3195 = vmatpush.bf16.msra.mxu0 0
      %3196 = vmatpush.bf16.msra.mxu0 %v2808
      %3197 = vmatpush.bf16.msra.mxu0 %v2596
      %3198 = vmatpush.bf16.msra.mxu0 %v2558
      %3199 = vmatmul.bf16.gmra.mxu0 %v2723
      %v3200 = vpop.f32.mrf.mxu0
      %v3201 = vadd.f32 %v2244, %v3200
      %v3202 = vpop.f32.mrf.mxu0
      %3203 = vdwg.mxu0
      %3204 = vmatpush.bf16.msra.mxu0 0
      %3205 = vmatpush.bf16.msra.mxu0 0
      %3206 = vmatpush.bf16.msra.mxu0 0
      %3207 = vmatpush.bf16.msra.mxu0 0
      %3208 = vmatpush.bf16.msra.mxu0 0
      %3209 = vmatpush.bf16.msra.mxu0 %v2811
      %3210 = vmatpush.bf16.msra.mxu0 %v2597
      %3211 = vmatpush.bf16.msra.mxu0 %v2559
      %3212 = vmatmul.bf16.gmra.mxu0 %v2723
      %v3213 = vpop.f32.mrf.mxu0
      %v3214 = vadd.f32 %v2244, %v3213
      %v3215 = vpop.f32.mrf.mxu0
      %3216 = vdwg.mxu0
      %3217 = vmatpush.bf16.msra.mxu0 0
      %3218 = vmatpush.bf16.msra.mxu0 0
      %3219 = vmatpush.bf16.msra.mxu0 0
      %3220 = vmatpush.bf16.msra.mxu0 0
      %3221 = vmatpush.bf16.msra.mxu0 0
      %3222 = vmatpush.bf16.msra.mxu0 %v2814
      %3223 = vmatpush.bf16.msra.mxu0 %v2598
      %3224 = vmatpush.bf16.msra.mxu0 %v2560
      %3225 = vmatmul.bf16.gmra.mxu0 %v2723
      %v3226 = vpop.f32.mrf.mxu0
      %v3227 = vadd.f32 %v2244, %v3226
      %v3228 = vpop.f32.mrf.mxu0
      %3229 = vdwg.mxu0
      %3230 = vmatpush.bf16.msra.mxu0 0
      %3231 = vmatpush.bf16.msra.mxu0 0
      %3232 = vmatpush.bf16.msra.mxu0 0
      %3233 = vmatpush.bf16.msra.mxu0 0
      %3234 = vmatpush.bf16.msra.mxu0 0
      %3235 = vmatpush.bf16.msra.mxu0 %v2817
      %3236 = vmatpush.bf16.msra.mxu0 %v2599
      %3237 = vmatpush.bf16.msra.mxu0 %v2561
      %3238 = vmatmul.bf16.gmra.mxu0 %v2723
      %v3239 = vpop.f32.mrf.mxu0
      %v3240 = vadd.f32 %v2244, %v3239
      %v3241 = vpop.f32.mrf.mxu0
      %3242 = vdwg.mxu0
      %3243 = vmatpush.bf16.msra.mxu0 0
      %3244 = vmatpush.bf16.msra.mxu0 0
      %3245 = vmatpush.bf16.msra.mxu0 0
      %3246 = vmatpush.bf16.msra.mxu0 0
      %3247 = vmatpush.bf16.msra.mxu0 0
      %3248 = vmatpush.bf16.msra.mxu0 %v2820
      %3249 = vmatpush.bf16.msra.mxu0 %v2600
      %3250 = vmatpush.bf16.msra.mxu0 %v2562
      %3251 = vmatmul.bf16.gmra.mxu0 %v2723
      %v3252 = vpop.f32.mrf.mxu0
      %v3253 = vadd.f32 %v2244, %v3252
      %v3254 = vpop.f32.mrf.mxu0
      %3255 = vdwg.mxu0
      %3256 = vmatpush.bf16.msra.mxu0 0
      %3257 = vmatpush.bf16.msra.mxu0 0
      %3258 = vmatpush.bf16.msra.mxu0 0
      %3259 = vmatpush.bf16.msra.mxu0 0
      %3260 = vmatpush.bf16.msra.mxu0 0
      %3261 = vmatpush.bf16.msra.mxu0 %v2823
      %3262 = vmatpush.bf16.msra.mxu0 %v2601
      %3263 = vmatpush.bf16.msra.mxu0 %v2563
      %3264 = vmatmul.bf16.gmra.mxu0 %v2723
      %v3265 = vpop.f32.mrf.mxu0
      %v3266 = vadd.f32 %v2244, %v3265
      %v3267 = vpop.f32.mrf.mxu0
      %3268 = vdwg.mxu0
      %3269 = vmatpush.bf16.msra.mxu0 0
      %3270 = vmatpush.bf16.msra.mxu0 0
      %3271 = vmatpush.bf16.msra.mxu0 0
      %3272 = vmatpush.bf16.msra.mxu0 0
      %3273 = vmatpush.bf16.msra.mxu0 0
      %3274 = vmatpush.bf16.msra.mxu0 %v2826
      %3275 = vmatpush.bf16.msra.mxu0 %v2602
      %3276 = vmatpush.bf16.msra.mxu0 %v2564
      %3277 = vmatmul.bf16.gmra.mxu0 %v2723
      %v3278 = vpop.f32.mrf.mxu0
      %v3279 = vadd.f32 %v2244, %v3278
      %v3280 = vpop.f32.mrf.mxu0
      %3281 = vdwg.mxu0
      %3282 = vmatpush.bf16.msra.mxu0 0
      %3283 = vmatpush.bf16.msra.mxu0 0
      %3284 = vmatpush.bf16.msra.mxu0 0
      %3285 = vmatpush.bf16.msra.mxu0 0
      %3286 = vmatpush.bf16.msra.mxu0 0
      %3287 = vmatpush.bf16.msra.mxu0 %v2829
      %3288 = vmatpush.bf16.msra.mxu0 %v2603
      %3289 = vmatpush.bf16.msra.mxu0 %v2565
      %3290 = vmatmul.bf16.gmra.mxu0 %v2723
      %v3291 = vpop.f32.mrf.mxu0
      %v3292 = vadd.f32 %v2244, %v3291
      %v3293 = vpop.f32.mrf.mxu0
      %3294 = vdwg.mxu0
      %3295 = vmatpush.bf16.msra.mxu0 0
      %3296 = vmatpush.bf16.msra.mxu0 0
      %3297 = vmatpush.bf16.msra.mxu0 0
      %3298 = vmatpush.bf16.msra.mxu0 0
      %3299 = vmatpush.bf16.msra.mxu0 0
      %3300 = vmatpush.bf16.msra.mxu0 %v2832
      %3301 = vmatpush.bf16.msra.mxu0 %v2604
      %3302 = vmatpush.bf16.msra.mxu0 %v2566
      %3303 = vmatmul.bf16.gmra.mxu0 %v2723
      %v3304 = vpop.f32.mrf.mxu0
      %v3305 = vadd.f32 %v2244, %v3304
      %v3306 = vpop.f32.mrf.mxu0
      %3307 = vdwg.mxu0
      %3308 = vmatpush.bf16.msra.mxu0 0
      %3309 = vmatpush.bf16.msra.mxu0 0
      %3310 = vmatpush.bf16.msra.mxu0 0
      %3311 = vmatpush.bf16.msra.mxu0 0
      %3312 = vmatpush.bf16.msra.mxu0 0
      %3313 = vmatpush.bf16.msra.mxu0 %v2835
      %3314 = vmatpush.bf16.msra.mxu0 %v2605
      %3315 = vmatpush.bf16.msra.mxu0 %v2567
      %3316 = vmatmul.bf16.gmra.mxu0 %v2723
      %v3317 = vpop.f32.mrf.mxu0
      %v3318 = vadd.f32 %v2244, %v3317
      %v3319 = vpop.f32.mrf.mxu0
      %3320 = vdwg.mxu0
      %3321 = vmatpush.bf16.msra.mxu0 0
      %3322 = vmatpush.bf16.msra.mxu0 0
      %3323 = vmatpush.bf16.msra.mxu0 0
      %3324 = vmatpush.bf16.msra.mxu0 0
      %3325 = vmatpush.bf16.msra.mxu0 0
      %3326 = vmatpush.bf16.msra.mxu0 %v2838
      %3327 = vmatpush.bf16.msra.mxu0 %v2606
      %3328 = vmatpush.bf16.msra.mxu0 %v2568
      %3329 = vmatmul.bf16.gmra.mxu0 %v2723
      %v3330 = vpop.f32.mrf.mxu0
      %v3331 = vadd.f32 %v2244, %v3330
      %v3332 = vpop.f32.mrf.mxu0
      %3333 = vdwg.mxu0
      %v3334 = vmax.f32 %v2850, 0.0
      %v3335 = vmax.f32 %v2863, 0.0
      %v3336 = vmax.f32 %v2876, 0.0
      %v3337 = vmax.f32 %v2889, 0.0
      %v3338 = vmax.f32 %v2902, 0.0
      %v3339 = vmax.f32 %v2915, 0.0
      %v3340 = vmax.f32 %v2928, 0.0
      %v3341 = vmax.f32 %v2941, 0.0
      %v3342 = vmax.f32 %v2954, 0.0
      %v3343 = vmax.f32 %v2967, 0.0
      %v3344 = vmax.f32 %v2980, 0.0
      %v3345 = vmax.f32 %v2993, 0.0
      %v3346 = vmax.f32 %v3006, 0.0
      %v3347 = vmax.f32 %v3019, 0.0
      %v3348 = vmax.f32 %v3032, 0.0
      %v3349 = vmax.f32 %v3045, 0.0
      %v3350 = vmax.f32 %v3058, 0.0
      %v3351 = vmax.f32 %v3071, 0.0
      %v3352 = vmax.f32 %v3084, 0.0
      %v3353 = vmax.f32 %v3097, 0.0
      %v3354 = vmax.f32 %v3110, 0.0
      %v3355 = vmax.f32 %v3123, 0.0
      %v3356 = vmax.f32 %v3136, 0.0
      %v3357 = vmax.f32 %v3149, 0.0
      %v3358 = vmax.f32 %v3162, 0.0
      %v3359 = vmax.f32 %v3175, 0.0
      %v3360 = vmax.f32 %v3188, 0.0
      %v3361 = vmax.f32 %v3201, 0.0
      %v3362 = vmax.f32 %v3214, 0.0
      %v3363 = vmax.f32 %v3227, 0.0
      %v3364 = vmax.f32 %v3240, 0.0
      %v3365 = vmax.f32 %v3253, 0.0
      %v3366 = vmax.f32 %v3266, 0.0
      %v3367 = vmax.f32 %v3279, 0.0
      %v3368 = vmax.f32 %v3292, 0.0
      %v3369 = vmax.f32 %v3305, 0.0
      %v3370 = vmax.f32 %v3318, 0.0
      %v3371 = vmax.f32 %v3331, 0.0
      %v3372 = vsel %vm364, 1, 0
      %v3373 = vsel %vm365, 1, 0
      %v3374 = vsel %vm366, 1, 0
      %v3375 = vsel %vm367, 1, 0
      %v3376 = vsel %vm368, 1, 0
      %v3377 = vperm.slane %v3372, 0
      %v3378 = vperm.slane %v3372, 1
      %v3379 = vperm.slane %v3372, 2
      %v3380 = vperm.slane %v3372, 3
      %v3381 = vperm.slane %v3372, 4
      %v3382 = vperm.slane %v3372, 5
      %v3383 = vperm.slane %v3372, 6
      %v3384 = vperm.slane %v3372, 7
      %v3385 = vperm.slane %v3373, 0
      %v3386 = vperm.slane %v3373, 1
      %v3387 = vperm.slane %v3373, 2
      %v3388 = vperm.slane %v3373, 3
      %v3389 = vperm.slane %v3373, 4
      %v3390 = vperm.slane %v3373, 5
      %v3391 = vperm.slane %v3373, 6
      %v3392 = vperm.slane %v3373, 7
      %v3393 = vperm.slane %v3374, 0
      %v3394 = vperm.slane %v3374, 1
      %v3395 = vperm.slane %v3374, 2
      %v3396 = vperm.slane %v3374, 3
      %v3397 = vperm.slane %v3374, 4
      %v3398 = vperm.slane %v3374, 5
      %v3399 = vperm.slane %v3374, 6
      %v3400 = vperm.slane %v3374, 7
      %v3401 = vperm.slane %v3375, 0
      %v3402 = vperm.slane %v3375, 1
      %v3403 = vperm.slane %v3375, 2
      %v3404 = vperm.slane %v3375, 3
      %v3405 = vperm.slane %v3375, 4
      %v3406 = vperm.slane %v3375, 5
      %v3407 = vperm.slane %v3375, 6
      %v3408 = vperm.slane %v3375, 7
      %v3409 = vperm.slane %v3376, 0
      %v3410 = vperm.slane %v3376, 1
      %v3411 = vperm.slane %v3376, 2
      %v3412 = vperm.slane %v3376, 3
      %v3413 = vperm.slane %v3376, 4
      %v3414 = vperm.slane %v3376, 5
      %vm3415 = vcmp.eq.s32.totalorder %v3377, 1
      %vm3416 = vcmp.eq.s32.totalorder %v3378, 1
      %vm3417 = vcmp.eq.s32.totalorder %v3379, 1
      %vm3418 = vcmp.eq.s32.totalorder %v3380, 1
      %vm3419 = vcmp.eq.s32.totalorder %v3381, 1
      %vm3420 = vcmp.eq.s32.totalorder %v3382, 1
      %vm3421 = vcmp.eq.s32.totalorder %v3383, 1
      %vm3422 = vcmp.eq.s32.totalorder %v3384, 1
      %vm3423 = vcmp.eq.s32.totalorder %v3385, 1
      %vm3424 = vcmp.eq.s32.totalorder %v3386, 1
      %vm3425 = vcmp.eq.s32.totalorder %v3387, 1
      %vm3426 = vcmp.eq.s32.totalorder %v3388, 1
      %vm3427 = vcmp.eq.s32.totalorder %v3389, 1
      %vm3428 = vcmp.eq.s32.totalorder %v3390, 1
      %vm3429 = vcmp.eq.s32.totalorder %v3391, 1
      %vm3430 = vcmp.eq.s32.totalorder %v3392, 1
      %vm3431 = vcmp.eq.s32.totalorder %v3393, 1
      %vm3432 = vcmp.eq.s32.totalorder %v3394, 1
      %vm3433 = vcmp.eq.s32.totalorder %v3395, 1
      %vm3434 = vcmp.eq.s32.totalorder %v3396, 1
      %vm3435 = vcmp.eq.s32.totalorder %v3397, 1
      %vm3436 = vcmp.eq.s32.totalorder %v3398, 1
      %vm3437 = vcmp.eq.s32.totalorder %v3399, 1
      %vm3438 = vcmp.eq.s32.totalorder %v3400, 1
      %vm3439 = vcmp.eq.s32.totalorder %v3401, 1
      %vm3440 = vcmp.eq.s32.totalorder %v3402, 1
      %vm3441 = vcmp.eq.s32.totalorder %v3403, 1
      %vm3442 = vcmp.eq.s32.totalorder %v3404, 1
      %vm3443 = vcmp.eq.s32.totalorder %v3405, 1
      %vm3444 = vcmp.eq.s32.totalorder %v3406, 1
      %vm3445 = vcmp.eq.s32.totalorder %v3407, 1
      %vm3446 = vcmp.eq.s32.totalorder %v3408, 1
      %vm3447 = vcmp.eq.s32.totalorder %v3409, 1
      %vm3448 = vcmp.eq.s32.totalorder %v3410, 1
      %vm3449 = vcmp.eq.s32.totalorder %v3411, 1
      %vm3450 = vcmp.eq.s32.totalorder %v3412, 1
      %vm3451 = vcmp.eq.s32.totalorder %v3413, 1
      %vm3452 = vcmp.eq.s32.totalorder %v3414, 1
      %v3453 = vsel %vm3415, %v3334, 0.0
      %v3454 = vsel %vm3416, %v3335, 0.0
      %v3455 = vsel %vm3417, %v3336, 0.0
      %v3456 = vsel %vm3418, %v3337, 0.0
      %v3457 = vsel %vm3419, %v3338, 0.0
      %v3458 = vsel %vm3420, %v3339, 0.0
      %v3459 = vsel %vm3421, %v3340, 0.0
      %v3460 = vsel %vm3422, %v3341, 0.0
      %v3461 = vsel %vm3423, %v3342, 0.0
      %v3462 = vsel %vm3424, %v3343, 0.0
      %v3463 = vsel %vm3425, %v3344, 0.0
      %v3464 = vsel %vm3426, %v3345, 0.0
      %v3465 = vsel %vm3427, %v3346, 0.0
      %v3466 = vsel %vm3428, %v3347, 0.0
      %v3467 = vsel %vm3429, %v3348, 0.0
      %v3468 = vsel %vm3430, %v3349, 0.0
      %v3469 = vsel %vm3431, %v3350, 0.0
      %v3470 = vsel %vm3432, %v3351, 0.0
      %v3471 = vsel %vm3433, %v3352, 0.0
      %v3472 = vsel %vm3434, %v3353, 0.0
      %v3473 = vsel %vm3435, %v3354, 0.0
      %v3474 = vsel %vm3436, %v3355, 0.0
      %v3475 = vsel %vm3437, %v3356, 0.0
      %v3476 = vsel %vm3438, %v3357, 0.0
      %v3477 = vsel %vm3439, %v3358, 0.0
      %v3478 = vsel %vm3440, %v3359, 0.0
      %v3479 = vsel %vm3441, %v3360, 0.0
      %v3480 = vsel %vm3442, %v3361, 0.0
      %v3481 = vsel %vm3443, %v3362, 0.0
      %v3482 = vsel %vm3444, %v3363, 0.0
      %v3483 = vsel %vm3445, %v3364, 0.0
      %v3484 = vsel %vm3446, %v3365, 0.0
      %v3485 = vsel %vm3447, %v3366, 0.0
      %v3486 = vsel %vm3448, %v3367, 0.0
      %v3487 = vsel %vm3449, %v3368, 0.0
      %v3488 = vsel %vm3450, %v3369, 0.0
      %v3489 = vsel %vm3451, %v3370, 0.0
      %v3490 = vsel %vm3452, %v3371, 0.0
      %v3491 = vpack.c.bf16 %v3454, %v3453
      %v3492 = vpack.c.bf16 %v3456, %v3455
      %v3493 = vpack.c.bf16 %v3458, %v3457
      %v3494 = vpack.c.bf16 %v3460, %v3459
      %v3495 = vpack.c.bf16 %v3462, %v3461
      %v3496 = vpack.c.bf16 %v3464, %v3463
      %v3497 = vpack.c.bf16 %v3466, %v3465
      %v3498 = vpack.c.bf16 %v3468, %v3467
      %v3499 = vpack.c.bf16 %v3470, %v3469
      %v3500 = vpack.c.bf16 %v3472, %v3471
      %v3501 = vpack.c.bf16 %v3474, %v3473
      %v3502 = vpack.c.bf16 %v3476, %v3475
      %v3503 = vpack.c.bf16 %v3478, %v3477
      %v3504 = vpack.c.bf16 %v3480, %v3479
      %v3505 = vpack.c.bf16 %v3482, %v3481
      %v3506 = vpack.c.bf16 %v3484, %v3483
      %v3507 = vpack.c.bf16 %v3486, %v3485
      %v3508 = vpack.c.bf16 %v3488, %v3487
      %v3509 = vpack.c.bf16 %v3490, %v3489
      %3510 = vst [vmem:[#allocation2 + $0x4] sm:$0xff] %v3491
      %3511 = vst [vmem:[#allocation2 + $0xc] sm:$0xff] %v3492
      %3512 = vst [vmem:[#allocation2 + $0x14] sm:$0xff] %v3493
      %3513 = vst [vmem:[#allocation2 + $0x1c] sm:$0xff] %v3494
      %3514 = vst [vmem:[#allocation2 + $0x24] sm:$0xff] %v3495
      %3515 = vst [vmem:[#allocation2 + $0x2c] sm:$0xff] %v3496
      %3516 = vst [vmem:[#allocation2 + $0x34] sm:$0xff] %v3497
      %3517 = vst [vmem:[#allocation2 + $0x3c] sm:$0xff] %v3498
      %3518 = vst [vmem:[#allocation2 + $0x44] sm:$0xff] %v3499
      %3519 = vst [vmem:[#allocation2 + $0x4c] sm:$0xff] %v3500
      %3520 = vst [vmem:[#allocation2 + $0x54] sm:$0xff] %v3501
      %3521 = vst [vmem:[#allocation2 + $0x5c] sm:$0xff] %v3502
      %3522 = vst [vmem:[#allocation2 + $0x64] sm:$0xff] %v3503
      %3523 = vst [vmem:[#allocation2 + $0x6c] sm:$0xff] %v3504
      %3524 = vst [vmem:[#allocation2 + $0x74] sm:$0xff] %v3505
      %3525 = vst [vmem:[#allocation2 + $0x7c] sm:$0xff] %v3506
      %3526 = vst [vmem:[#allocation2 + $0x84] sm:$0xff] %v3507
      %3527 = vst [vmem:[#allocation2 + $0x8c] sm:$0xff] %v3508
      %3528 = vst [vmem:[#allocation2 + $0x94] sm:$0xff] %v3509
      %v3529 = vld [vmem:[#allocation2] sm:$0xff]
      %v3530 = vld [vmem:[#allocation2 + $0x8] sm:$0xff]
      %v3531 = vld [vmem:[#allocation2 + $0x10] sm:$0xff]
      %v3532 = vld [vmem:[#allocation2 + $0x18] sm:$0xff]
      %v3533 = vld [vmem:[#allocation2 + $0x20] sm:$0xff]
      %v3534 = vld [vmem:[#allocation2 + $0x28] sm:$0xff]
      %v3535 = vld [vmem:[#allocation2 + $0x30] sm:$0xff]
      %v3536 = vld [vmem:[#allocation2 + $0x38] sm:$0xff]
      %v3537 = vld [vmem:[#allocation2 + $0x40] sm:$0xff]
      %v3538 = vld [vmem:[#allocation2 + $0x48] sm:$0xff]
      %v3539 = vld [vmem:[#allocation2 + $0x50] sm:$0xff]
      %v3540 = vld [vmem:[#allocation2 + $0x58] sm:$0xff]
      %v3541 = vld [vmem:[#allocation2 + $0x60] sm:$0xff]
      %v3542 = vld [vmem:[#allocation2 + $0x68] sm:$0xff]
      %v3543 = vld [vmem:[#allocation2 + $0x70] sm:$0xff]
      %v3544 = vld [vmem:[#allocation2 + $0x78] sm:$0xff]
      %v3545 = vld [vmem:[#allocation2 + $0x80] sm:$0xff]
      %v3546 = vld [vmem:[#allocation2 + $0x88] sm:$0xff]
      %v3547 = vld [vmem:[#allocation2 + $0x90] sm:$0xff]
      %v3548 = vld [vmem:[#allocation2 + $0x98] sm:$0xf]
      %3569 = vrot.lane.b32.xlu0 %v3529, 19
      %v3570 = vpop.permute.xlu0 %3569
      %3571 = vrot.lane.b32.xlu0 %v3530, 19
      %v3572 = vpop.permute.xlu0 %3571
      %3573 = vrot.lane.b32.xlu0 %v3531, 19
      %v3574 = vpop.permute.xlu0 %3573
      %3575 = vrot.lane.b32.xlu0 %v3532, 19
      %v3576 = vpop.permute.xlu0 %3575
      %3577 = vrot.lane.b32.xlu0 %v3533, 19
      %v3578 = vpop.permute.xlu0 %3577
      %3579 = vrot.lane.b32.xlu0 %v3534, 19
      %v3580 = vpop.permute.xlu0 %3579
      %3581 = vrot.lane.b32.xlu0 %v3535, 19
      %v3582 = vpop.permute.xlu0 %3581
      %3583 = vrot.lane.b32.xlu0 %v3536, 19
      %v3584 = vpop.permute.xlu0 %3583
      %3585 = vrot.lane.b32.xlu0 %v3537, 19
      %v3586 = vpop.permute.xlu0 %3585
      %3587 = vrot.lane.b32.xlu0 %v3538, 19
      %v3588 = vpop.permute.xlu0 %3587
      %3589 = vrot.lane.b32.xlu0 %v3539, 19
      %v3590 = vpop.permute.xlu0 %3589
      %3591 = vrot.lane.b32.xlu0 %v3540, 19
      %v3592 = vpop.permute.xlu0 %3591
      %3593 = vrot.lane.b32.xlu0 %v3541, 19
      %v3594 = vpop.permute.xlu0 %3593
      %3595 = vrot.lane.b32.xlu0 %v3542, 19
      %v3596 = vpop.permute.xlu0 %3595
      %3597 = vrot.lane.b32.xlu0 %v3543, 19
      %v3598 = vpop.permute.xlu0 %3597
      %3599 = vrot.lane.b32.xlu0 %v3544, 19
      %v3600 = vpop.permute.xlu0 %3599
      %3601 = vrot.lane.b32.xlu0 %v3545, 19
      %v3602 = vpop.permute.xlu0 %3601
      %3603 = vrot.lane.b32.xlu0 %v3546, 19
      %v3604 = vpop.permute.xlu0 %3603
      %3605 = vrot.lane.b32.xlu0 %v3547, 19
      %v3606 = vpop.permute.xlu0 %3605
      %3607 = vrot.lane.b32.xlu0 %v3548, 19
      %v3608 = vpop.permute.xlu0 %3607
      %v3609 = vrot.slane %v3570, 4
      %v3610 = vrot.slane %v3572, 4
      %v3611 = vrot.slane %v3574, 4
      %v3612 = vrot.slane %v3576, 4
      %v3613 = vrot.slane %v3578, 4
      %v3614 = vrot.slane %v3580, 4
      %v3615 = vrot.slane %v3582, 4
      %v3616 = vrot.slane %v3584, 4
      %v3617 = vrot.slane %v3586, 4
      %v3618 = vrot.slane %v3588, 4
      %v3619 = vrot.slane %v3590, 4
      %v3620 = vrot.slane %v3592, 4
      %v3621 = vrot.slane %v3594, 4
      %v3622 = vrot.slane %v3596, 4
      %v3623 = vrot.slane %v3598, 4
      %v3624 = vrot.slane %v3600, 4
      %v3625 = vrot.slane %v3602, 4
      %v3626 = vrot.slane %v3604, 4
      %v3627 = vrot.slane %v3606, 4
      %v3628 = vrot.slane %v3608, 4
      %v3629 = vsel %vm502, %v3609, %v3610
      %v3630 = vsel %vm504, %v3570, %v3629
      %v3631 = vsel %vm502, %v3610, %v3611
      %v3632 = vsel %vm504, %v3572, %v3631
      %v3633 = vsel %vm502, %v3611, %v3612
      %v3634 = vsel %vm504, %v3574, %v3633
      %v3635 = vsel %vm502, %v3612, %v3613
      %v3636 = vsel %vm504, %v3576, %v3635
      %v3637 = vsel %vm502, %v3613, %v3614
      %v3638 = vsel %vm504, %v3578, %v3637
      %v3639 = vsel %vm502, %v3614, %v3615
      %v3640 = vsel %vm504, %v3580, %v3639
      %v3641 = vsel %vm502, %v3615, %v3616
      %v3642 = vsel %vm504, %v3582, %v3641
      %v3643 = vsel %vm502, %v3616, %v3617
      %v3644 = vsel %vm504, %v3584, %v3643
      %v3645 = vsel %vm502, %v3617, %v3618
      %v3646 = vsel %vm504, %v3586, %v3645
      %v3647 = vsel %vm502, %v3618, %v3619
      %v3648 = vsel %vm504, %v3588, %v3647
      %v3649 = vsel %vm502, %v3619, %v3620
      %v3650 = vsel %vm504, %v3590, %v3649
      %v3651 = vsel %vm502, %v3620, %v3621
      %v3652 = vsel %vm504, %v3592, %v3651
      %v3653 = vsel %vm502, %v3621, %v3622
      %v3654 = vsel %vm504, %v3594, %v3653
      %v3655 = vsel %vm502, %v3622, %v3623
      %v3656 = vsel %vm504, %v3596, %v3655
      %v3657 = vsel %vm502, %v3623, %v3624
      %v3658 = vsel %vm504, %v3598, %v3657
      %v3659 = vsel %vm502, %v3624, %v3625
      %v3660 = vsel %vm504, %v3600, %v3659
      %v3661 = vsel %vm502, %v3625, %v3626
      %v3662 = vsel %vm504, %v3602, %v3661
      %v3663 = vsel %vm502, %v3626, %v3627
      %v3664 = vsel %vm504, %v3604, %v3663
      %v3665 = vsel %vm502, %v3627, %v3628
      %v3666 = vsel %vm504, %v3606, %v3665
      %3686 = vst [vmem:[#allocation3] sm:$0xff] %v3630
      %3687 = vst [vmem:[#allocation3 + $0x8] sm:$0xff] %v3632
      %3688 = vst [vmem:[#allocation3 + $0x10] sm:$0xff] %v3634
      %3689 = vst [vmem:[#allocation3 + $0x18] sm:$0xff] %v3636
      %3690 = vst [vmem:[#allocation3 + $0x20] sm:$0xff] %v3638
      %3691 = vst [vmem:[#allocation3 + $0x28] sm:$0xff] %v3640
      %3692 = vst [vmem:[#allocation3 + $0x30] sm:$0xff] %v3642
      %3693 = vst [vmem:[#allocation3 + $0x38] sm:$0xff] %v3644
      %3694 = vst [vmem:[#allocation3 + $0x40] sm:$0xff] %v3646
      %3695 = vst [vmem:[#allocation3 + $0x48] sm:$0xff] %v3648
      %3696 = vst [vmem:[#allocation3 + $0x50] sm:$0xff] %v3650
      %3697 = vst [vmem:[#allocation3 + $0x58] sm:$0xff] %v3652
      %3698 = vst [vmem:[#allocation3 + $0x60] sm:$0xff] %v3654
      %3699 = vst [vmem:[#allocation3 + $0x68] sm:$0xff] %v3656
      %3700 = vst [vmem:[#allocation3 + $0x70] sm:$0xff] %v3658
      %3701 = vst [vmem:[#allocation3 + $0x78] sm:$0xff] %v3660
      %3702 = vst [vmem:[#allocation3 + $0x80] sm:$0xff] %v3662
      %3703 = vst [vmem:[#allocation3 + $0x88] sm:$0xff] %v3664
      %3704 = vst [vmem:[#allocation3 + $0x90] sm:$0xff] %v3666
      %v3705 = vld [vmem:[#allocation2] sm:$0xff]
      %v3706 = vld [vmem:[#allocation2 + $0x8] sm:$0xff]
      %v3707 = vld [vmem:[#allocation2 + $0x10] sm:$0xff]
      %v3708 = vld [vmem:[#allocation2 + $0x18] sm:$0xff]
      %v3709 = vld [vmem:[#allocation2 + $0x20] sm:$0xff]
      %v3710 = vld [vmem:[#allocation2 + $0x28] sm:$0xff]
      %v3711 = vld [vmem:[#allocation2 + $0x30] sm:$0xff]
      %v3712 = vld [vmem:[#allocation2 + $0x38] sm:$0xff]
      %v3713 = vld [vmem:[#allocation2 + $0x40] sm:$0xff]
      %v3714 = vld [vmem:[#allocation2 + $0x48] sm:$0xff]
      %v3715 = vld [vmem:[#allocation2 + $0x50] sm:$0xff]
      %v3716 = vld [vmem:[#allocation2 + $0x58] sm:$0xff]
      %v3717 = vld [vmem:[#allocation2 + $0x60] sm:$0xff]
      %v3718 = vld [vmem:[#allocation2 + $0x68] sm:$0xff]
      %v3719 = vld [vmem:[#allocation2 + $0x70] sm:$0xff]
      %v3720 = vld [vmem:[#allocation2 + $0x78] sm:$0xff]
      %v3721 = vld [vmem:[#allocation2 + $0x80] sm:$0xff]
      %v3722 = vld [vmem:[#allocation2 + $0x88] sm:$0xff]
      %v3723 = vld [vmem:[#allocation2 + $0x90] sm:$0xff]
      %v3724 = vld [vmem:[#allocation2 + $0x98] sm:$0xf]
      %3745 = vrot.lane.b32.xlu0 %v3705, 18
      %v3746 = vpop.permute.xlu0 %3745
      %3747 = vrot.lane.b32.xlu0 %v3706, 18
      %v3748 = vpop.permute.xlu0 %3747
      %3749 = vrot.lane.b32.xlu0 %v3707, 18
      %v3750 = vpop.permute.xlu0 %3749
      %3751 = vrot.lane.b32.xlu0 %v3708, 18
      %v3752 = vpop.permute.xlu0 %3751
      %3753 = vrot.lane.b32.xlu0 %v3709, 18
      %v3754 = vpop.permute.xlu0 %3753
      %3755 = vrot.lane.b32.xlu0 %v3710, 18
      %v3756 = vpop.permute.xlu0 %3755
      %3757 = vrot.lane.b32.xlu0 %v3711, 18
      %v3758 = vpop.permute.xlu0 %3757
      %3759 = vrot.lane.b32.xlu0 %v3712, 18
      %v3760 = vpop.permute.xlu0 %3759
      %3761 = vrot.lane.b32.xlu0 %v3713, 18
      %v3762 = vpop.permute.xlu0 %3761
      %3763 = vrot.lane.b32.xlu0 %v3714, 18
      %v3764 = vpop.permute.xlu0 %3763
      %3765 = vrot.lane.b32.xlu0 %v3715, 18
      %v3766 = vpop.permute.xlu0 %3765
      %3767 = vrot.lane.b32.xlu0 %v3716, 18
      %v3768 = vpop.permute.xlu0 %3767
      %3769 = vrot.lane.b32.xlu0 %v3717, 18
      %v3770 = vpop.permute.xlu0 %3769
      %3771 = vrot.lane.b32.xlu0 %v3718, 18
      %v3772 = vpop.permute.xlu0 %3771
      %3773 = vrot.lane.b32.xlu0 %v3719, 18
      %v3774 = vpop.permute.xlu0 %3773
      %3775 = vrot.lane.b32.xlu0 %v3720, 18
      %v3776 = vpop.permute.xlu0 %3775
      %3777 = vrot.lane.b32.xlu0 %v3721, 18
      %v3778 = vpop.permute.xlu0 %3777
      %3779 = vrot.lane.b32.xlu0 %v3722, 18
      %v3780 = vpop.permute.xlu0 %3779
      %3781 = vrot.lane.b32.xlu0 %v3723, 18
      %v3782 = vpop.permute.xlu0 %3781
      %3783 = vrot.lane.b32.xlu0 %v3724, 18
      %v3784 = vpop.permute.xlu0 %3783
      %v3785 = vrot.slane %v3746, 4
      %v3786 = vrot.slane %v3748, 4
      %v3787 = vrot.slane %v3750, 4
      %v3788 = vrot.slane %v3752, 4
      %v3789 = vrot.slane %v3754, 4
      %v3790 = vrot.slane %v3756, 4
      %v3791 = vrot.slane %v3758, 4
      %v3792 = vrot.slane %v3760, 4
      %v3793 = vrot.slane %v3762, 4
      %v3794 = vrot.slane %v3764, 4
      %v3795 = vrot.slane %v3766, 4
      %v3796 = vrot.slane %v3768, 4
      %v3797 = vrot.slane %v3770, 4
      %v3798 = vrot.slane %v3772, 4
      %v3799 = vrot.slane %v3774, 4
      %v3800 = vrot.slane %v3776, 4
      %v3801 = vrot.slane %v3778, 4
      %v3802 = vrot.slane %v3780, 4
      %v3803 = vrot.slane %v3782, 4
      %v3804 = vrot.slane %v3784, 4
      %v3805 = vsel %vm502, %v3785, %v3786
      %v3806 = vsel %vm715, %v3746, %v3805
      %v3807 = vsel %vm502, %v3786, %v3787
      %v3808 = vsel %vm715, %v3748, %v3807
      %v3809 = vsel %vm502, %v3787, %v3788
      %v3810 = vsel %vm715, %v3750, %v3809
      %v3811 = vsel %vm502, %v3788, %v3789
      %v3812 = vsel %vm715, %v3752, %v3811
      %v3813 = vsel %vm502, %v3789, %v3790
      %v3814 = vsel %vm715, %v3754, %v3813
      %v3815 = vsel %vm502, %v3790, %v3791
      %v3816 = vsel %vm715, %v3756, %v3815
      %v3817 = vsel %vm502, %v3791, %v3792
      %v3818 = vsel %vm715, %v3758, %v3817
      %v3819 = vsel %vm502, %v3792, %v3793
      %v3820 = vsel %vm715, %v3760, %v3819
      %v3821 = vsel %vm502, %v3793, %v3794
      %v3822 = vsel %vm715, %v3762, %v3821
      %v3823 = vsel %vm502, %v3794, %v3795
      %v3824 = vsel %vm715, %v3764, %v3823
      %v3825 = vsel %vm502, %v3795, %v3796
      %v3826 = vsel %vm715, %v3766, %v3825
      %v3827 = vsel %vm502, %v3796, %v3797
      %v3828 = vsel %vm715, %v3768, %v3827
      %v3829 = vsel %vm502, %v3797, %v3798
      %v3830 = vsel %vm715, %v3770, %v3829
      %v3831 = vsel %vm502, %v3798, %v3799
      %v3832 = vsel %vm715, %v3772, %v3831
      %v3833 = vsel %vm502, %v3799, %v3800
      %v3834 = vsel %vm715, %v3774, %v3833
      %v3835 = vsel %vm502, %v3800, %v3801
      %v3836 = vsel %vm715, %v3776, %v3835
      %v3837 = vsel %vm502, %v3801, %v3802
      %v3838 = vsel %vm715, %v3778, %v3837
      %v3839 = vsel %vm502, %v3802, %v3803
      %v3840 = vsel %vm715, %v3780, %v3839
      %v3841 = vsel %vm502, %v3803, %v3804
      %v3842 = vsel %vm715, %v3782, %v3841
      %3862 = vst [vmem:[#allocation3 + $0x98] sm:$0xff] %v3806
      %3863 = vst [vmem:[#allocation3 + $0xa0] sm:$0xff] %v3808
      %3864 = vst [vmem:[#allocation3 + $0xa8] sm:$0xff] %v3810
      %3865 = vst [vmem:[#allocation3 + $0xb0] sm:$0xff] %v3812
      %3866 = vst [vmem:[#allocation3 + $0xb8] sm:$0xff] %v3814
      %3867 = vst [vmem:[#allocation3 + $0xc0] sm:$0xff] %v3816
      %3868 = vst [vmem:[#allocation3 + $0xc8] sm:$0xff] %v3818
      %3869 = vst [vmem:[#allocation3 + $0xd0] sm:$0xff] %v3820
      %3870 = vst [vmem:[#allocation3 + $0xd8] sm:$0xff] %v3822
      %3871 = vst [vmem:[#allocation3 + $0xe0] sm:$0xff] %v3824
      %3872 = vst [vmem:[#allocation3 + $0xe8] sm:$0xff] %v3826
      %3873 = vst [vmem:[#allocation3 + $0xf0] sm:$0xff] %v3828
      %3874 = vst [vmem:[#allocation3 + $0xf8] sm:$0xff] %v3830
      %3875 = vst [vmem:[#allocation3 + $0x100] sm:$0xff] %v3832
      %3876 = vst [vmem:[#allocation3 + $0x108] sm:$0xff] %v3834
      %3877 = vst [vmem:[#allocation3 + $0x110] sm:$0xff] %v3836
      %3878 = vst [vmem:[#allocation3 + $0x118] sm:$0xff] %v3838
      %3879 = vst [vmem:[#allocation3 + $0x120] sm:$0xff] %v3840
      %3880 = vst [vmem:[#allocation3 + $0x128] sm:$0xff] %v3842
      %v3881 = vld [vmem:[#allocation2] sm:$0xff]
      %v3882 = vld [vmem:[#allocation2 + $0x8] sm:$0xff]
      %v3883 = vld [vmem:[#allocation2 + $0x10] sm:$0xff]
      %v3884 = vld [vmem:[#allocation2 + $0x18] sm:$0xff]
      %v3885 = vld [vmem:[#allocation2 + $0x20] sm:$0xff]
      %v3886 = vld [vmem:[#allocation2 + $0x28] sm:$0xff]
      %v3887 = vld [vmem:[#allocation2 + $0x30] sm:$0xff]
      %v3888 = vld [vmem:[#allocation2 + $0x38] sm:$0xff]
      %v3889 = vld [vmem:[#allocation2 + $0x40] sm:$0xff]
      %v3890 = vld [vmem:[#allocation2 + $0x48] sm:$0xff]
      %v3891 = vld [vmem:[#allocation2 + $0x50] sm:$0xff]
      %v3892 = vld [vmem:[#allocation2 + $0x58] sm:$0xff]
      %v3893 = vld [vmem:[#allocation2 + $0x60] sm:$0xff]
      %v3894 = vld [vmem:[#allocation2 + $0x68] sm:$0xff]
      %v3895 = vld [vmem:[#allocation2 + $0x70] sm:$0xff]
      %v3896 = vld [vmem:[#allocation2 + $0x78] sm:$0xff]
      %v3897 = vld [vmem:[#allocation2 + $0x80] sm:$0xff]
      %v3898 = vld [vmem:[#allocation2 + $0x88] sm:$0xff]
      %v3899 = vld [vmem:[#allocation2 + $0x90] sm:$0xff]
      %v3900 = vld [vmem:[#allocation2 + $0x98] sm:$0xf]
      %3921 = vrot.lane.b32.xlu0 %v3881, 17
      %v3922 = vpop.permute.xlu0 %3921
      %3923 = vrot.lane.b32.xlu0 %v3882, 17
      %v3924 = vpop.permute.xlu0 %3923
      %3925 = vrot.lane.b32.xlu0 %v3883, 17
      %v3926 = vpop.permute.xlu0 %3925
      %3927 = vrot.lane.b32.xlu0 %v3884, 17
      %v3928 = vpop.permute.xlu0 %3927
      %3929 = vrot.lane.b32.xlu0 %v3885, 17
      %v3930 = vpop.permute.xlu0 %3929
      %3931 = vrot.lane.b32.xlu0 %v3886, 17
      %v3932 = vpop.permute.xlu0 %3931
      %3933 = vrot.lane.b32.xlu0 %v3887, 17
      %v3934 = vpop.permute.xlu0 %3933
      %3935 = vrot.lane.b32.xlu0 %v3888, 17
      %v3936 = vpop.permute.xlu0 %3935
      %3937 = vrot.lane.b32.xlu0 %v3889, 17
      %v3938 = vpop.permute.xlu0 %3937
      %3939 = vrot.lane.b32.xlu0 %v3890, 17
      %v3940 = vpop.permute.xlu0 %3939
      %3941 = vrot.lane.b32.xlu0 %v3891, 17
      %v3942 = vpop.permute.xlu0 %3941
      %3943 = vrot.lane.b32.xlu0 %v3892, 17
      %v3944 = vpop.permute.xlu0 %3943
      %3945 = vrot.lane.b32.xlu0 %v3893, 17
      %v3946 = vpop.permute.xlu0 %3945
      %3947 = vrot.lane.b32.xlu0 %v3894, 17
      %v3948 = vpop.permute.xlu0 %3947
      %3949 = vrot.lane.b32.xlu0 %v3895, 17
      %v3950 = vpop.permute.xlu0 %3949
      %3951 = vrot.lane.b32.xlu0 %v3896, 17
      %v3952 = vpop.permute.xlu0 %3951
      %3953 = vrot.lane.b32.xlu0 %v3897, 17
      %v3954 = vpop.permute.xlu0 %3953
      %3955 = vrot.lane.b32.xlu0 %v3898, 17
      %v3956 = vpop.permute.xlu0 %3955
      %3957 = vrot.lane.b32.xlu0 %v3899, 17
      %v3958 = vpop.permute.xlu0 %3957
      %3959 = vrot.lane.b32.xlu0 %v3900, 17
      %v3960 = vpop.permute.xlu0 %3959
      %v3961 = vrot.slane %v3922, 4
      %v3962 = vrot.slane %v3924, 4
      %v3963 = vrot.slane %v3926, 4
      %v3964 = vrot.slane %v3928, 4
      %v3965 = vrot.slane %v3930, 4
      %v3966 = vrot.slane %v3932, 4
      %v3967 = vrot.slane %v3934, 4
      %v3968 = vrot.slane %v3936, 4
      %v3969 = vrot.slane %v3938, 4
      %v3970 = vrot.slane %v3940, 4
      %v3971 = vrot.slane %v3942, 4
      %v3972 = vrot.slane %v3944, 4
      %v3973 = vrot.slane %v3946, 4
      %v3974 = vrot.slane %v3948, 4
      %v3975 = vrot.slane %v3950, 4
      %v3976 = vrot.slane %v3952, 4
      %v3977 = vrot.slane %v3954, 4
      %v3978 = vrot.slane %v3956, 4
      %v3979 = vrot.slane %v3958, 4
      %v3980 = vrot.slane %v3960, 4
      %v3981 = vsel %vm502, %v3961, %v3962
      %v3982 = vsel %vm925, %v3922, %v3981
      %v3983 = vsel %vm502, %v3962, %v3963
      %v3984 = vsel %vm925, %v3924, %v3983
      %v3985 = vsel %vm502, %v3963, %v3964
      %v3986 = vsel %vm925, %v3926, %v3985
      %v3987 = vsel %vm502, %v3964, %v3965
      %v3988 = vsel %vm925, %v3928, %v3987
      %v3989 = vsel %vm502, %v3965, %v3966
      %v3990 = vsel %vm925, %v3930, %v3989
      %v3991 = vsel %vm502, %v3966, %v3967
      %v3992 = vsel %vm925, %v3932, %v3991
      %v3993 = vsel %vm502, %v3967, %v3968
      %v3994 = vsel %vm925, %v3934, %v3993
      %v3995 = vsel %vm502, %v3968, %v3969
      %v3996 = vsel %vm925, %v3936, %v3995
      %v3997 = vsel %vm502, %v3969, %v3970
      %v3998 = vsel %vm925, %v3938, %v3997
      %v3999 = vsel %vm502, %v3970, %v3971
      %v4000 = vsel %vm925, %v3940, %v3999
      %v4001 = vsel %vm502, %v3971, %v3972
      %v4002 = vsel %vm925, %v3942, %v4001
      %v4003 = vsel %vm502, %v3972, %v3973
      %v4004 = vsel %vm925, %v3944, %v4003
      %v4005 = vsel %vm502, %v3973, %v3974
      %v4006 = vsel %vm925, %v3946, %v4005
      %v4007 = vsel %vm502, %v3974, %v3975
      %v4008 = vsel %vm925, %v3948, %v4007
      %v4009 = vsel %vm502, %v3975, %v3976
      %v4010 = vsel %vm925, %v3950, %v4009
      %v4011 = vsel %vm502, %v3976, %v3977
      %v4012 = vsel %vm925, %v3952, %v4011
      %v4013 = vsel %vm502, %v3977, %v3978
      %v4014 = vsel %vm925, %v3954, %v4013
      %v4015 = vsel %vm502, %v3978, %v3979
      %v4016 = vsel %vm925, %v3956, %v4015
      %v4017 = vsel %vm502, %v3979, %v3980
      %v4018 = vsel %vm925, %v3958, %v4017
      %4038 = vst [vmem:[#allocation3 + $0x130] sm:$0xff] %v3982
      %4039 = vst [vmem:[#allocation3 + $0x138] sm:$0xff] %v3984
      %4040 = vst [vmem:[#allocation3 + $0x140] sm:$0xff] %v3986
      %4041 = vst [vmem:[#allocation3 + $0x148] sm:$0xff] %v3988
      %4042 = vst [vmem:[#allocation3 + $0x150] sm:$0xff] %v3990
      %4043 = vst [vmem:[#allocation3 + $0x158] sm:$0xff] %v3992
      %4044 = vst [vmem:[#allocation3 + $0x160] sm:$0xff] %v3994
      %4045 = vst [vmem:[#allocation3 + $0x168] sm:$0xff] %v3996
      %4046 = vst [vmem:[#allocation3 + $0x170] sm:$0xff] %v3998
      %4047 = vst [vmem:[#allocation3 + $0x178] sm:$0xff] %v4000
      %4048 = vst [vmem:[#allocation3 + $0x180] sm:$0xff] %v4002
      %4049 = vst [vmem:[#allocation3 + $0x188] sm:$0xff] %v4004
      %4050 = vst [vmem:[#allocation3 + $0x190] sm:$0xff] %v4006
      %4051 = vst [vmem:[#allocation3 + $0x198] sm:$0xff] %v4008
      %4052 = vst [vmem:[#allocation3 + $0x1a0] sm:$0xff] %v4010
      %4053 = vst [vmem:[#allocation3 + $0x1a8] sm:$0xff] %v4012
      %4054 = vst [vmem:[#allocation3 + $0x1b0] sm:$0xff] %v4014
      %4055 = vst [vmem:[#allocation3 + $0x1b8] sm:$0xff] %v4016
      %4056 = vst [vmem:[#allocation3 + $0x1c0] sm:$0xff] %v4018
      %v4057 = vld [vmem:[#allocation2] sm:$0xff]
      %v4058 = vld [vmem:[#allocation2 + $0x8] sm:$0xff]
      %v4059 = vld [vmem:[#allocation2 + $0x10] sm:$0xff]
      %v4060 = vld [vmem:[#allocation2 + $0x18] sm:$0xff]
      %v4061 = vld [vmem:[#allocation2 + $0x20] sm:$0xff]
      %v4062 = vld [vmem:[#allocation2 + $0x28] sm:$0xff]
      %v4063 = vld [vmem:[#allocation2 + $0x30] sm:$0xff]
      %v4064 = vld [vmem:[#allocation2 + $0x38] sm:$0xff]
      %v4065 = vld [vmem:[#allocation2 + $0x40] sm:$0xff]
      %v4066 = vld [vmem:[#allocation2 + $0x48] sm:$0xff]
      %v4067 = vld [vmem:[#allocation2 + $0x50] sm:$0xff]
      %v4068 = vld [vmem:[#allocation2 + $0x58] sm:$0xff]
      %v4069 = vld [vmem:[#allocation2 + $0x60] sm:$0xff]
      %v4070 = vld [vmem:[#allocation2 + $0x68] sm:$0xff]
      %v4071 = vld [vmem:[#allocation2 + $0x70] sm:$0xff]
      %v4072 = vld [vmem:[#allocation2 + $0x78] sm:$0xff]
      %v4073 = vld [vmem:[#allocation2 + $0x80] sm:$0xff]
      %v4074 = vld [vmem:[#allocation2 + $0x88] sm:$0xff]
      %v4075 = vld [vmem:[#allocation2 + $0x90] sm:$0xff]
      %v4076 = vld [vmem:[#allocation2 + $0x98] sm:$0xf]
      %4097 = vrot.lane.b32.xlu0 %v4057, 1
      %v4098 = vpop.permute.xlu0 %4097
      %4099 = vrot.lane.b32.xlu0 %v4058, 1
      %v4100 = vpop.permute.xlu0 %4099
      %4101 = vrot.lane.b32.xlu0 %v4059, 1
      %v4102 = vpop.permute.xlu0 %4101
      %4103 = vrot.lane.b32.xlu0 %v4060, 1
      %v4104 = vpop.permute.xlu0 %4103
      %4105 = vrot.lane.b32.xlu0 %v4061, 1
      %v4106 = vpop.permute.xlu0 %4105
      %4107 = vrot.lane.b32.xlu0 %v4062, 1
      %v4108 = vpop.permute.xlu0 %4107
      %4109 = vrot.lane.b32.xlu0 %v4063, 1
      %v4110 = vpop.permute.xlu0 %4109
      %4111 = vrot.lane.b32.xlu0 %v4064, 1
      %v4112 = vpop.permute.xlu0 %4111
      %4113 = vrot.lane.b32.xlu0 %v4065, 1
      %v4114 = vpop.permute.xlu0 %4113
      %4115 = vrot.lane.b32.xlu0 %v4066, 1
      %v4116 = vpop.permute.xlu0 %4115
      %4117 = vrot.lane.b32.xlu0 %v4067, 1
      %v4118 = vpop.permute.xlu0 %4117
      %4119 = vrot.lane.b32.xlu0 %v4068, 1
      %v4120 = vpop.permute.xlu0 %4119
      %4121 = vrot.lane.b32.xlu0 %v4069, 1
      %v4122 = vpop.permute.xlu0 %4121
      %4123 = vrot.lane.b32.xlu0 %v4070, 1
      %v4124 = vpop.permute.xlu0 %4123
      %4125 = vrot.lane.b32.xlu0 %v4071, 1
      %v4126 = vpop.permute.xlu0 %4125
      %4127 = vrot.lane.b32.xlu0 %v4072, 1
      %v4128 = vpop.permute.xlu0 %4127
      %4129 = vrot.lane.b32.xlu0 %v4073, 1
      %v4130 = vpop.permute.xlu0 %4129
      %4131 = vrot.lane.b32.xlu0 %v4074, 1
      %v4132 = vpop.permute.xlu0 %4131
      %4133 = vrot.lane.b32.xlu0 %v4075, 1
      %v4134 = vpop.permute.xlu0 %4133
      %4135 = vrot.lane.b32.xlu0 %v4076, 1
      %v4136 = vpop.permute.xlu0 %4135
      %v4137 = vrot.slane %v4098, 4
      %v4138 = vrot.slane %v4100, 4
      %v4139 = vrot.slane %v4102, 4
      %v4140 = vrot.slane %v4104, 4
      %v4141 = vrot.slane %v4106, 4
      %v4142 = vrot.slane %v4108, 4
      %v4143 = vrot.slane %v4110, 4
      %v4144 = vrot.slane %v4112, 4
      %v4145 = vrot.slane %v4114, 4
      %v4146 = vrot.slane %v4116, 4
      %v4147 = vrot.slane %v4118, 4
      %v4148 = vrot.slane %v4120, 4
      %v4149 = vrot.slane %v4122, 4
      %v4150 = vrot.slane %v4124, 4
      %v4151 = vrot.slane %v4126, 4
      %v4152 = vrot.slane %v4128, 4
      %v4153 = vrot.slane %v4130, 4
      %v4154 = vrot.slane %v4132, 4
      %v4155 = vrot.slane %v4134, 4
      %v4156 = vrot.slane %v4136, 4
      %v4157 = vsel %vm502, %v4137, %v4138
      %v4158 = vsel %vm1136, %v4098, %v4157
      %v4159 = vsel %vm502, %v4138, %v4139
      %v4160 = vsel %vm1136, %v4100, %v4159
      %v4161 = vsel %vm502, %v4139, %v4140
      %v4162 = vsel %vm1136, %v4102, %v4161
      %v4163 = vsel %vm502, %v4140, %v4141
      %v4164 = vsel %vm1136, %v4104, %v4163
      %v4165 = vsel %vm502, %v4141, %v4142
      %v4166 = vsel %vm1136, %v4106, %v4165
      %v4167 = vsel %vm502, %v4142, %v4143
      %v4168 = vsel %vm1136, %v4108, %v4167
      %v4169 = vsel %vm502, %v4143, %v4144
      %v4170 = vsel %vm1136, %v4110, %v4169
      %v4171 = vsel %vm502, %v4144, %v4145
      %v4172 = vsel %vm1136, %v4112, %v4171
      %v4173 = vsel %vm502, %v4145, %v4146
      %v4174 = vsel %vm1136, %v4114, %v4173
      %v4175 = vsel %vm502, %v4146, %v4147
      %v4176 = vsel %vm1136, %v4116, %v4175
      %v4177 = vsel %vm502, %v4147, %v4148
      %v4178 = vsel %vm1136, %v4118, %v4177
      %v4179 = vsel %vm502, %v4148, %v4149
      %v4180 = vsel %vm1136, %v4120, %v4179
      %v4181 = vsel %vm502, %v4149, %v4150
      %v4182 = vsel %vm1136, %v4122, %v4181
      %v4183 = vsel %vm502, %v4150, %v4151
      %v4184 = vsel %vm1136, %v4124, %v4183
      %v4185 = vsel %vm502, %v4151, %v4152
      %v4186 = vsel %vm1136, %v4126, %v4185
      %v4187 = vsel %vm502, %v4152, %v4153
      %v4188 = vsel %vm1136, %v4128, %v4187
      %v4189 = vsel %vm502, %v4153, %v4154
      %v4190 = vsel %vm1136, %v4130, %v4189
      %v4191 = vsel %vm502, %v4154, %v4155
      %v4192 = vsel %vm1136, %v4132, %v4191
      %v4193 = vsel %vm502, %v4155, %v4156
      %v4194 = vsel %vm1136, %v4134, %v4193
      %4214 = vst [vmem:[#allocation3 + $0x1c8] sm:$0xff] %v4158
      %4215 = vst [vmem:[#allocation3 + $0x1d0] sm:$0xff] %v4160
      %4216 = vst [vmem:[#allocation3 + $0x1d8] sm:$0xff] %v4162
      %4217 = vst [vmem:[#allocation3 + $0x1e0] sm:$0xff] %v4164
      %4218 = vst [vmem:[#allocation3 + $0x1e8] sm:$0xff] %v4166
      %4219 = vst [vmem:[#allocation3 + $0x1f0] sm:$0xff] %v4168
      %4220 = vst [vmem:[#allocation3 + $0x1f8] sm:$0xff] %v4170
      %4221 = vst [vmem:[#allocation3 + $0x200] sm:$0xff] %v4172
      %4222 = vst [vmem:[#allocation3 + $0x208] sm:$0xff] %v4174
      %4223 = vst [vmem:[#allocation3 + $0x210] sm:$0xff] %v4176
      %4224 = vst [vmem:[#allocation3 + $0x218] sm:$0xff] %v4178
      %4225 = vst [vmem:[#allocation3 + $0x220] sm:$0xff] %v4180
      %4226 = vst [vmem:[#allocation3 + $0x228] sm:$0xff] %v4182
      %4227 = vst [vmem:[#allocation3 + $0x230] sm:$0xff] %v4184
      %4228 = vst [vmem:[#allocation3 + $0x238] sm:$0xff] %v4186
      %4229 = vst [vmem:[#allocation3 + $0x240] sm:$0xff] %v4188
      %4230 = vst [vmem:[#allocation3 + $0x248] sm:$0xff] %v4190
      %4231 = vst [vmem:[#allocation3 + $0x250] sm:$0xff] %v4192
      %4232 = vst [vmem:[#allocation3 + $0x258] sm:$0xff] %v4194
      %v4233 = vld [vmem:[#allocation2 + $0x4] sm:$0xff]
      %v4234 = vld [vmem:[#allocation2 + $0xc] sm:$0xff]
      %v4235 = vld [vmem:[#allocation2 + $0x14] sm:$0xff]
      %v4236 = vld [vmem:[#allocation2 + $0x1c] sm:$0xff]
      %v4237 = vld [vmem:[#allocation2 + $0x24] sm:$0xff]
      %v4238 = vld [vmem:[#allocation2 + $0x2c] sm:$0xff]
      %v4239 = vld [vmem:[#allocation2 + $0x34] sm:$0xff]
      %v4240 = vld [vmem:[#allocation2 + $0x3c] sm:$0xff]
      %v4241 = vld [vmem:[#allocation2 + $0x44] sm:$0xff]
      %v4242 = vld [vmem:[#allocation2 + $0x4c] sm:$0xff]
      %v4243 = vld [vmem:[#allocation2 + $0x54] sm:$0xff]
      %v4244 = vld [vmem:[#allocation2 + $0x5c] sm:$0xff]
      %v4245 = vld [vmem:[#allocation2 + $0x64] sm:$0xff]
      %v4246 = vld [vmem:[#allocation2 + $0x6c] sm:$0xff]
      %v4247 = vld [vmem:[#allocation2 + $0x74] sm:$0xff]
      %v4248 = vld [vmem:[#allocation2 + $0x7c] sm:$0xff]
      %v4249 = vld [vmem:[#allocation2 + $0x84] sm:$0xff]
      %v4250 = vld [vmem:[#allocation2 + $0x8c] sm:$0xff]
      %v4251 = vld [vmem:[#allocation2 + $0x94] sm:$0xff]
      %4252 = vst [vmem:[#allocation3 + $0x260] sm:$0xff] %v4233
      %4253 = vst [vmem:[#allocation3 + $0x268] sm:$0xff] %v4234
      %4254 = vst [vmem:[#allocation3 + $0x270] sm:$0xff] %v4235
      %4255 = vst [vmem:[#allocation3 + $0x278] sm:$0xff] %v4236
      %4256 = vst [vmem:[#allocation3 + $0x280] sm:$0xff] %v4237
      %4257 = vst [vmem:[#allocation3 + $0x288] sm:$0xff] %v4238
      %4258 = vst [vmem:[#allocation3 + $0x290] sm:$0xff] %v4239
      %4259 = vst [vmem:[#allocation3 + $0x298] sm:$0xff] %v4240
      %4260 = vst [vmem:[#allocation3 + $0x2a0] sm:$0xff] %v4241
      %4261 = vst [vmem:[#allocation3 + $0x2a8] sm:$0xff] %v4242
      %4262 = vst [vmem:[#allocation3 + $0x2b0] sm:$0xff] %v4243
      %4263 = vst [vmem:[#allocation3 + $0x2b8] sm:$0xff] %v4244
      %4264 = vst [vmem:[#allocation3 + $0x2c0] sm:$0xff] %v4245
      %4265 = vst [vmem:[#allocation3 + $0x2c8] sm:$0xff] %v4246
      %4266 = vst [vmem:[#allocation3 + $0x2d0] sm:$0xff] %v4247
      %4267 = vst [vmem:[#allocation3 + $0x2d8] sm:$0xff] %v4248
      %4268 = vst [vmem:[#allocation3 + $0x2e0] sm:$0xff] %v4249
      %4269 = vst [vmem:[#allocation3 + $0x2e8] sm:$0xff] %v4250
      %4270 = vst [vmem:[#allocation3 + $0x2f0] sm:$0xff] %v4251
      %v4271 = vld [vmem:[#allocation2 + $0x4] sm:$0xff]
      %v4272 = vld [vmem:[#allocation2 + $0xc] sm:$0xff]
      %v4273 = vld [vmem:[#allocation2 + $0x14] sm:$0xff]
      %v4274 = vld [vmem:[#allocation2 + $0x1c] sm:$0xff]
      %v4275 = vld [vmem:[#allocation2 + $0x24] sm:$0xff]
      %v4276 = vld [vmem:[#allocation2 + $0x2c] sm:$0xff]
      %v4277 = vld [vmem:[#allocation2 + $0x34] sm:$0xff]
      %v4278 = vld [vmem:[#allocation2 + $0x3c] sm:$0xff]
      %v4279 = vld [vmem:[#allocation2 + $0x44] sm:$0xff]
      %v4280 = vld [vmem:[#allocation2 + $0x4c] sm:$0xff]
      %v4281 = vld [vmem:[#allocation2 + $0x54] sm:$0xff]
      %v4282 = vld [vmem:[#allocation2 + $0x5c] sm:$0xff]
      %v4283 = vld [vmem:[#allocation2 + $0x64] sm:$0xff]
      %v4284 = vld [vmem:[#allocation2 + $0x6c] sm:$0xff]
      %v4285 = vld [vmem:[#allocation2 + $0x74] sm:$0xff]
      %v4286 = vld [vmem:[#allocation2 + $0x7c] sm:$0xff]
      %v4287 = vld [vmem:[#allocation2 + $0x84] sm:$0xff]
      %v4288 = vld [vmem:[#allocation2 + $0x8c] sm:$0xff]
      %v4289 = vld [vmem:[#allocation2 + $0x94] sm:$0xff]
      %v4290 = vld [vmem:[#allocation2 + $0x9c] sm:$0xf]
      %4311 = vrot.lane.b32.xlu0 %v4271, 127
      %v4312 = vpop.permute.xlu0 %4311
      %4313 = vrot.lane.b32.xlu0 %v4272, 127
      %v4314 = vpop.permute.xlu0 %4313
      %4315 = vrot.lane.b32.xlu0 %v4273, 127
      %v4316 = vpop.permute.xlu0 %4315
      %4317 = vrot.lane.b32.xlu0 %v4274, 127
      %v4318 = vpop.permute.xlu0 %4317
      %4319 = vrot.lane.b32.xlu0 %v4275, 127
      %v4320 = vpop.permute.xlu0 %4319
      %4321 = vrot.lane.b32.xlu0 %v4276, 127
      %v4322 = vpop.permute.xlu0 %4321
      %4323 = vrot.lane.b32.xlu0 %v4277, 127
      %v4324 = vpop.permute.xlu0 %4323
      %4325 = vrot.lane.b32.xlu0 %v4278, 127
      %v4326 = vpop.permute.xlu0 %4325
      %4327 = vrot.lane.b32.xlu0 %v4279, 127
      %v4328 = vpop.permute.xlu0 %4327
      %4329 = vrot.lane.b32.xlu0 %v4280, 127
      %v4330 = vpop.permute.xlu0 %4329
      %4331 = vrot.lane.b32.xlu0 %v4281, 127
      %v4332 = vpop.permute.xlu0 %4331
      %4333 = vrot.lane.b32.xlu0 %v4282, 127
      %v4334 = vpop.permute.xlu0 %4333
      %4335 = vrot.lane.b32.xlu0 %v4283, 127
      %v4336 = vpop.permute.xlu0 %4335
      %4337 = vrot.lane.b32.xlu0 %v4284, 127
      %v4338 = vpop.permute.xlu0 %4337
      %4339 = vrot.lane.b32.xlu0 %v4285, 127
      %v4340 = vpop.permute.xlu0 %4339
      %4341 = vrot.lane.b32.xlu0 %v4286, 127
      %v4342 = vpop.permute.xlu0 %4341
      %4343 = vrot.lane.b32.xlu0 %v4287, 127
      %v4344 = vpop.permute.xlu0 %4343
      %4345 = vrot.lane.b32.xlu0 %v4288, 127
      %v4346 = vpop.permute.xlu0 %4345
      %4347 = vrot.lane.b32.xlu0 %v4289, 127
      %v4348 = vpop.permute.xlu0 %4347
      %4349 = vrot.lane.b32.xlu0 %v4290, 127
      %v4350 = vpop.permute.xlu0 %4349
      %v4351 = vrot.slane %v4312, 4
      %v4352 = vrot.slane %v4314, 4
      %v4353 = vrot.slane %v4316, 4
      %v4354 = vrot.slane %v4318, 4
      %v4355 = vrot.slane %v4320, 4
      %v4356 = vrot.slane %v4322, 4
      %v4357 = vrot.slane %v4324, 4
      %v4358 = vrot.slane %v4326, 4
      %v4359 = vrot.slane %v4328, 4
      %v4360 = vrot.slane %v4330, 4
      %v4361 = vrot.slane %v4332, 4
      %v4362 = vrot.slane %v4334, 4
      %v4363 = vrot.slane %v4336, 4
      %v4364 = vrot.slane %v4338, 4
      %v4365 = vrot.slane %v4340, 4
      %v4366 = vrot.slane %v4342, 4
      %v4367 = vrot.slane %v4344, 4
      %v4368 = vrot.slane %v4346, 4
      %v4369 = vrot.slane %v4348, 4
      %v4370 = vrot.slane %v4350, 4
      %v4371 = vsel %vm502, %v4351, %v4352
      %v4372 = vsel %vm1437, %v4312, %v4371
      %v4373 = vsel %vm502, %v4352, %v4353
      %v4374 = vsel %vm1437, %v4314, %v4373
      %v4375 = vsel %vm502, %v4353, %v4354
      %v4376 = vsel %vm1437, %v4316, %v4375
      %v4377 = vsel %vm502, %v4354, %v4355
      %v4378 = vsel %vm1437, %v4318, %v4377
      %v4379 = vsel %vm502, %v4355, %v4356
      %v4380 = vsel %vm1437, %v4320, %v4379
      %v4381 = vsel %vm502, %v4356, %v4357
      %v4382 = vsel %vm1437, %v4322, %v4381
      %v4383 = vsel %vm502, %v4357, %v4358
      %v4384 = vsel %vm1437, %v4324, %v4383
      %v4385 = vsel %vm502, %v4358, %v4359
      %v4386 = vsel %vm1437, %v4326, %v4385
      %v4387 = vsel %vm502, %v4359, %v4360
      %v4388 = vsel %vm1437, %v4328, %v4387
      %v4389 = vsel %vm502, %v4360, %v4361
      %v4390 = vsel %vm1437, %v4330, %v4389
      %v4391 = vsel %vm502, %v4361, %v4362
      %v4392 = vsel %vm1437, %v4332, %v4391
      %v4393 = vsel %vm502, %v4362, %v4363
      %v4394 = vsel %vm1437, %v4334, %v4393
      %v4395 = vsel %vm502, %v4363, %v4364
      %v4396 = vsel %vm1437, %v4336, %v4395
      %v4397 = vsel %vm502, %v4364, %v4365
      %v4398 = vsel %vm1437, %v4338, %v4397
      %v4399 = vsel %vm502, %v4365, %v4366
      %v4400 = vsel %vm1437, %v4340, %v4399
      %v4401 = vsel %vm502, %v4366, %v4367
      %v4402 = vsel %vm1437, %v4342, %v4401
      %v4403 = vsel %vm502, %v4367, %v4368
      %v4404 = vsel %vm1437, %v4344, %v4403
      %v4405 = vsel %vm502, %v4368, %v4369
      %v4406 = vsel %vm1437, %v4346, %v4405
      %v4407 = vsel %vm502, %v4369, %v4370
      %v4408 = vsel %vm1437, %v4348, %v4407
      %4428 = vst [vmem:[#allocation3 + $0x2f8] sm:$0xff] %v4372
      %4429 = vst [vmem:[#allocation3 + $0x300] sm:$0xff] %v4374
      %4430 = vst [vmem:[#allocation3 + $0x308] sm:$0xff] %v4376
      %4431 = vst [vmem:[#allocation3 + $0x310] sm:$0xff] %v4378
      %4432 = vst [vmem:[#allocation3 + $0x318] sm:$0xff] %v4380
      %4433 = vst [vmem:[#allocation3 + $0x320] sm:$0xff] %v4382
      %4434 = vst [vmem:[#allocation3 + $0x328] sm:$0xff] %v4384
      %4435 = vst [vmem:[#allocation3 + $0x330] sm:$0xff] %v4386
      %4436 = vst [vmem:[#allocation3 + $0x338] sm:$0xff] %v4388
      %4437 = vst [vmem:[#allocation3 + $0x340] sm:$0xff] %v4390
      %4438 = vst [vmem:[#allocation3 + $0x348] sm:$0xff] %v4392
      %4439 = vst [vmem:[#allocation3 + $0x350] sm:$0xff] %v4394
      %4440 = vst [vmem:[#allocation3 + $0x358] sm:$0xff] %v4396
      %4441 = vst [vmem:[#allocation3 + $0x360] sm:$0xff] %v4398
      %4442 = vst [vmem:[#allocation3 + $0x368] sm:$0xff] %v4400
      %4443 = vst [vmem:[#allocation3 + $0x370] sm:$0xff] %v4402
      %4444 = vst [vmem:[#allocation3 + $0x378] sm:$0xff] %v4404
      %4445 = vst [vmem:[#allocation3 + $0x380] sm:$0xff] %v4406
      %4446 = vst [vmem:[#allocation3 + $0x388] sm:$0xff] %v4408
      %v4447 = vld [vmem:[#allocation2 + $0x4] sm:$0xff]
      %v4448 = vld [vmem:[#allocation2 + $0xc] sm:$0xff]
      %v4449 = vld [vmem:[#allocation2 + $0x14] sm:$0xff]
      %v4450 = vld [vmem:[#allocation2 + $0x1c] sm:$0xff]
      %v4451 = vld [vmem:[#allocation2 + $0x24] sm:$0xff]
      %v4452 = vld [vmem:[#allocation2 + $0x2c] sm:$0xff]
      %v4453 = vld [vmem:[#allocation2 + $0x34] sm:$0xff]
      %v4454 = vld [vmem:[#allocation2 + $0x3c] sm:$0xff]
      %v4455 = vld [vmem:[#allocation2 + $0x44] sm:$0xff]
      %v4456 = vld [vmem:[#allocation2 + $0x4c] sm:$0xff]
      %v4457 = vld [vmem:[#allocation2 + $0x54] sm:$0xff]
      %v4458 = vld [vmem:[#allocation2 + $0x5c] sm:$0xff]
      %v4459 = vld [vmem:[#allocation2 + $0x64] sm:$0xff]
      %v4460 = vld [vmem:[#allocation2 + $0x6c] sm:$0xff]
      %v4461 = vld [vmem:[#allocation2 + $0x74] sm:$0xff]
      %v4462 = vld [vmem:[#allocation2 + $0x7c] sm:$0xff]
      %v4463 = vld [vmem:[#allocation2 + $0x84] sm:$0xff]
      %v4464 = vld [vmem:[#allocation2 + $0x8c] sm:$0xff]
      %v4465 = vld [vmem:[#allocation2 + $0x94] sm:$0xff]
      %v4466 = vld [vmem:[#allocation2 + $0x9c] sm:$0xf]
      %4487 = vrot.lane.b32.xlu0 %v4447, 111
      %v4488 = vpop.permute.xlu0 %4487
      %4489 = vrot.lane.b32.xlu0 %v4448, 111
      %v4490 = vpop.permute.xlu0 %4489
      %4491 = vrot.lane.b32.xlu0 %v4449, 111
      %v4492 = vpop.permute.xlu0 %4491
      %4493 = vrot.lane.b32.xlu0 %v4450, 111
      %v4494 = vpop.permute.xlu0 %4493
      %4495 = vrot.lane.b32.xlu0 %v4451, 111
      %v4496 = vpop.permute.xlu0 %4495
      %4497 = vrot.lane.b32.xlu0 %v4452, 111
      %v4498 = vpop.permute.xlu0 %4497
      %4499 = vrot.lane.b32.xlu0 %v4453, 111
      %v4500 = vpop.permute.xlu0 %4499
      %4501 = vrot.lane.b32.xlu0 %v4454, 111
      %v4502 = vpop.permute.xlu0 %4501
      %4503 = vrot.lane.b32.xlu0 %v4455, 111
      %v4504 = vpop.permute.xlu0 %4503
      %4505 = vrot.lane.b32.xlu0 %v4456, 111
      %v4506 = vpop.permute.xlu0 %4505
      %4507 = vrot.lane.b32.xlu0 %v4457, 111
      %v4508 = vpop.permute.xlu0 %4507
      %4509 = vrot.lane.b32.xlu0 %v4458, 111
      %v4510 = vpop.permute.xlu0 %4509
      %4511 = vrot.lane.b32.xlu0 %v4459, 111
      %v4512 = vpop.permute.xlu0 %4511
      %4513 = vrot.lane.b32.xlu0 %v4460, 111
      %v4514 = vpop.permute.xlu0 %4513
      %4515 = vrot.lane.b32.xlu0 %v4461, 111
      %v4516 = vpop.permute.xlu0 %4515
      %4517 = vrot.lane.b32.xlu0 %v4462, 111
      %v4518 = vpop.permute.xlu0 %4517
      %4519 = vrot.lane.b32.xlu0 %v4463, 111
      %v4520 = vpop.permute.xlu0 %4519
      %4521 = vrot.lane.b32.xlu0 %v4464, 111
      %v4522 = vpop.permute.xlu0 %4521
      %4523 = vrot.lane.b32.xlu0 %v4465, 111
      %v4524 = vpop.permute.xlu0 %4523
      %4525 = vrot.lane.b32.xlu0 %v4466, 111
      %v4526 = vpop.permute.xlu0 %4525
      %v4527 = vrot.slane %v4488, 4
      %v4528 = vrot.slane %v4490, 4
      %v4529 = vrot.slane %v4492, 4
      %v4530 = vrot.slane %v4494, 4
      %v4531 = vrot.slane %v4496, 4
      %v4532 = vrot.slane %v4498, 4
      %v4533 = vrot.slane %v4500, 4
      %v4534 = vrot.slane %v4502, 4
      %v4535 = vrot.slane %v4504, 4
      %v4536 = vrot.slane %v4506, 4
      %v4537 = vrot.slane %v4508, 4
      %v4538 = vrot.slane %v4510, 4
      %v4539 = vrot.slane %v4512, 4
      %v4540 = vrot.slane %v4514, 4
      %v4541 = vrot.slane %v4516, 4
      %v4542 = vrot.slane %v4518, 4
      %v4543 = vrot.slane %v4520, 4
      %v4544 = vrot.slane %v4522, 4
      %v4545 = vrot.slane %v4524, 4
      %v4546 = vrot.slane %v4526, 4
      %v4547 = vsel %vm502, %v4527, %v4528
      %v4548 = vsel %vm1647, %v4488, %v4547
      %v4549 = vsel %vm502, %v4528, %v4529
      %v4550 = vsel %vm1647, %v4490, %v4549
      %v4551 = vsel %vm502, %v4529, %v4530
      %v4552 = vsel %vm1647, %v4492, %v4551
      %v4553 = vsel %vm502, %v4530, %v4531
      %v4554 = vsel %vm1647, %v4494, %v4553
      %v4555 = vsel %vm502, %v4531, %v4532
      %v4556 = vsel %vm1647, %v4496, %v4555
      %v4557 = vsel %vm502, %v4532, %v4533
      %v4558 = vsel %vm1647, %v4498, %v4557
      %v4559 = vsel %vm502, %v4533, %v4534
      %v4560 = vsel %vm1647, %v4500, %v4559
      %v4561 = vsel %vm502, %v4534, %v4535
      %v4562 = vsel %vm1647, %v4502, %v4561
      %v4563 = vsel %vm502, %v4535, %v4536
      %v4564 = vsel %vm1647, %v4504, %v4563
      %v4565 = vsel %vm502, %v4536, %v4537
      %v4566 = vsel %vm1647, %v4506, %v4565
      %v4567 = vsel %vm502, %v4537, %v4538
      %v4568 = vsel %vm1647, %v4508, %v4567
      %v4569 = vsel %vm502, %v4538, %v4539
      %v4570 = vsel %vm1647, %v4510, %v4569
      %v4571 = vsel %vm502, %v4539, %v4540
      %v4572 = vsel %vm1647, %v4512, %v4571
      %v4573 = vsel %vm502, %v4540, %v4541
      %v4574 = vsel %vm1647, %v4514, %v4573
      %v4575 = vsel %vm502, %v4541, %v4542
      %v4576 = vsel %vm1647, %v4516, %v4575
      %v4577 = vsel %vm502, %v4542, %v4543
      %v4578 = vsel %vm1647, %v4518, %v4577
      %v4579 = vsel %vm502, %v4543, %v4544
      %v4580 = vsel %vm1647, %v4520, %v4579
      %v4581 = vsel %vm502, %v4544, %v4545
      %v4582 = vsel %vm1647, %v4522, %v4581
      %v4583 = vsel %vm502, %v4545, %v4546
      %v4584 = vsel %vm1647, %v4524, %v4583
      %4604 = vst [vmem:[#allocation3 + $0x390] sm:$0xff] %v4548
      %4605 = vst [vmem:[#allocation3 + $0x398] sm:$0xff] %v4550
      %4606 = vst [vmem:[#allocation3 + $0x3a0] sm:$0xff] %v4552
      %4607 = vst [vmem:[#allocation3 + $0x3a8] sm:$0xff] %v4554
      %4608 = vst [vmem:[#allocation3 + $0x3b0] sm:$0xff] %v4556
      %4609 = vst [vmem:[#allocation3 + $0x3b8] sm:$0xff] %v4558
      %4610 = vst [vmem:[#allocation3 + $0x3c0] sm:$0xff] %v4560
      %4611 = vst [vmem:[#allocation3 + $0x3c8] sm:$0xff] %v4562
      %4612 = vst [vmem:[#allocation3 + $0x3d0] sm:$0xff] %v4564
      %4613 = vst [vmem:[#allocation3 + $0x3d8] sm:$0xff] %v4566
      %4614 = vst [vmem:[#allocation3 + $0x3e0] sm:$0xff] %v4568
      %4615 = vst [vmem:[#allocation3 + $0x3e8] sm:$0xff] %v4570
      %4616 = vst [vmem:[#allocation3 + $0x3f0] sm:$0xff] %v4572
      %4617 = vst [vmem:[#allocation3 + $0x3f8] sm:$0xff] %v4574
      %4618 = vst [vmem:[#allocation3 + $0x400] sm:$0xff] %v4576
      %4619 = vst [vmem:[#allocation3 + $0x408] sm:$0xff] %v4578
      %4620 = vst [vmem:[#allocation3 + $0x410] sm:$0xff] %v4580
      %4621 = vst [vmem:[#allocation3 + $0x418] sm:$0xff] %v4582
      %4622 = vst [vmem:[#allocation3 + $0x420] sm:$0xff] %v4584
      %v4623 = vld [vmem:[#allocation2 + $0x4] sm:$0xff]
      %v4624 = vld [vmem:[#allocation2 + $0xc] sm:$0xff]
      %v4625 = vld [vmem:[#allocation2 + $0x14] sm:$0xff]
      %v4626 = vld [vmem:[#allocation2 + $0x1c] sm:$0xff]
      %v4627 = vld [vmem:[#allocation2 + $0x24] sm:$0xff]
      %v4628 = vld [vmem:[#allocation2 + $0x2c] sm:$0xff]
      %v4629 = vld [vmem:[#allocation2 + $0x34] sm:$0xff]
      %v4630 = vld [vmem:[#allocation2 + $0x3c] sm:$0xff]
      %v4631 = vld [vmem:[#allocation2 + $0x44] sm:$0xff]
      %v4632 = vld [vmem:[#allocation2 + $0x4c] sm:$0xff]
      %v4633 = vld [vmem:[#allocation2 + $0x54] sm:$0xff]
      %v4634 = vld [vmem:[#allocation2 + $0x5c] sm:$0xff]
      %v4635 = vld [vmem:[#allocation2 + $0x64] sm:$0xff]
      %v4636 = vld [vmem:[#allocation2 + $0x6c] sm:$0xff]
      %v4637 = vld [vmem:[#allocation2 + $0x74] sm:$0xff]
      %v4638 = vld [vmem:[#allocation2 + $0x7c] sm:$0xff]
      %v4639 = vld [vmem:[#allocation2 + $0x84] sm:$0xff]
      %v4640 = vld [vmem:[#allocation2 + $0x8c] sm:$0xff]
      %v4641 = vld [vmem:[#allocation2 + $0x94] sm:$0xff]
      %v4642 = vld [vmem:[#allocation2 + $0x9c] sm:$0xf]
      %4663 = vrot.lane.b32.xlu0 %v4623, 110
      %v4664 = vpop.permute.xlu0 %4663
      %4665 = vrot.lane.b32.xlu0 %v4624, 110
      %v4666 = vpop.permute.xlu0 %4665
      %4667 = vrot.lane.b32.xlu0 %v4625, 110
      %v4668 = vpop.permute.xlu0 %4667
      %4669 = vrot.lane.b32.xlu0 %v4626, 110
      %v4670 = vpop.permute.xlu0 %4669
      %4671 = vrot.lane.b32.xlu0 %v4627, 110
      %v4672 = vpop.permute.xlu0 %4671
      %4673 = vrot.lane.b32.xlu0 %v4628, 110
      %v4674 = vpop.permute.xlu0 %4673
      %4675 = vrot.lane.b32.xlu0 %v4629, 110
      %v4676 = vpop.permute.xlu0 %4675
      %4677 = vrot.lane.b32.xlu0 %v4630, 110
      %v4678 = vpop.permute.xlu0 %4677
      %4679 = vrot.lane.b32.xlu0 %v4631, 110
      %v4680 = vpop.permute.xlu0 %4679
      %4681 = vrot.lane.b32.xlu0 %v4632, 110
      %v4682 = vpop.permute.xlu0 %4681
      %4683 = vrot.lane.b32.xlu0 %v4633, 110
      %v4684 = vpop.permute.xlu0 %4683
      %4685 = vrot.lane.b32.xlu0 %v4634, 110
      %v4686 = vpop.permute.xlu0 %4685
      %4687 = vrot.lane.b32.xlu0 %v4635, 110
      %v4688 = vpop.permute.xlu0 %4687
      %4689 = vrot.lane.b32.xlu0 %v4636, 110
      %v4690 = vpop.permute.xlu0 %4689
      %4691 = vrot.lane.b32.xlu0 %v4637, 110
      %v4692 = vpop.permute.xlu0 %4691
      %4693 = vrot.lane.b32.xlu0 %v4638, 110
      %v4694 = vpop.permute.xlu0 %4693
      %4695 = vrot.lane.b32.xlu0 %v4639, 110
      %v4696 = vpop.permute.xlu0 %4695
      %4697 = vrot.lane.b32.xlu0 %v4640, 110
      %v4698 = vpop.permute.xlu0 %4697
      %4699 = vrot.lane.b32.xlu0 %v4641, 110
      %v4700 = vpop.permute.xlu0 %4699
      %4701 = vrot.lane.b32.xlu0 %v4642, 110
      %v4702 = vpop.permute.xlu0 %4701
      %v4703 = vrot.slane %v4664, 4
      %v4704 = vrot.slane %v4666, 4
      %v4705 = vrot.slane %v4668, 4
      %v4706 = vrot.slane %v4670, 4
      %v4707 = vrot.slane %v4672, 4
      %v4708 = vrot.slane %v4674, 4
      %v4709 = vrot.slane %v4676, 4
      %v4710 = vrot.slane %v4678, 4
      %v4711 = vrot.slane %v4680, 4
      %v4712 = vrot.slane %v4682, 4
      %v4713 = vrot.slane %v4684, 4
      %v4714 = vrot.slane %v4686, 4
      %v4715 = vrot.slane %v4688, 4
      %v4716 = vrot.slane %v4690, 4
      %v4717 = vrot.slane %v4692, 4
      %v4718 = vrot.slane %v4694, 4
      %v4719 = vrot.slane %v4696, 4
      %v4720 = vrot.slane %v4698, 4
      %v4721 = vrot.slane %v4700, 4
      %v4722 = vrot.slane %v4702, 4
      %v4723 = vsel %vm502, %v4703, %v4704
      %v4724 = vsel %vm1858, %v4664, %v4723
      %v4725 = vsel %vm502, %v4704, %v4705
      %v4726 = vsel %vm1858, %v4666, %v4725
      %v4727 = vsel %vm502, %v4705, %v4706
      %v4728 = vsel %vm1858, %v4668, %v4727
      %v4729 = vsel %vm502, %v4706, %v4707
      %v4730 = vsel %vm1858, %v4670, %v4729
      %v4731 = vsel %vm502, %v4707, %v4708
      %v4732 = vsel %vm1858, %v4672, %v4731
      %v4733 = vsel %vm502, %v4708, %v4709
      %v4734 = vsel %vm1858, %v4674, %v4733
      %v4735 = vsel %vm502, %v4709, %v4710
      %v4736 = vsel %vm1858, %v4676, %v4735
      %v4737 = vsel %vm502, %v4710, %v4711
      %v4738 = vsel %vm1858, %v4678, %v4737
      %v4739 = vsel %vm502, %v4711, %v4712
      %v4740 = vsel %vm1858, %v4680, %v4739
      %v4741 = vsel %vm502, %v4712, %v4713
      %v4742 = vsel %vm1858, %v4682, %v4741
      %v4743 = vsel %vm502, %v4713, %v4714
      %v4744 = vsel %vm1858, %v4684, %v4743
      %v4745 = vsel %vm502, %v4714, %v4715
      %v4746 = vsel %vm1858, %v4686, %v4745
      %v4747 = vsel %vm502, %v4715, %v4716
      %v4748 = vsel %vm1858, %v4688, %v4747
      %v4749 = vsel %vm502, %v4716, %v4717
      %v4750 = vsel %vm1858, %v4690, %v4749
      %v4751 = vsel %vm502, %v4717, %v4718
      %v4752 = vsel %vm1858, %v4692, %v4751
      %v4753 = vsel %vm502, %v4718, %v4719
      %v4754 = vsel %vm1858, %v4694, %v4753
      %v4755 = vsel %vm502, %v4719, %v4720
      %v4756 = vsel %vm1858, %v4696, %v4755
      %v4757 = vsel %vm502, %v4720, %v4721
      %v4758 = vsel %vm1858, %v4698, %v4757
      %v4759 = vsel %vm502, %v4721, %v4722
      %v4760 = vsel %vm1858, %v4700, %v4759
      %4780 = vst [vmem:[#allocation3 + $0x428] sm:$0xff] %v4724
      %4781 = vst [vmem:[#allocation3 + $0x430] sm:$0xff] %v4726
      %4782 = vst [vmem:[#allocation3 + $0x438] sm:$0xff] %v4728
      %4783 = vst [vmem:[#allocation3 + $0x440] sm:$0xff] %v4730
      %4784 = vst [vmem:[#allocation3 + $0x448] sm:$0xff] %v4732
      %4785 = vst [vmem:[#allocation3 + $0x450] sm:$0xff] %v4734
      %4786 = vst [vmem:[#allocation3 + $0x458] sm:$0xff] %v4736
      %4787 = vst [vmem:[#allocation3 + $0x460] sm:$0xff] %v4738
      %4788 = vst [vmem:[#allocation3 + $0x468] sm:$0xff] %v4740
      %4789 = vst [vmem:[#allocation3 + $0x470] sm:$0xff] %v4742
      %4790 = vst [vmem:[#allocation3 + $0x478] sm:$0xff] %v4744
      %4791 = vst [vmem:[#allocation3 + $0x480] sm:$0xff] %v4746
      %4792 = vst [vmem:[#allocation3 + $0x488] sm:$0xff] %v4748
      %4793 = vst [vmem:[#allocation3 + $0x490] sm:$0xff] %v4750
      %4794 = vst [vmem:[#allocation3 + $0x498] sm:$0xff] %v4752
      %4795 = vst [vmem:[#allocation3 + $0x4a0] sm:$0xff] %v4754
      %4796 = vst [vmem:[#allocation3 + $0x4a8] sm:$0xff] %v4756
      %4797 = vst [vmem:[#allocation3 + $0x4b0] sm:$0xff] %v4758
      %4798 = vst [vmem:[#allocation3 + $0x4b8] sm:$0xff] %v4760
      %v4799 = vld [vmem:[#allocation2 + $0x4] sm:$0xff]
      %v4800 = vld [vmem:[#allocation2 + $0xc] sm:$0xff]
      %v4801 = vld [vmem:[#allocation2 + $0x14] sm:$0xff]
      %v4802 = vld [vmem:[#allocation2 + $0x1c] sm:$0xff]
      %v4803 = vld [vmem:[#allocation2 + $0x24] sm:$0xff]
      %v4804 = vld [vmem:[#allocation2 + $0x2c] sm:$0xff]
      %v4805 = vld [vmem:[#allocation2 + $0x34] sm:$0xff]
      %v4806 = vld [vmem:[#allocation2 + $0x3c] sm:$0xff]
      %v4807 = vld [vmem:[#allocation2 + $0x44] sm:$0xff]
      %v4808 = vld [vmem:[#allocation2 + $0x4c] sm:$0xff]
      %v4809 = vld [vmem:[#allocation2 + $0x54] sm:$0xff]
      %v4810 = vld [vmem:[#allocation2 + $0x5c] sm:$0xff]
      %v4811 = vld [vmem:[#allocation2 + $0x64] sm:$0xff]
      %v4812 = vld [vmem:[#allocation2 + $0x6c] sm:$0xff]
      %v4813 = vld [vmem:[#allocation2 + $0x74] sm:$0xff]
      %v4814 = vld [vmem:[#allocation2 + $0x7c] sm:$0xff]
      %v4815 = vld [vmem:[#allocation2 + $0x84] sm:$0xff]
      %v4816 = vld [vmem:[#allocation2 + $0x8c] sm:$0xff]
      %v4817 = vld [vmem:[#allocation2 + $0x94] sm:$0xff]
      %v4818 = vld [vmem:[#allocation2 + $0x9c] sm:$0xf]
      %4839 = vrot.lane.b32.xlu0 %v4799, 109
      %v4840 = vpop.permute.xlu0 %4839
      %4841 = vrot.lane.b32.xlu0 %v4800, 109
      %v4842 = vpop.permute.xlu0 %4841
      %4843 = vrot.lane.b32.xlu0 %v4801, 109
      %v4844 = vpop.permute.xlu0 %4843
      %4845 = vrot.lane.b32.xlu0 %v4802, 109
      %v4846 = vpop.permute.xlu0 %4845
      %4847 = vrot.lane.b32.xlu0 %v4803, 109
      %v4848 = vpop.permute.xlu0 %4847
      %4849 = vrot.lane.b32.xlu0 %v4804, 109
      %v4850 = vpop.permute.xlu0 %4849
      %4851 = vrot.lane.b32.xlu0 %v4805, 109
      %v4852 = vpop.permute.xlu0 %4851
      %4853 = vrot.lane.b32.xlu0 %v4806, 109
      %v4854 = vpop.permute.xlu0 %4853
      %4855 = vrot.lane.b32.xlu0 %v4807, 109
      %v4856 = vpop.permute.xlu0 %4855
      %4857 = vrot.lane.b32.xlu0 %v4808, 109
      %v4858 = vpop.permute.xlu0 %4857
      %4859 = vrot.lane.b32.xlu0 %v4809, 109
      %v4860 = vpop.permute.xlu0 %4859
      %4861 = vrot.lane.b32.xlu0 %v4810, 109
      %v4862 = vpop.permute.xlu0 %4861
      %4863 = vrot.lane.b32.xlu0 %v4811, 109
      %v4864 = vpop.permute.xlu0 %4863
      %4865 = vrot.lane.b32.xlu0 %v4812, 109
      %v4866 = vpop.permute.xlu0 %4865
      %4867 = vrot.lane.b32.xlu0 %v4813, 109
      %v4868 = vpop.permute.xlu0 %4867
      %4869 = vrot.lane.b32.xlu0 %v4814, 109
      %v4870 = vpop.permute.xlu0 %4869
      %4871 = vrot.lane.b32.xlu0 %v4815, 109
      %v4872 = vpop.permute.xlu0 %4871
      %4873 = vrot.lane.b32.xlu0 %v4816, 109
      %v4874 = vpop.permute.xlu0 %4873
      %4875 = vrot.lane.b32.xlu0 %v4817, 109
      %v4876 = vpop.permute.xlu0 %4875
      %4877 = vrot.lane.b32.xlu0 %v4818, 109
      %v4878 = vpop.permute.xlu0 %4877
      %v4879 = vrot.slane %v4840, 4
      %v4880 = vrot.slane %v4842, 4
      %v4881 = vrot.slane %v4844, 4
      %v4882 = vrot.slane %v4846, 4
      %v4883 = vrot.slane %v4848, 4
      %v4884 = vrot.slane %v4850, 4
      %v4885 = vrot.slane %v4852, 4
      %v4886 = vrot.slane %v4854, 4
      %v4887 = vrot.slane %v4856, 4
      %v4888 = vrot.slane %v4858, 4
      %v4889 = vrot.slane %v4860, 4
      %v4890 = vrot.slane %v4862, 4
      %v4891 = vrot.slane %v4864, 4
      %v4892 = vrot.slane %v4866, 4
      %v4893 = vrot.slane %v4868, 4
      %v4894 = vrot.slane %v4870, 4
      %v4895 = vrot.slane %v4872, 4
      %v4896 = vrot.slane %v4874, 4
      %v4897 = vrot.slane %v4876, 4
      %v4898 = vrot.slane %v4878, 4
      %v4899 = vsel %vm502, %v4879, %v4880
      %v4900 = vsel %vm2068, %v4840, %v4899
      %v4901 = vsel %vm502, %v4880, %v4881
      %v4902 = vsel %vm2068, %v4842, %v4901
      %v4903 = vsel %vm502, %v4881, %v4882
      %v4904 = vsel %vm2068, %v4844, %v4903
      %v4905 = vsel %vm502, %v4882, %v4883
      %v4906 = vsel %vm2068, %v4846, %v4905
      %v4907 = vsel %vm502, %v4883, %v4884
      %v4908 = vsel %vm2068, %v4848, %v4907
      %v4909 = vsel %vm502, %v4884, %v4885
      %v4910 = vsel %vm2068, %v4850, %v4909
      %v4911 = vsel %vm502, %v4885, %v4886
      %v4912 = vsel %vm2068, %v4852, %v4911
      %v4913 = vsel %vm502, %v4886, %v4887
      %v4914 = vsel %vm2068, %v4854, %v4913
      %v4915 = vsel %vm502, %v4887, %v4888
      %v4916 = vsel %vm2068, %v4856, %v4915
      %v4917 = vsel %vm502, %v4888, %v4889
      %v4918 = vsel %vm2068, %v4858, %v4917
      %v4919 = vsel %vm502, %v4889, %v4890
      %v4920 = vsel %vm2068, %v4860, %v4919
      %v4921 = vsel %vm502, %v4890, %v4891
      %v4922 = vsel %vm2068, %v4862, %v4921
      %v4923 = vsel %vm502, %v4891, %v4892
      %v4924 = vsel %vm2068, %v4864, %v4923
      %v4925 = vsel %vm502, %v4892, %v4893
      %v4926 = vsel %vm2068, %v4866, %v4925
      %v4927 = vsel %vm502, %v4893, %v4894
      %v4928 = vsel %vm2068, %v4868, %v4927
      %v4929 = vsel %vm502, %v4894, %v4895
      %v4930 = vsel %vm2068, %v4870, %v4929
      %v4931 = vsel %vm502, %v4895, %v4896
      %v4932 = vsel %vm2068, %v4872, %v4931
      %v4933 = vsel %vm502, %v4896, %v4897
      %v4934 = vsel %vm2068, %v4874, %v4933
      %v4935 = vsel %vm502, %v4897, %v4898
      %v4936 = vsel %vm2068, %v4876, %v4935
      %4956 = vst [vmem:[#allocation3 + $0x4c0] sm:$0xff] %v4900
      %4957 = vst [vmem:[#allocation3 + $0x4c8] sm:$0xff] %v4902
      %4958 = vst [vmem:[#allocation3 + $0x4d0] sm:$0xff] %v4904
      %4959 = vst [vmem:[#allocation3 + $0x4d8] sm:$0xff] %v4906
      %4960 = vst [vmem:[#allocation3 + $0x4e0] sm:$0xff] %v4908
      %4961 = vst [vmem:[#allocation3 + $0x4e8] sm:$0xff] %v4910
      %4962 = vst [vmem:[#allocation3 + $0x4f0] sm:$0xff] %v4912
      %4963 = vst [vmem:[#allocation3 + $0x4f8] sm:$0xff] %v4914
      %4964 = vst [vmem:[#allocation3 + $0x500] sm:$0xff] %v4916
      %4965 = vst [vmem:[#allocation3 + $0x508] sm:$0xff] %v4918
      %4966 = vst [vmem:[#allocation3 + $0x510] sm:$0xff] %v4920
      %4967 = vst [vmem:[#allocation3 + $0x518] sm:$0xff] %v4922
      %4968 = vst [vmem:[#allocation3 + $0x520] sm:$0xff] %v4924
      %4969 = vst [vmem:[#allocation3 + $0x528] sm:$0xff] %v4926
      %4970 = vst [vmem:[#allocation3 + $0x530] sm:$0xff] %v4928
      %4971 = vst [vmem:[#allocation3 + $0x538] sm:$0xff] %v4930
      %4972 = vst [vmem:[#allocation3 + $0x540] sm:$0xff] %v4932
      %4973 = vst [vmem:[#allocation3 + $0x548] sm:$0xff] %v4934
      %4974 = vst [vmem:[#allocation3 + $0x550] sm:$0xff] %v4936
      %v4975 = vld [vmem:[%s4] sm:$0xf]
      %v4976 = vld [vmem:[#allocation3] sm:$0xff]
      %v4977 = vld [vmem:[#allocation3 + $0x8] sm:$0xff]
      %v4978 = vld [vmem:[#allocation3 + $0x10] sm:$0xff]
      %v4979 = vld [vmem:[#allocation3 + $0x18] sm:$0xff]
      %v4980 = vld [vmem:[#allocation3 + $0x20] sm:$0xff]
      %v4981 = vld [vmem:[#allocation3 + $0x28] sm:$0xff]
      %v4982 = vld [vmem:[#allocation3 + $0x30] sm:$0xff]
      %v4983 = vld [vmem:[#allocation3 + $0x38] sm:$0xff]
      %v4984 = vld [vmem:[#allocation3 + $0x40] sm:$0xff]
      %v4985 = vld [vmem:[#allocation3 + $0x48] sm:$0xff]
      %v4986 = vld [vmem:[#allocation3 + $0x50] sm:$0xff]
      %v4987 = vld [vmem:[#allocation3 + $0x58] sm:$0xff]
      %v4988 = vld [vmem:[#allocation3 + $0x60] sm:$0xff]
      %v4989 = vld [vmem:[#allocation3 + $0x68] sm:$0xff]
      %v4990 = vld [vmem:[#allocation3 + $0x70] sm:$0xff]
      %v4991 = vld [vmem:[#allocation3 + $0x78] sm:$0xff]
      %v4992 = vld [vmem:[#allocation3 + $0x80] sm:$0xff]
      %v4993 = vld [vmem:[#allocation3 + $0x88] sm:$0xff]
      %v4994 = vld [vmem:[#allocation3 + $0x90] sm:$0xff]
      %v4995 = vld [vmem:[#allocation3 + $0x98] sm:$0xff]
      %v4996 = vld [vmem:[#allocation3 + $0xa0] sm:$0xff]
      %v4997 = vld [vmem:[#allocation3 + $0xa8] sm:$0xff]
      %v4998 = vld [vmem:[#allocation3 + $0xb0] sm:$0xff]
      %v4999 = vld [vmem:[#allocation3 + $0xb8] sm:$0xff]
      %v5000 = vld [vmem:[#allocation3 + $0xc0] sm:$0xff]
      %v5001 = vld [vmem:[#allocation3 + $0xc8] sm:$0xff]
      %v5002 = vld [vmem:[#allocation3 + $0xd0] sm:$0xff]
      %v5003 = vld [vmem:[#allocation3 + $0xd8] sm:$0xff]
      %v5004 = vld [vmem:[#allocation3 + $0xe0] sm:$0xff]
      %v5005 = vld [vmem:[#allocation3 + $0xe8] sm:$0xff]
      %v5006 = vld [vmem:[#allocation3 + $0xf0] sm:$0xff]
      %v5007 = vld [vmem:[#allocation3 + $0xf8] sm:$0xff]
      %v5008 = vld [vmem:[#allocation3 + $0x100] sm:$0xff]
      %v5009 = vld [vmem:[#allocation3 + $0x108] sm:$0xff]
      %v5010 = vld [vmem:[#allocation3 + $0x110] sm:$0xff]
      %v5011 = vld [vmem:[#allocation3 + $0x118] sm:$0xff]
      %v5012 = vld [vmem:[#allocation3 + $0x120] sm:$0xff]
      %v5013 = vld [vmem:[#allocation3 + $0x128] sm:$0xff]
      %v5014 = vld [vmem:[#allocation3 + $0x130] sm:$0xff]
      %v5015 = vld [vmem:[#allocation3 + $0x138] sm:$0xff]
      %v5016 = vld [vmem:[#allocation3 + $0x140] sm:$0xff]
      %v5017 = vld [vmem:[#allocation3 + $0x148] sm:$0xff]
      %v5018 = vld [vmem:[#allocation3 + $0x150] sm:$0xff]
      %v5019 = vld [vmem:[#allocation3 + $0x158] sm:$0xff]
      %v5020 = vld [vmem:[#allocation3 + $0x160] sm:$0xff]
      %v5021 = vld [vmem:[#allocation3 + $0x168] sm:$0xff]
      %v5022 = vld [vmem:[#allocation3 + $0x170] sm:$0xff]
      %v5023 = vld [vmem:[#allocation3 + $0x178] sm:$0xff]
      %v5024 = vld [vmem:[#allocation3 + $0x180] sm:$0xff]
      %v5025 = vld [vmem:[#allocation3 + $0x188] sm:$0xff]
      %v5026 = vld [vmem:[#allocation3 + $0x190] sm:$0xff]
      %v5027 = vld [vmem:[#allocation3 + $0x198] sm:$0xff]
      %v5028 = vld [vmem:[#allocation3 + $0x1a0] sm:$0xff]
      %v5029 = vld [vmem:[#allocation3 + $0x1a8] sm:$0xff]
      %v5030 = vld [vmem:[#allocation3 + $0x1b0] sm:$0xff]
      %v5031 = vld [vmem:[#allocation3 + $0x1b8] sm:$0xff]
      %v5032 = vld [vmem:[#allocation3 + $0x1c0] sm:$0xff]
      %v5033 = vld [vmem:[#allocation3 + $0x1c8] sm:$0xff]
      %v5034 = vld [vmem:[#allocation3 + $0x1d0] sm:$0xff]
      %v5035 = vld [vmem:[#allocation3 + $0x1d8] sm:$0xff]
      %v5036 = vld [vmem:[#allocation3 + $0x1e0] sm:$0xff]
      %v5037 = vld [vmem:[#allocation3 + $0x1e8] sm:$0xff]
      %v5038 = vld [vmem:[#allocation3 + $0x1f0] sm:$0xff]
      %v5039 = vld [vmem:[#allocation3 + $0x1f8] sm:$0xff]
      %v5040 = vld [vmem:[#allocation3 + $0x200] sm:$0xff]
      %v5041 = vld [vmem:[#allocation3 + $0x208] sm:$0xff]
      %v5042 = vld [vmem:[#allocation3 + $0x210] sm:$0xff]
      %v5043 = vld [vmem:[#allocation3 + $0x218] sm:$0xff]
      %v5044 = vld [vmem:[#allocation3 + $0x220] sm:$0xff]
      %v5045 = vld [vmem:[#allocation3 + $0x228] sm:$0xff]
      %v5046 = vld [vmem:[#allocation3 + $0x230] sm:$0xff]
      %v5047 = vld [vmem:[#allocation3 + $0x238] sm:$0xff]
      %v5048 = vld [vmem:[#allocation3 + $0x240] sm:$0xff]
      %v5049 = vld [vmem:[#allocation3 + $0x248] sm:$0xff]
      %v5050 = vld [vmem:[#allocation3 + $0x250] sm:$0xff]
      %v5051 = vld [vmem:[#allocation3 + $0x258] sm:$0xff]
      %v5052 = vld [vmem:[#allocation3 + $0x260] sm:$0xff]
      %v5053 = vld [vmem:[#allocation3 + $0x268] sm:$0xff]
      %v5054 = vld [vmem:[#allocation3 + $0x270] sm:$0xff]
      %v5055 = vld [vmem:[#allocation3 + $0x278] sm:$0xff]
      %v5056 = vld [vmem:[#allocation3 + $0x280] sm:$0xff]
      %v5057 = vld [vmem:[#allocation3 + $0x288] sm:$0xff]
      %v5058 = vld [vmem:[#allocation3 + $0x290] sm:$0xff]
      %v5059 = vld [vmem:[#allocation3 + $0x298] sm:$0xff]
      %v5060 = vld [vmem:[#allocation3 + $0x2a0] sm:$0xff]
      %v5061 = vld [vmem:[#allocation3 + $0x2a8] sm:$0xff]
      %v5062 = vld [vmem:[#allocation3 + $0x2b0] sm:$0xff]
      %v5063 = vld [vmem:[#allocation3 + $0x2b8] sm:$0xff]
      %v5064 = vld [vmem:[#allocation3 + $0x2c0] sm:$0xff]
      %v5065 = vld [vmem:[#allocation3 + $0x2c8] sm:$0xff]
      %v5066 = vld [vmem:[#allocation3 + $0x2d0] sm:$0xff]
      %v5067 = vld [vmem:[#allocation3 + $0x2d8] sm:$0xff]
      %v5068 = vld [vmem:[#allocation3 + $0x2e0] sm:$0xff]
      %v5069 = vld [vmem:[#allocation3 + $0x2e8] sm:$0xff]
      %v5070 = vld [vmem:[#allocation3 + $0x2f0] sm:$0xff]
      %v5071 = vld [vmem:[#allocation3 + $0x2f8] sm:$0xff]
      %v5072 = vld [vmem:[#allocation3 + $0x300] sm:$0xff]
      %v5073 = vld [vmem:[#allocation3 + $0x308] sm:$0xff]
      %v5074 = vld [vmem:[#allocation3 + $0x310] sm:$0xff]
      %v5075 = vld [vmem:[#allocation3 + $0x318] sm:$0xff]
      %v5076 = vld [vmem:[#allocation3 + $0x320] sm:$0xff]
      %v5077 = vld [vmem:[#allocation3 + $0x328] sm:$0xff]
      %v5078 = vld [vmem:[#allocation3 + $0x330] sm:$0xff]
      %v5079 = vld [vmem:[#allocation3 + $0x338] sm:$0xff]
      %v5080 = vld [vmem:[#allocation3 + $0x340] sm:$0xff]
      %v5081 = vld [vmem:[#allocation3 + $0x348] sm:$0xff]
      %v5082 = vld [vmem:[#allocation3 + $0x350] sm:$0xff]
      %v5083 = vld [vmem:[#allocation3 + $0x358] sm:$0xff]
      %v5084 = vld [vmem:[#allocation3 + $0x360] sm:$0xff]
      %v5085 = vld [vmem:[#allocation3 + $0x368] sm:$0xff]
      %v5086 = vld [vmem:[#allocation3 + $0x370] sm:$0xff]
      %v5087 = vld [vmem:[#allocation3 + $0x378] sm:$0xff]
      %v5088 = vld [vmem:[#allocation3 + $0x380] sm:$0xff]
      %v5089 = vld [vmem:[#allocation3 + $0x388] sm:$0xff]
      %v5090 = vld [vmem:[#allocation3 + $0x390] sm:$0xff]
      %v5091 = vld [vmem:[#allocation3 + $0x398] sm:$0xff]
      %v5092 = vld [vmem:[#allocation3 + $0x3a0] sm:$0xff]
      %v5093 = vld [vmem:[#allocation3 + $0x3a8] sm:$0xff]
      %v5094 = vld [vmem:[#allocation3 + $0x3b0] sm:$0xff]
      %v5095 = vld [vmem:[#allocation3 + $0x3b8] sm:$0xff]
      %v5096 = vld [vmem:[#allocation3 + $0x3c0] sm:$0xff]
      %v5097 = vld [vmem:[#allocation3 + $0x3c8] sm:$0xff]
      %v5098 = vld [vmem:[#allocation3 + $0x3d0] sm:$0xff]
      %v5099 = vld [vmem:[#allocation3 + $0x3d8] sm:$0xff]
      %v5100 = vld [vmem:[#allocation3 + $0x3e0] sm:$0xff]
      %v5101 = vld [vmem:[#allocation3 + $0x3e8] sm:$0xff]
      %v5102 = vld [vmem:[#allocation3 + $0x3f0] sm:$0xff]
      %v5103 = vld [vmem:[#allocation3 + $0x3f8] sm:$0xff]
      %v5104 = vld [vmem:[#allocation3 + $0x400] sm:$0xff]
      %v5105 = vld [vmem:[#allocation3 + $0x408] sm:$0xff]
      %v5106 = vld [vmem:[#allocation3 + $0x410] sm:$0xff]
      %v5107 = vld [vmem:[#allocation3 + $0x418] sm:$0xff]
      %v5108 = vld [vmem:[#allocation3 + $0x420] sm:$0xff]
      %v5109 = vld [vmem:[#allocation3 + $0x428] sm:$0xff]
      %v5110 = vld [vmem:[#allocation3 + $0x430] sm:$0xff]
      %v5111 = vld [vmem:[#allocation3 + $0x438] sm:$0xff]
      %v5112 = vld [vmem:[#allocation3 + $0x440] sm:$0xff]
      %v5113 = vld [vmem:[#allocation3 + $0x448] sm:$0xff]
      %v5114 = vld [vmem:[#allocation3 + $0x450] sm:$0xff]
      %v5115 = vld [vmem:[#allocation3 + $0x458] sm:$0xff]
      %v5116 = vld [vmem:[#allocation3 + $0x460] sm:$0xff]
      %v5117 = vld [vmem:[#allocation3 + $0x468] sm:$0xff]
      %v5118 = vld [vmem:[#allocation3 + $0x470] sm:$0xff]
      %v5119 = vld [vmem:[#allocation3 + $0x478] sm:$0xff]
      %v5120 = vld [vmem:[#allocation3 + $0x480] sm:$0xff]
      %v5121 = vld [vmem:[#allocation3 + $0x488] sm:$0xff]
      %v5122 = vld [vmem:[#allocation3 + $0x490] sm:$0xff]
      %v5123 = vld [vmem:[#allocation3 + $0x498] sm:$0xff]
      %v5124 = vld [vmem:[#allocation3 + $0x4a0] sm:$0xff]
      %v5125 = vld [vmem:[#allocation3 + $0x4a8] sm:$0xff]
      %v5126 = vld [vmem:[#allocation3 + $0x4b0] sm:$0xff]
      %v5127 = vld [vmem:[#allocation3 + $0x4b8] sm:$0xff]
      %v5128 = vld [vmem:[#allocation3 + $0x4c0] sm:$0xff]
      %v5129 = vld [vmem:[#allocation3 + $0x4c8] sm:$0xff]
      %v5130 = vld [vmem:[#allocation3 + $0x4d0] sm:$0xff]
      %v5131 = vld [vmem:[#allocation3 + $0x4d8] sm:$0xff]
      %v5132 = vld [vmem:[#allocation3 + $0x4e0] sm:$0xff]
      %v5133 = vld [vmem:[#allocation3 + $0x4e8] sm:$0xff]
      %v5134 = vld [vmem:[#allocation3 + $0x4f0] sm:$0xff]
      %v5135 = vld [vmem:[#allocation3 + $0x4f8] sm:$0xff]
      %v5136 = vld [vmem:[#allocation3 + $0x500] sm:$0xff]
      %v5137 = vld [vmem:[#allocation3 + $0x508] sm:$0xff]
      %v5138 = vld [vmem:[#allocation3 + $0x510] sm:$0xff]
      %v5139 = vld [vmem:[#allocation3 + $0x518] sm:$0xff]
      %v5140 = vld [vmem:[#allocation3 + $0x520] sm:$0xff]
      %v5141 = vld [vmem:[#allocation3 + $0x528] sm:$0xff]
      %v5142 = vld [vmem:[#allocation3 + $0x530] sm:$0xff]
      %v5143 = vld [vmem:[#allocation3 + $0x538] sm:$0xff]
      %v5144 = vld [vmem:[#allocation3 + $0x540] sm:$0xff]
      %v5145 = vld [vmem:[#allocation3 + $0x548] sm:$0xff]
      %v5146 = vld [vmem:[#allocation3 + $0x550] sm:$0xff]
      %v5147 = vld [vmem:[%s5] sm:$0xff]
      %5149 = vset.pattern.permute.xlu0 0
      %5150 = vperm.xlu0 %5149, %v5147
      %v5151 = vpop.permute.xlu0 %5150
      %v5324 = vunpack.c.l.b16 %v4976
      %v5325 = vunpack.c.h.b16 %v4976
      %v5326 = vunpack.c.l.b16 %v4977
      %v5327 = vunpack.c.h.b16 %v4977
      %v5328 = vunpack.c.l.b16 %v4978
      %v5329 = vunpack.c.h.b16 %v4978
      %v5330 = vunpack.c.l.b16 %v4979
      %v5331 = vunpack.c.h.b16 %v4979
      %v5332 = vunpack.c.l.b16 %v4980
      %v5333 = vunpack.c.h.b16 %v4980
      %v5334 = vunpack.c.l.b16 %v4981
      %v5335 = vunpack.c.h.b16 %v4981
      %v5336 = vunpack.c.l.b16 %v4982
      %v5337 = vunpack.c.h.b16 %v4982
      %v5338 = vunpack.c.l.b16 %v4983
      %v5339 = vunpack.c.h.b16 %v4983
      %v5340 = vunpack.c.l.b16 %v4984
      %v5341 = vunpack.c.h.b16 %v4984
      %v5342 = vunpack.c.l.b16 %v4985
      %v5343 = vunpack.c.h.b16 %v4985
      %v5344 = vunpack.c.l.b16 %v4986
      %v5345 = vunpack.c.h.b16 %v4986
      %v5346 = vunpack.c.l.b16 %v4987
      %v5347 = vunpack.c.h.b16 %v4987
      %v5348 = vunpack.c.l.b16 %v4988
      %v5349 = vunpack.c.h.b16 %v4988
      %v5350 = vunpack.c.l.b16 %v4989
      %v5351 = vunpack.c.h.b16 %v4989
      %v5352 = vunpack.c.l.b16 %v4990
      %v5353 = vunpack.c.h.b16 %v4990
      %v5354 = vunpack.c.l.b16 %v4991
      %v5355 = vunpack.c.h.b16 %v4991
      %v5356 = vunpack.c.l.b16 %v4992
      %v5357 = vunpack.c.h.b16 %v4992
      %v5358 = vunpack.c.l.b16 %v4993
      %v5359 = vunpack.c.h.b16 %v4993
      %v5360 = vunpack.c.l.b16 %v4994
      %v5361 = vunpack.c.h.b16 %v4994
      %v5362 = vunpack.c.l.b16 %v4995
      %v5363 = vunpack.c.h.b16 %v4995
      %v5364 = vunpack.c.l.b16 %v4996
      %v5365 = vunpack.c.h.b16 %v4996
      %v5366 = vunpack.c.l.b16 %v4997
      %v5367 = vunpack.c.h.b16 %v4997
      %v5368 = vunpack.c.l.b16 %v4998
      %v5369 = vunpack.c.h.b16 %v4998
      %v5370 = vunpack.c.l.b16 %v4999
      %v5371 = vunpack.c.h.b16 %v4999
      %v5372 = vunpack.c.l.b16 %v5000
      %v5373 = vunpack.c.h.b16 %v5000
      %v5374 = vunpack.c.l.b16 %v5001
      %v5375 = vunpack.c.h.b16 %v5001
      %v5376 = vunpack.c.l.b16 %v5002
      %v5377 = vunpack.c.h.b16 %v5002
      %v5378 = vunpack.c.l.b16 %v5003
      %v5379 = vunpack.c.h.b16 %v5003
      %v5380 = vunpack.c.l.b16 %v5004
      %v5381 = vunpack.c.h.b16 %v5004
      %v5382 = vunpack.c.l.b16 %v5005
      %v5383 = vunpack.c.h.b16 %v5005
      %v5384 = vunpack.c.l.b16 %v5006
      %v5385 = vunpack.c.h.b16 %v5006
      %v5386 = vunpack.c.l.b16 %v5007
      %v5387 = vunpack.c.h.b16 %v5007
      %v5388 = vunpack.c.l.b16 %v5008
      %v5389 = vunpack.c.h.b16 %v5008
      %v5390 = vunpack.c.l.b16 %v5009
      %v5391 = vunpack.c.h.b16 %v5009
      %v5392 = vunpack.c.l.b16 %v5010
      %v5393 = vunpack.c.h.b16 %v5010
      %v5394 = vunpack.c.l.b16 %v5011
      %v5395 = vunpack.c.h.b16 %v5011
      %v5396 = vunpack.c.l.b16 %v5012
      %v5397 = vunpack.c.h.b16 %v5012
      %v5398 = vunpack.c.l.b16 %v5013
      %v5399 = vunpack.c.h.b16 %v5013
      %v5400 = vunpack.c.l.b16 %v5014
      %v5401 = vunpack.c.h.b16 %v5014
      %v5402 = vunpack.c.l.b16 %v5015
      %v5403 = vunpack.c.h.b16 %v5015
      %v5404 = vunpack.c.l.b16 %v5016
      %v5405 = vunpack.c.h.b16 %v5016
      %v5406 = vunpack.c.l.b16 %v5017
      %v5407 = vunpack.c.h.b16 %v5017
      %v5408 = vunpack.c.l.b16 %v5018
      %v5409 = vunpack.c.h.b16 %v5018
      %v5410 = vunpack.c.l.b16 %v5019
      %v5411 = vunpack.c.h.b16 %v5019
      %v5412 = vunpack.c.l.b16 %v5020
      %v5413 = vunpack.c.h.b16 %v5020
      %v5414 = vunpack.c.l.b16 %v5021
      %v5415 = vunpack.c.h.b16 %v5021
      %v5416 = vunpack.c.l.b16 %v5022
      %v5417 = vunpack.c.h.b16 %v5022
      %v5418 = vunpack.c.l.b16 %v5023
      %v5419 = vunpack.c.h.b16 %v5023
      %v5420 = vunpack.c.l.b16 %v5024
      %v5421 = vunpack.c.h.b16 %v5024
      %v5422 = vunpack.c.l.b16 %v5025
      %v5423 = vunpack.c.h.b16 %v5025
      %v5424 = vunpack.c.l.b16 %v5026
      %v5425 = vunpack.c.h.b16 %v5026
      %v5426 = vunpack.c.l.b16 %v5027
      %v5427 = vunpack.c.h.b16 %v5027
      %v5428 = vunpack.c.l.b16 %v5028
      %v5429 = vunpack.c.h.b16 %v5028
      %v5430 = vunpack.c.l.b16 %v5029
      %v5431 = vunpack.c.h.b16 %v5029
      %v5432 = vunpack.c.l.b16 %v5030
      %v5433 = vunpack.c.h.b16 %v5030
      %v5434 = vunpack.c.l.b16 %v5031
      %v5435 = vunpack.c.h.b16 %v5031
      %v5436 = vunpack.c.l.b16 %v5032
      %v5437 = vunpack.c.h.b16 %v5032
      %v5438 = vunpack.c.l.b16 %v5033
      %v5439 = vunpack.c.h.b16 %v5033
      %v5440 = vunpack.c.l.b16 %v5034
      %v5441 = vunpack.c.h.b16 %v5034
      %v5442 = vunpack.c.l.b16 %v5035
      %v5443 = vunpack.c.h.b16 %v5035
      %v5444 = vunpack.c.l.b16 %v5036
      %v5445 = vunpack.c.h.b16 %v5036
      %v5446 = vunpack.c.l.b16 %v5037
      %v5447 = vunpack.c.h.b16 %v5037
      %v5448 = vunpack.c.l.b16 %v5038
      %v5449 = vunpack.c.h.b16 %v5038
      %v5450 = vunpack.c.l.b16 %v5039
      %v5451 = vunpack.c.h.b16 %v5039
      %v5452 = vunpack.c.l.b16 %v5040
      %v5453 = vunpack.c.h.b16 %v5040
      %v5454 = vunpack.c.l.b16 %v5041
      %v5455 = vunpack.c.h.b16 %v5041
      %v5456 = vunpack.c.l.b16 %v5042
      %v5457 = vunpack.c.h.b16 %v5042
      %v5458 = vunpack.c.l.b16 %v5043
      %v5459 = vunpack.c.h.b16 %v5043
      %v5460 = vunpack.c.l.b16 %v5044
      %v5461 = vunpack.c.h.b16 %v5044
      %v5462 = vunpack.c.l.b16 %v5045
      %v5463 = vunpack.c.h.b16 %v5045
      %v5464 = vunpack.c.l.b16 %v5046
      %v5465 = vunpack.c.h.b16 %v5046
      %v5466 = vunpack.c.l.b16 %v5047
      %v5467 = vunpack.c.h.b16 %v5047
      %v5468 = vunpack.c.l.b16 %v5048
      %v5469 = vunpack.c.h.b16 %v5048
      %v5470 = vunpack.c.l.b16 %v5049
      %v5471 = vunpack.c.h.b16 %v5049
      %v5472 = vunpack.c.l.b16 %v5050
      %v5473 = vunpack.c.h.b16 %v5050
      %v5474 = vunpack.c.l.b16 %v5051
      %v5475 = vunpack.c.h.b16 %v5051
      %v5476 = vunpack.c.l.b16 %v5052
      %v5477 = vunpack.c.h.b16 %v5052
      %v5478 = vunpack.c.l.b16 %v5053
      %v5479 = vunpack.c.h.b16 %v5053
      %v5480 = vunpack.c.l.b16 %v5054
      %v5481 = vunpack.c.h.b16 %v5054
      %v5482 = vunpack.c.l.b16 %v5055
      %v5483 = vunpack.c.h.b16 %v5055
      %v5484 = vunpack.c.l.b16 %v5056
      %v5485 = vunpack.c.h.b16 %v5056
      %v5486 = vunpack.c.l.b16 %v5057
      %v5487 = vunpack.c.h.b16 %v5057
      %v5488 = vunpack.c.l.b16 %v5058
      %v5489 = vunpack.c.h.b16 %v5058
      %v5490 = vunpack.c.l.b16 %v5059
      %v5491 = vunpack.c.h.b16 %v5059
      %v5492 = vunpack.c.l.b16 %v5060
      %v5493 = vunpack.c.h.b16 %v5060
      %v5494 = vunpack.c.l.b16 %v5061
      %v5495 = vunpack.c.h.b16 %v5061
      %v5496 = vunpack.c.l.b16 %v5062
      %v5497 = vunpack.c.h.b16 %v5062
      %v5498 = vunpack.c.l.b16 %v5063
      %v5499 = vunpack.c.h.b16 %v5063
      %v5500 = vunpack.c.l.b16 %v5064
      %v5501 = vunpack.c.h.b16 %v5064
      %v5502 = vunpack.c.l.b16 %v5065
      %v5503 = vunpack.c.h.b16 %v5065
      %v5504 = vunpack.c.l.b16 %v5066
      %v5505 = vunpack.c.h.b16 %v5066
      %v5506 = vunpack.c.l.b16 %v5067
      %v5507 = vunpack.c.h.b16 %v5067
      %v5508 = vunpack.c.l.b16 %v5068
      %v5509 = vunpack.c.h.b16 %v5068
      %v5510 = vunpack.c.l.b16 %v5069
      %v5511 = vunpack.c.h.b16 %v5069
      %v5512 = vunpack.c.l.b16 %v5070
      %v5513 = vunpack.c.h.b16 %v5070
      %v5514 = vunpack.c.l.b16 %v5071
      %v5515 = vunpack.c.h.b16 %v5071
      %v5516 = vunpack.c.l.b16 %v5072
      %v5517 = vunpack.c.h.b16 %v5072
      %v5518 = vunpack.c.l.b16 %v5073
      %v5519 = vunpack.c.h.b16 %v5073
      %v5520 = vunpack.c.l.b16 %v5074
      %v5521 = vunpack.c.h.b16 %v5074
      %v5522 = vunpack.c.l.b16 %v5075
      %v5523 = vunpack.c.h.b16 %v5075
      %v5524 = vunpack.c.l.b16 %v5076
      %v5525 = vunpack.c.h.b16 %v5076
      %v5526 = vunpack.c.l.b16 %v5077
      %v5527 = vunpack.c.h.b16 %v5077
      %v5528 = vunpack.c.l.b16 %v5078
      %v5529 = vunpack.c.h.b16 %v5078
      %v5530 = vunpack.c.l.b16 %v5079
      %v5531 = vunpack.c.h.b16 %v5079
      %v5532 = vunpack.c.l.b16 %v5080
      %v5533 = vunpack.c.h.b16 %v5080
      %v5534 = vunpack.c.l.b16 %v5081
      %v5535 = vunpack.c.h.b16 %v5081
      %v5536 = vunpack.c.l.b16 %v5082
      %v5537 = vunpack.c.h.b16 %v5082
      %v5538 = vunpack.c.l.b16 %v5083
      %v5539 = vunpack.c.h.b16 %v5083
      %v5540 = vunpack.c.l.b16 %v5084
      %v5541 = vunpack.c.h.b16 %v5084
      %v5542 = vunpack.c.l.b16 %v5085
      %v5543 = vunpack.c.h.b16 %v5085
      %v5544 = vunpack.c.l.b16 %v5086
      %v5545 = vunpack.c.h.b16 %v5086
      %v5546 = vunpack.c.l.b16 %v5087
      %v5547 = vunpack.c.h.b16 %v5087
      %v5548 = vunpack.c.l.b16 %v5088
      %v5549 = vunpack.c.h.b16 %v5088
      %v5550 = vunpack.c.l.b16 %v5089
      %v5551 = vunpack.c.h.b16 %v5089
      %v5552 = vunpack.c.l.b16 %v5090
      %v5553 = vunpack.c.h.b16 %v5090
      %v5554 = vunpack.c.l.b16 %v5091
      %v5555 = vunpack.c.h.b16 %v5091
      %v5556 = vunpack.c.l.b16 %v5092
      %v5557 = vunpack.c.h.b16 %v5092
      %v5558 = vunpack.c.l.b16 %v5093
      %v5559 = vunpack.c.h.b16 %v5093
      %v5560 = vunpack.c.l.b16 %v5094
      %v5561 = vunpack.c.h.b16 %v5094
      %v5562 = vunpack.c.l.b16 %v5095
      %v5563 = vunpack.c.h.b16 %v5095
      %v5564 = vunpack.c.l.b16 %v5096
      %v5565 = vunpack.c.h.b16 %v5096
      %v5566 = vunpack.c.l.b16 %v5097
      %v5567 = vunpack.c.h.b16 %v5097
      %v5568 = vunpack.c.l.b16 %v5098
      %v5569 = vunpack.c.h.b16 %v5098
      %v5570 = vunpack.c.l.b16 %v5099
      %v5571 = vunpack.c.h.b16 %v5099
      %v5572 = vunpack.c.l.b16 %v5100
      %v5573 = vunpack.c.h.b16 %v5100
      %v5574 = vunpack.c.l.b16 %v5101
      %v5575 = vunpack.c.h.b16 %v5101
      %v5576 = vunpack.c.l.b16 %v5102
      %v5577 = vunpack.c.h.b16 %v5102
      %v5578 = vunpack.c.l.b16 %v5103
      %v5579 = vunpack.c.h.b16 %v5103
      %v5580 = vunpack.c.l.b16 %v5104
      %v5581 = vunpack.c.h.b16 %v5104
      %v5582 = vunpack.c.l.b16 %v5105
      %v5583 = vunpack.c.h.b16 %v5105
      %v5584 = vunpack.c.l.b16 %v5106
      %v5585 = vunpack.c.h.b16 %v5106
      %v5586 = vunpack.c.l.b16 %v5107
      %v5587 = vunpack.c.h.b16 %v5107
      %v5588 = vunpack.c.l.b16 %v5108
      %v5589 = vunpack.c.h.b16 %v5108
      %v5590 = vunpack.c.l.b16 %v5109
      %v5591 = vunpack.c.h.b16 %v5109
      %v5592 = vunpack.c.l.b16 %v5110
      %v5593 = vunpack.c.h.b16 %v5110
      %v5594 = vunpack.c.l.b16 %v5111
      %v5595 = vunpack.c.h.b16 %v5111
      %v5596 = vunpack.c.l.b16 %v5112
      %v5597 = vunpack.c.h.b16 %v5112
      %v5598 = vunpack.c.l.b16 %v5113
      %v5599 = vunpack.c.h.b16 %v5113
      %v5600 = vunpack.c.l.b16 %v5114
      %v5601 = vunpack.c.h.b16 %v5114
      %v5602 = vunpack.c.l.b16 %v5115
      %v5603 = vunpack.c.h.b16 %v5115
      %v5604 = vunpack.c.l.b16 %v5116
      %v5605 = vunpack.c.h.b16 %v5116
      %v5606 = vunpack.c.l.b16 %v5117
      %v5607 = vunpack.c.h.b16 %v5117
      %v5608 = vunpack.c.l.b16 %v5118
      %v5609 = vunpack.c.h.b16 %v5118
      %v5610 = vunpack.c.l.b16 %v5119
      %v5611 = vunpack.c.h.b16 %v5119
      %v5612 = vunpack.c.l.b16 %v5120
      %v5613 = vunpack.c.h.b16 %v5120
      %v5614 = vunpack.c.l.b16 %v5121
      %v5615 = vunpack.c.h.b16 %v5121
      %v5616 = vunpack.c.l.b16 %v5122
      %v5617 = vunpack.c.h.b16 %v5122
      %v5618 = vunpack.c.l.b16 %v5123
      %v5619 = vunpack.c.h.b16 %v5123
      %v5620 = vunpack.c.l.b16 %v5124
      %v5621 = vunpack.c.h.b16 %v5124
      %v5622 = vunpack.c.l.b16 %v5125
      %v5623 = vunpack.c.h.b16 %v5125
      %v5624 = vunpack.c.l.b16 %v5126
      %v5625 = vunpack.c.h.b16 %v5126
      %v5626 = vunpack.c.l.b16 %v5127
      %v5627 = vunpack.c.h.b16 %v5127
      %v5628 = vunpack.c.l.b16 %v5128
      %v5629 = vunpack.c.h.b16 %v5128
      %v5630 = vunpack.c.l.b16 %v5129
      %v5631 = vunpack.c.h.b16 %v5129
      %v5632 = vunpack.c.l.b16 %v5130
      %v5633 = vunpack.c.h.b16 %v5130
      %v5634 = vunpack.c.l.b16 %v5131
      %v5635 = vunpack.c.h.b16 %v5131
      %v5636 = vunpack.c.l.b16 %v5132
      %v5637 = vunpack.c.h.b16 %v5132
      %v5638 = vunpack.c.l.b16 %v5133
      %v5639 = vunpack.c.h.b16 %v5133
      %v5640 = vunpack.c.l.b16 %v5134
      %v5641 = vunpack.c.h.b16 %v5134
      %v5642 = vunpack.c.l.b16 %v5135
      %v5643 = vunpack.c.h.b16 %v5135
      %v5644 = vunpack.c.l.b16 %v5136
      %v5645 = vunpack.c.h.b16 %v5136
      %v5646 = vunpack.c.l.b16 %v5137
      %v5647 = vunpack.c.h.b16 %v5137
      %v5648 = vunpack.c.l.b16 %v5138
      %v5649 = vunpack.c.h.b16 %v5138
      %v5650 = vunpack.c.l.b16 %v5139
      %v5651 = vunpack.c.h.b16 %v5139
      %v5652 = vunpack.c.l.b16 %v5140
      %v5653 = vunpack.c.h.b16 %v5140
      %v5654 = vunpack.c.l.b16 %v5141
      %v5655 = vunpack.c.h.b16 %v5141
      %v5656 = vunpack.c.l.b16 %v5142
      %v5657 = vunpack.c.h.b16 %v5142
      %v5658 = vunpack.c.l.b16 %v5143
      %v5659 = vunpack.c.h.b16 %v5143
      %v5660 = vunpack.c.l.b16 %v5144
      %v5661 = vunpack.c.h.b16 %v5144
      %v5662 = vunpack.c.l.b16 %v5145
      %v5663 = vunpack.c.h.b16 %v5145
      %v5664 = vunpack.c.l.b16 %v5146
      %v5665 = vunpack.c.h.b16 %v5146
      %v5666 = vpack.c.b16 %v5362, %v5324
      %v5667 = vpack.c.b16 %v5363, %v5325
      %v5668 = vpack.c.b16 %v5364, %v5326
      %v5669 = vpack.c.b16 %v5365, %v5327
      %v5670 = vpack.c.b16 %v5366, %v5328
      %v5671 = vpack.c.b16 %v5367, %v5329
      %v5672 = vpack.c.b16 %v5368, %v5330
      %v5673 = vpack.c.b16 %v5369, %v5331
      %v5674 = vpack.c.b16 %v5370, %v5332
      %v5675 = vpack.c.b16 %v5371, %v5333
      %v5676 = vpack.c.b16 %v5372, %v5334
      %v5677 = vpack.c.b16 %v5373, %v5335
      %v5678 = vpack.c.b16 %v5374, %v5336
      %v5679 = vpack.c.b16 %v5375, %v5337
      %v5680 = vpack.c.b16 %v5376, %v5338
      %v5681 = vpack.c.b16 %v5377, %v5339
      %v5682 = vpack.c.b16 %v5378, %v5340
      %v5683 = vpack.c.b16 %v5379, %v5341
      %v5684 = vpack.c.b16 %v5380, %v5342
      %v5685 = vpack.c.b16 %v5381, %v5343
      %v5686 = vpack.c.b16 %v5382, %v5344
      %v5687 = vpack.c.b16 %v5383, %v5345
      %v5688 = vpack.c.b16 %v5384, %v5346
      %v5689 = vpack.c.b16 %v5385, %v5347
      %v5690 = vpack.c.b16 %v5386, %v5348
      %v5691 = vpack.c.b16 %v5387, %v5349
      %v5692 = vpack.c.b16 %v5388, %v5350
      %v5693 = vpack.c.b16 %v5389, %v5351
      %v5694 = vpack.c.b16 %v5390, %v5352
      %v5695 = vpack.c.b16 %v5391, %v5353
      %v5696 = vpack.c.b16 %v5392, %v5354
      %v5697 = vpack.c.b16 %v5393, %v5355
      %v5698 = vpack.c.b16 %v5394, %v5356
      %v5699 = vpack.c.b16 %v5395, %v5357
      %v5700 = vpack.c.b16 %v5396, %v5358
      %v5701 = vpack.c.b16 %v5397, %v5359
      %v5702 = vpack.c.b16 %v5398, %v5360
      %v5703 = vpack.c.b16 %v5399, %v5361
      %v5704 = vpack.c.b16 %v5438, %v5400
      %v5705 = vpack.c.b16 %v5439, %v5401
      %v5706 = vpack.c.b16 %v5440, %v5402
      %v5707 = vpack.c.b16 %v5441, %v5403
      %v5708 = vpack.c.b16 %v5442, %v5404
      %v5709 = vpack.c.b16 %v5443, %v5405
      %v5710 = vpack.c.b16 %v5444, %v5406
      %v5711 = vpack.c.b16 %v5445, %v5407
      %v5712 = vpack.c.b16 %v5446, %v5408
      %v5713 = vpack.c.b16 %v5447, %v5409
      %v5714 = vpack.c.b16 %v5448, %v5410
      %v5715 = vpack.c.b16 %v5449, %v5411
      %v5716 = vpack.c.b16 %v5450, %v5412
      %v5717 = vpack.c.b16 %v5451, %v5413
      %v5718 = vpack.c.b16 %v5452, %v5414
      %v5719 = vpack.c.b16 %v5453, %v5415
      %v5720 = vpack.c.b16 %v5454, %v5416
      %v5721 = vpack.c.b16 %v5455, %v5417
      %v5722 = vpack.c.b16 %v5456, %v5418
      %v5723 = vpack.c.b16 %v5457, %v5419
      %v5724 = vpack.c.b16 %v5458, %v5420
      %v5725 = vpack.c.b16 %v5459, %v5421
      %v5726 = vpack.c.b16 %v5460, %v5422
      %v5727 = vpack.c.b16 %v5461, %v5423
      %v5728 = vpack.c.b16 %v5462, %v5424
      %v5729 = vpack.c.b16 %v5463, %v5425
      %v5730 = vpack.c.b16 %v5464, %v5426
      %v5731 = vpack.c.b16 %v5465, %v5427
      %v5732 = vpack.c.b16 %v5466, %v5428
      %v5733 = vpack.c.b16 %v5467, %v5429
      %v5734 = vpack.c.b16 %v5468, %v5430
      %v5735 = vpack.c.b16 %v5469, %v5431
      %v5736 = vpack.c.b16 %v5470, %v5432
      %v5737 = vpack.c.b16 %v5471, %v5433
      %v5738 = vpack.c.b16 %v5472, %v5434
      %v5739 = vpack.c.b16 %v5473, %v5435
      %v5740 = vpack.c.b16 %v5474, %v5436
      %v5741 = vpack.c.b16 %v5475, %v5437
      %v5742 = vpack.c.b16 %v5514, %v5476
      %v5743 = vpack.c.b16 %v5515, %v5477
      %v5744 = vpack.c.b16 %v5516, %v5478
      %v5745 = vpack.c.b16 %v5517, %v5479
      %v5746 = vpack.c.b16 %v5518, %v5480
      %v5747 = vpack.c.b16 %v5519, %v5481
      %v5748 = vpack.c.b16 %v5520, %v5482
      %v5749 = vpack.c.b16 %v5521, %v5483
      %v5750 = vpack.c.b16 %v5522, %v5484
      %v5751 = vpack.c.b16 %v5523, %v5485
      %v5752 = vpack.c.b16 %v5524, %v5486
      %v5753 = vpack.c.b16 %v5525, %v5487
      %v5754 = vpack.c.b16 %v5526, %v5488
      %v5755 = vpack.c.b16 %v5527, %v5489
      %v5756 = vpack.c.b16 %v5528, %v5490
      %v5757 = vpack.c.b16 %v5529, %v5491
      %v5758 = vpack.c.b16 %v5530, %v5492
      %v5759 = vpack.c.b16 %v5531, %v5493
      %v5760 = vpack.c.b16 %v5532, %v5494
      %v5761 = vpack.c.b16 %v5533, %v5495
      %v5762 = vpack.c.b16 %v5534, %v5496
      %v5763 = vpack.c.b16 %v5535, %v5497
      %v5764 = vpack.c.b16 %v5536, %v5498
      %v5765 = vpack.c.b16 %v5537, %v5499
      %v5766 = vpack.c.b16 %v5538, %v5500
      %v5767 = vpack.c.b16 %v5539, %v5501
      %v5768 = vpack.c.b16 %v5540, %v5502
      %v5769 = vpack.c.b16 %v5541, %v5503
      %v5770 = vpack.c.b16 %v5542, %v5504
      %v5771 = vpack.c.b16 %v5543, %v5505
      %v5772 = vpack.c.b16 %v5544, %v5506
      %v5773 = vpack.c.b16 %v5545, %v5507
      %v5774 = vpack.c.b16 %v5546, %v5508
      %v5775 = vpack.c.b16 %v5547, %v5509
      %v5776 = vpack.c.b16 %v5548, %v5510
      %v5777 = vpack.c.b16 %v5549, %v5511
      %v5778 = vpack.c.b16 %v5550, %v5512
      %v5779 = vpack.c.b16 %v5551, %v5513
      %v5780 = vpack.c.b16 %v5590, %v5552
      %v5781 = vpack.c.b16 %v5591, %v5553
      %v5782 = vpack.c.b16 %v5592, %v5554
      %v5783 = vpack.c.b16 %v5593, %v5555
      %v5784 = vpack.c.b16 %v5594, %v5556
      %v5785 = vpack.c.b16 %v5595, %v5557
      %v5786 = vpack.c.b16 %v5596, %v5558
      %v5787 = vpack.c.b16 %v5597, %v5559
      %v5788 = vpack.c.b16 %v5598, %v5560
      %v5789 = vpack.c.b16 %v5599, %v5561
      %v5790 = vpack.c.b16 %v5600, %v5562
      %v5791 = vpack.c.b16 %v5601, %v5563
      %v5792 = vpack.c.b16 %v5602, %v5564
      %v5793 = vpack.c.b16 %v5603, %v5565
      %v5794 = vpack.c.b16 %v5604, %v5566
      %v5795 = vpack.c.b16 %v5605, %v5567
      %v5796 = vpack.c.b16 %v5606, %v5568
      %v5797 = vpack.c.b16 %v5607, %v5569
      %v5798 = vpack.c.b16 %v5608, %v5570
      %v5799 = vpack.c.b16 %v5609, %v5571
      %v5800 = vpack.c.b16 %v5610, %v5572
      %v5801 = vpack.c.b16 %v5611, %v5573
      %v5802 = vpack.c.b16 %v5612, %v5574
      %v5803 = vpack.c.b16 %v5613, %v5575
      %v5804 = vpack.c.b16 %v5614, %v5576
      %v5805 = vpack.c.b16 %v5615, %v5577
      %v5806 = vpack.c.b16 %v5616, %v5578
      %v5807 = vpack.c.b16 %v5617, %v5579
      %v5808 = vpack.c.b16 %v5618, %v5580
      %v5809 = vpack.c.b16 %v5619, %v5581
      %v5810 = vpack.c.b16 %v5620, %v5582
      %v5811 = vpack.c.b16 %v5621, %v5583
      %v5812 = vpack.c.b16 %v5622, %v5584
      %v5813 = vpack.c.b16 %v5623, %v5585
      %v5814 = vpack.c.b16 %v5624, %v5586
      %v5815 = vpack.c.b16 %v5625, %v5587
      %v5816 = vpack.c.b16 %v5626, %v5588
      %v5817 = vpack.c.b16 %v5627, %v5589
      %v5818 = vpack.c.b16 %v5628, %v5628
      %v5819 = vpack.c.b16 %v5629, %v5629
      %v5820 = vpack.c.b16 %v5630, %v5630
      %v5821 = vpack.c.b16 %v5631, %v5631
      %v5822 = vpack.c.b16 %v5632, %v5632
      %v5823 = vpack.c.b16 %v5633, %v5633
      %v5824 = vpack.c.b16 %v5634, %v5634
      %v5825 = vpack.c.b16 %v5635, %v5635
      %v5826 = vpack.c.b16 %v5636, %v5636
      %v5827 = vpack.c.b16 %v5637, %v5637
      %v5828 = vpack.c.b16 %v5638, %v5638
      %v5829 = vpack.c.b16 %v5639, %v5639
      %v5830 = vpack.c.b16 %v5640, %v5640
      %v5831 = vpack.c.b16 %v5641, %v5641
      %v5832 = vpack.c.b16 %v5642, %v5642
      %v5833 = vpack.c.b16 %v5643, %v5643
      %v5834 = vpack.c.b16 %v5644, %v5644
      %v5835 = vpack.c.b16 %v5645, %v5645
      %v5836 = vpack.c.b16 %v5646, %v5646
      %v5837 = vpack.c.b16 %v5647, %v5647
      %v5838 = vpack.c.b16 %v5648, %v5648
      %v5839 = vpack.c.b16 %v5649, %v5649
      %v5840 = vpack.c.b16 %v5650, %v5650
      %v5841 = vpack.c.b16 %v5651, %v5651
      %v5842 = vpack.c.b16 %v5652, %v5652
      %v5843 = vpack.c.b16 %v5653, %v5653
      %v5844 = vpack.c.b16 %v5654, %v5654
      %v5845 = vpack.c.b16 %v5655, %v5655
      %v5846 = vpack.c.b16 %v5656, %v5656
      %v5847 = vpack.c.b16 %v5657, %v5657
      %v5848 = vpack.c.b16 %v5658, %v5658
      %v5849 = vpack.c.b16 %v5659, %v5659
      %v5850 = vpack.c.b16 %v5660, %v5660
      %v5851 = vpack.c.b16 %v5661, %v5661
      %v5852 = vpack.c.b16 %v5662, %v5662
      %v5853 = vpack.c.b16 %v5663, %v5663
      %v5854 = vpack.c.b16 %v5664, %v5664
      %v5855 = vpack.c.b16 %v5665, %v5665
      %vm6008 = vcmask 588800
      %v6010 = vsel %vm6008, %v4975, 0
      %vm6012 = vcmask 1043456
      %v6014 = vsel %vm6012, %v5818, 0
      %v6017 = vsel %vm6012, %v5819, 0
      %v6020 = vsel %vm6012, %v5820, 0
      %v6023 = vsel %vm6012, %v5821, 0
      %v6026 = vsel %vm6012, %v5822, 0
      %v6029 = vsel %vm6012, %v5823, 0
      %v6032 = vsel %vm6012, %v5824, 0
      %v6035 = vsel %vm6012, %v5825, 0
      %v6038 = vsel %vm6012, %v5826, 0
      %v6041 = vsel %vm6012, %v5827, 0
      %v6044 = vsel %vm6012, %v5828, 0
      %v6047 = vsel %vm6012, %v5829, 0
      %v6050 = vsel %vm6012, %v5830, 0
      %v6053 = vsel %vm6012, %v5831, 0
      %v6056 = vsel %vm6012, %v5832, 0
      %v6059 = vsel %vm6012, %v5833, 0
      %v6062 = vsel %vm6012, %v5834, 0
      %v6065 = vsel %vm6012, %v5835, 0
      %v6068 = vsel %vm6012, %v5836, 0
      %v6071 = vsel %vm6012, %v5837, 0
      %v6074 = vsel %vm6012, %v5838, 0
      %v6077 = vsel %vm6012, %v5839, 0
      %v6080 = vsel %vm6012, %v5840, 0
      %v6083 = vsel %vm6012, %v5841, 0
      %v6086 = vsel %vm6012, %v5842, 0
      %v6089 = vsel %vm6012, %v5843, 0
      %v6092 = vsel %vm6012, %v5844, 0
      %v6095 = vsel %vm6012, %v5845, 0
      %v6098 = vsel %vm6012, %v5846, 0
      %v6101 = vsel %vm6012, %v5847, 0
      %v6104 = vsel %vm6012, %v5848, 0
      %v6107 = vsel %vm6012, %v5849, 0
      %v6110 = vsel %vm6012, %v5850, 0
      %v6113 = vsel %vm6012, %v5851, 0
      %v6116 = vsel %vm6012, %v5852, 0
      %v6119 = vsel %vm6012, %v5853, 0
      %v6122 = vsel %vm6012, %v5854, 0
      %v6125 = vsel %vm6012, %v5855, 0
      %6127 = vmatpush.bf16.msra.mxu0 0
      %6128 = vmatpush.bf16.msra.mxu0 0
      %6129 = vmatpush.bf16.msra.mxu0 0
      %6130 = vmatpush.bf16.msra.mxu0 %v6014
      %6131 = vmatpush.bf16.msra.mxu0 %v5780
      %6132 = vmatpush.bf16.msra.mxu0 %v5742
      %6133 = vmatpush.bf16.msra.mxu0 %v5704
      %6134 = vmatpush.bf16.msra.mxu0 %v5666
      %6135 = vmatmul.bf16.gmra.mxu0 %v6010
      %v6136 = vpop.f32.mrf.mxu0
      %v6137 = vadd.f32 %v5151, %v6136
      %v6138 = vpop.f32.mrf.mxu0
      %6139 = vdwg.mxu0
      %6140 = vmatpush.bf16.msra.mxu0 0
      %6141 = vmatpush.bf16.msra.mxu0 0
      %6142 = vmatpush.bf16.msra.mxu0 0
      %6143 = vmatpush.bf16.msra.mxu0 %v6017
      %6144 = vmatpush.bf16.msra.mxu0 %v5781
      %6145 = vmatpush.bf16.msra.mxu0 %v5743
      %6146 = vmatpush.bf16.msra.mxu0 %v5705
      %6147 = vmatpush.bf16.msra.mxu0 %v5667
      %6148 = vmatmul.bf16.gmra.mxu0 %v6010
      %v6149 = vpop.f32.mrf.mxu0
      %v6150 = vadd.f32 %v5151, %v6149
      %v6151 = vpop.f32.mrf.mxu0
      %6152 = vdwg.mxu0
      %6153 = vmatpush.bf16.msra.mxu0 0
      %6154 = vmatpush.bf16.msra.mxu0 0
      %6155 = vmatpush.bf16.msra.mxu0 0
      %6156 = vmatpush.bf16.msra.mxu0 %v6020
      %6157 = vmatpush.bf16.msra.mxu0 %v5782
      %6158 = vmatpush.bf16.msra.mxu0 %v5744
      %6159 = vmatpush.bf16.msra.mxu0 %v5706
      %6160 = vmatpush.bf16.msra.mxu0 %v5668
      %6161 = vmatmul.bf16.gmra.mxu0 %v6010
      %v6162 = vpop.f32.mrf.mxu0
      %v6163 = vadd.f32 %v5151, %v6162
      %v6164 = vpop.f32.mrf.mxu0
      %6165 = vdwg.mxu0
      %6166 = vmatpush.bf16.msra.mxu0 0
      %6167 = vmatpush.bf16.msra.mxu0 0
      %6168 = vmatpush.bf16.msra.mxu0 0
      %6169 = vmatpush.bf16.msra.mxu0 %v6023
      %6170 = vmatpush.bf16.msra.mxu0 %v5783
      %6171 = vmatpush.bf16.msra.mxu0 %v5745
      %6172 = vmatpush.bf16.msra.mxu0 %v5707
      %6173 = vmatpush.bf16.msra.mxu0 %v5669
      %6174 = vmatmul.bf16.gmra.mxu0 %v6010
      %v6175 = vpop.f32.mrf.mxu0
      %v6176 = vadd.f32 %v5151, %v6175
      %v6177 = vpop.f32.mrf.mxu0
      %6178 = vdwg.mxu0
      %6179 = vmatpush.bf16.msra.mxu0 0
      %6180 = vmatpush.bf16.msra.mxu0 0
      %6181 = vmatpush.bf16.msra.mxu0 0
      %6182 = vmatpush.bf16.msra.mxu0 %v6026
      %6183 = vmatpush.bf16.msra.mxu0 %v5784
      %6184 = vmatpush.bf16.msra.mxu0 %v5746
      %6185 = vmatpush.bf16.msra.mxu0 %v5708
      %6186 = vmatpush.bf16.msra.mxu0 %v5670
      %6187 = vmatmul.bf16.gmra.mxu0 %v6010
      %v6188 = vpop.f32.mrf.mxu0
      %v6189 = vadd.f32 %v5151, %v6188
      %v6190 = vpop.f32.mrf.mxu0
      %6191 = vdwg.mxu0
      %6192 = vmatpush.bf16.msra.mxu0 0
      %6193 = vmatpush.bf16.msra.mxu0 0
      %6194 = vmatpush.bf16.msra.mxu0 0
      %6195 = vmatpush.bf16.msra.mxu0 %v6029
      %6196 = vmatpush.bf16.msra.mxu0 %v5785
      %6197 = vmatpush.bf16.msra.mxu0 %v5747
      %6198 = vmatpush.bf16.msra.mxu0 %v5709
      %6199 = vmatpush.bf16.msra.mxu0 %v5671
      %6200 = vmatmul.bf16.gmra.mxu0 %v6010
      %v6201 = vpop.f32.mrf.mxu0
      %v6202 = vadd.f32 %v5151, %v6201
      %v6203 = vpop.f32.mrf.mxu0
      %6204 = vdwg.mxu0
      %6205 = vmatpush.bf16.msra.mxu0 0
      %6206 = vmatpush.bf16.msra.mxu0 0
      %6207 = vmatpush.bf16.msra.mxu0 0
      %6208 = vmatpush.bf16.msra.mxu0 %v6032
      %6209 = vmatpush.bf16.msra.mxu0 %v5786
      %6210 = vmatpush.bf16.msra.mxu0 %v5748
      %6211 = vmatpush.bf16.msra.mxu0 %v5710
      %6212 = vmatpush.bf16.msra.mxu0 %v5672
      %6213 = vmatmul.bf16.gmra.mxu0 %v6010
      %v6214 = vpop.f32.mrf.mxu0
      %v6215 = vadd.f32 %v5151, %v6214
      %v6216 = vpop.f32.mrf.mxu0
      %6217 = vdwg.mxu0
      %6218 = vmatpush.bf16.msra.mxu0 0
      %6219 = vmatpush.bf16.msra.mxu0 0
      %6220 = vmatpush.bf16.msra.mxu0 0
      %6221 = vmatpush.bf16.msra.mxu0 %v6035
      %6222 = vmatpush.bf16.msra.mxu0 %v5787
      %6223 = vmatpush.bf16.msra.mxu0 %v5749
      %6224 = vmatpush.bf16.msra.mxu0 %v5711
      %6225 = vmatpush.bf16.msra.mxu0 %v5673
      %6226 = vmatmul.bf16.gmra.mxu0 %v6010
      %v6227 = vpop.f32.mrf.mxu0
      %v6228 = vadd.f32 %v5151, %v6227
      %v6229 = vpop.f32.mrf.mxu0
      %6230 = vdwg.mxu0
      %6231 = vmatpush.bf16.msra.mxu0 0
      %6232 = vmatpush.bf16.msra.mxu0 0
      %6233 = vmatpush.bf16.msra.mxu0 0
      %6234 = vmatpush.bf16.msra.mxu0 %v6038
      %6235 = vmatpush.bf16.msra.mxu0 %v5788
      %6236 = vmatpush.bf16.msra.mxu0 %v5750
      %6237 = vmatpush.bf16.msra.mxu0 %v5712
      %6238 = vmatpush.bf16.msra.mxu0 %v5674
      %6239 = vmatmul.bf16.gmra.mxu0 %v6010
      %v6240 = vpop.f32.mrf.mxu0
      %v6241 = vadd.f32 %v5151, %v6240
      %v6242 = vpop.f32.mrf.mxu0
      %6243 = vdwg.mxu0
      %6244 = vmatpush.bf16.msra.mxu0 0
      %6245 = vmatpush.bf16.msra.mxu0 0
      %6246 = vmatpush.bf16.msra.mxu0 0
      %6247 = vmatpush.bf16.msra.mxu0 %v6041
      %6248 = vmatpush.bf16.msra.mxu0 %v5789
      %6249 = vmatpush.bf16.msra.mxu0 %v5751
      %6250 = vmatpush.bf16.msra.mxu0 %v5713
      %6251 = vmatpush.bf16.msra.mxu0 %v5675
      %6252 = vmatmul.bf16.gmra.mxu0 %v6010
      %v6253 = vpop.f32.mrf.mxu0
      %v6254 = vadd.f32 %v5151, %v6253
      %v6255 = vpop.f32.mrf.mxu0
      %6256 = vdwg.mxu0
      %6257 = vmatpush.bf16.msra.mxu0 0
      %6258 = vmatpush.bf16.msra.mxu0 0
      %6259 = vmatpush.bf16.msra.mxu0 0
      %6260 = vmatpush.bf16.msra.mxu0 %v6044
      %6261 = vmatpush.bf16.msra.mxu0 %v5790
      %6262 = vmatpush.bf16.msra.mxu0 %v5752
      %6263 = vmatpush.bf16.msra.mxu0 %v5714
      %6264 = vmatpush.bf16.msra.mxu0 %v5676
      %6265 = vmatmul.bf16.gmra.mxu0 %v6010
      %v6266 = vpop.f32.mrf.mxu0
      %v6267 = vadd.f32 %v5151, %v6266
      %v6268 = vpop.f32.mrf.mxu0
      %6269 = vdwg.mxu0
      %6270 = vmatpush.bf16.msra.mxu0 0
      %6271 = vmatpush.bf16.msra.mxu0 0
      %6272 = vmatpush.bf16.msra.mxu0 0
      %6273 = vmatpush.bf16.msra.mxu0 %v6047
      %6274 = vmatpush.bf16.msra.mxu0 %v5791
      %6275 = vmatpush.bf16.msra.mxu0 %v5753
      %6276 = vmatpush.bf16.msra.mxu0 %v5715
      %6277 = vmatpush.bf16.msra.mxu0 %v5677
      %6278 = vmatmul.bf16.gmra.mxu0 %v6010
      %v6279 = vpop.f32.mrf.mxu0
      %v6280 = vadd.f32 %v5151, %v6279
      %v6281 = vpop.f32.mrf.mxu0
      %6282 = vdwg.mxu0
      %6283 = vmatpush.bf16.msra.mxu0 0
      %6284 = vmatpush.bf16.msra.mxu0 0
      %6285 = vmatpush.bf16.msra.mxu0 0
      %6286 = vmatpush.bf16.msra.mxu0 %v6050
      %6287 = vmatpush.bf16.msra.mxu0 %v5792
      %6288 = vmatpush.bf16.msra.mxu0 %v5754
      %6289 = vmatpush.bf16.msra.mxu0 %v5716
      %6290 = vmatpush.bf16.msra.mxu0 %v5678
      %6291 = vmatmul.bf16.gmra.mxu0 %v6010
      %v6292 = vpop.f32.mrf.mxu0
      %v6293 = vadd.f32 %v5151, %v6292
      %v6294 = vpop.f32.mrf.mxu0
      %6295 = vdwg.mxu0
      %6296 = vmatpush.bf16.msra.mxu0 0
      %6297 = vmatpush.bf16.msra.mxu0 0
      %6298 = vmatpush.bf16.msra.mxu0 0
      %6299 = vmatpush.bf16.msra.mxu0 %v6053
      %6300 = vmatpush.bf16.msra.mxu0 %v5793
      %6301 = vmatpush.bf16.msra.mxu0 %v5755
      %6302 = vmatpush.bf16.msra.mxu0 %v5717
      %6303 = vmatpush.bf16.msra.mxu0 %v5679
      %6304 = vmatmul.bf16.gmra.mxu0 %v6010
      %v6305 = vpop.f32.mrf.mxu0
      %v6306 = vadd.f32 %v5151, %v6305
      %v6307 = vpop.f32.mrf.mxu0
      %6308 = vdwg.mxu0
      %6309 = vmatpush.bf16.msra.mxu0 0
      %6310 = vmatpush.bf16.msra.mxu0 0
      %6311 = vmatpush.bf16.msra.mxu0 0
      %6312 = vmatpush.bf16.msra.mxu0 %v6056
      %6313 = vmatpush.bf16.msra.mxu0 %v5794
      %6314 = vmatpush.bf16.msra.mxu0 %v5756
      %6315 = vmatpush.bf16.msra.mxu0 %v5718
      %6316 = vmatpush.bf16.msra.mxu0 %v5680
      %6317 = vmatmul.bf16.gmra.mxu0 %v6010
      %v6318 = vpop.f32.mrf.mxu0
      %v6319 = vadd.f32 %v5151, %v6318
      %v6320 = vpop.f32.mrf.mxu0
      %6321 = vdwg.mxu0
      %6322 = vmatpush.bf16.msra.mxu0 0
      %6323 = vmatpush.bf16.msra.mxu0 0
      %6324 = vmatpush.bf16.msra.mxu0 0
      %6325 = vmatpush.bf16.msra.mxu0 %v6059
      %6326 = vmatpush.bf16.msra.mxu0 %v5795
      %6327 = vmatpush.bf16.msra.mxu0 %v5757
      %6328 = vmatpush.bf16.msra.mxu0 %v5719
      %6329 = vmatpush.bf16.msra.mxu0 %v5681
      %6330 = vmatmul.bf16.gmra.mxu0 %v6010
      %v6331 = vpop.f32.mrf.mxu0
      %v6332 = vadd.f32 %v5151, %v6331
      %v6333 = vpop.f32.mrf.mxu0
      %6334 = vdwg.mxu0
      %6335 = vmatpush.bf16.msra.mxu0 0
      %6336 = vmatpush.bf16.msra.mxu0 0
      %6337 = vmatpush.bf16.msra.mxu0 0
      %6338 = vmatpush.bf16.msra.mxu0 %v6062
      %6339 = vmatpush.bf16.msra.mxu0 %v5796
      %6340 = vmatpush.bf16.msra.mxu0 %v5758
      %6341 = vmatpush.bf16.msra.mxu0 %v5720
      %6342 = vmatpush.bf16.msra.mxu0 %v5682
      %6343 = vmatmul.bf16.gmra.mxu0 %v6010
      %v6344 = vpop.f32.mrf.mxu0
      %v6345 = vadd.f32 %v5151, %v6344
      %v6346 = vpop.f32.mrf.mxu0
      %6347 = vdwg.mxu0
      %6348 = vmatpush.bf16.msra.mxu0 0
      %6349 = vmatpush.bf16.msra.mxu0 0
      %6350 = vmatpush.bf16.msra.mxu0 0
      %6351 = vmatpush.bf16.msra.mxu0 %v6065
      %6352 = vmatpush.bf16.msra.mxu0 %v5797
      %6353 = vmatpush.bf16.msra.mxu0 %v5759
      %6354 = vmatpush.bf16.msra.mxu0 %v5721
      %6355 = vmatpush.bf16.msra.mxu0 %v5683
      %6356 = vmatmul.bf16.gmra.mxu0 %v6010
      %v6357 = vpop.f32.mrf.mxu0
      %v6358 = vadd.f32 %v5151, %v6357
      %v6359 = vpop.f32.mrf.mxu0
      %6360 = vdwg.mxu0
      %6361 = vmatpush.bf16.msra.mxu0 0
      %6362 = vmatpush.bf16.msra.mxu0 0
      %6363 = vmatpush.bf16.msra.mxu0 0
      %6364 = vmatpush.bf16.msra.mxu0 %v6068
      %6365 = vmatpush.bf16.msra.mxu0 %v5798
      %6366 = vmatpush.bf16.msra.mxu0 %v5760
      %6367 = vmatpush.bf16.msra.mxu0 %v5722
      %6368 = vmatpush.bf16.msra.mxu0 %v5684
      %6369 = vmatmul.bf16.gmra.mxu0 %v6010
      %v6370 = vpop.f32.mrf.mxu0
      %v6371 = vadd.f32 %v5151, %v6370
      %v6372 = vpop.f32.mrf.mxu0
      %6373 = vdwg.mxu0
      %6374 = vmatpush.bf16.msra.mxu0 0
      %6375 = vmatpush.bf16.msra.mxu0 0
      %6376 = vmatpush.bf16.msra.mxu0 0
      %6377 = vmatpush.bf16.msra.mxu0 %v6071
      %6378 = vmatpush.bf16.msra.mxu0 %v5799
      %6379 = vmatpush.bf16.msra.mxu0 %v5761
      %6380 = vmatpush.bf16.msra.mxu0 %v5723
      %6381 = vmatpush.bf16.msra.mxu0 %v5685
      %6382 = vmatmul.bf16.gmra.mxu0 %v6010
      %v6383 = vpop.f32.mrf.mxu0
      %v6384 = vadd.f32 %v5151, %v6383
      %v6385 = vpop.f32.mrf.mxu0
      %6386 = vdwg.mxu0
      %6387 = vmatpush.bf16.msra.mxu0 0
      %6388 = vmatpush.bf16.msra.mxu0 0
      %6389 = vmatpush.bf16.msra.mxu0 0
      %6390 = vmatpush.bf16.msra.mxu0 %v6074
      %6391 = vmatpush.bf16.msra.mxu0 %v5800
      %6392 = vmatpush.bf16.msra.mxu0 %v5762
      %6393 = vmatpush.bf16.msra.mxu0 %v5724
      %6394 = vmatpush.bf16.msra.mxu0 %v5686
      %6395 = vmatmul.bf16.gmra.mxu0 %v6010
      %v6396 = vpop.f32.mrf.mxu0
      %v6397 = vadd.f32 %v5151, %v6396
      %v6398 = vpop.f32.mrf.mxu0
      %6399 = vdwg.mxu0
      %6400 = vmatpush.bf16.msra.mxu0 0
      %6401 = vmatpush.bf16.msra.mxu0 0
      %6402 = vmatpush.bf16.msra.mxu0 0
      %6403 = vmatpush.bf16.msra.mxu0 %v6077
      %6404 = vmatpush.bf16.msra.mxu0 %v5801
      %6405 = vmatpush.bf16.msra.mxu0 %v5763
      %6406 = vmatpush.bf16.msra.mxu0 %v5725
      %6407 = vmatpush.bf16.msra.mxu0 %v5687
      %6408 = vmatmul.bf16.gmra.mxu0 %v6010
      %v6409 = vpop.f32.mrf.mxu0
      %v6410 = vadd.f32 %v5151, %v6409
      %v6411 = vpop.f32.mrf.mxu0
      %6412 = vdwg.mxu0
      %6413 = vmatpush.bf16.msra.mxu0 0
      %6414 = vmatpush.bf16.msra.mxu0 0
      %6415 = vmatpush.bf16.msra.mxu0 0
      %6416 = vmatpush.bf16.msra.mxu0 %v6080
      %6417 = vmatpush.bf16.msra.mxu0 %v5802
      %6418 = vmatpush.bf16.msra.mxu0 %v5764
      %6419 = vmatpush.bf16.msra.mxu0 %v5726
      %6420 = vmatpush.bf16.msra.mxu0 %v5688
      %6421 = vmatmul.bf16.gmra.mxu0 %v6010
      %v6422 = vpop.f32.mrf.mxu0
      %v6423 = vadd.f32 %v5151, %v6422
      %v6424 = vpop.f32.mrf.mxu0
      %6425 = vdwg.mxu0
      %6426 = vmatpush.bf16.msra.mxu0 0
      %6427 = vmatpush.bf16.msra.mxu0 0
      %6428 = vmatpush.bf16.msra.mxu0 0
      %6429 = vmatpush.bf16.msra.mxu0 %v6083
      %6430 = vmatpush.bf16.msra.mxu0 %v5803
      %6431 = vmatpush.bf16.msra.mxu0 %v5765
      %6432 = vmatpush.bf16.msra.mxu0 %v5727
      %6433 = vmatpush.bf16.msra.mxu0 %v5689
      %6434 = vmatmul.bf16.gmra.mxu0 %v6010
      %v6435 = vpop.f32.mrf.mxu0
      %v6436 = vadd.f32 %v5151, %v6435
      %v6437 = vpop.f32.mrf.mxu0
      %6438 = vdwg.mxu0
      %6439 = vmatpush.bf16.msra.mxu0 0
      %6440 = vmatpush.bf16.msra.mxu0 0
      %6441 = vmatpush.bf16.msra.mxu0 0
      %6442 = vmatpush.bf16.msra.mxu0 %v6086
      %6443 = vmatpush.bf16.msra.mxu0 %v5804
      %6444 = vmatpush.bf16.msra.mxu0 %v5766
      %6445 = vmatpush.bf16.msra.mxu0 %v5728
      %6446 = vmatpush.bf16.msra.mxu0 %v5690
      %6447 = vmatmul.bf16.gmra.mxu0 %v6010
      %v6448 = vpop.f32.mrf.mxu0
      %v6449 = vadd.f32 %v5151, %v6448
      %v6450 = vpop.f32.mrf.mxu0
      %6451 = vdwg.mxu0
      %6452 = vmatpush.bf16.msra.mxu0 0
      %6453 = vmatpush.bf16.msra.mxu0 0
      %6454 = vmatpush.bf16.msra.mxu0 0
      %6455 = vmatpush.bf16.msra.mxu0 %v6089
      %6456 = vmatpush.bf16.msra.mxu0 %v5805
      %6457 = vmatpush.bf16.msra.mxu0 %v5767
      %6458 = vmatpush.bf16.msra.mxu0 %v5729
      %6459 = vmatpush.bf16.msra.mxu0 %v5691
      %6460 = vmatmul.bf16.gmra.mxu0 %v6010
      %v6461 = vpop.f32.mrf.mxu0
      %v6462 = vadd.f32 %v5151, %v6461
      %v6463 = vpop.f32.mrf.mxu0
      %6464 = vdwg.mxu0
      %6465 = vmatpush.bf16.msra.mxu0 0
      %6466 = vmatpush.bf16.msra.mxu0 0
      %6467 = vmatpush.bf16.msra.mxu0 0
      %6468 = vmatpush.bf16.msra.mxu0 %v6092
      %6469 = vmatpush.bf16.msra.mxu0 %v5806
      %6470 = vmatpush.bf16.msra.mxu0 %v5768
      %6471 = vmatpush.bf16.msra.mxu0 %v5730
      %6472 = vmatpush.bf16.msra.mxu0 %v5692
      %6473 = vmatmul.bf16.gmra.mxu0 %v6010
      %v6474 = vpop.f32.mrf.mxu0
      %v6475 = vadd.f32 %v5151, %v6474
      %v6476 = vpop.f32.mrf.mxu0
      %6477 = vdwg.mxu0
      %6478 = vmatpush.bf16.msra.mxu0 0
      %6479 = vmatpush.bf16.msra.mxu0 0
      %6480 = vmatpush.bf16.msra.mxu0 0
      %6481 = vmatpush.bf16.msra.mxu0 %v6095
      %6482 = vmatpush.bf16.msra.mxu0 %v5807
      %6483 = vmatpush.bf16.msra.mxu0 %v5769
      %6484 = vmatpush.bf16.msra.mxu0 %v5731
      %6485 = vmatpush.bf16.msra.mxu0 %v5693
      %6486 = vmatmul.bf16.gmra.mxu0 %v6010
      %v6487 = vpop.f32.mrf.mxu0
      %v6488 = vadd.f32 %v5151, %v6487
      %v6489 = vpop.f32.mrf.mxu0
      %6490 = vdwg.mxu0
      %6491 = vmatpush.bf16.msra.mxu0 0
      %6492 = vmatpush.bf16.msra.mxu0 0
      %6493 = vmatpush.bf16.msra.mxu0 0
      %6494 = vmatpush.bf16.msra.mxu0 %v6098
      %6495 = vmatpush.bf16.msra.mxu0 %v5808
      %6496 = vmatpush.bf16.msra.mxu0 %v5770
      %6497 = vmatpush.bf16.msra.mxu0 %v5732
      %6498 = vmatpush.bf16.msra.mxu0 %v5694
      %6499 = vmatmul.bf16.gmra.mxu0 %v6010
      %v6500 = vpop.f32.mrf.mxu0
      %v6501 = vadd.f32 %v5151, %v6500
      %v6502 = vpop.f32.mrf.mxu0
      %6503 = vdwg.mxu0
      %6504 = vmatpush.bf16.msra.mxu0 0
      %6505 = vmatpush.bf16.msra.mxu0 0
      %6506 = vmatpush.bf16.msra.mxu0 0
      %6507 = vmatpush.bf16.msra.mxu0 %v6101
      %6508 = vmatpush.bf16.msra.mxu0 %v5809
      %6509 = vmatpush.bf16.msra.mxu0 %v5771
      %6510 = vmatpush.bf16.msra.mxu0 %v5733
      %6511 = vmatpush.bf16.msra.mxu0 %v5695
      %6512 = vmatmul.bf16.gmra.mxu0 %v6010
      %v6513 = vpop.f32.mrf.mxu0
      %v6514 = vadd.f32 %v5151, %v6513
      %v6515 = vpop.f32.mrf.mxu0
      %6516 = vdwg.mxu0
      %6517 = vmatpush.bf16.msra.mxu0 0
      %6518 = vmatpush.bf16.msra.mxu0 0
      %6519 = vmatpush.bf16.msra.mxu0 0
      %6520 = vmatpush.bf16.msra.mxu0 %v6104
      %6521 = vmatpush.bf16.msra.mxu0 %v5810
      %6522 = vmatpush.bf16.msra.mxu0 %v5772
      %6523 = vmatpush.bf16.msra.mxu0 %v5734
      %6524 = vmatpush.bf16.msra.mxu0 %v5696
      %6525 = vmatmul.bf16.gmra.mxu0 %v6010
      %v6526 = vpop.f32.mrf.mxu0
      %v6527 = vadd.f32 %v5151, %v6526
      %v6528 = vpop.f32.mrf.mxu0
      %6529 = vdwg.mxu0
      %6530 = vmatpush.bf16.msra.mxu0 0
      %6531 = vmatpush.bf16.msra.mxu0 0
      %6532 = vmatpush.bf16.msra.mxu0 0
      %6533 = vmatpush.bf16.msra.mxu0 %v6107
      %6534 = vmatpush.bf16.msra.mxu0 %v5811
      %6535 = vmatpush.bf16.msra.mxu0 %v5773
      %6536 = vmatpush.bf16.msra.mxu0 %v5735
      %6537 = vmatpush.bf16.msra.mxu0 %v5697
      %6538 = vmatmul.bf16.gmra.mxu0 %v6010
      %v6539 = vpop.f32.mrf.mxu0
      %v6540 = vadd.f32 %v5151, %v6539
      %v6541 = vpop.f32.mrf.mxu0
      %6542 = vdwg.mxu0
      %6543 = vmatpush.bf16.msra.mxu0 0
      %6544 = vmatpush.bf16.msra.mxu0 0
      %6545 = vmatpush.bf16.msra.mxu0 0
      %6546 = vmatpush.bf16.msra.mxu0 %v6110
      %6547 = vmatpush.bf16.msra.mxu0 %v5812
      %6548 = vmatpush.bf16.msra.mxu0 %v5774
      %6549 = vmatpush.bf16.msra.mxu0 %v5736
      %6550 = vmatpush.bf16.msra.mxu0 %v5698
      %6551 = vmatmul.bf16.gmra.mxu0 %v6010
      %v6552 = vpop.f32.mrf.mxu0
      %v6553 = vadd.f32 %v5151, %v6552
      %v6554 = vpop.f32.mrf.mxu0
      %6555 = vdwg.mxu0
      %6556 = vmatpush.bf16.msra.mxu0 0
      %6557 = vmatpush.bf16.msra.mxu0 0
      %6558 = vmatpush.bf16.msra.mxu0 0
      %6559 = vmatpush.bf16.msra.mxu0 %v6113
      %6560 = vmatpush.bf16.msra.mxu0 %v5813
      %6561 = vmatpush.bf16.msra.mxu0 %v5775
      %6562 = vmatpush.bf16.msra.mxu0 %v5737
      %6563 = vmatpush.bf16.msra.mxu0 %v5699
      %6564 = vmatmul.bf16.gmra.mxu0 %v6010
      %v6565 = vpop.f32.mrf.mxu0
      %v6566 = vadd.f32 %v5151, %v6565
      %v6567 = vpop.f32.mrf.mxu0
      %6568 = vdwg.mxu0
      %6569 = vmatpush.bf16.msra.mxu0 0
      %6570 = vmatpush.bf16.msra.mxu0 0
      %6571 = vmatpush.bf16.msra.mxu0 0
      %6572 = vmatpush.bf16.msra.mxu0 %v6116
      %6573 = vmatpush.bf16.msra.mxu0 %v5814
      %6574 = vmatpush.bf16.msra.mxu0 %v5776
      %6575 = vmatpush.bf16.msra.mxu0 %v5738
      %6576 = vmatpush.bf16.msra.mxu0 %v5700
      %6577 = vmatmul.bf16.gmra.mxu0 %v6010
      %v6578 = vpop.f32.mrf.mxu0
      %v6579 = vadd.f32 %v5151, %v6578
      %v6580 = vpop.f32.mrf.mxu0
      %6581 = vdwg.mxu0
      %6582 = vmatpush.bf16.msra.mxu0 0
      %6583 = vmatpush.bf16.msra.mxu0 0
      %6584 = vmatpush.bf16.msra.mxu0 0
      %6585 = vmatpush.bf16.msra.mxu0 %v6119
      %6586 = vmatpush.bf16.msra.mxu0 %v5815
      %6587 = vmatpush.bf16.msra.mxu0 %v5777
      %6588 = vmatpush.bf16.msra.mxu0 %v5739
      %6589 = vmatpush.bf16.msra.mxu0 %v5701
      %6590 = vmatmul.bf16.gmra.mxu0 %v6010
      %v6591 = vpop.f32.mrf.mxu0
      %v6592 = vadd.f32 %v5151, %v6591
      %v6593 = vpop.f32.mrf.mxu0
      %6594 = vdwg.mxu0
      %6595 = vmatpush.bf16.msra.mxu0 0
      %6596 = vmatpush.bf16.msra.mxu0 0
      %6597 = vmatpush.bf16.msra.mxu0 0
      %6598 = vmatpush.bf16.msra.mxu0 %v6122
      %6599 = vmatpush.bf16.msra.mxu0 %v5816
      %6600 = vmatpush.bf16.msra.mxu0 %v5778
      %6601 = vmatpush.bf16.msra.mxu0 %v5740
      %6602 = vmatpush.bf16.msra.mxu0 %v5702
      %6603 = vmatmul.bf16.gmra.mxu0 %v6010
      %v6604 = vpop.f32.mrf.mxu0
      %v6605 = vadd.f32 %v5151, %v6604
      %v6606 = vpop.f32.mrf.mxu0
      %6607 = vdwg.mxu0
      %6608 = vmatpush.bf16.msra.mxu0 0
      %6609 = vmatpush.bf16.msra.mxu0 0
      %6610 = vmatpush.bf16.msra.mxu0 0
      %6611 = vmatpush.bf16.msra.mxu0 %v6125
      %6612 = vmatpush.bf16.msra.mxu0 %v5817
      %6613 = vmatpush.bf16.msra.mxu0 %v5779
      %6614 = vmatpush.bf16.msra.mxu0 %v5741
      %6615 = vmatpush.bf16.msra.mxu0 %v5703
      %6616 = vmatmul.bf16.gmra.mxu0 %v6010
      %v6617 = vpop.f32.mrf.mxu0
      %v6618 = vadd.f32 %v5151, %v6617
      %v6619 = vpop.f32.mrf.mxu0
      %6620 = vdwg.mxu0
      %v6621 = vmax.f32 %v6137, 0.0
      %v6622 = vmax.f32 %v6150, 0.0
      %v6623 = vmax.f32 %v6163, 0.0
      %v6624 = vmax.f32 %v6176, 0.0
      %v6625 = vmax.f32 %v6189, 0.0
      %v6626 = vmax.f32 %v6202, 0.0
      %v6627 = vmax.f32 %v6215, 0.0
      %v6628 = vmax.f32 %v6228, 0.0
      %v6629 = vmax.f32 %v6241, 0.0
      %v6630 = vmax.f32 %v6254, 0.0
      %v6631 = vmax.f32 %v6267, 0.0
      %v6632 = vmax.f32 %v6280, 0.0
      %v6633 = vmax.f32 %v6293, 0.0
      %v6634 = vmax.f32 %v6306, 0.0
      %v6635 = vmax.f32 %v6319, 0.0
      %v6636 = vmax.f32 %v6332, 0.0
      %v6637 = vmax.f32 %v6345, 0.0
      %v6638 = vmax.f32 %v6358, 0.0
      %v6639 = vmax.f32 %v6371, 0.0
      %v6640 = vmax.f32 %v6384, 0.0
      %v6641 = vmax.f32 %v6397, 0.0
      %v6642 = vmax.f32 %v6410, 0.0
      %v6643 = vmax.f32 %v6423, 0.0
      %v6644 = vmax.f32 %v6436, 0.0
      %v6645 = vmax.f32 %v6449, 0.0
      %v6646 = vmax.f32 %v6462, 0.0
      %v6647 = vmax.f32 %v6475, 0.0
      %v6648 = vmax.f32 %v6488, 0.0
      %v6649 = vmax.f32 %v6501, 0.0
      %v6650 = vmax.f32 %v6514, 0.0
      %v6651 = vmax.f32 %v6527, 0.0
      %v6652 = vmax.f32 %v6540, 0.0
      %v6653 = vmax.f32 %v6553, 0.0
      %v6654 = vmax.f32 %v6566, 0.0
      %v6655 = vmax.f32 %v6579, 0.0
      %v6656 = vmax.f32 %v6592, 0.0
      %v6657 = vmax.f32 %v6605, 0.0
      %v6658 = vmax.f32 %v6618, 0.0
      %v6659 = vsel %vm3415, %v6621, 0.0
      %v6660 = vsel %vm3416, %v6622, 0.0
      %v6661 = vsel %vm3417, %v6623, 0.0
      %v6662 = vsel %vm3418, %v6624, 0.0
      %v6663 = vsel %vm3419, %v6625, 0.0
      %v6664 = vsel %vm3420, %v6626, 0.0
      %v6665 = vsel %vm3421, %v6627, 0.0
      %v6666 = vsel %vm3422, %v6628, 0.0
      %v6667 = vsel %vm3423, %v6629, 0.0
      %v6668 = vsel %vm3424, %v6630, 0.0
      %v6669 = vsel %vm3425, %v6631, 0.0
      %v6670 = vsel %vm3426, %v6632, 0.0
      %v6671 = vsel %vm3427, %v6633, 0.0
      %v6672 = vsel %vm3428, %v6634, 0.0
      %v6673 = vsel %vm3429, %v6635, 0.0
      %v6674 = vsel %vm3430, %v6636, 0.0
      %v6675 = vsel %vm3431, %v6637, 0.0
      %v6676 = vsel %vm3432, %v6638, 0.0
      %v6677 = vsel %vm3433, %v6639, 0.0
      %v6678 = vsel %vm3434, %v6640, 0.0
      %v6679 = vsel %vm3435, %v6641, 0.0
      %v6680 = vsel %vm3436, %v6642, 0.0
      %v6681 = vsel %vm3437, %v6643, 0.0
      %v6682 = vsel %vm3438, %v6644, 0.0
      %v6683 = vsel %vm3439, %v6645, 0.0
      %v6684 = vsel %vm3440, %v6646, 0.0
      %v6685 = vsel %vm3441, %v6647, 0.0
      %v6686 = vsel %vm3442, %v6648, 0.0
      %v6687 = vsel %vm3443, %v6649, 0.0
      %v6688 = vsel %vm3444, %v6650, 0.0
      %v6689 = vsel %vm3445, %v6651, 0.0
      %v6690 = vsel %vm3446, %v6652, 0.0
      %v6691 = vsel %vm3447, %v6653, 0.0
      %v6692 = vsel %vm3448, %v6654, 0.0
      %v6693 = vsel %vm3449, %v6655, 0.0
      %v6694 = vsel %vm3450, %v6656, 0.0
      %v6695 = vsel %vm3451, %v6657, 0.0
      %v6696 = vsel %vm3452, %v6658, 0.0
      %v6697 = vpack.c.bf16 %v6660, %v6659
      %v6698 = vpack.c.bf16 %v6662, %v6661
      %v6699 = vpack.c.bf16 %v6664, %v6663
      %v6700 = vpack.c.bf16 %v6666, %v6665
      %v6701 = vpack.c.bf16 %v6668, %v6667
      %v6702 = vpack.c.bf16 %v6670, %v6669
      %v6703 = vpack.c.bf16 %v6672, %v6671
      %v6704 = vpack.c.bf16 %v6674, %v6673
      %v6705 = vpack.c.bf16 %v6676, %v6675
      %v6706 = vpack.c.bf16 %v6678, %v6677
      %v6707 = vpack.c.bf16 %v6680, %v6679
      %v6708 = vpack.c.bf16 %v6682, %v6681
      %v6709 = vpack.c.bf16 %v6684, %v6683
      %v6710 = vpack.c.bf16 %v6686, %v6685
      %v6711 = vpack.c.bf16 %v6688, %v6687
      %v6712 = vpack.c.bf16 %v6690, %v6689
      %v6713 = vpack.c.bf16 %v6692, %v6691
      %v6714 = vpack.c.bf16 %v6694, %v6693
      %v6715 = vpack.c.bf16 %v6696, %v6695
      %6716 = vst [vmem:[#allocation2 + $0x4] sm:$0xff] %v6697
      %6717 = vst [vmem:[#allocation2 + $0xc] sm:$0xff] %v6698
      %6718 = vst [vmem:[#allocation2 + $0x14] sm:$0xff] %v6699
      %6719 = vst [vmem:[#allocation2 + $0x1c] sm:$0xff] %v6700
      %6720 = vst [vmem:[#allocation2 + $0x24] sm:$0xff] %v6701
      %6721 = vst [vmem:[#allocation2 + $0x2c] sm:$0xff] %v6702
      %6722 = vst [vmem:[#allocation2 + $0x34] sm:$0xff] %v6703
      %6723 = vst [vmem:[#allocation2 + $0x3c] sm:$0xff] %v6704
      %6724 = vst [vmem:[#allocation2 + $0x44] sm:$0xff] %v6705
      %6725 = vst [vmem:[#allocation2 + $0x4c] sm:$0xff] %v6706
      %6726 = vst [vmem:[#allocation2 + $0x54] sm:$0xff] %v6707
      %6727 = vst [vmem:[#allocation2 + $0x5c] sm:$0xff] %v6708
      %6728 = vst [vmem:[#allocation2 + $0x64] sm:$0xff] %v6709
      %6729 = vst [vmem:[#allocation2 + $0x6c] sm:$0xff] %v6710
      %6730 = vst [vmem:[#allocation2 + $0x74] sm:$0xff] %v6711
      %6731 = vst [vmem:[#allocation2 + $0x7c] sm:$0xff] %v6712
      %6732 = vst [vmem:[#allocation2 + $0x84] sm:$0xff] %v6713
      %6733 = vst [vmem:[#allocation2 + $0x8c] sm:$0xff] %v6714
      %6734 = vst [vmem:[#allocation2 + $0x94] sm:$0xff] %v6715
      %v6735 = vld [vmem:[#allocation2 + $0x4] sm:$0x11]
      %v6736 = vld [vmem:[#allocation2 + $0xc] sm:$0x1]
      %vm6737 = vcmask 1040384
      %vm6738 = vsmask.f32 256
      %vm6739 = vmand %vm6737, %vm6738
      %vm6740 = vcmask 1044484
      %vm6741 = vsmask.f32 4352
      %vm6742 = vmand %vm6740, %vm6741
      %vm6743 = vmor %vm6742, %vm6739
      %v6744 = vld [vmem:[#allocation4] sm:$0x11]
      %v6745 = vsel %vm6743, %v6735, %v6744
      %6746 = vst [vmem:[#allocation4] sm:$0x11] %v6745
      %v6747 = vld [vmem:[#allocation4 + $0x8] sm:$0x1]
      %v6748 = vsel %vm6739, %v6736, %v6747
      %6749 = vst [vmem:[#allocation4 + $0x8] sm:$0x1] %v6748
      %v6750 = vld [vmem:[#allocation2 + $0x18] sm:$0x11]
      %v6751 = vld [vmem:[#allocation2 + $0x20] sm:$0x1]
      %v6753 = vshll.u32 %v6750, 16
      %v6756 = vshll.u32 %v6751, 16
      %vm6760 = vsmask.f32 7938
      %vm6761 = vmand %vm6737, %vm6760
      %vm6762 = vsmask.f32 7954
      %vm6763 = vmand %vm6740, %vm6762
      %vm6764 = vmor %vm6763, %vm6761
      %v6765 = vld [vmem:[#allocation4] sm:$0x11]
      %v6766 = vsel %vm6764, %v6753, %v6765
      %6767 = vst [vmem:[#allocation4] sm:$0x11] %v6766
      %v6768 = vld [vmem:[#allocation4 + $0x8] sm:$0x1]
      %v6769 = vsel %vm6761, %v6756, %v6768
      %6770 = vst [vmem:[#allocation4 + $0x8] sm:$0x1] %v6769
      %v6771 = vld [vmem:[#allocation2 + $0x2c] sm:$0x11]
      %v6772 = vld [vmem:[#allocation2 + $0x34] sm:$0x1]
      %v6775 = vrot.slane %v6771, 7
      %v6776 = vrot.slane %v6772, 7
      %vm6779 = vcmask 1041409
      %vm6780 = vsmask.f32 1280
      %vm6781 = vmand %vm6779, %vm6780
      %vm6782 = vcmask 1045509
      %vm6783 = vsmask.f32 5376
      %vm6784 = vmand %vm6782, %vm6783
      %vm6785 = vmor %vm6784, %vm6781
      %v6786 = vld [vmem:[#allocation4] sm:$0x22]
      %v6787 = vsel %vm6785, %v6775, %v6786
      %6788 = vst [vmem:[#allocation4] sm:$0x22] %v6787
      %v6789 = vld [vmem:[#allocation4 + $0x8] sm:$0x2]
      %v6790 = vsel %vm6781, %v6776, %v6789
      %6791 = vst [vmem:[#allocation4 + $0x8] sm:$0x2] %v6790
      %v6792 = vld [vmem:[#allocation2 + $0x40] sm:$0x11]
      %v6793 = vld [vmem:[#allocation2 + $0x48] sm:$0x1]
      %v6795 = vshll.u32 %v6792, 16
      %v6797 = vrot.slane %v6795, 7
      %v6799 = vshll.u32 %v6793, 16
      %v6801 = vrot.slane %v6799, 7
      %vm6804 = vsmask.f32 7942
      %vm6805 = vmand %vm6779, %vm6804
      %vm6806 = vsmask.f32 7958
      %vm6807 = vmand %vm6782, %vm6806
      %vm6808 = vmor %vm6807, %vm6805
      %v6809 = vld [vmem:[#allocation4] sm:$0x22]
      %v6810 = vsel %vm6808, %v6797, %v6809
      %6811 = vst [vmem:[#allocation4] sm:$0x22] %v6810
      %v6812 = vld [vmem:[#allocation4 + $0x8] sm:$0x2]
      %v6813 = vsel %vm6805, %v6801, %v6812
      %6814 = vst [vmem:[#allocation4 + $0x8] sm:$0x2] %v6813
      %v6815 = vld [vmem:[#allocation2 + $0x54] sm:$0x11]
      %v6816 = vld [vmem:[#allocation2 + $0x5c] sm:$0x1]
      %v6819 = vrot.slane %v6815, 6
      %v6820 = vrot.slane %v6816, 6
      %vm6823 = vcmask 1042434
      %vm6824 = vsmask.f32 2304
      %vm6825 = vmand %vm6823, %vm6824
      %vm6826 = vcmask 1046534
      %vm6827 = vsmask.f32 6400
      %vm6828 = vmand %vm6826, %vm6827
      %vm6829 = vmor %vm6828, %vm6825
      %v6830 = vld [vmem:[#allocation4] sm:$0x44]
      %v6831 = vsel %vm6829, %v6819, %v6830
      %6832 = vst [vmem:[#allocation4] sm:$0x44] %v6831
      %v6833 = vld [vmem:[#allocation4 + $0x8] sm:$0x4]
      %v6834 = vsel %vm6825, %v6820, %v6833
      %6835 = vst [vmem:[#allocation4 + $0x8] sm:$0x4] %v6834
      %v6836 = vld [vmem:[#allocation2 + $0x68] sm:$0x11]
      %v6837 = vld [vmem:[#allocation2 + $0x70] sm:$0x1]
      %v6839 = vshll.u32 %v6836, 16
      %v6841 = vrot.slane %v6839, 6
      %v6843 = vshll.u32 %v6837, 16
      %v6845 = vrot.slane %v6843, 6
      %vm6848 = vsmask.f32 7946
      %vm6849 = vmand %vm6823, %vm6848
      %vm6850 = vsmask.f32 7962
      %vm6851 = vmand %vm6826, %vm6850
      %vm6852 = vmor %vm6851, %vm6849
      %v6853 = vld [vmem:[#allocation4] sm:$0x44]
      %v6854 = vsel %vm6852, %v6841, %v6853
      %6855 = vst [vmem:[#allocation4] sm:$0x44] %v6854
      %v6856 = vld [vmem:[#allocation4 + $0x8] sm:$0x4]
      %v6857 = vsel %vm6849, %v6845, %v6856
      %6858 = vst [vmem:[#allocation4 + $0x8] sm:$0x4] %v6857
      %v6859 = vld [vmem:[#allocation2 + $0x7c] sm:$0x11]
      %v6860 = vld [vmem:[#allocation2 + $0x84] sm:$0x1]
      %v6863 = vrot.slane %v6859, 5
      %v6864 = vrot.slane %v6860, 5
      %vm6867 = vcmask 1043459
      %vm6868 = vsmask.f32 3328
      %vm6869 = vmand %vm6867, %vm6868
      %vm6870 = vcmask 1047559
      %vm6871 = vsmask.f32 7424
      %vm6872 = vmand %vm6870, %vm6871
      %vm6873 = vmor %vm6872, %vm6869
      %v6874 = vld [vmem:[#allocation4] sm:$0x88]
      %v6875 = vsel %vm6873, %v6863, %v6874
      %6876 = vst [vmem:[#allocation4] sm:$0x88] %v6875
      %v6877 = vld [vmem:[#allocation4 + $0x8] sm:$0x8]
      %v6878 = vsel %vm6869, %v6864, %v6877
      %6879 = vst [vmem:[#allocation4 + $0x8] sm:$0x8] %v6878
      %v6880 = vld [vmem:[#allocation2 + $0x90] sm:$0x11]
      %v6881 = vld [vmem:[#allocation2 + $0x98] sm:$0x1]
      %v6883 = vshll.u32 %v6880, 16
      %v6885 = vrot.slane %v6883, 5
      %v6887 = vshll.u32 %v6881, 16
      %v6889 = vrot.slane %v6887, 5
      %vm6892 = vsmask.f32 7950
      %vm6893 = vmand %vm6867, %vm6892
      %vm6894 = vsmask.f32 7966
      %vm6895 = vmand %vm6870, %vm6894
      %vm6896 = vmor %vm6895, %vm6893
      %v6897 = vld [vmem:[#allocation4] sm:$0x88]
      %v6898 = vsel %vm6896, %v6885, %v6897
      %6899 = vst [vmem:[#allocation4] sm:$0x88] %v6898
      %v6900 = vld [vmem:[#allocation4 + $0x8] sm:$0x8]
      %v6901 = vsel %vm6893, %v6889, %v6900
      %6902 = vst [vmem:[#allocation4 + $0x8] sm:$0x8] %v6901
      %v6903 = vld [vmem:[#allocation2 + $0x4] sm:$0x11]
      %v6904 = vld [vmem:[#allocation2 + $0xc] sm:$0x1]
      %v6906 = vshrl.u32 %v6903, 16
      %v6908 = vrot.slane %v6906, 4
      %v6909 = vrot.slane %v6908, 4
      %v6911 = vshrl.u32 %v6904, 16
      %v6913 = vrot.slane %v6911, 4
      %v6914 = vrot.slane %v6913, 4
      %v6917 = vld [vmem:[#allocation4 + $0xc] sm:$0x11]
      %v6918 = vsel %vm6743, %v6909, %v6917
      %6919 = vst [vmem:[#allocation4 + $0xc] sm:$0x11] %v6918
      %v6920 = vld [vmem:[#allocation4 + $0x14] sm:$0x1]
      %v6921 = vsel %vm6739, %v6914, %v6920
      %6922 = vst [vmem:[#allocation4 + $0x14] sm:$0x1] %v6921
      %v6923 = vld [vmem:[#allocation2 + $0x18] sm:$0x11]
      %v6924 = vld [vmem:[#allocation2 + $0x20] sm:$0x1]
      %v6925 = vld [vmem:[#allocation4 + $0xc] sm:$0x11]
      %v6926 = vsel %vm6764, %v6923, %v6925
      %6927 = vst [vmem:[#allocation4 + $0xc] sm:$0x11] %v6926
      %v6928 = vld [vmem:[#allocation4 + $0x14] sm:$0x1]
      %v6929 = vsel %vm6761, %v6924, %v6928
      %6930 = vst [vmem:[#allocation4 + $0x14] sm:$0x1] %v6929
      %v6931 = vld [vmem:[#allocation2 + $0x2c] sm:$0x11]
      %v6932 = vld [vmem:[#allocation2 + $0x34] sm:$0x1]
      %v6934 = vshrl.u32 %v6931, 16
      %v6936 = vrot.slane %v6934, 7
      %v6938 = vshrl.u32 %v6932, 16
      %v6940 = vrot.slane %v6938, 7
      %v6943 = vld [vmem:[#allocation4 + $0xc] sm:$0x22]
      %v6944 = vsel %vm6785, %v6936, %v6943
      %6945 = vst [vmem:[#allocation4 + $0xc] sm:$0x22] %v6944
      %v6946 = vld [vmem:[#allocation4 + $0x14] sm:$0x2]
      %v6947 = vsel %vm6781, %v6940, %v6946
      %6948 = vst [vmem:[#allocation4 + $0x14] sm:$0x2] %v6947
      %v6949 = vld [vmem:[#allocation2 + $0x40] sm:$0x11]
      %v6950 = vld [vmem:[#allocation2 + $0x48] sm:$0x1]
      %v6953 = vrot.slane %v6949, 7
      %v6954 = vrot.slane %v6950, 7
      %v6957 = vld [vmem:[#allocation4 + $0xc] sm:$0x22]
      %v6958 = vsel %vm6808, %v6953, %v6957
      %6959 = vst [vmem:[#allocation4 + $0xc] sm:$0x22] %v6958
      %v6960 = vld [vmem:[#allocation4 + $0x14] sm:$0x2]
      %v6961 = vsel %vm6805, %v6954, %v6960
      %6962 = vst [vmem:[#allocation4 + $0x14] sm:$0x2] %v6961
      %v6963 = vld [vmem:[#allocation2 + $0x54] sm:$0x11]
      %v6964 = vld [vmem:[#allocation2 + $0x5c] sm:$0x1]
      %v6966 = vshrl.u32 %v6963, 16
      %v6968 = vrot.slane %v6966, 6
      %v6970 = vshrl.u32 %v6964, 16
      %v6972 = vrot.slane %v6970, 6
      %v6975 = vld [vmem:[#allocation4 + $0xc] sm:$0x44]
      %v6976 = vsel %vm6829, %v6968, %v6975
      %6977 = vst [vmem:[#allocation4 + $0xc] sm:$0x44] %v6976
      %v6978 = vld [vmem:[#allocation4 + $0x14] sm:$0x4]
      %v6979 = vsel %vm6825, %v6972, %v6978
      %6980 = vst [vmem:[#allocation4 + $0x14] sm:$0x4] %v6979
      %v6981 = vld [vmem:[#allocation2 + $0x68] sm:$0x11]
      %v6982 = vld [vmem:[#allocation2 + $0x70] sm:$0x1]
      %v6985 = vrot.slane %v6981, 6
      %v6986 = vrot.slane %v6982, 6
      %v6989 = vld [vmem:[#allocation4 + $0xc] sm:$0x44]
      %v6990 = vsel %vm6852, %v6985, %v6989
      %6991 = vst [vmem:[#allocation4 + $0xc] sm:$0x44] %v6990
      %v6992 = vld [vmem:[#allocation4 + $0x14] sm:$0x4]
      %v6993 = vsel %vm6849, %v6986, %v6992
      %6994 = vst [vmem:[#allocation4 + $0x14] sm:$0x4] %v6993
      %v6995 = vld [vmem:[#allocation2 + $0x7c] sm:$0x11]
      %v6996 = vld [vmem:[#allocation2 + $0x84] sm:$0x1]
      %v6998 = vshrl.u32 %v6995, 16
      %v7000 = vrot.slane %v6998, 5
      %v7002 = vshrl.u32 %v6996, 16
      %v7004 = vrot.slane %v7002, 5
      %v7007 = vld [vmem:[#allocation4 + $0xc] sm:$0x88]
      %v7008 = vsel %vm6873, %v7000, %v7007
      %7009 = vst [vmem:[#allocation4 + $0xc] sm:$0x88] %v7008
      %v7010 = vld [vmem:[#allocation4 + $0x14] sm:$0x8]
      %v7011 = vsel %vm6869, %v7004, %v7010
      %7012 = vst [vmem:[#allocation4 + $0x14] sm:$0x8] %v7011
      %v7013 = vld [vmem:[#allocation2 + $0x90] sm:$0x11]
      %v7014 = vld [vmem:[#allocation2 + $0x98] sm:$0x1]
      %v7017 = vrot.slane %v7013, 5
      %v7018 = vrot.slane %v7014, 5
      %v7021 = vld [vmem:[#allocation4 + $0xc] sm:$0x88]
      %v7022 = vsel %vm6896, %v7017, %v7021
      %7023 = vst [vmem:[#allocation4 + $0xc] sm:$0x88] %v7022
      %v7024 = vld [vmem:[#allocation4 + $0x14] sm:$0x8]
      %v7025 = vsel %vm6893, %v7018, %v7024
      %7026 = vst [vmem:[#allocation4 + $0x14] sm:$0x8] %v7025
      %v7027 = vld [vmem:[#allocation2 + $0x4] sm:$0x22]
      %v7028 = vld [vmem:[#allocation2 + $0xc] sm:$0x2]
      %v7031 = vrot.slane %v7027, 5
      %v7032 = vrot.slane %v7031, 4
      %v7033 = vrot.slane %v7028, 5
      %v7034 = vrot.slane %v7033, 4
      %v7037 = vld [vmem:[#allocation4 + $0x18] sm:$0x11]
      %v7038 = vsel %vm6743, %v7032, %v7037
      %7039 = vst [vmem:[#allocation4 + $0x18] sm:$0x11] %v7038
      %v7040 = vld [vmem:[#allocation4 + $0x20] sm:$0x1]
      %v7041 = vsel %vm6739, %v7034, %v7040
      %7042 = vst [vmem:[#allocation4 + $0x20] sm:$0x1] %v7041
      %v7043 = vld [vmem:[#allocation2 + $0x18] sm:$0x22]
      %v7044 = vld [vmem:[#allocation2 + $0x20] sm:$0x2]
      %v7046 = vshll.u32 %v7043, 16
      %v7048 = vrot.slane %v7046, 5
      %v7049 = vrot.slane %v7048, 4
      %v7051 = vshll.u32 %v7044, 16
      %v7053 = vrot.slane %v7051, 5
      %v7054 = vrot.slane %v7053, 4
      %v7057 = vld [vmem:[#allocation4 + $0x18] sm:$0x11]
      %v7058 = vsel %vm6764, %v7049, %v7057
      %7059 = vst [vmem:[#allocation4 + $0x18] sm:$0x11] %v7058
      %v7060 = vld [vmem:[#allocation4 + $0x20] sm:$0x1]
      %v7061 = vsel %vm6761, %v7054, %v7060
      %7062 = vst [vmem:[#allocation4 + $0x20] sm:$0x1] %v7061
      %v7063 = vld [vmem:[#allocation2 + $0x2c] sm:$0x22]
      %v7064 = vld [vmem:[#allocation2 + $0x34] sm:$0x2]
      %v7065 = vld [vmem:[#allocation4 + $0x18] sm:$0x22]
      %v7066 = vsel %vm6785, %v7063, %v7065
      %7067 = vst [vmem:[#allocation4 + $0x18] sm:$0x22] %v7066
      %v7068 = vld [vmem:[#allocation4 + $0x20] sm:$0x2]
      %v7069 = vsel %vm6781, %v7064, %v7068
      %7070 = vst [vmem:[#allocation4 + $0x20] sm:$0x2] %v7069
      %v7071 = vld [vmem:[#allocation2 + $0x40] sm:$0x22]
      %v7072 = vld [vmem:[#allocation2 + $0x48] sm:$0x2]
      %v7074 = vshll.u32 %v7071, 16
      %v7077 = vshll.u32 %v7072, 16
      %v7081 = vld [vmem:[#allocation4 + $0x18] sm:$0x22]
      %v7082 = vsel %vm6808, %v7074, %v7081
      %7083 = vst [vmem:[#allocation4 + $0x18] sm:$0x22] %v7082
      %v7084 = vld [vmem:[#allocation4 + $0x20] sm:$0x2]
      %v7085 = vsel %vm6805, %v7077, %v7084
      %7086 = vst [vmem:[#allocation4 + $0x20] sm:$0x2] %v7085
      %v7087 = vld [vmem:[#allocation2 + $0x54] sm:$0x22]
      %v7088 = vld [vmem:[#allocation2 + $0x5c] sm:$0x2]
      %v7091 = vrot.slane %v7087, 7
      %v7092 = vrot.slane %v7088, 7
      %v7095 = vld [vmem:[#allocation4 + $0x18] sm:$0x44]
      %v7096 = vsel %vm6829, %v7091, %v7095
      %7097 = vst [vmem:[#allocation4 + $0x18] sm:$0x44] %v7096
      %v7098 = vld [vmem:[#allocation4 + $0x20] sm:$0x4]
      %v7099 = vsel %vm6825, %v7092, %v7098
      %7100 = vst [vmem:[#allocation4 + $0x20] sm:$0x4] %v7099
      %v7101 = vld [vmem:[#allocation2 + $0x68] sm:$0x22]
      %v7102 = vld [vmem:[#allocation2 + $0x70] sm:$0x2]
      %v7104 = vshll.u32 %v7101, 16
      %v7106 = vrot.slane %v7104, 7
      %v7108 = vshll.u32 %v7102, 16
      %v7110 = vrot.slane %v7108, 7
      %v7113 = vld [vmem:[#allocation4 + $0x18] sm:$0x44]
      %v7114 = vsel %vm6852, %v7106, %v7113
      %7115 = vst [vmem:[#allocation4 + $0x18] sm:$0x44] %v7114
      %v7116 = vld [vmem:[#allocation4 + $0x20] sm:$0x4]
      %v7117 = vsel %vm6849, %v7110, %v7116
      %7118 = vst [vmem:[#allocation4 + $0x20] sm:$0x4] %v7117
      %v7119 = vld [vmem:[#allocation2 + $0x7c] sm:$0x22]
      %v7120 = vld [vmem:[#allocation2 + $0x84] sm:$0x2]
      %v7123 = vrot.slane %v7119, 6
      %v7124 = vrot.slane %v7120, 6
      %v7127 = vld [vmem:[#allocation4 + $0x18] sm:$0x88]
      %v7128 = vsel %vm6873, %v7123, %v7127
      %7129 = vst [vmem:[#allocation4 + $0x18] sm:$0x88] %v7128
      %v7130 = vld [vmem:[#allocation4 + $0x20] sm:$0x8]
      %v7131 = vsel %vm6869, %v7124, %v7130
      %7132 = vst [vmem:[#allocation4 + $0x20] sm:$0x8] %v7131
      %v7133 = vld [vmem:[#allocation2 + $0x90] sm:$0x22]
      %v7134 = vld [vmem:[#allocation2 + $0x98] sm:$0x2]
      %v7136 = vshll.u32 %v7133, 16
      %v7138 = vrot.slane %v7136, 6
      %v7140 = vshll.u32 %v7134, 16
      %v7142 = vrot.slane %v7140, 6
      %v7145 = vld [vmem:[#allocation4 + $0x18] sm:$0x88]
      %v7146 = vsel %vm6896, %v7138, %v7145
      %7147 = vst [vmem:[#allocation4 + $0x18] sm:$0x88] %v7146
      %v7148 = vld [vmem:[#allocation4 + $0x20] sm:$0x8]
      %v7149 = vsel %vm6893, %v7142, %v7148
      %7150 = vst [vmem:[#allocation4 + $0x20] sm:$0x8] %v7149
      %v7151 = vld [vmem:[#allocation2 + $0x4] sm:$0x22]
      %v7152 = vld [vmem:[#allocation2 + $0xc] sm:$0x2]
      %v7154 = vshrl.u32 %v7151, 16
      %v7156 = vrot.slane %v7154, 5
      %v7157 = vrot.slane %v7156, 4
      %v7159 = vshrl.u32 %v7152, 16
      %v7161 = vrot.slane %v7159, 5
      %v7162 = vrot.slane %v7161, 4
      %v7165 = vld [vmem:[#allocation4 + $0x24] sm:$0x11]
      %v7166 = vsel %vm6743, %v7157, %v7165
      %7167 = vst [vmem:[#allocation4 + $0x24] sm:$0x11] %v7166
      %v7168 = vld [vmem:[#allocation4 + $0x2c] sm:$0x1]
      %v7169 = vsel %vm6739, %v7162, %v7168
      %7170 = vst [vmem:[#allocation4 + $0x2c] sm:$0x1] %v7169
      %v7171 = vld [vmem:[#allocation2 + $0x18] sm:$0x22]
      %v7172 = vld [vmem:[#allocation2 + $0x20] sm:$0x2]
      %v7175 = vrot.slane %v7171, 5
      %v7176 = vrot.slane %v7175, 4
      %v7177 = vrot.slane %v7172, 5
      %v7178 = vrot.slane %v7177, 4
      %v7181 = vld [vmem:[#allocation4 + $0x24] sm:$0x11]
      %v7182 = vsel %vm6764, %v7176, %v7181
      %7183 = vst [vmem:[#allocation4 + $0x24] sm:$0x11] %v7182
      %v7184 = vld [vmem:[#allocation4 + $0x2c] sm:$0x1]
      %v7185 = vsel %vm6761, %v7178, %v7184
      %7186 = vst [vmem:[#allocation4 + $0x2c] sm:$0x1] %v7185
      %v7187 = vld [vmem:[#allocation2 + $0x2c] sm:$0x22]
      %v7188 = vld [vmem:[#allocation2 + $0x34] sm:$0x2]
      %v7190 = vshrl.u32 %v7187, 16
      %v7192 = vrot.slane %v7190, 4
      %v7193 = vrot.slane %v7192, 4
      %v7195 = vshrl.u32 %v7188, 16
      %v7197 = vrot.slane %v7195, 4
      %v7198 = vrot.slane %v7197, 4
      %v7201 = vld [vmem:[#allocation4 + $0x24] sm:$0x22]
      %v7202 = vsel %vm6785, %v7193, %v7201
      %7203 = vst [vmem:[#allocation4 + $0x24] sm:$0x22] %v7202
      %v7204 = vld [vmem:[#allocation4 + $0x2c] sm:$0x2]
      %v7205 = vsel %vm6781, %v7198, %v7204
      %7206 = vst [vmem:[#allocation4 + $0x2c] sm:$0x2] %v7205
      %v7207 = vld [vmem:[#allocation2 + $0x40] sm:$0x22]
      %v7208 = vld [vmem:[#allocation2 + $0x48] sm:$0x2]
      %v7209 = vld [vmem:[#allocation4 + $0x24] sm:$0x22]
      %v7210 = vsel %vm6808, %v7207, %v7209
      %7211 = vst [vmem:[#allocation4 + $0x24] sm:$0x22] %v7210
      %v7212 = vld [vmem:[#allocation4 + $0x2c] sm:$0x2]
      %v7213 = vsel %vm6805, %v7208, %v7212
      %7214 = vst [vmem:[#allocation4 + $0x2c] sm:$0x2] %v7213
      %v7215 = vld [vmem:[#allocation2 + $0x54] sm:$0x22]
      %v7216 = vld [vmem:[#allocation2 + $0x5c] sm:$0x2]
      %v7218 = vshrl.u32 %v7215, 16
      %v7220 = vrot.slane %v7218, 7
      %v7222 = vshrl.u32 %v7216, 16
      %v7224 = vrot.slane %v7222, 7
      %v7227 = vld [vmem:[#allocation4 + $0x24] sm:$0x44]
      %v7228 = vsel %vm6829, %v7220, %v7227
      %7229 = vst [vmem:[#allocation4 + $0x24] sm:$0x44] %v7228
      %v7230 = vld [vmem:[#allocation4 + $0x2c] sm:$0x4]
      %v7231 = vsel %vm6825, %v7224, %v7230
      %7232 = vst [vmem:[#allocation4 + $0x2c] sm:$0x4] %v7231
      %v7233 = vld [vmem:[#allocation2 + $0x68] sm:$0x22]
      %v7234 = vld [vmem:[#allocation2 + $0x70] sm:$0x2]
      %v7237 = vrot.slane %v7233, 7
      %v7238 = vrot.slane %v7234, 7
      %v7241 = vld [vmem:[#allocation4 + $0x24] sm:$0x44]
      %v7242 = vsel %vm6852, %v7237, %v7241
      %7243 = vst [vmem:[#allocation4 + $0x24] sm:$0x44] %v7242
      %v7244 = vld [vmem:[#allocation4 + $0x2c] sm:$0x4]
      %v7245 = vsel %vm6849, %v7238, %v7244
      %7246 = vst [vmem:[#allocation4 + $0x2c] sm:$0x4] %v7245
      %v7247 = vld [vmem:[#allocation2 + $0x7c] sm:$0x22]
      %v7248 = vld [vmem:[#allocation2 + $0x84] sm:$0x2]
      %v7250 = vshrl.u32 %v7247, 16
      %v7252 = vrot.slane %v7250, 6
      %v7254 = vshrl.u32 %v7248, 16
      %v7256 = vrot.slane %v7254, 6
      %v7259 = vld [vmem:[#allocation4 + $0x24] sm:$0x88]
      %v7260 = vsel %vm6873, %v7252, %v7259
      %7261 = vst [vmem:[#allocation4 + $0x24] sm:$0x88] %v7260
      %v7262 = vld [vmem:[#allocation4 + $0x2c] sm:$0x8]
      %v7263 = vsel %vm6869, %v7256, %v7262
      %7264 = vst [vmem:[#allocation4 + $0x2c] sm:$0x8] %v7263
      %v7265 = vld [vmem:[#allocation2 + $0x90] sm:$0x22]
      %v7266 = vld [vmem:[#allocation2 + $0x98] sm:$0x2]
      %v7269 = vrot.slane %v7265, 6
      %v7270 = vrot.slane %v7266, 6
      %v7273 = vld [vmem:[#allocation4 + $0x24] sm:$0x88]
      %v7274 = vsel %vm6896, %v7269, %v7273
      %7275 = vst [vmem:[#allocation4 + $0x24] sm:$0x88] %v7274
      %v7276 = vld [vmem:[#allocation4 + $0x2c] sm:$0x8]
      %v7277 = vsel %vm6893, %v7270, %v7276
      %7278 = vst [vmem:[#allocation4 + $0x2c] sm:$0x8] %v7277
      %v7279 = vld [vmem:[#allocation2 + $0x4] sm:$0x44]
      %v7280 = vld [vmem:[#allocation2 + $0xc] sm:$0x4]
      %v7283 = vrot.slane %v7279, 6
      %v7284 = vrot.slane %v7283, 4
      %v7285 = vrot.slane %v7280, 6
      %v7286 = vrot.slane %v7285, 4
      %v7289 = vld [vmem:[#allocation4 + $0x30] sm:$0x11]
      %v7290 = vsel %vm6743, %v7284, %v7289
      %7291 = vst [vmem:[#allocation4 + $0x30] sm:$0x11] %v7290
      %v7292 = vld [vmem:[#allocation4 + $0x38] sm:$0x1]
      %v7293 = vsel %vm6739, %v7286, %v7292
      %7294 = vst [vmem:[#allocation4 + $0x38] sm:$0x1] %v7293
      %v7295 = vld [vmem:[#allocation2 + $0x18] sm:$0x44]
      %v7296 = vld [vmem:[#allocation2 + $0x20] sm:$0x4]
      %v7298 = vshll.u32 %v7295, 16
      %v7300 = vrot.slane %v7298, 6
      %v7301 = vrot.slane %v7300, 4
      %v7303 = vshll.u32 %v7296, 16
      %v7305 = vrot.slane %v7303, 6
      %v7306 = vrot.slane %v7305, 4
      %v7309 = vld [vmem:[#allocation4 + $0x30] sm:$0x11]
      %v7310 = vsel %vm6764, %v7301, %v7309
      %7311 = vst [vmem:[#allocation4 + $0x30] sm:$0x11] %v7310
      %v7312 = vld [vmem:[#allocation4 + $0x38] sm:$0x1]
      %v7313 = vsel %vm6761, %v7306, %v7312
      %7314 = vst [vmem:[#allocation4 + $0x38] sm:$0x1] %v7313
      %v7315 = vld [vmem:[#allocation2 + $0x2c] sm:$0x44]
      %v7316 = vld [vmem:[#allocation2 + $0x34] sm:$0x4]
      %v7319 = vrot.slane %v7315, 5
      %v7320 = vrot.slane %v7319, 4
      %v7321 = vrot.slane %v7316, 5
      %v7322 = vrot.slane %v7321, 4
      %v7325 = vld [vmem:[#allocation4 + $0x30] sm:$0x22]
      %v7326 = vsel %vm6785, %v7320, %v7325
      %7327 = vst [vmem:[#allocation4 + $0x30] sm:$0x22] %v7326
      %v7328 = vld [vmem:[#allocation4 + $0x38] sm:$0x2]
      %v7329 = vsel %vm6781, %v7322, %v7328
      %7330 = vst [vmem:[#allocation4 + $0x38] sm:$0x2] %v7329
      %v7331 = vld [vmem:[#allocation2 + $0x40] sm:$0x44]
      %v7332 = vld [vmem:[#allocation2 + $0x48] sm:$0x4]
      %v7334 = vshll.u32 %v7331, 16
      %v7336 = vrot.slane %v7334, 5
      %v7337 = vrot.slane %v7336, 4
      %v7339 = vshll.u32 %v7332, 16
      %v7341 = vrot.slane %v7339, 5
      %v7342 = vrot.slane %v7341, 4
      %v7345 = vld [vmem:[#allocation4 + $0x30] sm:$0x22]
      %v7346 = vsel %vm6808, %v7337, %v7345
      %7347 = vst [vmem:[#allocation4 + $0x30] sm:$0x22] %v7346
      %v7348 = vld [vmem:[#allocation4 + $0x38] sm:$0x2]
      %v7349 = vsel %vm6805, %v7342, %v7348
      %7350 = vst [vmem:[#allocation4 + $0x38] sm:$0x2] %v7349
      %v7351 = vld [vmem:[#allocation2 + $0x54] sm:$0x44]
      %v7352 = vld [vmem:[#allocation2 + $0x5c] sm:$0x4]
      %v7353 = vld [vmem:[#allocation4 + $0x30] sm:$0x44]
      %v7354 = vsel %vm6829, %v7351, %v7353
      %7355 = vst [vmem:[#allocation4 + $0x30] sm:$0x44] %v7354
      %v7356 = vld [vmem:[#allocation4 + $0x38] sm:$0x4]
      %v7357 = vsel %vm6825, %v7352, %v7356
      %7358 = vst [vmem:[#allocation4 + $0x38] sm:$0x4] %v7357
      %v7359 = vld [vmem:[#allocation2 + $0x68] sm:$0x44]
      %v7360 = vld [vmem:[#allocation2 + $0x70] sm:$0x4]
      %v7362 = vshll.u32 %v7359, 16
      %v7365 = vshll.u32 %v7360, 16
      %v7369 = vld [vmem:[#allocation4 + $0x30] sm:$0x44]
      %v7370 = vsel %vm6852, %v7362, %v7369
      %7371 = vst [vmem:[#allocation4 + $0x30] sm:$0x44] %v7370
      %v7372 = vld [vmem:[#allocation4 + $0x38] sm:$0x4]
      %v7373 = vsel %vm6849, %v7365, %v7372
      %7374 = vst [vmem:[#allocation4 + $0x38] sm:$0x4] %v7373
      %v7375 = vld [vmem:[#allocation2 + $0x7c] sm:$0x44]
      %v7376 = vld [vmem:[#allocation2 + $0x84] sm:$0x4]
      %v7379 = vrot.slane %v7375, 7
      %v7380 = vrot.slane %v7376, 7
      %v7383 = vld [vmem:[#allocation4 + $0x30] sm:$0x88]
      %v7384 = vsel %vm6873, %v7379, %v7383
      %7385 = vst [vmem:[#allocation4 + $0x30] sm:$0x88] %v7384
      %v7386 = vld [vmem:[#allocation4 + $0x38] sm:$0x8]
      %v7387 = vsel %vm6869, %v7380, %v7386
      %7388 = vst [vmem:[#allocation4 + $0x38] sm:$0x8] %v7387
      %v7389 = vld [vmem:[#allocation2 + $0x90] sm:$0x44]
      %v7390 = vld [vmem:[#allocation2 + $0x98] sm:$0x4]
      %v7392 = vshll.u32 %v7389, 16
      %v7394 = vrot.slane %v7392, 7
      %v7396 = vshll.u32 %v7390, 16
      %v7398 = vrot.slane %v7396, 7
      %v7401 = vld [vmem:[#allocation4 + $0x30] sm:$0x88]
      %v7402 = vsel %vm6896, %v7394, %v7401
      %7403 = vst [vmem:[#allocation4 + $0x30] sm:$0x88] %v7402
      %v7404 = vld [vmem:[#allocation4 + $0x38] sm:$0x8]
      %v7405 = vsel %vm6893, %v7398, %v7404
      %7406 = vst [vmem:[#allocation4 + $0x38] sm:$0x8] %v7405
      %v7407 = vld [vmem:[#allocation2 + $0x4] sm:$0x44]
      %v7408 = vld [vmem:[#allocation2 + $0xc] sm:$0x4]
      %v7410 = vshrl.u32 %v7407, 16
      %v7412 = vrot.slane %v7410, 6
      %v7413 = vrot.slane %v7412, 4
      %v7415 = vshrl.u32 %v7408, 16
      %v7417 = vrot.slane %v7415, 6
      %v7418 = vrot.slane %v7417, 4
      %v7421 = vld [vmem:[#allocation4 + $0x3c] sm:$0x11]
      %v7422 = vsel %vm6743, %v7413, %v7421
      %7423 = vst [vmem:[#allocation4 + $0x3c] sm:$0x11] %v7422
      %v7424 = vld [vmem:[#allocation4 + $0x44] sm:$0x1]
      %v7425 = vsel %vm6739, %v7418, %v7424
      %7426 = vst [vmem:[#allocation4 + $0x44] sm:$0x1] %v7425
      %v7427 = vld [vmem:[#allocation2 + $0x18] sm:$0x44]
      %v7428 = vld [vmem:[#allocation2 + $0x20] sm:$0x4]
      %v7431 = vrot.slane %v7427, 6
      %v7432 = vrot.slane %v7431, 4
      %v7433 = vrot.slane %v7428, 6
      %v7434 = vrot.slane %v7433, 4
      %v7437 = vld [vmem:[#allocation4 + $0x3c] sm:$0x11]
      %v7438 = vsel %vm6764, %v7432, %v7437
      %7439 = vst [vmem:[#allocation4 + $0x3c] sm:$0x11] %v7438
      %v7440 = vld [vmem:[#allocation4 + $0x44] sm:$0x1]
      %v7441 = vsel %vm6761, %v7434, %v7440
      %7442 = vst [vmem:[#allocation4 + $0x44] sm:$0x1] %v7441
      %v7443 = vld [vmem:[#allocation2 + $0x2c] sm:$0x44]
      %v7444 = vld [vmem:[#allocation2 + $0x34] sm:$0x4]
      %v7446 = vshrl.u32 %v7443, 16
      %v7448 = vrot.slane %v7446, 5
      %v7449 = vrot.slane %v7448, 4
      %v7451 = vshrl.u32 %v7444, 16
      %v7453 = vrot.slane %v7451, 5
      %v7454 = vrot.slane %v7453, 4
      %v7457 = vld [vmem:[#allocation4 + $0x3c] sm:$0x22]
      %v7458 = vsel %vm6785, %v7449, %v7457
      %7459 = vst [vmem:[#allocation4 + $0x3c] sm:$0x22] %v7458
      %v7460 = vld [vmem:[#allocation4 + $0x44] sm:$0x2]
      %v7461 = vsel %vm6781, %v7454, %v7460
      %7462 = vst [vmem:[#allocation4 + $0x44] sm:$0x2] %v7461
      %v7463 = vld [vmem:[#allocation2 + $0x40] sm:$0x44]
      %v7464 = vld [vmem:[#allocation2 + $0x48] sm:$0x4]
      %v7467 = vrot.slane %v7463, 5
      %v7468 = vrot.slane %v7467, 4
      %v7469 = vrot.slane %v7464, 5
      %v7470 = vrot.slane %v7469, 4
      %v7473 = vld [vmem:[#allocation4 + $0x3c] sm:$0x22]
      %v7474 = vsel %vm6808, %v7468, %v7473
      %7475 = vst [vmem:[#allocation4 + $0x3c] sm:$0x22] %v7474
      %v7476 = vld [vmem:[#allocation4 + $0x44] sm:$0x2]
      %v7477 = vsel %vm6805, %v7470, %v7476
      %7478 = vst [vmem:[#allocation4 + $0x44] sm:$0x2] %v7477
      %v7479 = vld [vmem:[#allocation2 + $0x54] sm:$0x44]
      %v7480 = vld [vmem:[#allocation2 + $0x5c] sm:$0x4]
      %v7482 = vshrl.u32 %v7479, 16
      %v7484 = vrot.slane %v7482, 4
      %v7485 = vrot.slane %v7484, 4
      %v7487 = vshrl.u32 %v7480, 16
      %v7489 = vrot.slane %v7487, 4
      %v7490 = vrot.slane %v7489, 4
      %v7493 = vld [vmem:[#allocation4 + $0x3c] sm:$0x44]
      %v7494 = vsel %vm6829, %v7485, %v7493
      %7495 = vst [vmem:[#allocation4 + $0x3c] sm:$0x44] %v7494
      %v7496 = vld [vmem:[#allocation4 + $0x44] sm:$0x4]
      %v7497 = vsel %vm6825, %v7490, %v7496
      %7498 = vst [vmem:[#allocation4 + $0x44] sm:$0x4] %v7497
      %v7499 = vld [vmem:[#allocation2 + $0x68] sm:$0x44]
      %v7500 = vld [vmem:[#allocation2 + $0x70] sm:$0x4]
      %v7501 = vld [vmem:[#allocation4 + $0x3c] sm:$0x44]
      %v7502 = vsel %vm6852, %v7499, %v7501
      %7503 = vst [vmem:[#allocation4 + $0x3c] sm:$0x44] %v7502
      %v7504 = vld [vmem:[#allocation4 + $0x44] sm:$0x4]
      %v7505 = vsel %vm6849, %v7500, %v7504
      %7506 = vst [vmem:[#allocation4 + $0x44] sm:$0x4] %v7505
      %v7507 = vld [vmem:[#allocation2 + $0x7c] sm:$0x44]
      %v7508 = vld [vmem:[#allocation2 + $0x84] sm:$0x4]
      %v7510 = vshrl.u32 %v7507, 16
      %v7512 = vrot.slane %v7510, 7
      %v7514 = vshrl.u32 %v7508, 16
      %v7516 = vrot.slane %v7514, 7
      %v7519 = vld [vmem:[#allocation4 + $0x3c] sm:$0x88]
      %v7520 = vsel %vm6873, %v7512, %v7519
      %7521 = vst [vmem:[#allocation4 + $0x3c] sm:$0x88] %v7520
      %v7522 = vld [vmem:[#allocation4 + $0x44] sm:$0x8]
      %v7523 = vsel %vm6869, %v7516, %v7522
      %7524 = vst [vmem:[#allocation4 + $0x44] sm:$0x8] %v7523
      %v7525 = vld [vmem:[#allocation2 + $0x90] sm:$0x44]
      %v7526 = vld [vmem:[#allocation2 + $0x98] sm:$0x4]
      %v7529 = vrot.slane %v7525, 7
      %v7530 = vrot.slane %v7526, 7
      %v7533 = vld [vmem:[#allocation4 + $0x3c] sm:$0x88]
      %v7534 = vsel %vm6896, %v7529, %v7533
      %7535 = vst [vmem:[#allocation4 + $0x3c] sm:$0x88] %v7534
      %v7536 = vld [vmem:[#allocation4 + $0x44] sm:$0x8]
      %v7537 = vsel %vm6893, %v7530, %v7536
      %7538 = vst [vmem:[#allocation4 + $0x44] sm:$0x8] %v7537
      %v7539 = vld [vmem:[#allocation2 + $0x4] sm:$0x88]
      %v7540 = vld [vmem:[#allocation2 + $0xc] sm:$0x8]
      %v7543 = vrot.slane %v7539, 7
      %v7544 = vrot.slane %v7543, 4
      %v7545 = vrot.slane %v7540, 7
      %v7546 = vrot.slane %v7545, 4
      %v7549 = vld [vmem:[#allocation4 + $0x48] sm:$0x11]
      %v7550 = vsel %vm6743, %v7544, %v7549
      %7551 = vst [vmem:[#allocation4 + $0x48] sm:$0x11] %v7550
      %v7552 = vld [vmem:[#allocation4 + $0x50] sm:$0x1]
      %v7553 = vsel %vm6739, %v7546, %v7552
      %7554 = vst [vmem:[#allocation4 + $0x50] sm:$0x1] %v7553
      %v7555 = vld [vmem:[#allocation2 + $0x18] sm:$0x88]
      %v7556 = vld [vmem:[#allocation2 + $0x20] sm:$0x8]
      %v7558 = vshll.u32 %v7555, 16
      %v7560 = vrot.slane %v7558, 7
      %v7561 = vrot.slane %v7560, 4
      %v7563 = vshll.u32 %v7556, 16
      %v7565 = vrot.slane %v7563, 7
      %v7566 = vrot.slane %v7565, 4
      %v7569 = vld [vmem:[#allocation4 + $0x48] sm:$0x11]
      %v7570 = vsel %vm6764, %v7561, %v7569
      %7571 = vst [vmem:[#allocation4 + $0x48] sm:$0x11] %v7570
      %v7572 = vld [vmem:[#allocation4 + $0x50] sm:$0x1]
      %v7573 = vsel %vm6761, %v7566, %v7572
      %7574 = vst [vmem:[#allocation4 + $0x50] sm:$0x1] %v7573
      %v7575 = vld [vmem:[#allocation2 + $0x2c] sm:$0x88]
      %v7576 = vld [vmem:[#allocation2 + $0x34] sm:$0x8]
      %v7579 = vrot.slane %v7575, 6
      %v7580 = vrot.slane %v7579, 4
      %v7581 = vrot.slane %v7576, 6
      %v7582 = vrot.slane %v7581, 4
      %v7585 = vld [vmem:[#allocation4 + $0x48] sm:$0x22]
      %v7586 = vsel %vm6785, %v7580, %v7585
      %7587 = vst [vmem:[#allocation4 + $0x48] sm:$0x22] %v7586
      %v7588 = vld [vmem:[#allocation4 + $0x50] sm:$0x2]
      %v7589 = vsel %vm6781, %v7582, %v7588
      %7590 = vst [vmem:[#allocation4 + $0x50] sm:$0x2] %v7589
      %v7591 = vld [vmem:[#allocation2 + $0x40] sm:$0x88]
      %v7592 = vld [vmem:[#allocation2 + $0x48] sm:$0x8]
      %v7594 = vshll.u32 %v7591, 16
      %v7596 = vrot.slane %v7594, 6
      %v7597 = vrot.slane %v7596, 4
      %v7599 = vshll.u32 %v7592, 16
      %v7601 = vrot.slane %v7599, 6
      %v7602 = vrot.slane %v7601, 4
      %v7605 = vld [vmem:[#allocation4 + $0x48] sm:$0x22]
      %v7606 = vsel %vm6808, %v7597, %v7605
      %7607 = vst [vmem:[#allocation4 + $0x48] sm:$0x22] %v7606
      %v7608 = vld [vmem:[#allocation4 + $0x50] sm:$0x2]
      %v7609 = vsel %vm6805, %v7602, %v7608
      %7610 = vst [vmem:[#allocation4 + $0x50] sm:$0x2] %v7609
      %v7611 = vld [vmem:[#allocation2 + $0x54] sm:$0x88]
      %v7612 = vld [vmem:[#allocation2 + $0x5c] sm:$0x8]
      %v7615 = vrot.slane %v7611, 5
      %v7616 = vrot.slane %v7615, 4
      %v7617 = vrot.slane %v7612, 5
      %v7618 = vrot.slane %v7617, 4
      %v7621 = vld [vmem:[#allocation4 + $0x48] sm:$0x44]
      %v7622 = vsel %vm6829, %v7616, %v7621
      %7623 = vst [vmem:[#allocation4 + $0x48] sm:$0x44] %v7622
      %v7624 = vld [vmem:[#allocation4 + $0x50] sm:$0x4]
      %v7625 = vsel %vm6825, %v7618, %v7624
      %7626 = vst [vmem:[#allocation4 + $0x50] sm:$0x4] %v7625
      %v7627 = vld [vmem:[#allocation2 + $0x68] sm:$0x88]
      %v7628 = vld [vmem:[#allocation2 + $0x70] sm:$0x8]
      %v7630 = vshll.u32 %v7627, 16
      %v7632 = vrot.slane %v7630, 5
      %v7633 = vrot.slane %v7632, 4
      %v7635 = vshll.u32 %v7628, 16
      %v7637 = vrot.slane %v7635, 5
      %v7638 = vrot.slane %v7637, 4
      %v7641 = vld [vmem:[#allocation4 + $0x48] sm:$0x44]
      %v7642 = vsel %vm6852, %v7633, %v7641
      %7643 = vst [vmem:[#allocation4 + $0x48] sm:$0x44] %v7642
      %v7644 = vld [vmem:[#allocation4 + $0x50] sm:$0x4]
      %v7645 = vsel %vm6849, %v7638, %v7644
      %7646 = vst [vmem:[#allocation4 + $0x50] sm:$0x4] %v7645
      %v7647 = vld [vmem:[#allocation2 + $0x7c] sm:$0x88]
      %v7648 = vld [vmem:[#allocation2 + $0x84] sm:$0x8]
      %v7649 = vld [vmem:[#allocation4 + $0x48] sm:$0x88]
      %v7650 = vsel %vm6873, %v7647, %v7649
      %7651 = vst [vmem:[#allocation4 + $0x48] sm:$0x88] %v7650
      %v7652 = vld [vmem:[#allocation4 + $0x50] sm:$0x8]
      %v7653 = vsel %vm6869, %v7648, %v7652
      %7654 = vst [vmem:[#allocation4 + $0x50] sm:$0x8] %v7653
      %v7655 = vld [vmem:[#allocation2 + $0x90] sm:$0x88]
      %v7656 = vld [vmem:[#allocation2 + $0x98] sm:$0x8]
      %v7658 = vshll.u32 %v7655, 16
      %v7661 = vshll.u32 %v7656, 16
      %v7665 = vld [vmem:[#allocation4 + $0x48] sm:$0x88]
      %v7666 = vsel %vm6896, %v7658, %v7665
      %7667 = vst [vmem:[#allocation4 + $0x48] sm:$0x88] %v7666
      %v7668 = vld [vmem:[#allocation4 + $0x50] sm:$0x8]
      %v7669 = vsel %vm6893, %v7661, %v7668
      %7670 = vst [vmem:[#allocation4 + $0x50] sm:$0x8] %v7669
      %v7671 = vld [vmem:[#allocation2 + $0x4] sm:$0x88]
      %v7672 = vld [vmem:[#allocation2 + $0xc] sm:$0x8]
      %v7674 = vshrl.u32 %v7671, 16
      %v7676 = vrot.slane %v7674, 7
      %v7677 = vrot.slane %v7676, 4
      %v7679 = vshrl.u32 %v7672, 16
      %v7681 = vrot.slane %v7679, 7
      %v7682 = vrot.slane %v7681, 4
      %v7685 = vld [vmem:[#allocation4 + $0x54] sm:$0x11]
      %v7686 = vsel %vm6743, %v7677, %v7685
      %7687 = vst [vmem:[#allocation4 + $0x54] sm:$0x11] %v7686
      %v7688 = vld [vmem:[#allocation4 + $0x5c] sm:$0x1]
      %v7689 = vsel %vm6739, %v7682, %v7688
      %7690 = vst [vmem:[#allocation4 + $0x5c] sm:$0x1] %v7689
      %v7691 = vld [vmem:[#allocation2 + $0x18] sm:$0x88]
      %v7692 = vld [vmem:[#allocation2 + $0x20] sm:$0x8]
      %v7695 = vrot.slane %v7691, 7
      %v7696 = vrot.slane %v7695, 4
      %v7697 = vrot.slane %v7692, 7
      %v7698 = vrot.slane %v7697, 4
      %v7701 = vld [vmem:[#allocation4 + $0x54] sm:$0x11]
      %v7702 = vsel %vm6764, %v7696, %v7701
      %7703 = vst [vmem:[#allocation4 + $0x54] sm:$0x11] %v7702
      %v7704 = vld [vmem:[#allocation4 + $0x5c] sm:$0x1]
      %v7705 = vsel %vm6761, %v7698, %v7704
      %7706 = vst [vmem:[#allocation4 + $0x5c] sm:$0x1] %v7705
      %v7707 = vld [vmem:[#allocation2 + $0x2c] sm:$0x88]
      %v7708 = vld [vmem:[#allocation2 + $0x34] sm:$0x8]
      %v7710 = vshrl.u32 %v7707, 16
      %v7712 = vrot.slane %v7710, 6
      %v7713 = vrot.slane %v7712, 4
      %v7715 = vshrl.u32 %v7708, 16
      %v7717 = vrot.slane %v7715, 6
      %v7718 = vrot.slane %v7717, 4
      %v7721 = vld [vmem:[#allocation4 + $0x54] sm:$0x22]
      %v7722 = vsel %vm6785, %v7713, %v7721
      %7723 = vst [vmem:[#allocation4 + $0x54] sm:$0x22] %v7722
      %v7724 = vld [vmem:[#allocation4 + $0x5c] sm:$0x2]
      %v7725 = vsel %vm6781, %v7718, %v7724
      %7726 = vst [vmem:[#allocation4 + $0x5c] sm:$0x2] %v7725
      %v7727 = vld [vmem:[#allocation2 + $0x40] sm:$0x88]
      %v7728 = vld [vmem:[#allocation2 + $0x48] sm:$0x8]
      %v7731 = vrot.slane %v7727, 6
      %v7732 = vrot.slane %v7731, 4
      %v7733 = vrot.slane %v7728, 6
      %v7734 = vrot.slane %v7733, 4
      %v7737 = vld [vmem:[#allocation4 + $0x54] sm:$0x22]
      %v7738 = vsel %vm6808, %v7732, %v7737
      %7739 = vst [vmem:[#allocation4 + $0x54] sm:$0x22] %v7738
      %v7740 = vld [vmem:[#allocation4 + $0x5c] sm:$0x2]
      %v7741 = vsel %vm6805, %v7734, %v7740
      %7742 = vst [vmem:[#allocation4 + $0x5c] sm:$0x2] %v7741
      %v7743 = vld [vmem:[#allocation2 + $0x54] sm:$0x88]
      %v7744 = vld [vmem:[#allocation2 + $0x5c] sm:$0x8]
      %v7746 = vshrl.u32 %v7743, 16
      %v7748 = vrot.slane %v7746, 5
      %v7749 = vrot.slane %v7748, 4
      %v7751 = vshrl.u32 %v7744, 16
      %v7753 = vrot.slane %v7751, 5
      %v7754 = vrot.slane %v7753, 4
      %v7757 = vld [vmem:[#allocation4 + $0x54] sm:$0x44]
      %v7758 = vsel %vm6829, %v7749, %v7757
      %7759 = vst [vmem:[#allocation4 + $0x54] sm:$0x44] %v7758
      %v7760 = vld [vmem:[#allocation4 + $0x5c] sm:$0x4]
      %v7761 = vsel %vm6825, %v7754, %v7760
      %7762 = vst [vmem:[#allocation4 + $0x5c] sm:$0x4] %v7761
      %v7763 = vld [vmem:[#allocation2 + $0x68] sm:$0x88]
      %v7764 = vld [vmem:[#allocation2 + $0x70] sm:$0x8]
      %v7767 = vrot.slane %v7763, 5
      %v7768 = vrot.slane %v7767, 4
      %v7769 = vrot.slane %v7764, 5
      %v7770 = vrot.slane %v7769, 4
      %v7773 = vld [vmem:[#allocation4 + $0x54] sm:$0x44]
      %v7774 = vsel %vm6852, %v7768, %v7773
      %7775 = vst [vmem:[#allocation4 + $0x54] sm:$0x44] %v7774
      %v7776 = vld [vmem:[#allocation4 + $0x5c] sm:$0x4]
      %v7777 = vsel %vm6849, %v7770, %v7776
      %7778 = vst [vmem:[#allocation4 + $0x5c] sm:$0x4] %v7777
      %v7779 = vld [vmem:[#allocation2 + $0x7c] sm:$0x88]
      %v7780 = vld [vmem:[#allocation2 + $0x84] sm:$0x8]
      %v7782 = vshrl.u32 %v7779, 16
      %v7784 = vrot.slane %v7782, 4
      %v7785 = vrot.slane %v7784, 4
      %v7787 = vshrl.u32 %v7780, 16
      %v7789 = vrot.slane %v7787, 4
      %v7790 = vrot.slane %v7789, 4
      %v7793 = vld [vmem:[#allocation4 + $0x54] sm:$0x88]
      %v7794 = vsel %vm6873, %v7785, %v7793
      %7795 = vst [vmem:[#allocation4 + $0x54] sm:$0x88] %v7794
      %v7796 = vld [vmem:[#allocation4 + $0x5c] sm:$0x8]
      %v7797 = vsel %vm6869, %v7790, %v7796
      %7798 = vst [vmem:[#allocation4 + $0x5c] sm:$0x8] %v7797
      %v7799 = vld [vmem:[#allocation2 + $0x90] sm:$0x88]
      %v7800 = vld [vmem:[#allocation2 + $0x98] sm:$0x8]
      %v7801 = vld [vmem:[#allocation4 + $0x54] sm:$0x88]
      %v7802 = vsel %vm6896, %v7799, %v7801
      %7803 = vst [vmem:[#allocation4 + $0x54] sm:$0x88] %v7802
      %v7804 = vld [vmem:[#allocation4 + $0x5c] sm:$0x8]
      %v7805 = vsel %vm6893, %v7800, %v7804
      %7806 = vst [vmem:[#allocation4 + $0x5c] sm:$0x8] %v7805
      %v7807 = vld [vmem:[#allocation4] sm:$0xff]
      %v7808 = vld [vmem:[#allocation4 + $0x8] sm:$0xff]
      %v7809 = vld [vmem:[#allocation4 + $0x10] sm:$0xff]
      %v7810 = vld [vmem:[#allocation4 + $0x18] sm:$0xff]
      %v7811 = vld [vmem:[#allocation4 + $0x20] sm:$0xff]
      %v7812 = vld [vmem:[#allocation4 + $0x28] sm:$0xff]
      %v7813 = vld [vmem:[#allocation4 + $0x30] sm:$0xff]
      %v7814 = vld [vmem:[#allocation4 + $0x38] sm:$0xff]
      %v7815 = vld [vmem:[#allocation4 + $0x40] sm:$0xff]
      %v7816 = vld [vmem:[#allocation4 + $0x48] sm:$0xff]
      %v7817 = vld [vmem:[#allocation4 + $0x50] sm:$0xff]
      %v7818 = vld [vmem:[#allocation4 + $0x58] sm:$0xff]
      %v7819 = vld [vmem:[%s6] sm:$0xf]
      %v7820 = vld [vmem:[%s6 + $0x4] sm:$0xf]
      %v7821 = vld [vmem:[%s6 + $0x8] sm:$0xf]
      %v7822 = vld [vmem:[%s6 + $0xc] sm:$0xf]
      %v7823 = vld [vmem:[%s6 + $0x10] sm:$0xf]
      %v7824 = vld [vmem:[%s6 + $0x14] sm:$0xf]
      %v7825 = vld [vmem:[%s6 + $0x18] sm:$0xf]
      %v7826 = vld [vmem:[%s6 + $0x1c] sm:$0xf]
      %v7827 = vld [vmem:[%s6 + $0x20] sm:$0xf]
      %v7828 = vld [vmem:[%s6 + $0x24] sm:$0xf]
      %v7829 = vld [vmem:[%s6 + $0x28] sm:$0xf]
      %v7830 = vld [vmem:[%s6 + $0x2c] sm:$0xf]
      %v7831 = vld [vmem:[%s6 + $0x30] sm:$0xf]
      %v7832 = vld [vmem:[%s6 + $0x34] sm:$0xf]
      %v7833 = vld [vmem:[%s6 + $0x38] sm:$0xf]
      %v7834 = vld [vmem:[%s6 + $0x3c] sm:$0xf]
      %v7835 = vld [vmem:[%s6 + $0x40] sm:$0xf]
      %v7836 = vld [vmem:[%s6 + $0x44] sm:$0xf]
      %v7837 = vld [vmem:[%s6 + $0x48] sm:$0xf]
      %v7838 = vld [vmem:[%s6 + $0x4c] sm:$0xf]
      %v7839 = vld [vmem:[%s6 + $0x50] sm:$0xf]
      %v7840 = vld [vmem:[%s6 + $0x54] sm:$0xf]
      %v7841 = vld [vmem:[%s6 + $0x58] sm:$0xf]
      %v7842 = vld [vmem:[%s6 + $0x5c] sm:$0xf]
      %v7843 = vld [vmem:[%s6 + $0x60] sm:$0xf]
      %v7844 = vld [vmem:[%s6 + $0x64] sm:$0xf]
      %v7845 = vld [vmem:[%s6 + $0x68] sm:$0xf]
      %v7846 = vld [vmem:[%s6 + $0x6c] sm:$0xf]
      %v7847 = vld [vmem:[%s6 + $0x70] sm:$0xf]
      %v7848 = vld [vmem:[%s6 + $0x74] sm:$0xf]
      %v7849 = vld [vmem:[%s6 + $0x78] sm:$0xf]
      %v7850 = vld [vmem:[%s6 + $0x7c] sm:$0xf]
      %v7851 = vld [vmem:[%s6 + $0x80] sm:$0xf]
      %v7852 = vld [vmem:[%s6 + $0x84] sm:$0xf]
      %v7853 = vld [vmem:[%s6 + $0x88] sm:$0xf]
      %v7854 = vld [vmem:[%s6 + $0x8c] sm:$0xf]
      %v7855 = vld [vmem:[%s6 + $0x90] sm:$0xf]
      %v7856 = vld [vmem:[%s6 + $0x94] sm:$0xf]
      %v7857 = vld [vmem:[%s6 + $0x98] sm:$0xf]
      %v7858 = vld [vmem:[%s6 + $0x9c] sm:$0xf]
      %v7859 = vld [vmem:[%s6 + $0xa0] sm:$0xf]
      %v7860 = vld [vmem:[%s6 + $0xa4] sm:$0xf]
      %v7861 = vld [vmem:[%s6 + $0xa8] sm:$0xf]
      %v7862 = vld [vmem:[%s6 + $0xac] sm:$0xf]
      %v7863 = vld [vmem:[%s6 + $0xb0] sm:$0xf]
      %v7864 = vld [vmem:[%s6 + $0xb4] sm:$0xf]
      %v7865 = vld [vmem:[%s6 + $0xb8] sm:$0xf]
      %v7866 = vld [vmem:[%s6 + $0xbc] sm:$0xf]
      %v7867 = vld [vmem:[%s6 + $0xc0] sm:$0xf]
      %v7868 = vld [vmem:[%s6 + $0xc4] sm:$0xf]
      %v7869 = vld [vmem:[%s6 + $0xc8] sm:$0xf]
      %v7870 = vld [vmem:[%s6 + $0xcc] sm:$0xf]
      %v7871 = vld [vmem:[%s6 + $0xd0] sm:$0xf]
      %v7872 = vld [vmem:[%s6 + $0xd4] sm:$0xf]
      %v7873 = vld [vmem:[%s6 + $0xd8] sm:$0xf]
      %v7874 = vld [vmem:[%s6 + $0xdc] sm:$0xf]
      %v7875 = vld [vmem:[%s6 + $0xe0] sm:$0xf]
      %v7876 = vld [vmem:[%s6 + $0xe4] sm:$0xf]
      %v7877 = vld [vmem:[%s6 + $0xe8] sm:$0xf]
      %v7878 = vld [vmem:[%s6 + $0xec] sm:$0xf]
      %v7879 = vld [vmem:[%s6 + $0xf0] sm:$0xf]
      %v7880 = vld [vmem:[%s6 + $0xf4] sm:$0xf]
      %v7881 = vld [vmem:[%s6 + $0xf8] sm:$0xf]
      %v7882 = vld [vmem:[%s6 + $0xfc] sm:$0xf]
      %v7883 = vld [vmem:[%s6 + $0x100] sm:$0xf]
      %v7884 = vld [vmem:[%s6 + $0x104] sm:$0xf]
      %v7885 = vld [vmem:[%s6 + $0x108] sm:$0xf]
      %v7886 = vld [vmem:[%s6 + $0x10c] sm:$0xf]
      %v7887 = vld [vmem:[%s6 + $0x110] sm:$0xf]
      %v7888 = vld [vmem:[%s6 + $0x114] sm:$0xf]
      %v7889 = vld [vmem:[%s6 + $0x118] sm:$0xf]
      %v7890 = vld [vmem:[%s6 + $0x11c] sm:$0xf]
      %v7891 = vld [vmem:[%s6 + $0x120] sm:$0xf]
      %v7892 = vld [vmem:[%s6 + $0x124] sm:$0xf]
      %v7893 = vld [vmem:[%s6 + $0x128] sm:$0xf]
      %v7894 = vld [vmem:[%s6 + $0x12c] sm:$0xf]
      %v7895 = vld [vmem:[%s6 + $0x130] sm:$0xf]
      %v7896 = vld [vmem:[%s6 + $0x134] sm:$0xf]
      %v7897 = vld [vmem:[%s6 + $0x138] sm:$0xf]
      %v7898 = vld [vmem:[%s6 + $0x13c] sm:$0xf]
      %v7899 = vld [vmem:[%s6 + $0x140] sm:$0xf]
      %v7900 = vld [vmem:[%s6 + $0x144] sm:$0xf]
      %v7901 = vld [vmem:[%s6 + $0x148] sm:$0xf]
      %v7902 = vld [vmem:[%s6 + $0x14c] sm:$0xf]
      %v7903 = vld [vmem:[%s6 + $0x150] sm:$0xf]
      %v7904 = vld [vmem:[%s6 + $0x154] sm:$0xf]
      %v7905 = vld [vmem:[%s6 + $0x158] sm:$0xf]
      %v7906 = vld [vmem:[%s6 + $0x15c] sm:$0xf]
      %v7907 = vld [vmem:[%s6 + $0x160] sm:$0xf]
      %v7908 = vld [vmem:[%s6 + $0x164] sm:$0xf]
      %v7909 = vld [vmem:[%s6 + $0x168] sm:$0xf]
      %v7910 = vld [vmem:[%s6 + $0x16c] sm:$0xf]
      %v7911 = vld [vmem:[%s6 + $0x170] sm:$0xf]
      %v7912 = vld [vmem:[%s6 + $0x174] sm:$0xf]
      %v7913 = vld [vmem:[%s6 + $0x178] sm:$0xf]
      %v7914 = vld [vmem:[%s6 + $0x17c] sm:$0xf]
      %v7915 = vld [vmem:[%s6 + $0x180] sm:$0xf]
      %v7916 = vld [vmem:[%s6 + $0x184] sm:$0xf]
      %v7917 = vld [vmem:[%s6 + $0x188] sm:$0xf]
      %v7918 = vld [vmem:[%s6 + $0x18c] sm:$0xf]
      %v7919 = vld [vmem:[%s6 + $0x190] sm:$0xf]
      %v7920 = vld [vmem:[%s6 + $0x194] sm:$0xf]
      %v7921 = vld [vmem:[%s6 + $0x198] sm:$0xf]
      %v7922 = vld [vmem:[%s6 + $0x19c] sm:$0xf]
      %v7923 = vld [vmem:[%s6 + $0x1a0] sm:$0xf]
      %v7924 = vld [vmem:[%s6 + $0x1a4] sm:$0xf]
      %v7925 = vld [vmem:[%s6 + $0x1a8] sm:$0xf]
      %v7926 = vld [vmem:[%s6 + $0x1ac] sm:$0xf]
      %v7927 = vld [vmem:[%s6 + $0x1b0] sm:$0xf]
      %v7928 = vld [vmem:[%s6 + $0x1b4] sm:$0xf]
      %v7929 = vld [vmem:[%s6 + $0x1b8] sm:$0xf]
      %v7930 = vld [vmem:[%s6 + $0x1bc] sm:$0xf]
      %v7931 = vld [vmem:[%s6 + $0x1c0] sm:$0xf]
      %v7932 = vld [vmem:[%s6 + $0x1c4] sm:$0xf]
      %v7933 = vld [vmem:[%s6 + $0x1c8] sm:$0xf]
      %v7934 = vld [vmem:[%s6 + $0x1cc] sm:$0xf]
      %v7935 = vld [vmem:[%s6 + $0x1d0] sm:$0xf]
      %v7936 = vld [vmem:[%s6 + $0x1d4] sm:$0xf]
      %v7937 = vld [vmem:[%s6 + $0x1d8] sm:$0xf]
      %v7938 = vld [vmem:[%s6 + $0x1dc] sm:$0xf]
      %v7939 = vld [vmem:[%s6 + $0x1e0] sm:$0xf]
      %v7940 = vld [vmem:[%s6 + $0x1e4] sm:$0xf]
      %v7941 = vld [vmem:[%s6 + $0x1e8] sm:$0xf]
      %v7942 = vld [vmem:[%s6 + $0x1ec] sm:$0xf]
      %v7943 = vld [vmem:[%s6 + $0x1f0] sm:$0xf]
      %v7944 = vld [vmem:[%s6 + $0x1f4] sm:$0xf]
      %v7945 = vld [vmem:[%s6 + $0x1f8] sm:$0xf]
      %v7946 = vld [vmem:[%s6 + $0x1fc] sm:$0xf]
      %v7947 = vld [vmem:[%s6 + $0x200] sm:$0xf]
      %v7948 = vld [vmem:[%s6 + $0x204] sm:$0xf]
      %v7949 = vld [vmem:[%s6 + $0x208] sm:$0xf]
      %v7950 = vld [vmem:[%s6 + $0x20c] sm:$0xf]
      %v7951 = vld [vmem:[%s6 + $0x210] sm:$0xf]
      %v7952 = vld [vmem:[%s6 + $0x214] sm:$0xf]
      %v7953 = vld [vmem:[%s6 + $0x218] sm:$0xf]
      %v7954 = vld [vmem:[%s6 + $0x21c] sm:$0xf]
      %v7955 = vld [vmem:[%s6 + $0x220] sm:$0xf]
      %v7956 = vld [vmem:[%s6 + $0x224] sm:$0xf]
      %v7957 = vld [vmem:[%s6 + $0x228] sm:$0xf]
      %v7958 = vld [vmem:[%s6 + $0x22c] sm:$0xf]
      %v7959 = vld [vmem:[%s6 + $0x230] sm:$0xf]
      %v7960 = vld [vmem:[%s6 + $0x234] sm:$0xf]
      %v7961 = vld [vmem:[%s6 + $0x238] sm:$0xf]
      %v7962 = vld [vmem:[%s6 + $0x23c] sm:$0xf]
      %v7963 = vld [vmem:[%s6 + $0x240] sm:$0xf]
      %v7964 = vld [vmem:[%s6 + $0x244] sm:$0xf]
      %v7965 = vld [vmem:[%s6 + $0x248] sm:$0xf]
      %v7966 = vld [vmem:[%s6 + $0x24c] sm:$0xf]
      %v7967 = vld [vmem:[%s6 + $0x250] sm:$0xf]
      %v7968 = vld [vmem:[%s6 + $0x254] sm:$0xf]
      %v7969 = vld [vmem:[%s6 + $0x258] sm:$0xf]
      %v7970 = vld [vmem:[%s6 + $0x25c] sm:$0xf]
      %v7971 = vld [vmem:[%s6 + $0x260] sm:$0xf]
      %v7972 = vld [vmem:[%s6 + $0x264] sm:$0xf]
      %v7973 = vld [vmem:[%s6 + $0x268] sm:$0xf]
      %v7974 = vld [vmem:[%s6 + $0x26c] sm:$0xf]
      %v7975 = vld [vmem:[%s6 + $0x270] sm:$0xf]
      %v7976 = vld [vmem:[%s6 + $0x274] sm:$0xf]
      %v7977 = vld [vmem:[%s6 + $0x278] sm:$0xf]
      %v7978 = vld [vmem:[%s6 + $0x27c] sm:$0xf]
      %v7979 = vld [vmem:[%s6 + $0x280] sm:$0xf]
      %v7980 = vld [vmem:[%s6 + $0x284] sm:$0xf]
      %v7981 = vld [vmem:[%s6 + $0x288] sm:$0xf]
      %v7982 = vld [vmem:[%s6 + $0x28c] sm:$0xf]
      %v7983 = vld [vmem:[%s6 + $0x290] sm:$0xf]
      %v7984 = vld [vmem:[%s6 + $0x294] sm:$0xf]
      %v7985 = vld [vmem:[%s6 + $0x298] sm:$0xf]
      %v7986 = vld [vmem:[%s6 + $0x29c] sm:$0xf]
      %v7987 = vld [vmem:[%s6 + $0x2a0] sm:$0xf]
      %v7988 = vld [vmem:[%s6 + $0x2a4] sm:$0xf]
      %v7989 = vld [vmem:[%s6 + $0x2a8] sm:$0xf]
      %v7990 = vld [vmem:[%s6 + $0x2ac] sm:$0xf]
      %v7991 = vld [vmem:[%s6 + $0x2b0] sm:$0xf]
      %v7992 = vld [vmem:[%s6 + $0x2b4] sm:$0xf]
      %v7993 = vld [vmem:[%s6 + $0x2b8] sm:$0xf]
      %v7994 = vld [vmem:[%s6 + $0x2bc] sm:$0xf]
      %v7995 = vld [vmem:[%s6 + $0x2c0] sm:$0xf]
      %v7996 = vld [vmem:[%s6 + $0x2c4] sm:$0xf]
      %v7997 = vld [vmem:[%s6 + $0x2c8] sm:$0xf]
      %v7998 = vld [vmem:[%s6 + $0x2cc] sm:$0xf]
      %v7999 = vld [vmem:[%s6 + $0x2d0] sm:$0xf]
      %v8000 = vld [vmem:[%s6 + $0x2d4] sm:$0xf]
      %v8001 = vld [vmem:[%s6 + $0x2d8] sm:$0xf]
      %v8002 = vld [vmem:[%s6 + $0x2dc] sm:$0xf]
      %v8003 = vld [vmem:[%s6 + $0x2e0] sm:$0xf]
      %v8004 = vld [vmem:[%s6 + $0x2e4] sm:$0xf]
      %v8005 = vld [vmem:[%s6 + $0x2e8] sm:$0xf]
      %v8006 = vld [vmem:[%s6 + $0x2ec] sm:$0xf]
      %v8007 = vld [vmem:[%s6 + $0x2f0] sm:$0xf]
      %v8008 = vld [vmem:[%s6 + $0x2f4] sm:$0xf]
      %v8009 = vld [vmem:[%s6 + $0x2f8] sm:$0xf]
      %v8010 = vld [vmem:[%s6 + $0x2fc] sm:$0xf]
      %v8011 = vld [vmem:[%s6 + $0x300] sm:$0xf]
      %v8012 = vld [vmem:[%s6 + $0x304] sm:$0xf]
      %v8013 = vld [vmem:[%s6 + $0x308] sm:$0xf]
      %v8014 = vld [vmem:[%s6 + $0x30c] sm:$0xf]
      %v8015 = vld [vmem:[%s6 + $0x310] sm:$0xf]
      %v8016 = vld [vmem:[%s6 + $0x314] sm:$0xf]
      %v8017 = vld [vmem:[%s6 + $0x318] sm:$0xf]
      %v8018 = vld [vmem:[%s6 + $0x31c] sm:$0xf]
      %v8019 = vld [vmem:[%s6 + $0x320] sm:$0xf]
      %v8020 = vld [vmem:[%s6 + $0x324] sm:$0xf]
      %v8021 = vld [vmem:[%s6 + $0x328] sm:$0xf]
      %v8022 = vld [vmem:[%s6 + $0x32c] sm:$0xf]
      %v8023 = vld [vmem:[%s6 + $0x330] sm:$0xf]
      %v8024 = vld [vmem:[%s6 + $0x334] sm:$0xf]
      %v8025 = vld [vmem:[%s6 + $0x338] sm:$0xf]
      %v8026 = vld [vmem:[%s6 + $0x33c] sm:$0xf]
      %v8027 = vld [vmem:[%s6 + $0x340] sm:$0xf]
      %v8028 = vld [vmem:[%s6 + $0x344] sm:$0xf]
      %v8029 = vld [vmem:[%s6 + $0x348] sm:$0xf]
      %v8030 = vld [vmem:[%s6 + $0x34c] sm:$0xf]
      %v8031 = vld [vmem:[%s6 + $0x350] sm:$0xf]
      %v8032 = vld [vmem:[%s6 + $0x354] sm:$0xf]
      %v8033 = vld [vmem:[%s6 + $0x358] sm:$0xf]
      %v8034 = vld [vmem:[%s6 + $0x35c] sm:$0xf]
      %v8035 = vld [vmem:[%s6 + $0x360] sm:$0xf]
      %v8036 = vld [vmem:[%s6 + $0x364] sm:$0xf]
      %v8037 = vld [vmem:[%s6 + $0x368] sm:$0xf]
      %v8038 = vld [vmem:[%s6 + $0x36c] sm:$0xf]
      %v8039 = vld [vmem:[%s6 + $0x370] sm:$0xf]
      %v8040 = vld [vmem:[%s6 + $0x374] sm:$0xf]
      %v8041 = vld [vmem:[%s6 + $0x378] sm:$0xf]
      %v8042 = vld [vmem:[%s6 + $0x37c] sm:$0xf]
      %v8043 = vld [vmem:[%s6 + $0x380] sm:$0xf]
      %v8044 = vld [vmem:[%s6 + $0x384] sm:$0xf]
      %v8045 = vld [vmem:[%s6 + $0x388] sm:$0xf]
      %v8046 = vld [vmem:[%s6 + $0x38c] sm:$0xf]
      %v8047 = vld [vmem:[%s6 + $0x390] sm:$0xf]
      %v8048 = vld [vmem:[%s6 + $0x394] sm:$0xf]
      %v8049 = vld [vmem:[%s6 + $0x398] sm:$0xf]
      %v8050 = vld [vmem:[%s6 + $0x39c] sm:$0xf]
      %v8051 = vld [vmem:[%s6 + $0x3a0] sm:$0xf]
      %v8052 = vld [vmem:[%s6 + $0x3a4] sm:$0xf]
      %v8053 = vld [vmem:[%s6 + $0x3a8] sm:$0xf]
      %v8054 = vld [vmem:[%s6 + $0x3ac] sm:$0xf]
      %v8055 = vld [vmem:[%s6 + $0x3b0] sm:$0xf]
      %v8056 = vld [vmem:[%s6 + $0x3b4] sm:$0xf]
      %v8057 = vld [vmem:[%s6 + $0x3b8] sm:$0xf]
      %v8058 = vld [vmem:[%s6 + $0x3bc] sm:$0xf]
      %v8059 = vld [vmem:[%s6 + $0x3c0] sm:$0xf]
      %v8060 = vld [vmem:[%s6 + $0x3c4] sm:$0xf]
      %v8061 = vld [vmem:[%s6 + $0x3c8] sm:$0xf]
      %v8062 = vld [vmem:[%s6 + $0x3cc] sm:$0xf]
      %v8063 = vld [vmem:[%s6 + $0x3d0] sm:$0xf]
      %v8064 = vld [vmem:[%s6 + $0x3d4] sm:$0xf]
      %v8065 = vld [vmem:[%s6 + $0x3d8] sm:$0xf]
      %v8066 = vld [vmem:[%s6 + $0x3dc] sm:$0xf]
      %v8067 = vld [vmem:[%s6 + $0x3e0] sm:$0xf]
      %v8068 = vld [vmem:[%s6 + $0x3e4] sm:$0xf]
      %v8069 = vld [vmem:[%s6 + $0x3e8] sm:$0xf]
      %v8070 = vld [vmem:[%s6 + $0x3ec] sm:$0xf]
      %v8071 = vld [vmem:[%s6 + $0x3f0] sm:$0xf]
      %v8072 = vld [vmem:[%s6 + $0x3f4] sm:$0xf]
      %v8073 = vld [vmem:[%s6 + $0x3f8] sm:$0xf]
      %v8074 = vld [vmem:[%s6 + $0x3fc] sm:$0xf]
      %v8075 = vld [vmem:[%s6 + $0x400] sm:$0xf]
      %v8076 = vld [vmem:[%s6 + $0x404] sm:$0xf]
      %v8077 = vld [vmem:[%s6 + $0x408] sm:$0xf]
      %v8078 = vld [vmem:[%s6 + $0x40c] sm:$0xf]
      %v8079 = vld [vmem:[%s6 + $0x410] sm:$0xf]
      %v8080 = vld [vmem:[%s6 + $0x414] sm:$0xf]
      %v8081 = vld [vmem:[%s6 + $0x418] sm:$0xf]
      %v8082 = vld [vmem:[%s6 + $0x41c] sm:$0xf]
      %v8083 = vld [vmem:[%s6 + $0x420] sm:$0xf]
      %v8084 = vld [vmem:[%s6 + $0x424] sm:$0xf]
      %v8085 = vld [vmem:[%s6 + $0x428] sm:$0xf]
      %v8086 = vld [vmem:[%s6 + $0x42c] sm:$0xf]
      %v8087 = vld [vmem:[%s6 + $0x430] sm:$0xf]
      %v8088 = vld [vmem:[%s6 + $0x434] sm:$0xf]
      %v8089 = vld [vmem:[%s6 + $0x438] sm:$0xf]
      %v8090 = vld [vmem:[%s6 + $0x43c] sm:$0xf]
      %v8091 = vld [vmem:[%s6 + $0x440] sm:$0xf]
      %v8092 = vld [vmem:[%s6 + $0x444] sm:$0xf]
      %v8093 = vld [vmem:[%s6 + $0x448] sm:$0xf]
      %v8094 = vld [vmem:[%s6 + $0x44c] sm:$0xf]
      %v8095 = vld [vmem:[%s6 + $0x450] sm:$0xf]
      %v8096 = vld [vmem:[%s6 + $0x454] sm:$0xf]
      %v8097 = vld [vmem:[%s6 + $0x458] sm:$0xf]
      %v8098 = vld [vmem:[%s6 + $0x45c] sm:$0xf]
      %v8099 = vld [vmem:[%s6 + $0x460] sm:$0xf]
      %v8100 = vld [vmem:[%s6 + $0x464] sm:$0xf]
      %v8101 = vld [vmem:[%s6 + $0x468] sm:$0xf]
      %v8102 = vld [vmem:[%s6 + $0x46c] sm:$0xf]
      %v8103 = vld [vmem:[%s6 + $0x470] sm:$0xf]
      %v8104 = vld [vmem:[%s6 + $0x474] sm:$0xf]
      %v8105 = vld [vmem:[%s6 + $0x478] sm:$0xf]
      %v8106 = vld [vmem:[%s6 + $0x47c] sm:$0xf]
      %v8107 = vld [vmem:[%s6 + $0x480] sm:$0xf]
      %v8108 = vld [vmem:[%s6 + $0x484] sm:$0xf]
      %v8109 = vld [vmem:[%s6 + $0x488] sm:$0xf]
      %v8110 = vld [vmem:[%s6 + $0x48c] sm:$0xf]
      %v8111 = vld [vmem:[%s6 + $0x490] sm:$0xf]
      %v8112 = vld [vmem:[%s6 + $0x494] sm:$0xf]
      %v8113 = vld [vmem:[%s6 + $0x498] sm:$0xf]
      %v8114 = vld [vmem:[%s6 + $0x49c] sm:$0xf]
      %v8115 = vld [vmem:[%s6 + $0x4a0] sm:$0xf]
      %v8116 = vld [vmem:[%s6 + $0x4a4] sm:$0xf]
      %v8117 = vld [vmem:[%s6 + $0x4a8] sm:$0xf]
      %v8118 = vld [vmem:[%s6 + $0x4ac] sm:$0xf]
      %v8119 = vld [vmem:[%s6 + $0x4b0] sm:$0xf]
      %v8120 = vld [vmem:[%s6 + $0x4b4] sm:$0xf]
      %v8121 = vld [vmem:[%s6 + $0x4b8] sm:$0xf]
      %v8122 = vld [vmem:[%s6 + $0x4bc] sm:$0xf]
      %v8123 = vld [vmem:[%s6 + $0x4c0] sm:$0xf]
      %v8124 = vld [vmem:[%s6 + $0x4c4] sm:$0xf]
      %v8125 = vld [vmem:[%s6 + $0x4c8] sm:$0xf]
      %v8126 = vld [vmem:[%s6 + $0x4cc] sm:$0xf]
      %v8127 = vld [vmem:[%s6 + $0x4d0] sm:$0xf]
      %v8128 = vld [vmem:[%s6 + $0x4d4] sm:$0xf]
      %v8129 = vld [vmem:[%s6 + $0x4d8] sm:$0xf]
      %v8130 = vld [vmem:[%s6 + $0x4dc] sm:$0xf]
      %v8131 = vld [vmem:[%s6 + $0x4e0] sm:$0xf]
      %v8132 = vld [vmem:[%s6 + $0x4e4] sm:$0xf]
      %v8133 = vld [vmem:[%s6 + $0x4e8] sm:$0xf]
      %v8134 = vld [vmem:[%s6 + $0x4ec] sm:$0xf]
      %v8135 = vld [vmem:[%s6 + $0x4f0] sm:$0xf]
      %v8136 = vld [vmem:[%s6 + $0x4f4] sm:$0xf]
      %v8137 = vld [vmem:[%s6 + $0x4f8] sm:$0xf]
      %v8138 = vld [vmem:[%s6 + $0x4fc] sm:$0xf]
      %v8139 = vld [vmem:[%s6 + $0x500] sm:$0xf]
      %v8140 = vld [vmem:[%s6 + $0x504] sm:$0xf]
      %v8141 = vld [vmem:[%s6 + $0x508] sm:$0xf]
      %v8142 = vld [vmem:[%s6 + $0x50c] sm:$0xf]
      %v8143 = vld [vmem:[%s6 + $0x510] sm:$0xf]
      %v8144 = vld [vmem:[%s6 + $0x514] sm:$0xf]
      %v8145 = vld [vmem:[%s6 + $0x518] sm:$0xf]
      %v8146 = vld [vmem:[%s6 + $0x51c] sm:$0xf]
      %v8147 = vld [vmem:[%s6 + $0x520] sm:$0xf]
      %v8148 = vld [vmem:[%s6 + $0x524] sm:$0xf]
      %v8149 = vld [vmem:[%s6 + $0x528] sm:$0xf]
      %v8150 = vld [vmem:[%s6 + $0x52c] sm:$0xf]
      %v8151 = vld [vmem:[%s6 + $0x530] sm:$0xf]
      %v8152 = vld [vmem:[%s6 + $0x534] sm:$0xf]
      %v8153 = vld [vmem:[%s6 + $0x538] sm:$0xf]
      %v8154 = vld [vmem:[%s6 + $0x53c] sm:$0xf]
      %v8155 = vld [vmem:[%s6 + $0x540] sm:$0xf]
      %v8156 = vld [vmem:[%s6 + $0x544] sm:$0xf]
      %v8157 = vld [vmem:[%s6 + $0x548] sm:$0xf]
      %v8158 = vld [vmem:[%s6 + $0x54c] sm:$0xf]
      %v8159 = vld [vmem:[%s6 + $0x550] sm:$0xf]
      %v8160 = vld [vmem:[%s6 + $0x554] sm:$0xf]
      %v8161 = vld [vmem:[%s6 + $0x558] sm:$0xf]
      %v8162 = vld [vmem:[%s6 + $0x55c] sm:$0xf]
      %v8163 = vld [vmem:[%s6 + $0x560] sm:$0xf]
      %v8164 = vld [vmem:[%s6 + $0x564] sm:$0xf]
      %v8165 = vld [vmem:[%s6 + $0x568] sm:$0xf]
      %v8166 = vld [vmem:[%s6 + $0x56c] sm:$0xf]
      %v8167 = vld [vmem:[%s6 + $0x570] sm:$0xf]
      %v8168 = vld [vmem:[%s6 + $0x574] sm:$0xf]
      %v8169 = vld [vmem:[%s6 + $0x578] sm:$0xf]
      %v8170 = vld [vmem:[%s6 + $0x57c] sm:$0xf]
      %v8171 = vld [vmem:[%s6 + $0x580] sm:$0xf]
      %v8172 = vld [vmem:[%s6 + $0x584] sm:$0xf]
      %v8173 = vld [vmem:[%s6 + $0x588] sm:$0xf]
      %v8174 = vld [vmem:[%s6 + $0x58c] sm:$0xf]
      %v8175 = vld [vmem:[%s6 + $0x590] sm:$0xf]
      %v8176 = vld [vmem:[%s6 + $0x594] sm:$0xf]
      %v8177 = vld [vmem:[%s6 + $0x598] sm:$0xf]
      %v8178 = vld [vmem:[%s6 + $0x59c] sm:$0xf]
      %v8179 = vld [vmem:[%s6 + $0x5a0] sm:$0xf]
      %v8180 = vld [vmem:[%s6 + $0x5a4] sm:$0xf]
      %v8181 = vld [vmem:[%s6 + $0x5a8] sm:$0xf]
      %v8182 = vld [vmem:[%s6 + $0x5ac] sm:$0xf]
      %v8183 = vld [vmem:[%s6 + $0x5b0] sm:$0xf]
      %v8184 = vld [vmem:[%s6 + $0x5b4] sm:$0xf]
      %v8185 = vld [vmem:[%s6 + $0x5b8] sm:$0xf]
      %v8186 = vld [vmem:[%s6 + $0x5bc] sm:$0xf]
      %v8187 = vld [vmem:[%s6 + $0x5c0] sm:$0xf]
      %v8188 = vld [vmem:[%s6 + $0x5c4] sm:$0xf]
      %v8189 = vld [vmem:[%s6 + $0x5c8] sm:$0xf]
      %v8190 = vld [vmem:[%s6 + $0x5cc] sm:$0xf]
      %v8191 = vld [vmem:[%s6 + $0x5d0] sm:$0xf]
      %v8192 = vld [vmem:[%s6 + $0x5d4] sm:$0xf]
      %v8193 = vld [vmem:[%s6 + $0x5d8] sm:$0xf]
      %v8194 = vld [vmem:[%s6 + $0x5dc] sm:$0xf]
      %v8195 = vld [vmem:[%s6 + $0x5e0] sm:$0xf]
      %v8196 = vld [vmem:[%s6 + $0x5e4] sm:$0xf]
      %v8197 = vld [vmem:[%s6 + $0x5e8] sm:$0xf]
      %v8198 = vld [vmem:[%s6 + $0x5ec] sm:$0xf]
      %v8199 = vld [vmem:[%s6 + $0x5f0] sm:$0xf]
      %v8200 = vld [vmem:[%s6 + $0x5f4] sm:$0xf]
      %v8201 = vld [vmem:[%s6 + $0x5f8] sm:$0xf]
      %v8202 = vld [vmem:[%s6 + $0x5fc] sm:$0xf]
      %v8203 = vld [vmem:[%s7] sm:$0x1]
      %v8205 = vperm.slane %v8203, 0
      %v8219 = vunpack.c.l.b16 %v7807
      %v8220 = vunpack.c.h.b16 %v7807
      %v8221 = vunpack.c.l.b16 %v7808
      %v8222 = vunpack.c.h.b16 %v7808
      %v8223 = vunpack.c.l.b16 %v7809
      %v8224 = vunpack.c.h.b16 %v7809
      %v8225 = vunpack.c.l.b16 %v7810
      %v8226 = vunpack.c.h.b16 %v7810
      %v8227 = vunpack.c.l.b16 %v7811
      %v8228 = vunpack.c.h.b16 %v7811
      %v8229 = vunpack.c.l.b16 %v7812
      %v8230 = vunpack.c.h.b16 %v7812
      %v8231 = vunpack.c.l.b16 %v7813
      %v8232 = vunpack.c.h.b16 %v7813
      %v8233 = vunpack.c.l.b16 %v7814
      %v8234 = vunpack.c.h.b16 %v7814
      %v8235 = vunpack.c.l.b16 %v7815
      %v8236 = vunpack.c.h.b16 %v7815
      %v8237 = vunpack.c.l.b16 %v7816
      %v8238 = vunpack.c.h.b16 %v7816
      %v8239 = vunpack.c.l.b16 %v7817
      %v8240 = vunpack.c.h.b16 %v7817
      %v8241 = vunpack.c.l.b16 %v7818
      %v8242 = vunpack.c.h.b16 %v7818
      %v8243 = vpack.c.b16 %v8219, %v8219
      %v8244 = vpack.c.b16 %v8220, %v8220
      %v8245 = vpack.c.b16 %v8221, %v8221
      %v8246 = vpack.c.b16 %v8222, %v8222
      %v8247 = vpack.c.b16 %v8223, %v8223
      %v8248 = vpack.c.b16 %v8224, %v8224
      %v8249 = vpack.c.b16 %v8225, %v8225
      %v8250 = vpack.c.b16 %v8226, %v8226
      %v8251 = vpack.c.b16 %v8227, %v8227
      %v8252 = vpack.c.b16 %v8228, %v8228
      %v8253 = vpack.c.b16 %v8229, %v8229
      %v8254 = vpack.c.b16 %v8230, %v8230
      %v8255 = vpack.c.b16 %v8231, %v8231
      %v8256 = vpack.c.b16 %v8232, %v8232
      %v8257 = vpack.c.b16 %v8233, %v8233
      %v8258 = vpack.c.b16 %v8234, %v8234
      %v8259 = vpack.c.b16 %v8235, %v8235
      %v8260 = vpack.c.b16 %v8236, %v8236
      %v8261 = vpack.c.b16 %v8237, %v8237
      %v8262 = vpack.c.b16 %v8238, %v8238
      %v8263 = vpack.c.b16 %v8239, %v8239
      %v8264 = vpack.c.b16 %v8240, %v8240
      %v8265 = vpack.c.b16 %v8241, %v8241
      %v8266 = vpack.c.b16 %v8242, %v8242
      %v8675 = vunpack.c.l.b16 %v7819
      %v8676 = vunpack.c.l.b16 %v7820
      %v8677 = vunpack.c.l.b16 %v7821
      %v8678 = vunpack.c.l.b16 %v7822
      %v8679 = vunpack.c.l.b16 %v7823
      %v8680 = vunpack.c.l.b16 %v7824
      %v8681 = vunpack.c.l.b16 %v7825
      %v8682 = vunpack.c.l.b16 %v7826
      %v8683 = vunpack.c.l.b16 %v7827
      %v8684 = vunpack.c.l.b16 %v7828
      %v8685 = vunpack.c.l.b16 %v7829
      %v8686 = vunpack.c.l.b16 %v7830
      %v8687 = vunpack.c.l.b16 %v7831
      %v8688 = vunpack.c.l.b16 %v7832
      %v8689 = vunpack.c.l.b16 %v7833
      %v8690 = vunpack.c.l.b16 %v7834
      %v8691 = vunpack.c.l.b16 %v7835
      %v8692 = vunpack.c.l.b16 %v7836
      %v8693 = vunpack.c.l.b16 %v7837
      %v8694 = vunpack.c.l.b16 %v7838
      %v8695 = vunpack.c.l.b16 %v7839
      %v8696 = vunpack.c.l.b16 %v7840
      %v8697 = vunpack.c.l.b16 %v7841
      %v8698 = vunpack.c.l.b16 %v7842
      %v8699 = vunpack.c.l.b16 %v7843
      %v8700 = vunpack.c.l.b16 %v7844
      %v8701 = vunpack.c.l.b16 %v7845
      %v8702 = vunpack.c.l.b16 %v7846
      %v8703 = vunpack.c.l.b16 %v7847
      %v8704 = vunpack.c.l.b16 %v7848
      %v8705 = vunpack.c.l.b16 %v7849
      %v8706 = vunpack.c.l.b16 %v7850
      %v8707 = vunpack.c.l.b16 %v7851
      %v8708 = vunpack.c.l.b16 %v7852
      %v8709 = vunpack.c.l.b16 %v7853
      %v8710 = vunpack.c.l.b16 %v7854
      %v8711 = vunpack.c.l.b16 %v7855
      %v8712 = vunpack.c.l.b16 %v7856
      %v8713 = vunpack.c.l.b16 %v7857
      %v8714 = vunpack.c.l.b16 %v7858
      %v8715 = vunpack.c.l.b16 %v7859
      %v8716 = vunpack.c.l.b16 %v7860
      %v8717 = vunpack.c.l.b16 %v7861
      %v8718 = vunpack.c.l.b16 %v7862
      %v8719 = vunpack.c.l.b16 %v7863
      %v8720 = vunpack.c.l.b16 %v7864
      %v8721 = vunpack.c.l.b16 %v7865
      %v8722 = vunpack.c.l.b16 %v7866
      %v8723 = vunpack.c.l.b16 %v7867
      %v8724 = vunpack.c.l.b16 %v7868
      %v8725 = vunpack.c.l.b16 %v7869
      %v8726 = vunpack.c.l.b16 %v7870
      %v8727 = vunpack.c.l.b16 %v7871
      %v8728 = vunpack.c.l.b16 %v7872
      %v8729 = vunpack.c.l.b16 %v7873
      %v8730 = vunpack.c.l.b16 %v7874
      %v8731 = vunpack.c.l.b16 %v7875
      %v8732 = vunpack.c.l.b16 %v7876
      %v8733 = vunpack.c.l.b16 %v7877
      %v8734 = vunpack.c.l.b16 %v7878
      %v8735 = vunpack.c.l.b16 %v7879
      %v8736 = vunpack.c.l.b16 %v7880
      %v8737 = vunpack.c.l.b16 %v7881
      %v8738 = vunpack.c.l.b16 %v7882
      %v8739 = vunpack.c.l.b16 %v7883
      %v8740 = vunpack.c.l.b16 %v7884
      %v8741 = vunpack.c.l.b16 %v7885
      %v8742 = vunpack.c.l.b16 %v7886
      %v8743 = vunpack.c.l.b16 %v7887
      %v8744 = vunpack.c.l.b16 %v7888
      %v8745 = vunpack.c.l.b16 %v7889
      %v8746 = vunpack.c.l.b16 %v7890
      %v8747 = vunpack.c.l.b16 %v7891
      %v8748 = vunpack.c.l.b16 %v7892
      %v8749 = vunpack.c.l.b16 %v7893
      %v8750 = vunpack.c.l.b16 %v7894
      %v8751 = vunpack.c.l.b16 %v7895
      %v8752 = vunpack.c.l.b16 %v7896
      %v8753 = vunpack.c.l.b16 %v7897
      %v8754 = vunpack.c.l.b16 %v7898
      %v8755 = vunpack.c.l.b16 %v7899
      %v8756 = vunpack.c.l.b16 %v7900
      %v8757 = vunpack.c.l.b16 %v7901
      %v8758 = vunpack.c.l.b16 %v7902
      %v8759 = vunpack.c.l.b16 %v7903
      %v8760 = vunpack.c.l.b16 %v7904
      %v8761 = vunpack.c.l.b16 %v7905
      %v8762 = vunpack.c.l.b16 %v7906
      %v8763 = vunpack.c.l.b16 %v7907
      %v8764 = vunpack.c.l.b16 %v7908
      %v8765 = vunpack.c.l.b16 %v7909
      %v8766 = vunpack.c.l.b16 %v7910
      %v8767 = vunpack.c.l.b16 %v7911
      %v8768 = vunpack.c.l.b16 %v7912
      %v8769 = vunpack.c.l.b16 %v7913
      %v8770 = vunpack.c.l.b16 %v7914
      %v8771 = vunpack.c.l.b16 %v7915
      %v8772 = vunpack.c.l.b16 %v7916
      %v8773 = vunpack.c.l.b16 %v7917
      %v8774 = vunpack.c.l.b16 %v7918
      %v8775 = vunpack.c.l.b16 %v7919
      %v8776 = vunpack.c.l.b16 %v7920
      %v8777 = vunpack.c.l.b16 %v7921
      %v8778 = vunpack.c.l.b16 %v7922
      %v8779 = vunpack.c.l.b16 %v7923
      %v8780 = vunpack.c.l.b16 %v7924
      %v8781 = vunpack.c.l.b16 %v7925
      %v8782 = vunpack.c.l.b16 %v7926
      %v8783 = vunpack.c.l.b16 %v7927
      %v8784 = vunpack.c.l.b16 %v7928
      %v8785 = vunpack.c.l.b16 %v7929
      %v8786 = vunpack.c.l.b16 %v7930
      %v8787 = vunpack.c.l.b16 %v7931
      %v8788 = vunpack.c.l.b16 %v7932
      %v8789 = vunpack.c.l.b16 %v7933
      %v8790 = vunpack.c.l.b16 %v7934
      %v8791 = vunpack.c.l.b16 %v7935
      %v8792 = vunpack.c.l.b16 %v7936
      %v8793 = vunpack.c.l.b16 %v7937
      %v8794 = vunpack.c.l.b16 %v7938
      %v8795 = vunpack.c.l.b16 %v7939
      %v8796 = vunpack.c.l.b16 %v7940
      %v8797 = vunpack.c.l.b16 %v7941
      %v8798 = vunpack.c.l.b16 %v7942
      %v8799 = vunpack.c.l.b16 %v7943
      %v8800 = vunpack.c.l.b16 %v7944
      %v8801 = vunpack.c.l.b16 %v7945
      %v8802 = vunpack.c.l.b16 %v7946
      %v8803 = vunpack.c.l.b16 %v7947
      %v8804 = vunpack.c.l.b16 %v7948
      %v8805 = vunpack.c.l.b16 %v7949
      %v8806 = vunpack.c.l.b16 %v7950
      %v8807 = vunpack.c.l.b16 %v7951
      %v8808 = vunpack.c.l.b16 %v7952
      %v8809 = vunpack.c.l.b16 %v7953
      %v8810 = vunpack.c.l.b16 %v7954
      %v8811 = vunpack.c.l.b16 %v7955
      %v8812 = vunpack.c.l.b16 %v7956
      %v8813 = vunpack.c.l.b16 %v7957
      %v8814 = vunpack.c.l.b16 %v7958
      %v8815 = vunpack.c.l.b16 %v7959
      %v8816 = vunpack.c.l.b16 %v7960
      %v8817 = vunpack.c.l.b16 %v7961
      %v8818 = vunpack.c.l.b16 %v7962
      %v8819 = vunpack.c.l.b16 %v7963
      %v8820 = vunpack.c.l.b16 %v7964
      %v8821 = vunpack.c.l.b16 %v7965
      %v8822 = vunpack.c.l.b16 %v7966
      %v8823 = vunpack.c.l.b16 %v7967
      %v8824 = vunpack.c.l.b16 %v7968
      %v8825 = vunpack.c.l.b16 %v7969
      %v8826 = vunpack.c.l.b16 %v7970
      %v8827 = vunpack.c.l.b16 %v7971
      %v8828 = vunpack.c.l.b16 %v7972
      %v8829 = vunpack.c.l.b16 %v7973
      %v8830 = vunpack.c.l.b16 %v7974
      %v8831 = vunpack.c.l.b16 %v7975
      %v8832 = vunpack.c.l.b16 %v7976
      %v8833 = vunpack.c.l.b16 %v7977
      %v8834 = vunpack.c.l.b16 %v7978
      %v8835 = vunpack.c.l.b16 %v7979
      %v8836 = vunpack.c.l.b16 %v7980
      %v8837 = vunpack.c.l.b16 %v7981
      %v8838 = vunpack.c.l.b16 %v7982
      %v8839 = vunpack.c.l.b16 %v7983
      %v8840 = vunpack.c.l.b16 %v7984
      %v8841 = vunpack.c.l.b16 %v7985
      %v8842 = vunpack.c.l.b16 %v7986
      %v8843 = vunpack.c.l.b16 %v7987
      %v8844 = vunpack.c.l.b16 %v7988
      %v8845 = vunpack.c.l.b16 %v7989
      %v8846 = vunpack.c.l.b16 %v7990
      %v8847 = vunpack.c.l.b16 %v7991
      %v8848 = vunpack.c.l.b16 %v7992
      %v8849 = vunpack.c.l.b16 %v7993
      %v8850 = vunpack.c.l.b16 %v7994
      %v8851 = vunpack.c.l.b16 %v7995
      %v8852 = vunpack.c.l.b16 %v7996
      %v8853 = vunpack.c.l.b16 %v7997
      %v8854 = vunpack.c.l.b16 %v7998
      %v8855 = vunpack.c.l.b16 %v7999
      %v8856 = vunpack.c.l.b16 %v8000
      %v8857 = vunpack.c.l.b16 %v8001
      %v8858 = vunpack.c.l.b16 %v8002
      %v8859 = vunpack.c.l.b16 %v8003
      %v8860 = vunpack.c.l.b16 %v8004
      %v8861 = vunpack.c.l.b16 %v8005
      %v8862 = vunpack.c.l.b16 %v8006
      %v8863 = vunpack.c.l.b16 %v8007
      %v8864 = vunpack.c.l.b16 %v8008
      %v8865 = vunpack.c.l.b16 %v8009
      %v8866 = vunpack.c.l.b16 %v8010
      %v8867 = vunpack.c.l.b16 %v8011
      %v8868 = vunpack.c.l.b16 %v8012
      %v8869 = vunpack.c.l.b16 %v8013
      %v8870 = vunpack.c.l.b16 %v8014
      %v8871 = vunpack.c.l.b16 %v8015
      %v8872 = vunpack.c.l.b16 %v8016
      %v8873 = vunpack.c.l.b16 %v8017
      %v8874 = vunpack.c.l.b16 %v8018
      %v8875 = vunpack.c.l.b16 %v8019
      %v8876 = vunpack.c.l.b16 %v8020
      %v8877 = vunpack.c.l.b16 %v8021
      %v8878 = vunpack.c.l.b16 %v8022
      %v8879 = vunpack.c.l.b16 %v8023
      %v8880 = vunpack.c.l.b16 %v8024
      %v8881 = vunpack.c.l.b16 %v8025
      %v8882 = vunpack.c.l.b16 %v8026
      %v8883 = vunpack.c.l.b16 %v8027
      %v8884 = vunpack.c.l.b16 %v8028
      %v8885 = vunpack.c.l.b16 %v8029
      %v8886 = vunpack.c.l.b16 %v8030
      %v8887 = vunpack.c.l.b16 %v8031
      %v8888 = vunpack.c.l.b16 %v8032
      %v8889 = vunpack.c.l.b16 %v8033
      %v8890 = vunpack.c.l.b16 %v8034
      %v8891 = vunpack.c.l.b16 %v8035
      %v8892 = vunpack.c.l.b16 %v8036
      %v8893 = vunpack.c.l.b16 %v8037
      %v8894 = vunpack.c.l.b16 %v8038
      %v8895 = vunpack.c.l.b16 %v8039
      %v8896 = vunpack.c.l.b16 %v8040
      %v8897 = vunpack.c.l.b16 %v8041
      %v8898 = vunpack.c.l.b16 %v8042
      %v8899 = vunpack.c.l.b16 %v8043
      %v8900 = vunpack.c.l.b16 %v8044
      %v8901 = vunpack.c.l.b16 %v8045
      %v8902 = vunpack.c.l.b16 %v8046
      %v8903 = vunpack.c.l.b16 %v8047
      %v8904 = vunpack.c.l.b16 %v8048
      %v8905 = vunpack.c.l.b16 %v8049
      %v8906 = vunpack.c.l.b16 %v8050
      %v8907 = vunpack.c.l.b16 %v8051
      %v8908 = vunpack.c.l.b16 %v8052
      %v8909 = vunpack.c.l.b16 %v8053
      %v8910 = vunpack.c.l.b16 %v8054
      %v8911 = vunpack.c.l.b16 %v8055
      %v8912 = vunpack.c.l.b16 %v8056
      %v8913 = vunpack.c.l.b16 %v8057
      %v8914 = vunpack.c.l.b16 %v8058
      %v8915 = vunpack.c.l.b16 %v8059
      %v8916 = vunpack.c.l.b16 %v8060
      %v8917 = vunpack.c.l.b16 %v8061
      %v8918 = vunpack.c.l.b16 %v8062
      %v8919 = vunpack.c.l.b16 %v8063
      %v8920 = vunpack.c.l.b16 %v8064
      %v8921 = vunpack.c.l.b16 %v8065
      %v8922 = vunpack.c.l.b16 %v8066
      %v8923 = vunpack.c.l.b16 %v8067
      %v8924 = vunpack.c.l.b16 %v8068
      %v8925 = vunpack.c.l.b16 %v8069
      %v8926 = vunpack.c.l.b16 %v8070
      %v8927 = vunpack.c.l.b16 %v8071
      %v8928 = vunpack.c.l.b16 %v8072
      %v8929 = vunpack.c.l.b16 %v8073
      %v8930 = vunpack.c.l.b16 %v8074
      %v8931 = vunpack.c.l.b16 %v8075
      %v8932 = vunpack.c.l.b16 %v8076
      %v8933 = vunpack.c.l.b16 %v8077
      %v8934 = vunpack.c.l.b16 %v8078
      %v8935 = vunpack.c.l.b16 %v8079
      %v8936 = vunpack.c.l.b16 %v8080
      %v8937 = vunpack.c.l.b16 %v8081
      %v8938 = vunpack.c.l.b16 %v8082
      %v8939 = vunpack.c.l.b16 %v8083
      %v8940 = vunpack.c.l.b16 %v8084
      %v8941 = vunpack.c.l.b16 %v8085
      %v8942 = vunpack.c.l.b16 %v8086
      %v8943 = vunpack.c.l.b16 %v8087
      %v8944 = vunpack.c.l.b16 %v8088
      %v8945 = vunpack.c.l.b16 %v8089
      %v8946 = vunpack.c.l.b16 %v8090
      %v8947 = vunpack.c.l.b16 %v8091
      %v8948 = vunpack.c.l.b16 %v8092
      %v8949 = vunpack.c.l.b16 %v8093
      %v8950 = vunpack.c.l.b16 %v8094
      %v8951 = vunpack.c.l.b16 %v8095
      %v8952 = vunpack.c.l.b16 %v8096
      %v8953 = vunpack.c.l.b16 %v8097
      %v8954 = vunpack.c.l.b16 %v8098
      %v8955 = vunpack.c.l.b16 %v8099
      %v8956 = vunpack.c.l.b16 %v8100
      %v8957 = vunpack.c.l.b16 %v8101
      %v8958 = vunpack.c.l.b16 %v8102
      %v8959 = vunpack.c.l.b16 %v8103
      %v8960 = vunpack.c.l.b16 %v8104
      %v8961 = vunpack.c.l.b16 %v8105
      %v8962 = vunpack.c.l.b16 %v8106
      %v8963 = vunpack.c.l.b16 %v8107
      %v8964 = vunpack.c.l.b16 %v8108
      %v8965 = vunpack.c.l.b16 %v8109
      %v8966 = vunpack.c.l.b16 %v8110
      %v8967 = vunpack.c.l.b16 %v8111
      %v8968 = vunpack.c.l.b16 %v8112
      %v8969 = vunpack.c.l.b16 %v8113
      %v8970 = vunpack.c.l.b16 %v8114
      %v8971 = vunpack.c.l.b16 %v8115
      %v8972 = vunpack.c.l.b16 %v8116
      %v8973 = vunpack.c.l.b16 %v8117
      %v8974 = vunpack.c.l.b16 %v8118
      %v8975 = vunpack.c.l.b16 %v8119
      %v8976 = vunpack.c.l.b16 %v8120
      %v8977 = vunpack.c.l.b16 %v8121
      %v8978 = vunpack.c.l.b16 %v8122
      %v8979 = vunpack.c.l.b16 %v8123
      %v8980 = vunpack.c.l.b16 %v8124
      %v8981 = vunpack.c.l.b16 %v8125
      %v8982 = vunpack.c.l.b16 %v8126
      %v8983 = vunpack.c.l.b16 %v8127
      %v8984 = vunpack.c.l.b16 %v8128
      %v8985 = vunpack.c.l.b16 %v8129
      %v8986 = vunpack.c.l.b16 %v8130
      %v8987 = vunpack.c.l.b16 %v8131
      %v8988 = vunpack.c.l.b16 %v8132
      %v8989 = vunpack.c.l.b16 %v8133
      %v8990 = vunpack.c.l.b16 %v8134
      %v8991 = vunpack.c.l.b16 %v8135
      %v8992 = vunpack.c.l.b16 %v8136
      %v8993 = vunpack.c.l.b16 %v8137
      %v8994 = vunpack.c.l.b16 %v8138
      %v8995 = vunpack.c.l.b16 %v8139
      %v8996 = vunpack.c.l.b16 %v8140
      %v8997 = vunpack.c.l.b16 %v8141
      %v8998 = vunpack.c.l.b16 %v8142
      %v8999 = vunpack.c.l.b16 %v8143
      %v9000 = vunpack.c.l.b16 %v8144
      %v9001 = vunpack.c.l.b16 %v8145
      %v9002 = vunpack.c.l.b16 %v8146
      %v9003 = vunpack.c.l.b16 %v8147
      %v9004 = vunpack.c.l.b16 %v8148
      %v9005 = vunpack.c.l.b16 %v8149
      %v9006 = vunpack.c.l.b16 %v8150
      %v9007 = vunpack.c.l.b16 %v8151
      %v9008 = vunpack.c.l.b16 %v8152
      %v9009 = vunpack.c.l.b16 %v8153
      %v9010 = vunpack.c.l.b16 %v8154
      %v9011 = vunpack.c.l.b16 %v8155
      %v9012 = vunpack.c.l.b16 %v8156
      %v9013 = vunpack.c.l.b16 %v8157
      %v9014 = vunpack.c.l.b16 %v8158
      %v9015 = vunpack.c.l.b16 %v8159
      %v9016 = vunpack.c.l.b16 %v8160
      %v9017 = vunpack.c.l.b16 %v8161
      %v9018 = vunpack.c.l.b16 %v8162
      %v9019 = vunpack.c.l.b16 %v8163
      %v9020 = vunpack.c.l.b16 %v8164
      %v9021 = vunpack.c.l.b16 %v8165
      %v9022 = vunpack.c.l.b16 %v8166
      %v9023 = vunpack.c.l.b16 %v8167
      %v9024 = vunpack.c.l.b16 %v8168
      %v9025 = vunpack.c.l.b16 %v8169
      %v9026 = vunpack.c.l.b16 %v8170
      %v9027 = vunpack.c.l.b16 %v8171
      %v9028 = vunpack.c.l.b16 %v8172
      %v9029 = vunpack.c.l.b16 %v8173
      %v9030 = vunpack.c.l.b16 %v8174
      %v9031 = vunpack.c.l.b16 %v8175
      %v9032 = vunpack.c.l.b16 %v8176
      %v9033 = vunpack.c.l.b16 %v8177
      %v9034 = vunpack.c.l.b16 %v8178
      %v9035 = vunpack.c.l.b16 %v8179
      %v9036 = vunpack.c.l.b16 %v8180
      %v9037 = vunpack.c.l.b16 %v8181
      %v9038 = vunpack.c.l.b16 %v8182
      %v9039 = vunpack.c.l.b16 %v8183
      %v9040 = vunpack.c.l.b16 %v8184
      %v9041 = vunpack.c.l.b16 %v8185
      %v9042 = vunpack.c.l.b16 %v8186
      %v9043 = vunpack.c.l.b16 %v8187
      %v9044 = vunpack.c.l.b16 %v8188
      %v9045 = vunpack.c.l.b16 %v8189
      %v9046 = vunpack.c.l.b16 %v8190
      %v9047 = vunpack.c.l.b16 %v8191
      %v9048 = vunpack.c.l.b16 %v8192
      %v9049 = vunpack.c.l.b16 %v8193
      %v9050 = vunpack.c.l.b16 %v8194
      %v9051 = vunpack.c.l.b16 %v8195
      %v9052 = vunpack.c.l.b16 %v8196
      %v9053 = vunpack.c.l.b16 %v8197
      %v9054 = vunpack.c.l.b16 %v8198
      %v9055 = vunpack.c.l.b16 %v8199
      %v9056 = vunpack.c.l.b16 %v8200
      %v9057 = vunpack.c.l.b16 %v8201
      %v9058 = vunpack.c.l.b16 %v8202
      %v9059 = vpack.c.b16 %v8676, %v8675
      %v9060 = vpack.c.b16 %v8678, %v8677
      %v9061 = vpack.c.b16 %v8680, %v8679
      %v9062 = vpack.c.b16 %v8682, %v8681
      %v9063 = vpack.c.b16 %v8684, %v8683
      %v9064 = vpack.c.b16 %v8686, %v8685
      %v9065 = vpack.c.b16 %v8688, %v8687
      %v9066 = vpack.c.b16 %v8690, %v8689
      %v9067 = vpack.c.b16 %v8692, %v8691
      %v9068 = vpack.c.b16 %v8694, %v8693
      %v9069 = vpack.c.b16 %v8696, %v8695
      %v9070 = vpack.c.b16 %v8698, %v8697
      %v9071 = vpack.c.b16 %v8700, %v8699
      %v9072 = vpack.c.b16 %v8702, %v8701
      %v9073 = vpack.c.b16 %v8704, %v8703
      %v9074 = vpack.c.b16 %v8706, %v8705
      %v9075 = vpack.c.b16 %v8708, %v8707
      %v9076 = vpack.c.b16 %v8710, %v8709
      %v9077 = vpack.c.b16 %v8712, %v8711
      %v9078 = vpack.c.b16 %v8714, %v8713
      %v9079 = vpack.c.b16 %v8716, %v8715
      %v9080 = vpack.c.b16 %v8718, %v8717
      %v9081 = vpack.c.b16 %v8720, %v8719
      %v9082 = vpack.c.b16 %v8722, %v8721
      %v9083 = vpack.c.b16 %v8724, %v8723
      %v9084 = vpack.c.b16 %v8726, %v8725
      %v9085 = vpack.c.b16 %v8728, %v8727
      %v9086 = vpack.c.b16 %v8730, %v8729
      %v9087 = vpack.c.b16 %v8732, %v8731
      %v9088 = vpack.c.b16 %v8734, %v8733
      %v9089 = vpack.c.b16 %v8736, %v8735
      %v9090 = vpack.c.b16 %v8738, %v8737
      %v9091 = vpack.c.b16 %v8740, %v8739
      %v9092 = vpack.c.b16 %v8742, %v8741
      %v9093 = vpack.c.b16 %v8744, %v8743
      %v9094 = vpack.c.b16 %v8746, %v8745
      %v9095 = vpack.c.b16 %v8748, %v8747
      %v9096 = vpack.c.b16 %v8750, %v8749
      %v9097 = vpack.c.b16 %v8752, %v8751
      %v9098 = vpack.c.b16 %v8754, %v8753
      %v9099 = vpack.c.b16 %v8756, %v8755
      %v9100 = vpack.c.b16 %v8758, %v8757
      %v9101 = vpack.c.b16 %v8760, %v8759
      %v9102 = vpack.c.b16 %v8762, %v8761
      %v9103 = vpack.c.b16 %v8764, %v8763
      %v9104 = vpack.c.b16 %v8766, %v8765
      %v9105 = vpack.c.b16 %v8768, %v8767
      %v9106 = vpack.c.b16 %v8770, %v8769
      %v9107 = vpack.c.b16 %v8772, %v8771
      %v9108 = vpack.c.b16 %v8774, %v8773
      %v9109 = vpack.c.b16 %v8776, %v8775
      %v9110 = vpack.c.b16 %v8778, %v8777
      %v9111 = vpack.c.b16 %v8780, %v8779
      %v9112 = vpack.c.b16 %v8782, %v8781
      %v9113 = vpack.c.b16 %v8784, %v8783
      %v9114 = vpack.c.b16 %v8786, %v8785
      %v9115 = vpack.c.b16 %v8788, %v8787
      %v9116 = vpack.c.b16 %v8790, %v8789
      %v9117 = vpack.c.b16 %v8792, %v8791
      %v9118 = vpack.c.b16 %v8794, %v8793
      %v9119 = vpack.c.b16 %v8796, %v8795
      %v9120 = vpack.c.b16 %v8798, %v8797
      %v9121 = vpack.c.b16 %v8800, %v8799
      %v9122 = vpack.c.b16 %v8802, %v8801
      %v9123 = vpack.c.b16 %v8804, %v8803
      %v9124 = vpack.c.b16 %v8806, %v8805
      %v9125 = vpack.c.b16 %v8808, %v8807
      %v9126 = vpack.c.b16 %v8810, %v8809
      %v9127 = vpack.c.b16 %v8812, %v8811
      %v9128 = vpack.c.b16 %v8814, %v8813
      %v9129 = vpack.c.b16 %v8816, %v8815
      %v9130 = vpack.c.b16 %v8818, %v8817
      %v9131 = vpack.c.b16 %v8820, %v8819
      %v9132 = vpack.c.b16 %v8822, %v8821
      %v9133 = vpack.c.b16 %v8824, %v8823
      %v9134 = vpack.c.b16 %v8826, %v8825
      %v9135 = vpack.c.b16 %v8828, %v8827
      %v9136 = vpack.c.b16 %v8830, %v8829
      %v9137 = vpack.c.b16 %v8832, %v8831
      %v9138 = vpack.c.b16 %v8834, %v8833
      %v9139 = vpack.c.b16 %v8836, %v8835
      %v9140 = vpack.c.b16 %v8838, %v8837
      %v9141 = vpack.c.b16 %v8840, %v8839
      %v9142 = vpack.c.b16 %v8842, %v8841
      %v9143 = vpack.c.b16 %v8844, %v8843
      %v9144 = vpack.c.b16 %v8846, %v8845
      %v9145 = vpack.c.b16 %v8848, %v8847
      %v9146 = vpack.c.b16 %v8850, %v8849
      %v9147 = vpack.c.b16 %v8852, %v8851
      %v9148 = vpack.c.b16 %v8854, %v8853
      %v9149 = vpack.c.b16 %v8856, %v8855
      %v9150 = vpack.c.b16 %v8858, %v8857
      %v9151 = vpack.c.b16 %v8860, %v8859
      %v9152 = vpack.c.b16 %v8862, %v8861
      %v9153 = vpack.c.b16 %v8864, %v8863
      %v9154 = vpack.c.b16 %v8866, %v8865
      %v9155 = vpack.c.b16 %v8868, %v8867
      %v9156 = vpack.c.b16 %v8870, %v8869
      %v9157 = vpack.c.b16 %v8872, %v8871
      %v9158 = vpack.c.b16 %v8874, %v8873
      %v9159 = vpack.c.b16 %v8876, %v8875
      %v9160 = vpack.c.b16 %v8878, %v8877
      %v9161 = vpack.c.b16 %v8880, %v8879
      %v9162 = vpack.c.b16 %v8882, %v8881
      %v9163 = vpack.c.b16 %v8884, %v8883
      %v9164 = vpack.c.b16 %v8886, %v8885
      %v9165 = vpack.c.b16 %v8888, %v8887
      %v9166 = vpack.c.b16 %v8890, %v8889
      %v9167 = vpack.c.b16 %v8892, %v8891
      %v9168 = vpack.c.b16 %v8894, %v8893
      %v9169 = vpack.c.b16 %v8896, %v8895
      %v9170 = vpack.c.b16 %v8898, %v8897
      %v9171 = vpack.c.b16 %v8900, %v8899
      %v9172 = vpack.c.b16 %v8902, %v8901
      %v9173 = vpack.c.b16 %v8904, %v8903
      %v9174 = vpack.c.b16 %v8906, %v8905
      %v9175 = vpack.c.b16 %v8908, %v8907
      %v9176 = vpack.c.b16 %v8910, %v8909
      %v9177 = vpack.c.b16 %v8912, %v8911
      %v9178 = vpack.c.b16 %v8914, %v8913
      %v9179 = vpack.c.b16 %v8916, %v8915
      %v9180 = vpack.c.b16 %v8918, %v8917
      %v9181 = vpack.c.b16 %v8920, %v8919
      %v9182 = vpack.c.b16 %v8922, %v8921
      %v9183 = vpack.c.b16 %v8924, %v8923
      %v9184 = vpack.c.b16 %v8926, %v8925
      %v9185 = vpack.c.b16 %v8928, %v8927
      %v9186 = vpack.c.b16 %v8930, %v8929
      %v9187 = vpack.c.b16 %v8932, %v8931
      %v9188 = vpack.c.b16 %v8934, %v8933
      %v9189 = vpack.c.b16 %v8936, %v8935
      %v9190 = vpack.c.b16 %v8938, %v8937
      %v9191 = vpack.c.b16 %v8940, %v8939
      %v9192 = vpack.c.b16 %v8942, %v8941
      %v9193 = vpack.c.b16 %v8944, %v8943
      %v9194 = vpack.c.b16 %v8946, %v8945
      %v9195 = vpack.c.b16 %v8948, %v8947
      %v9196 = vpack.c.b16 %v8950, %v8949
      %v9197 = vpack.c.b16 %v8952, %v8951
      %v9198 = vpack.c.b16 %v8954, %v8953
      %v9199 = vpack.c.b16 %v8956, %v8955
      %v9200 = vpack.c.b16 %v8958, %v8957
      %v9201 = vpack.c.b16 %v8960, %v8959
      %v9202 = vpack.c.b16 %v8962, %v8961
      %v9203 = vpack.c.b16 %v8964, %v8963
      %v9204 = vpack.c.b16 %v8966, %v8965
      %v9205 = vpack.c.b16 %v8968, %v8967
      %v9206 = vpack.c.b16 %v8970, %v8969
      %v9207 = vpack.c.b16 %v8972, %v8971
      %v9208 = vpack.c.b16 %v8974, %v8973
      %v9209 = vpack.c.b16 %v8976, %v8975
      %v9210 = vpack.c.b16 %v8978, %v8977
      %v9211 = vpack.c.b16 %v8980, %v8979
      %v9212 = vpack.c.b16 %v8982, %v8981
      %v9213 = vpack.c.b16 %v8984, %v8983
      %v9214 = vpack.c.b16 %v8986, %v8985
      %v9215 = vpack.c.b16 %v8988, %v8987
      %v9216 = vpack.c.b16 %v8990, %v8989
      %v9217 = vpack.c.b16 %v8992, %v8991
      %v9218 = vpack.c.b16 %v8994, %v8993
      %v9219 = vpack.c.b16 %v8996, %v8995
      %v9220 = vpack.c.b16 %v8998, %v8997
      %v9221 = vpack.c.b16 %v9000, %v8999
      %v9222 = vpack.c.b16 %v9002, %v9001
      %v9223 = vpack.c.b16 %v9004, %v9003
      %v9224 = vpack.c.b16 %v9006, %v9005
      %v9225 = vpack.c.b16 %v9008, %v9007
      %v9226 = vpack.c.b16 %v9010, %v9009
      %v9227 = vpack.c.b16 %v9012, %v9011
      %v9228 = vpack.c.b16 %v9014, %v9013
      %v9229 = vpack.c.b16 %v9016, %v9015
      %v9230 = vpack.c.b16 %v9018, %v9017
      %v9231 = vpack.c.b16 %v9020, %v9019
      %v9232 = vpack.c.b16 %v9022, %v9021
      %v9233 = vpack.c.b16 %v9024, %v9023
      %v9234 = vpack.c.b16 %v9026, %v9025
      %v9235 = vpack.c.b16 %v9028, %v9027
      %v9236 = vpack.c.b16 %v9030, %v9029
      %v9237 = vpack.c.b16 %v9032, %v9031
      %v9238 = vpack.c.b16 %v9034, %v9033
      %v9239 = vpack.c.b16 %v9036, %v9035
      %v9240 = vpack.c.b16 %v9038, %v9037
      %v9241 = vpack.c.b16 %v9040, %v9039
      %v9242 = vpack.c.b16 %v9042, %v9041
      %v9243 = vpack.c.b16 %v9044, %v9043
      %v9244 = vpack.c.b16 %v9046, %v9045
      %v9245 = vpack.c.b16 %v9048, %v9047
      %v9246 = vpack.c.b16 %v9050, %v9049
      %v9247 = vpack.c.b16 %v9052, %v9051
      %v9248 = vpack.c.b16 %v9054, %v9053
      %v9249 = vpack.c.b16 %v9056, %v9055
      %v9250 = vpack.c.b16 %v9058, %v9057
      %9443 = vmatpush.bf16.msra.mxu0 %v9066
      %9444 = vmatpush.bf16.msra.mxu0 %v9065
      %9445 = vmatpush.bf16.msra.mxu0 %v9064
      %9446 = vmatpush.bf16.msra.mxu0 %v9063
      %9447 = vmatpush.bf16.msra.mxu0 %v9062
      %9448 = vmatpush.bf16.msra.mxu0 %v9061
      %9449 = vmatpush.bf16.msra.mxu0 %v9060
      %9450 = vmatpush.bf16.msra.mxu0 %v9059
      %9451 = vmatmul.bf16.gmra.mxu0 %v8243
      %v9452 = vpop.f32.mrf.mxu0
      %v9453 = vadd.f32 %v8205, %v9452
      %v9454 = vpop.f32.mrf.mxu0
      %9455 = vdwg.mxu0
      %9456 = vmatpush.bf16.msra.mxu0 %v9074
      %9457 = vmatpush.bf16.msra.mxu0 %v9073
      %9458 = vmatpush.bf16.msra.mxu0 %v9072
      %9459 = vmatpush.bf16.msra.mxu0 %v9071
      %9460 = vmatpush.bf16.msra.mxu0 %v9070
      %9461 = vmatpush.bf16.msra.mxu0 %v9069
      %9462 = vmatpush.bf16.msra.mxu0 %v9068
      %9463 = vmatpush.bf16.msra.mxu0 %v9067
      %9464 = vmatmul.bf16.gmra.mxu0 %v8244
      %v9465 = vpop.f32.mrf.mxu0
      %v9466 = vadd.f32 %v9453, %v9465
      %v9467 = vpop.f32.mrf.mxu0
      %9468 = vdwg.mxu0
      %9469 = vmatpush.bf16.msra.mxu0 %v9082
      %9470 = vmatpush.bf16.msra.mxu0 %v9081
      %9471 = vmatpush.bf16.msra.mxu0 %v9080
      %9472 = vmatpush.bf16.msra.mxu0 %v9079
      %9473 = vmatpush.bf16.msra.mxu0 %v9078
      %9474 = vmatpush.bf16.msra.mxu0 %v9077
      %9475 = vmatpush.bf16.msra.mxu0 %v9076
      %9476 = vmatpush.bf16.msra.mxu0 %v9075
      %9477 = vmatmul.bf16.gmra.mxu0 %v8245
      %v9478 = vpop.f32.mrf.mxu0
      %v9479 = vadd.f32 %v9466, %v9478
      %v9480 = vpop.f32.mrf.mxu0
      %9481 = vdwg.mxu0
      %9482 = vmatpush.bf16.msra.mxu0 %v9090
      %9483 = vmatpush.bf16.msra.mxu0 %v9089
      %9484 = vmatpush.bf16.msra.mxu0 %v9088
      %9485 = vmatpush.bf16.msra.mxu0 %v9087
      %9486 = vmatpush.bf16.msra.mxu0 %v9086
      %9487 = vmatpush.bf16.msra.mxu0 %v9085
      %9488 = vmatpush.bf16.msra.mxu0 %v9084
      %9489 = vmatpush.bf16.msra.mxu0 %v9083
      %9490 = vmatmul.bf16.gmra.mxu0 %v8246
      %v9491 = vpop.f32.mrf.mxu0
      %v9492 = vadd.f32 %v9479, %v9491
      %v9493 = vpop.f32.mrf.mxu0
      %9494 = vdwg.mxu0
      %9495 = vmatpush.bf16.msra.mxu0 %v9098
      %9496 = vmatpush.bf16.msra.mxu0 %v9097
      %9497 = vmatpush.bf16.msra.mxu0 %v9096
      %9498 = vmatpush.bf16.msra.mxu0 %v9095
      %9499 = vmatpush.bf16.msra.mxu0 %v9094
      %9500 = vmatpush.bf16.msra.mxu0 %v9093
      %9501 = vmatpush.bf16.msra.mxu0 %v9092
      %9502 = vmatpush.bf16.msra.mxu0 %v9091
      %9503 = vmatmul.bf16.gmra.mxu0 %v8247
      %v9504 = vpop.f32.mrf.mxu0
      %v9505 = vadd.f32 %v9492, %v9504
      %v9506 = vpop.f32.mrf.mxu0
      %9507 = vdwg.mxu0
      %9508 = vmatpush.bf16.msra.mxu0 %v9106
      %9509 = vmatpush.bf16.msra.mxu0 %v9105
      %9510 = vmatpush.bf16.msra.mxu0 %v9104
      %9511 = vmatpush.bf16.msra.mxu0 %v9103
      %9512 = vmatpush.bf16.msra.mxu0 %v9102
      %9513 = vmatpush.bf16.msra.mxu0 %v9101
      %9514 = vmatpush.bf16.msra.mxu0 %v9100
      %9515 = vmatpush.bf16.msra.mxu0 %v9099
      %9516 = vmatmul.bf16.gmra.mxu0 %v8248
      %v9517 = vpop.f32.mrf.mxu0
      %v9518 = vadd.f32 %v9505, %v9517
      %v9519 = vpop.f32.mrf.mxu0
      %9520 = vdwg.mxu0
      %9521 = vmatpush.bf16.msra.mxu0 %v9114
      %9522 = vmatpush.bf16.msra.mxu0 %v9113
      %9523 = vmatpush.bf16.msra.mxu0 %v9112
      %9524 = vmatpush.bf16.msra.mxu0 %v9111
      %9525 = vmatpush.bf16.msra.mxu0 %v9110
      %9526 = vmatpush.bf16.msra.mxu0 %v9109
      %9527 = vmatpush.bf16.msra.mxu0 %v9108
      %9528 = vmatpush.bf16.msra.mxu0 %v9107
      %9529 = vmatmul.bf16.gmra.mxu0 %v8249
      %v9530 = vpop.f32.mrf.mxu0
      %v9531 = vadd.f32 %v9518, %v9530
      %v9532 = vpop.f32.mrf.mxu0
      %9533 = vdwg.mxu0
      %9534 = vmatpush.bf16.msra.mxu0 %v9122
      %9535 = vmatpush.bf16.msra.mxu0 %v9121
      %9536 = vmatpush.bf16.msra.mxu0 %v9120
      %9537 = vmatpush.bf16.msra.mxu0 %v9119
      %9538 = vmatpush.bf16.msra.mxu0 %v9118
      %9539 = vmatpush.bf16.msra.mxu0 %v9117
      %9540 = vmatpush.bf16.msra.mxu0 %v9116
      %9541 = vmatpush.bf16.msra.mxu0 %v9115
      %9542 = vmatmul.bf16.gmra.mxu0 %v8250
      %v9543 = vpop.f32.mrf.mxu0
      %v9544 = vadd.f32 %v9531, %v9543
      %v9545 = vpop.f32.mrf.mxu0
      %9546 = vdwg.mxu0
      %9547 = vmatpush.bf16.msra.mxu0 %v9130
      %9548 = vmatpush.bf16.msra.mxu0 %v9129
      %9549 = vmatpush.bf16.msra.mxu0 %v9128
      %9550 = vmatpush.bf16.msra.mxu0 %v9127
      %9551 = vmatpush.bf16.msra.mxu0 %v9126
      %9552 = vmatpush.bf16.msra.mxu0 %v9125
      %9553 = vmatpush.bf16.msra.mxu0 %v9124
      %9554 = vmatpush.bf16.msra.mxu0 %v9123
      %9555 = vmatmul.bf16.gmra.mxu0 %v8251
      %v9556 = vpop.f32.mrf.mxu0
      %v9557 = vadd.f32 %v9544, %v9556
      %v9558 = vpop.f32.mrf.mxu0
      %9559 = vdwg.mxu0
      %9560 = vmatpush.bf16.msra.mxu0 %v9138
      %9561 = vmatpush.bf16.msra.mxu0 %v9137
      %9562 = vmatpush.bf16.msra.mxu0 %v9136
      %9563 = vmatpush.bf16.msra.mxu0 %v9135
      %9564 = vmatpush.bf16.msra.mxu0 %v9134
      %9565 = vmatpush.bf16.msra.mxu0 %v9133
      %9566 = vmatpush.bf16.msra.mxu0 %v9132
      %9567 = vmatpush.bf16.msra.mxu0 %v9131
      %9568 = vmatmul.bf16.gmra.mxu0 %v8252
      %v9569 = vpop.f32.mrf.mxu0
      %v9570 = vadd.f32 %v9557, %v9569
      %v9571 = vpop.f32.mrf.mxu0
      %9572 = vdwg.mxu0
      %9573 = vmatpush.bf16.msra.mxu0 %v9146
      %9574 = vmatpush.bf16.msra.mxu0 %v9145
      %9575 = vmatpush.bf16.msra.mxu0 %v9144
      %9576 = vmatpush.bf16.msra.mxu0 %v9143
      %9577 = vmatpush.bf16.msra.mxu0 %v9142
      %9578 = vmatpush.bf16.msra.mxu0 %v9141
      %9579 = vmatpush.bf16.msra.mxu0 %v9140
      %9580 = vmatpush.bf16.msra.mxu0 %v9139
      %9581 = vmatmul.bf16.gmra.mxu0 %v8253
      %v9582 = vpop.f32.mrf.mxu0
      %v9583 = vadd.f32 %v9570, %v9582
      %v9584 = vpop.f32.mrf.mxu0
      %9585 = vdwg.mxu0
      %9586 = vmatpush.bf16.msra.mxu0 %v9154
      %9587 = vmatpush.bf16.msra.mxu0 %v9153
      %9588 = vmatpush.bf16.msra.mxu0 %v9152
      %9589 = vmatpush.bf16.msra.mxu0 %v9151
      %9590 = vmatpush.bf16.msra.mxu0 %v9150
      %9591 = vmatpush.bf16.msra.mxu0 %v9149
      %9592 = vmatpush.bf16.msra.mxu0 %v9148
      %9593 = vmatpush.bf16.msra.mxu0 %v9147
      %9594 = vmatmul.bf16.gmra.mxu0 %v8254
      %v9595 = vpop.f32.mrf.mxu0
      %v9596 = vadd.f32 %v9583, %v9595
      %v9597 = vpop.f32.mrf.mxu0
      %9598 = vdwg.mxu0
      %9599 = vmatpush.bf16.msra.mxu0 %v9162
      %9600 = vmatpush.bf16.msra.mxu0 %v9161
      %9601 = vmatpush.bf16.msra.mxu0 %v9160
      %9602 = vmatpush.bf16.msra.mxu0 %v9159
      %9603 = vmatpush.bf16.msra.mxu0 %v9158
      %9604 = vmatpush.bf16.msra.mxu0 %v9157
      %9605 = vmatpush.bf16.msra.mxu0 %v9156
      %9606 = vmatpush.bf16.msra.mxu0 %v9155
      %9607 = vmatmul.bf16.gmra.mxu0 %v8255
      %v9608 = vpop.f32.mrf.mxu0
      %v9609 = vadd.f32 %v9596, %v9608
      %v9610 = vpop.f32.mrf.mxu0
      %9611 = vdwg.mxu0
      %9612 = vmatpush.bf16.msra.mxu0 %v9170
      %9613 = vmatpush.bf16.msra.mxu0 %v9169
      %9614 = vmatpush.bf16.msra.mxu0 %v9168
      %9615 = vmatpush.bf16.msra.mxu0 %v9167
      %9616 = vmatpush.bf16.msra.mxu0 %v9166
      %9617 = vmatpush.bf16.msra.mxu0 %v9165
      %9618 = vmatpush.bf16.msra.mxu0 %v9164
      %9619 = vmatpush.bf16.msra.mxu0 %v9163
      %9620 = vmatmul.bf16.gmra.mxu0 %v8256
      %v9621 = vpop.f32.mrf.mxu0
      %v9622 = vadd.f32 %v9609, %v9621
      %v9623 = vpop.f32.mrf.mxu0
      %9624 = vdwg.mxu0
      %9625 = vmatpush.bf16.msra.mxu0 %v9178
      %9626 = vmatpush.bf16.msra.mxu0 %v9177
      %9627 = vmatpush.bf16.msra.mxu0 %v9176
      %9628 = vmatpush.bf16.msra.mxu0 %v9175
      %9629 = vmatpush.bf16.msra.mxu0 %v9174
      %9630 = vmatpush.bf16.msra.mxu0 %v9173
      %9631 = vmatpush.bf16.msra.mxu0 %v9172
      %9632 = vmatpush.bf16.msra.mxu0 %v9171
      %9633 = vmatmul.bf16.gmra.mxu0 %v8257
      %v9634 = vpop.f32.mrf.mxu0
      %v9635 = vadd.f32 %v9622, %v9634
      %v9636 = vpop.f32.mrf.mxu0
      %9637 = vdwg.mxu0
      %9638 = vmatpush.bf16.msra.mxu0 %v9186
      %9639 = vmatpush.bf16.msra.mxu0 %v9185
      %9640 = vmatpush.bf16.msra.mxu0 %v9184
      %9641 = vmatpush.bf16.msra.mxu0 %v9183
      %9642 = vmatpush.bf16.msra.mxu0 %v9182
      %9643 = vmatpush.bf16.msra.mxu0 %v9181
      %9644 = vmatpush.bf16.msra.mxu0 %v9180
      %9645 = vmatpush.bf16.msra.mxu0 %v9179
      %9646 = vmatmul.bf16.gmra.mxu0 %v8258
      %v9647 = vpop.f32.mrf.mxu0
      %v9648 = vadd.f32 %v9635, %v9647
      %v9649 = vpop.f32.mrf.mxu0
      %9650 = vdwg.mxu0
      %9651 = vmatpush.bf16.msra.mxu0 %v9194
      %9652 = vmatpush.bf16.msra.mxu0 %v9193
      %9653 = vmatpush.bf16.msra.mxu0 %v9192
      %9654 = vmatpush.bf16.msra.mxu0 %v9191
      %9655 = vmatpush.bf16.msra.mxu0 %v9190
      %9656 = vmatpush.bf16.msra.mxu0 %v9189
      %9657 = vmatpush.bf16.msra.mxu0 %v9188
      %9658 = vmatpush.bf16.msra.mxu0 %v9187
      %9659 = vmatmul.bf16.gmra.mxu0 %v8259
      %v9660 = vpop.f32.mrf.mxu0
      %v9661 = vadd.f32 %v9648, %v9660
      %v9662 = vpop.f32.mrf.mxu0
      %9663 = vdwg.mxu0
      %9664 = vmatpush.bf16.msra.mxu0 %v9202
      %9665 = vmatpush.bf16.msra.mxu0 %v9201
      %9666 = vmatpush.bf16.msra.mxu0 %v9200
      %9667 = vmatpush.bf16.msra.mxu0 %v9199
      %9668 = vmatpush.bf16.msra.mxu0 %v9198
      %9669 = vmatpush.bf16.msra.mxu0 %v9197
      %9670 = vmatpush.bf16.msra.mxu0 %v9196
      %9671 = vmatpush.bf16.msra.mxu0 %v9195
      %9672 = vmatmul.bf16.gmra.mxu0 %v8260
      %v9673 = vpop.f32.mrf.mxu0
      %v9674 = vadd.f32 %v9661, %v9673
      %v9675 = vpop.f32.mrf.mxu0
      %9676 = vdwg.mxu0
      %9677 = vmatpush.bf16.msra.mxu0 %v9210
      %9678 = vmatpush.bf16.msra.mxu0 %v9209
      %9679 = vmatpush.bf16.msra.mxu0 %v9208
      %9680 = vmatpush.bf16.msra.mxu0 %v9207
      %9681 = vmatpush.bf16.msra.mxu0 %v9206
      %9682 = vmatpush.bf16.msra.mxu0 %v9205
      %9683 = vmatpush.bf16.msra.mxu0 %v9204
      %9684 = vmatpush.bf16.msra.mxu0 %v9203
      %9685 = vmatmul.bf16.gmra.mxu0 %v8261
      %v9686 = vpop.f32.mrf.mxu0
      %v9687 = vadd.f32 %v9674, %v9686
      %v9688 = vpop.f32.mrf.mxu0
      %9689 = vdwg.mxu0
      %9690 = vmatpush.bf16.msra.mxu0 %v9218
      %9691 = vmatpush.bf16.msra.mxu0 %v9217
      %9692 = vmatpush.bf16.msra.mxu0 %v9216
      %9693 = vmatpush.bf16.msra.mxu0 %v9215
      %9694 = vmatpush.bf16.msra.mxu0 %v9214
      %9695 = vmatpush.bf16.msra.mxu0 %v9213
      %9696 = vmatpush.bf16.msra.mxu0 %v9212
      %9697 = vmatpush.bf16.msra.mxu0 %v9211
      %9698 = vmatmul.bf16.gmra.mxu0 %v8262
      %v9699 = vpop.f32.mrf.mxu0
      %v9700 = vadd.f32 %v9687, %v9699
      %v9701 = vpop.f32.mrf.mxu0
      %9702 = vdwg.mxu0
      %9703 = vmatpush.bf16.msra.mxu0 %v9226
      %9704 = vmatpush.bf16.msra.mxu0 %v9225
      %9705 = vmatpush.bf16.msra.mxu0 %v9224
      %9706 = vmatpush.bf16.msra.mxu0 %v9223
      %9707 = vmatpush.bf16.msra.mxu0 %v9222
      %9708 = vmatpush.bf16.msra.mxu0 %v9221
      %9709 = vmatpush.bf16.msra.mxu0 %v9220
      %9710 = vmatpush.bf16.msra.mxu0 %v9219
      %9711 = vmatmul.bf16.gmra.mxu0 %v8263
      %v9712 = vpop.f32.mrf.mxu0
      %v9713 = vadd.f32 %v9700, %v9712
      %v9714 = vpop.f32.mrf.mxu0
      %9715 = vdwg.mxu0
      %9716 = vmatpush.bf16.msra.mxu0 %v9234
      %9717 = vmatpush.bf16.msra.mxu0 %v9233
      %9718 = vmatpush.bf16.msra.mxu0 %v9232
      %9719 = vmatpush.bf16.msra.mxu0 %v9231
      %9720 = vmatpush.bf16.msra.mxu0 %v9230
      %9721 = vmatpush.bf16.msra.mxu0 %v9229
      %9722 = vmatpush.bf16.msra.mxu0 %v9228
      %9723 = vmatpush.bf16.msra.mxu0 %v9227
      %9724 = vmatmul.bf16.gmra.mxu0 %v8264
      %v9725 = vpop.f32.mrf.mxu0
      %v9726 = vadd.f32 %v9713, %v9725
      %v9727 = vpop.f32.mrf.mxu0
      %9728 = vdwg.mxu0
      %9729 = vmatpush.bf16.msra.mxu0 %v9242
      %9730 = vmatpush.bf16.msra.mxu0 %v9241
      %9731 = vmatpush.bf16.msra.mxu0 %v9240
      %9732 = vmatpush.bf16.msra.mxu0 %v9239
      %9733 = vmatpush.bf16.msra.mxu0 %v9238
      %9734 = vmatpush.bf16.msra.mxu0 %v9237
      %9735 = vmatpush.bf16.msra.mxu0 %v9236
      %9736 = vmatpush.bf16.msra.mxu0 %v9235
      %9737 = vmatmul.bf16.gmra.mxu0 %v8265
      %v9738 = vpop.f32.mrf.mxu0
      %v9739 = vadd.f32 %v9726, %v9738
      %v9740 = vpop.f32.mrf.mxu0
      %9741 = vdwg.mxu0
      %9742 = vmatpush.bf16.msra.mxu0 %v9250
      %9743 = vmatpush.bf16.msra.mxu0 %v9249
      %9744 = vmatpush.bf16.msra.mxu0 %v9248
      %9745 = vmatpush.bf16.msra.mxu0 %v9247
      %9746 = vmatpush.bf16.msra.mxu0 %v9246
      %9747 = vmatpush.bf16.msra.mxu0 %v9245
      %9748 = vmatpush.bf16.msra.mxu0 %v9244
      %9749 = vmatpush.bf16.msra.mxu0 %v9243
      %9750 = vmatmul.bf16.gmra.mxu0 %v8266
      %v9751 = vpop.f32.mrf.mxu0
      %v9752 = vadd.f32 %v9739, %v9751
      %v9753 = vpop.f32.mrf.mxu0
      %9754 = vdwg.mxu0
      %v9755 = vmax.f32 %v9752, 0.0
      %v9756 = vpack.c.bf16 %v9755, %v9755
      %v9757 = vld [vmem:[%s8] sm:$0xf]
      %v9758 = vld [vmem:[%s8 + $0x4] sm:$0xf]
      %v9759 = vld [vmem:[%s8 + $0x8] sm:$0xf]
      %v9760 = vld [vmem:[%s8 + $0xc] sm:$0xf]
      %v9761 = vld [vmem:[%s9] sm:$0x1]
      %v9763 = vperm.slane %v9761, 0
      %v9769 = vunpack.c.l.b16 %v9757
      %v9770 = vunpack.c.l.b16 %v9758
      %v9771 = vunpack.c.l.b16 %v9759
      %v9772 = vunpack.c.l.b16 %v9760
      %v9773 = vpack.c.b16 %v9770, %v9769
      %v9774 = vpack.c.b16 %v9772, %v9771
      %vm9777 = vcmask 261120
      %v9779 = vsel %vm9777, %v9756, 0
      %9781 = vmatpush.bf16.msra.mxu0 0
      %9782 = vmatpush.bf16.msra.mxu0 0
      %9783 = vmatpush.bf16.msra.mxu0 0
      %9784 = vmatpush.bf16.msra.mxu0 0
      %9785 = vmatpush.bf16.msra.mxu0 0
      %9786 = vmatpush.bf16.msra.mxu0 0
      %9787 = vmatpush.bf16.msra.mxu0 %v9774
      %9788 = vmatpush.bf16.msra.mxu0 %v9773
      %9789 = vmatmul.bf16.gmra.mxu0 %v9779
      %v9790 = vpop.f32.mrf.mxu0
      %v9791 = vadd.f32 %v9763, %v9790
      %v9792 = vpop.f32.mrf.mxu0
      %9793 = vdwg.mxu0
      %vm9794 = vcmask 48128
      %9795 = vst.msk [vmem:[%s357] sm:$0xff] %vm9794, %v9791
      %p9796 = scmp.lt.s32.totalorder %s21, 1
      %s9797 = scalar_select %p9796, %s21, 1
      %s9798 = smul.addr %s9797, 8
      %s9799 = scalar_lea.vmem %s10, %s9798
      // Predicated region
      $region61: #{forward_impl.1} parent=59 // pred_check
        %p9800 = pneg %p254
      $region62: #{forward_impl.1} parent=59 // pred_check_branch
        %9802 = sbr.rel (%p9800) target = $region64
      $region63: #{forward_impl.1} parent=59 // pred_region
        _
      $region64: #{forward_impl.1} parent=59 // pred_fallthru
        _
    $region60: #{forward_impl.1} parent=5 // pred_fallthru
      _
    %p9803 = scmp.le.s32.totalorder 2, %s16
    // Predicated region
    $region65: #{forward_impl.1} parent=5 // pred_check
      %p9804 = pneg %p9803
    $region66: #{forward_impl.1} parent=5 // pred_check_branch
      %9806 = sbr.rel (%p9804) target = $region68
    $region67: #{forward_impl.1} parent=5 // pred_region
      %s9807 = ssub.s32 %s16, 2
      // Predicated region
      $region69: #{forward_impl.1} parent=67 // pred_check
        %p9808 = pneg %p260
      $region70: #{forward_impl.1} parent=67 // pred_check_branch
        %9810 = sbr.rel (%p9808) target = $region72
      $region71: #{forward_impl.1} parent=67 // pred_region
        %p9811 = scmp.lt.s32.totalorder %s22, 1
        %s9812 = scalar_select %p9811, %s22, 1
        %s9813 = smul.addr %s9812, 8
        %s9814 = scalar_lea.vmem %s10, %s9813
      $region72: #{forward_impl.1} parent=67 // pred_fallthru
        _
    $region68: #{forward_impl.1} parent=5 // pred_fallthru
      _
  $region6: #{forward_impl.1} parent=0 // loop_footer
    %s20 = sadd.s32 1, %s16
  $region7: #{forward_impl.1} parent=0 // loop_footer_branch
    %15 = sbr.rel target = $region3
  $region8: #{forward_impl.1} parent=0 // loop_exit
    _

</llo_original>
